<compile_context>
chip_gen: v5e
topology: v5e:2x2
jax: 0.10.0
libtpu: 0.0.40
codegen_flags: <defaults>
</compile_context>

<pallas_src>
import functools

import jax
import jax.numpy as jnp
import numpy as np
from jax import lax
from jax.experimental import pallas as pl
from jax.experimental.pallas import tpu as pltpu


# ------------------------- model / stage geometry ---------------------------
_KH = _KW = 2
_STRIDE = 2
_PAD = 2
_CHANNELS = (3, 64, 32, 16, 8, 4)       # C0 .. C5 (conv1..conv5 outputs)


def _conv_out(h):
    return (h + 2 * _PAD - _KH) // _STRIDE + 1


def _round_up(n, m=8):
    return ((n + m - 1) // m) * m


def _stage_geometry(n, h0, w0):
    """Per-stage spatial sizes and (sublane-padded) row counts."""
    geo = []
    hi, wi = h0, w0
    m_in_pad = n * hi * wi
    for _ in range(5):
        ho, wo = _conv_out(hi), _conv_out(wi)
        m_out = n * ho * wo
        geo.append(dict(hi=hi, wi=wi, ho=ho, wo=wo,
                        m_in_pad=m_in_pad, m_out=m_out,
                        m_out_pad=_round_up(m_out, 8)))
        hi, wi = ho, wo
        m_in_pad = geo[-1]["m_out_pad"]
    return geo


def _build_selection(n, g):
    """0/1 matrices T[q] (q = ki*2+kj) mapping previous-stage rows -> patches.

    T[q] has shape [m_out_pad, m_in_pad]; entries are set only for valid
    (non conv-padding, non row-padding) positions, so padded/garbage rows of
    the previous stage never contribute.
    """
    hi, wi, ho, wo = g["hi"], g["wi"], g["ho"], g["wo"]
    t = np.zeros((4, g["m_out_pad"], g["m_in_pad"]), np.float32)
    for ki in range(_KH):
        for kj in range(_KW):
            q = ki * _KW + kj
            for b in range(n):
                for oh in range(ho):
                    ih = _STRIDE * oh + ki - _PAD
                    if not (0 <= ih < hi):
                        continue
                    for ow in range(wo):
                        iw = _STRIDE * ow + kj - _PAD
                        if 0 <= iw < wi:
                            t[q,
                              b * ho * wo + oh * wo + ow,
                              b * hi * wi + ih * wi + iw] = 1.0
    return t


def _stack_weight(w):
    """[Cout, Cin, KH, KW] -> [4, Cin, Cout], q = ki*2+kj."""
    w = jnp.asarray(w, jnp.float32)
    cols = [jnp.transpose(w[:, :, ki, kj], (1, 0))
            for ki in range(_KH) for kj in range(_KW)]
    return jnp.stack(cols, axis=0)


def fold_bn(gamma, beta, mean, var, eps=1e-5):
    scale = gamma / jnp.sqrt(var + eps)
    shift = beta - mean * scale
    return scale[None, :].astype(jnp.float32), shift[None, :].astype(jnp.float32)


# ----------------------------- activations ---------------------------------
def _hardshrink(x):                     # nn.Hardshrink(lambda=0.5)
    return jnp.where(jnp.abs(x) > 0.5, x, jnp.zeros_like(x))


def _gelu_exact(x):                     # nn.GELU() default = erf-based
    return 0.5 * x * (1.0 + lax.erf(x * np.float32(1.0 / np.sqrt(2.0))))


def _tanhshrink(x):                     # nn.Tanhshrink
    return x - jnp.tanh(x)


def _softplus(x):                       # numerically stable softplus
    return jnp.maximum(x, 0.0) + jnp.log1p(jnp.exp(-jnp.abs(x)))


def _mish(x):                           # nn.Mish
    return x * jnp.tanh(_softplus(x))


def _identity(x):
    return x


def _softmax_last(x):                   # nn.Softmax2d == softmax over channels
    m = jnp.max(x, axis=-1, keepdims=True)
    e = jnp.exp(x - m)
    # exact reciprocal: keeps the 2e-4 tolerance with margin
    return e * pl.reciprocal(jnp.sum(e, axis=-1, keepdims=True), approx=False)


# ------------------------------ fused kernel --------------------------------
def _fused_forward_kernel(x_ref, *refs):
    # refs = (t1, w1, s1, b1, ..., t5, w5, s5, b5, o_ref); all VMEM-resident.
    o_ref = refs[-1]
    stage_refs = [refs[4 * i:4 * i + 4] for i in range(5)]
    acts = (_hardshrink, _gelu_exact, _tanhshrink, _mish, _identity)

    def conv_bn(a, t_ref, w_ref, s_ref, b_ref):
        acc = None
        for q in range(4):                       # 2x2 kernel positions
            sub = jnp.dot(t_ref[q], a, preferred_element_type=jnp.float32)
            part = jnp.dot(sub, w_ref[q], preferred_element_type=jnp.float32)
            acc = part if acc is None else acc + part
        return acc * s_ref[...] + b_ref[...]     # folded BN / bias epilogue

    a = x_ref[...]
    for (t, w, s, b), act in zip(stage_refs, acts):
        a = act(conv_bn(a, t, w, s, b))
    o_ref[...] = _softmax_last(a)


def _make_cost_estimate(geo, ops, x_size):
    macs = 0
    trans = 0
    for s, g in enumerate(geo):
        ci, co = _CHANNELS[s], _CHANNELS[s + 1]
        macs += 4 * (g["m_out_pad"] * g["m_in_pad"] * ci
                     + g["m_out_pad"] * ci * co)
        trans += 4 * g["m_out_pad"] * co          # erf/tanh/exp epilogues (rough)
    bytes_accessed = 4 * (x_size + sum(int(o.size) for o in ops)
                          + geo[-1]["m_out_pad"] * _CHANNELS[-1])
    return pl.CostEstimate(flops=2 * macs, transcendentals=trans,
                           bytes_accessed=bytes_accessed)


def prepare_ops(params, n, h, w):
    """Build all constant kernel operands (selection matrices, stacked weights,
    folded BN scale/shift) once, outside jit."""
    geo = _stage_geometry(n, h, w)
    s1, t1 = fold_bn(params["g1"], params["be1"], params["m1"], params["v1"])
    s2, t2 = fold_bn(params["g2"], params["be2"], params["m2"], params["v2"])
    scale_shift = [
        (s1, t1),
        (s2, t2),
        (jnp.ones((1, 16), jnp.float32), jnp.zeros((1, 16), jnp.float32)),
        (jnp.ones((1, 8), jnp.float32), params["b4"][None, :].astype(jnp.float32)),
        (jnp.ones((1, 4), jnp.float32), params["b5"][None, :].astype(jnp.float32)),
    ]
    weights = [params["w1"], params["w2"], params["w3"], params["w4"], params["w5"]]
    ops = []
    for s in range(5):
        ops.append(jnp.asarray(_build_selection(n, geo[s])))
        ops.append(_stack_weight(weights[s]))
        ops.append(scale_shift[s][0])
        ops.append(scale_shift[s][1])
    return tuple(ops)


def forward(x_nchw, ops):
    """Full forward pass: one fused Pallas kernel, everything VMEM-resident."""
    n, c, h, w = x_nchw.shape
    geo = _stage_geometry(n, h, w)
    last = geo[-1]
    c_out = _CHANNELS[-1]

    # tiny XLA prologue: NCHW -> [N*H*W, C] rows for the in-kernel matmuls
    x_flat = jnp.transpose(x_nchw, (0, 2, 3, 1)).reshape(n * h * w, c)

    cost = _make_cost_estimate(geo, ops, x_flat.size)
    n_inputs = 1 + len(ops)
    y = pl.pallas_call(
        _fused_forward_kernel,
        out_shape=jax.ShapeDtypeStruct((last["m_out_pad"], c_out), jnp.float32),
        in_specs=[pl.BlockSpec(memory_space=pltpu.MemorySpace.VMEM)] * n_inputs,
        out_specs=pl.BlockSpec(memory_space=pltpu.MemorySpace.VMEM),
        cost_estimate=cost,
    )(x_flat, *ops)

    # tiny XLA epilogue on the 512-byte result: rows -> NCHW
    y = y[: last["m_out"]].reshape(n, last["ho"], last["wo"], c_out)
    return jnp.transpose(y, (0, 3, 1, 2))


# ------------------------------ parameters ----------------------------------
def make_params(key):
    """Deterministic synthetic parameters matching the module's shapes."""
    ks = jax.random.split(key, 16)
    p = {}
    # conv weights: PyTorch layout [Cout, Cin, KH, KW]
    p["w1"] = jax.random.normal(ks[0], (64, 3, 2, 2), jnp.float32) * 0.2
    p["w2"] = jax.random.normal(ks[1], (32, 64, 2, 2), jnp.float32) * 0.1
    p["w3"] = jax.random.normal(ks[2], (16, 32, 2, 2), jnp.float32) * 0.1
    p["w4"] = jax.random.normal(ks[3], (8, 16, 2, 2), jnp.float32) * 0.1
    p["b4"] = jax.random.normal(ks[4], (8,), jnp.float32) * 0.1
    p["w5"] = jax.random.normal(ks[5], (4, 8, 2, 2), jnp.float32) * 0.1
    p["b5"] = jax.random.normal(ks[6], (4,), jnp.float32) * 0.1
    # BN1 / BN2 (inference-mode running stats)
    p["g1"] = 1.0 + 0.1 * jax.random.normal(ks[7], (64,), jnp.float32)
    p["be1"] = 0.1 * jax.random.normal(ks[8], (64,), jnp.float32)
    p["m1"] = 0.1 * jax.random.normal(ks[9], (64,), jnp.float32)
    p["v1"] = 1.0 + 0.1 * jnp.abs(jax.random.normal(ks[10], (64,), jnp.float32))
    p["g2"] = 1.0 + 0.1 * jax.random.normal(ks[11], (32,), jnp.float32)
    p["be2"] = 0.1 * jax.random.normal(ks[12], (32,), jnp.float32)
    p["m2"] = 0.1 * jax.random.normal(ks[13], (32,), jnp.float32)
    p["v2"] = 1.0 + 0.1 * jnp.abs(jax.random.normal(ks[14], (32,), jnp.float32))
    return p


# --------------------------- pure-JAX reference -----------------------------
def _conv_ref(x_nchw, w, b=None, stride=2, pad=2):
    y = lax.conv_general_dilated(
        x_nchw, w, window_strides=(stride, stride),
        padding=((pad, pad), (pad, pad)),
        dimension_numbers=("NCHW", "OIHW", "NCHW"))
    if b is not None:
        y = y + b[None, :, None, None]
    return y


def forward_ref(x, p):
    eps = 1e-5
    y = _conv_ref(x, p["w1"])
    y = (y - p["m1"][None, :, None, None]) / jnp.sqrt(p["v1"] + eps)[None, :, None, None]
    y = y * p["g1"][None, :, None, None] + p["be1"][None, :, None, None]
    y = _hardshrink(y)
    y = _conv_ref(y, p["w2"])
    y = (y - p["m2"][None, :, None, None]) / jnp.sqrt(p["v2"] + eps)[None, :, None, None]
    y = y * p["g2"][None, :, None, None] + p["be2"][None, :, None, None]
    y = _gelu_exact(y)
    y = _conv_ref(y, p["w3"])
    y = _tanhshrink(y)
    y = _conv_ref(y, p["w4"], p["b4"])
    y = _mish(y)
    y = _conv_ref(y, p["w5"], p["b5"])
    y = jax.nn.softmax(y, axis=1)
    return y


# --------------------------------- main -------------------------------------
if __name__ == "__main__":
    key = jax.random.PRNGKey(0)
    k_x, k_p = jax.random.split(key)
    x = jax.random.normal(k_x, (2, 3, 16, 16), jnp.float32)   # NCHW, like PyTorch
    params = make_params(k_p)

    # constant operands (selection matrices, stacked weights, folded BN) built once
    ops = prepare_ops(params, n=2, h=16, w=16)

    fwd = jax.jit(forward)
    out = jax.block_until_ready(fwd(x, ops))
    assert out.shape == (2, 4, 4, 4), out.shape

    ref = jax.block_until_ready(forward_ref(x, params))
    np.testing.assert_allclose(np.asarray(out), np.asarray(ref), atol=2e-4, rtol=2e-4)

    print("KERNEL_OK")
</pallas_src>

<mosaic_0001>
module attributes {stable_mosaic.version = 11 : i64} {
  func.func @_fused_forward_kernel(%arg0: memref<512x3xf32, #tpu.memory_space<vmem>>, %arg1: memref<4x200x512xf32, #tpu.memory_space<vmem>>, %arg2: memref<4x3x64xf32, #tpu.memory_space<vmem>>, %arg3: memref<1x64xf32, #tpu.memory_space<vmem>>, %arg4: memref<1x64xf32, #tpu.memory_space<vmem>>, %arg5: memref<4x104x200xf32, #tpu.memory_space<vmem>>, %arg6: memref<4x64x32xf32, #tpu.memory_space<vmem>>, %arg7: memref<1x32xf32, #tpu.memory_space<vmem>>, %arg8: memref<1x32xf32, #tpu.memory_space<vmem>>, %arg9: memref<4x56x104xf32, #tpu.memory_space<vmem>>, %arg10: memref<4x32x16xf32, #tpu.memory_space<vmem>>, %arg11: memref<1x16xf32, #tpu.memory_space<vmem>>, %arg12: memref<1x16xf32, #tpu.memory_space<vmem>>, %arg13: memref<4x32x56xf32, #tpu.memory_space<vmem>>, %arg14: memref<4x16x8xf32, #tpu.memory_space<vmem>>, %arg15: memref<1x8xf32, #tpu.memory_space<vmem>>, %arg16: memref<1x8xf32, #tpu.memory_space<vmem>>, %arg17: memref<4x32x32xf32, #tpu.memory_space<vmem>>, %arg18: memref<4x8x4xf32, #tpu.memory_space<vmem>>, %arg19: memref<1x4xf32, #tpu.memory_space<vmem>>, %arg20: memref<1x4xf32, #tpu.memory_space<vmem>>, %arg21: memref<32x4xf32, #tpu.memory_space<vmem>>) attributes {dimension_semantics = [], scalar_prefetch = 0 : i64, scratch_operands = 0 : i64, tpu.core_type = #tpu.core_type<tc>} {
    %c0 = arith.constant 0 : index
    %c0_0 = arith.constant 0 : index
    %0 = vector.load %arg0[%c0, %c0_0] : memref<512x3xf32, #tpu.memory_space<vmem>>, vector<512x3xf32>
    %c0_1 = arith.constant 0 : index
    %c0_2 = arith.constant 0 : index
    %c0_3 = arith.constant 0 : index
    %1 = vector.load %arg1[%c0_1, %c0_2, %c0_3] : memref<4x200x512xf32, #tpu.memory_space<vmem>>, vector<1x200x512xf32>
    %2 = vector.shape_cast %1 : vector<1x200x512xf32> to vector<200x512xf32>
    %cst = arith.constant dense<0.000000e+00> : vector<200x3xf32>
    %3 = tpu.matmul %2, %0, %cst {dimension_numbers = #tpu.dot_dimension_numbers<[1], [0], [0], [1], [0, 0, 1, 1], [], []>} : vector<200x512xf32>, vector<512x3xf32>, vector<200x3xf32> -> vector<200x3xf32>
    %c0_4 = arith.constant 0 : index
    %c0_5 = arith.constant 0 : index
    %c0_6 = arith.constant 0 : index
    %4 = vector.load %arg2[%c0_4, %c0_5, %c0_6] : memref<4x3x64xf32, #tpu.memory_space<vmem>>, vector<1x3x64xf32>
    %5 = vector.shape_cast %4 : vector<1x3x64xf32> to vector<3x64xf32>
    %cst_7 = arith.constant dense<0.000000e+00> : vector<200x64xf32>
    %6 = tpu.matmul %3, %5, %cst_7 {dimension_numbers = #tpu.dot_dimension_numbers<[1], [0], [0], [1], [0, 0, 1, 1], [], []>} : vector<200x3xf32>, vector<3x64xf32>, vector<200x64xf32> -> vector<200x64xf32>
    %c1 = arith.constant 1 : index
    %c0_8 = arith.constant 0 : index
    %c0_9 = arith.constant 0 : index
    %7 = vector.load %arg1[%c1, %c0_8, %c0_9] : memref<4x200x512xf32, #tpu.memory_space<vmem>>, vector<1x200x512xf32>
    %8 = vector.shape_cast %7 : vector<1x200x512xf32> to vector<200x512xf32>
    %cst_10 = arith.constant dense<0.000000e+00> : vector<200x3xf32>
    %9 = tpu.matmul %8, %0, %cst_10 {dimension_numbers = #tpu.dot_dimension_numbers<[1], [0], [0], [1], [0, 0, 1, 1], [], []>} : vector<200x512xf32>, vector<512x3xf32>, vector<200x3xf32> -> vector<200x3xf32>
    %c1_11 = arith.constant 1 : index
    %c0_12 = arith.constant 0 : index
    %c0_13 = arith.constant 0 : index
    %10 = vector.load %arg2[%c1_11, %c0_12, %c0_13] : memref<4x3x64xf32, #tpu.memory_space<vmem>>, vector<1x3x64xf32>
    %11 = vector.shape_cast %10 : vector<1x3x64xf32> to vector<3x64xf32>
    %cst_14 = arith.constant dense<0.000000e+00> : vector<200x64xf32>
    %12 = tpu.matmul %9, %11, %cst_14 {dimension_numbers = #tpu.dot_dimension_numbers<[1], [0], [0], [1], [0, 0, 1, 1], [], []>} : vector<200x3xf32>, vector<3x64xf32>, vector<200x64xf32> -> vector<200x64xf32>
    %13 = arith.addf %6, %12 : vector<200x64xf32>
    %c2 = arith.constant 2 : index
    %c0_15 = arith.constant 0 : index
    %c0_16 = arith.constant 0 : index
    %14 = vector.load %arg1[%c2, %c0_15, %c0_16] : memref<4x200x512xf32, #tpu.memory_space<vmem>>, vector<1x200x512xf32>
    %15 = vector.shape_cast %14 : vector<1x200x512xf32> to vector<200x512xf32>
    %cst_17 = arith.constant dense<0.000000e+00> : vector<200x3xf32>
    %16 = tpu.matmul %15, %0, %cst_17 {dimension_numbers = #tpu.dot_dimension_numbers<[1], [0], [0], [1], [0, 0, 1, 1], [], []>} : vector<200x512xf32>, vector<512x3xf32>, vector<200x3xf32> -> vector<200x3xf32>
    %c2_18 = arith.constant 2 : index
    %c0_19 = arith.constant 0 : index
    %c0_20 = arith.constant 0 : index
    %17 = vector.load %arg2[%c2_18, %c0_19, %c0_20] : memref<4x3x64xf32, #tpu.memory_space<vmem>>, vector<1x3x64xf32>
    %18 = vector.shape_cast %17 : vector<1x3x64xf32> to vector<3x64xf32>
    %cst_21 = arith.constant dense<0.000000e+00> : vector<200x64xf32>
    %19 = tpu.matmul %16, %18, %cst_21 {dimension_numbers = #tpu.dot_dimension_numbers<[1], [0], [0], [1], [0, 0, 1, 1], [], []>} : vector<200x3xf32>, vector<3x64xf32>, vector<200x64xf32> -> vector<200x64xf32>
    %20 = arith.addf %13, %19 : vector<200x64xf32>
    %c3 = arith.constant 3 : index
    %c0_22 = arith.constant 0 : index
    %c0_23 = arith.constant 0 : index
    %21 = vector.load %arg1[%c3, %c0_22, %c0_23] : memref<4x200x512xf32, #tpu.memory_space<vmem>>, vector<1x200x512xf32>
    %22 = vector.shape_cast %21 : vector<1x200x512xf32> to vector<200x512xf32>
    %cst_24 = arith.constant dense<0.000000e+00> : vector<200x3xf32>
    %23 = tpu.matmul %22, %0, %cst_24 {dimension_numbers = #tpu.dot_dimension_numbers<[1], [0], [0], [1], [0, 0, 1, 1], [], []>} : vector<200x512xf32>, vector<512x3xf32>, vector<200x3xf32> -> vector<200x3xf32>
    %c3_25 = arith.constant 3 : index
    %c0_26 = arith.constant 0 : index
    %c0_27 = arith.constant 0 : index
    %24 = vector.load %arg2[%c3_25, %c0_26, %c0_27] : memref<4x3x64xf32, #tpu.memory_space<vmem>>, vector<1x3x64xf32>
    %25 = vector.shape_cast %24 : vector<1x3x64xf32> to vector<3x64xf32>
    %cst_28 = arith.constant dense<0.000000e+00> : vector<200x64xf32>
    %26 = tpu.matmul %23, %25, %cst_28 {dimension_numbers = #tpu.dot_dimension_numbers<[1], [0], [0], [1], [0, 0, 1, 1], [], []>} : vector<200x3xf32>, vector<3x64xf32>, vector<200x64xf32> -> vector<200x64xf32>
    %27 = arith.addf %20, %26 : vector<200x64xf32>
    %c0_29 = arith.constant 0 : index
    %c0_30 = arith.constant 0 : index
    %28 = vector.load %arg3[%c0_29, %c0_30] : memref<1x64xf32, #tpu.memory_space<vmem>>, vector<1x64xf32>
    %29 = vector.broadcast %28 : vector<1x64xf32> to vector<200x64xf32>
    %30 = arith.mulf %27, %29 : vector<200x64xf32>
    %c0_31 = arith.constant 0 : index
    %c0_32 = arith.constant 0 : index
    %31 = vector.load %arg4[%c0_31, %c0_32] : memref<1x64xf32, #tpu.memory_space<vmem>>, vector<1x64xf32>
    %32 = vector.broadcast %31 : vector<1x64xf32> to vector<200x64xf32>
    %33 = arith.addf %30, %32 : vector<200x64xf32>
    %34 = math.absf %33 : vector<200x64xf32>
    %cst_33 = arith.constant 5.000000e-01 : f32
    %35 = vector.broadcast %cst_33 : f32 to vector<200x64xf32>
    %36 = arith.cmpf ogt, %34, %35 : vector<200x64xf32>
    %cst_34 = arith.constant 0.000000e+00 : f32
    %37 = vector.broadcast %cst_34 : f32 to vector<200x64xf32>
    %38 = arith.select %36, %33, %37 : vector<200x64xi1>, vector<200x64xf32>
    %c0_35 = arith.constant 0 : index
    %c0_36 = arith.constant 0 : index
    %c0_37 = arith.constant 0 : index
    %39 = vector.load %arg5[%c0_35, %c0_36, %c0_37] : memref<4x104x200xf32, #tpu.memory_space<vmem>>, vector<1x104x200xf32>
    %40 = vector.shape_cast %39 : vector<1x104x200xf32> to vector<104x200xf32>
    %cst_38 = arith.constant dense<0.000000e+00> : vector<104x64xf32>
    %41 = tpu.matmul %40, %38, %cst_38 {dimension_numbers = #tpu.dot_dimension_numbers<[1], [0], [0], [1], [0, 0, 1, 1], [], []>} : vector<104x200xf32>, vector<200x64xf32>, vector<104x64xf32> -> vector<104x64xf32>
    %c0_39 = arith.constant 0 : index
    %c0_40 = arith.constant 0 : index
    %c0_41 = arith.constant 0 : index
    %42 = vector.load %arg6[%c0_39, %c0_40, %c0_41] : memref<4x64x32xf32, #tpu.memory_space<vmem>>, vector<1x64x32xf32>
    %43 = vector.shape_cast %42 : vector<1x64x32xf32> to vector<64x32xf32>
    %cst_42 = arith.constant dense<0.000000e+00> : vector<104x32xf32>
    %44 = tpu.matmul %41, %43, %cst_42 {dimension_numbers = #tpu.dot_dimension_numbers<[1], [0], [0], [1], [0, 0, 1, 1], [], []>} : vector<104x64xf32>, vector<64x32xf32>, vector<104x32xf32> -> vector<104x32xf32>
    %c1_43 = arith.constant 1 : index
    %c0_44 = arith.constant 0 : index
    %c0_45 = arith.constant 0 : index
    %45 = vector.load %arg5[%c1_43, %c0_44, %c0_45] : memref<4x104x200xf32, #tpu.memory_space<vmem>>, vector<1x104x200xf32>
    %46 = vector.shape_cast %45 : vector<1x104x200xf32> to vector<104x200xf32>
    %cst_46 = arith.constant dense<0.000000e+00> : vector<104x64xf32>
    %47 = tpu.matmul %46, %38, %cst_46 {dimension_numbers = #tpu.dot_dimension_numbers<[1], [0], [0], [1], [0, 0, 1, 1], [], []>} : vector<104x200xf32>, vector<200x64xf32>, vector<104x64xf32> -> vector<104x64xf32>
    %c1_47 = arith.constant 1 : index
    %c0_48 = arith.constant 0 : index
    %c0_49 = arith.constant 0 : index
    %48 = vector.load %arg6[%c1_47, %c0_48, %c0_49] : memref<4x64x32xf32, #tpu.memory_space<vmem>>, vector<1x64x32xf32>
    %49 = vector.shape_cast %48 : vector<1x64x32xf32> to vector<64x32xf32>
    %cst_50 = arith.constant dense<0.000000e+00> : vector<104x32xf32>
    %50 = tpu.matmul %47, %49, %cst_50 {dimension_numbers = #tpu.dot_dimension_numbers<[1], [0], [0], [1], [0, 0, 1, 1], [], []>} : vector<104x64xf32>, vector<64x32xf32>, vector<104x32xf32> -> vector<104x32xf32>
    %51 = arith.addf %44, %50 : vector<104x32xf32>
    %c2_51 = arith.constant 2 : index
    %c0_52 = arith.constant 0 : index
    %c0_53 = arith.constant 0 : index
    %52 = vector.load %arg5[%c2_51, %c0_52, %c0_53] : memref<4x104x200xf32, #tpu.memory_space<vmem>>, vector<1x104x200xf32>
    %53 = vector.shape_cast %52 : vector<1x104x200xf32> to vector<104x200xf32>
    %cst_54 = arith.constant dense<0.000000e+00> : vector<104x64xf32>
    %54 = tpu.matmul %53, %38, %cst_54 {dimension_numbers = #tpu.dot_dimension_numbers<[1], [0], [0], [1], [0, 0, 1, 1], [], []>} : vector<104x200xf32>, vector<200x64xf32>, vector<104x64xf32> -> vector<104x64xf32>
    %c2_55 = arith.constant 2 : index
    %c0_56 = arith.constant 0 : index
    %c0_57 = arith.constant 0 : index
    %55 = vector.load %arg6[%c2_55, %c0_56, %c0_57] : memref<4x64x32xf32, #tpu.memory_space<vmem>>, vector<1x64x32xf32>
    %56 = vector.shape_cast %55 : vector<1x64x32xf32> to vector<64x32xf32>
    %cst_58 = arith.constant dense<0.000000e+00> : vector<104x32xf32>
    %57 = tpu.matmul %54, %56, %cst_58 {dimension_numbers = #tpu.dot_dimension_numbers<[1], [0], [0], [1], [0, 0, 1, 1], [], []>} : vector<104x64xf32>, vector<64x32xf32>, vector<104x32xf32> -> vector<104x32xf32>
    %58 = arith.addf %51, %57 : vector<104x32xf32>
    %c3_59 = arith.constant 3 : index
    %c0_60 = arith.constant 0 : index
    %c0_61 = arith.constant 0 : index
    %59 = vector.load %arg5[%c3_59, %c0_60, %c0_61] : memref<4x104x200xf32, #tpu.memory_space<vmem>>, vector<1x104x200xf32>
    %60 = vector.shape_cast %59 : vector<1x104x200xf32> to vector<104x200xf32>
    %cst_62 = arith.constant dense<0.000000e+00> : vector<104x64xf32>
    %61 = tpu.matmul %60, %38, %cst_62 {dimension_numbers = #tpu.dot_dimension_numbers<[1], [0], [0], [1], [0, 0, 1, 1], [], []>} : vector<104x200xf32>, vector<200x64xf32>, vector<104x64xf32> -> vector<104x64xf32>
    %c3_63 = arith.constant 3 : index
    %c0_64 = arith.constant 0 : index
    %c0_65 = arith.constant 0 : index
    %62 = vector.load %arg6[%c3_63, %c0_64, %c0_65] : memref<4x64x32xf32, #tpu.memory_space<vmem>>, vector<1x64x32xf32>
    %63 = vector.shape_cast %62 : vector<1x64x32xf32> to vector<64x32xf32>
    %cst_66 = arith.constant dense<0.000000e+00> : vector<104x32xf32>
    %64 = tpu.matmul %61, %63, %cst_66 {dimension_numbers = #tpu.dot_dimension_numbers<[1], [0], [0], [1], [0, 0, 1, 1], [], []>} : vector<104x64xf32>, vector<64x32xf32>, vector<104x32xf32> -> vector<104x32xf32>
    %65 = arith.addf %58, %64 : vector<104x32xf32>
    %c0_67 = arith.constant 0 : index
    %c0_68 = arith.constant 0 : index
    %66 = vector.load %arg7[%c0_67, %c0_68] : memref<1x32xf32, #tpu.memory_space<vmem>>, vector<1x32xf32>
    %67 = vector.broadcast %66 : vector<1x32xf32> to vector<104x32xf32>
    %68 = arith.mulf %65, %67 : vector<104x32xf32>
    %c0_69 = arith.constant 0 : index
    %c0_70 = arith.constant 0 : index
    %69 = vector.load %arg8[%c0_69, %c0_70] : memref<1x32xf32, #tpu.memory_space<vmem>>, vector<1x32xf32>
    %70 = vector.broadcast %69 : vector<1x32xf32> to vector<104x32xf32>
    %71 = arith.addf %68, %70 : vector<104x32xf32>
    %cst_71 = arith.constant 5.000000e-01 : f32
    %72 = vector.broadcast %cst_71 : f32 to vector<104x32xf32>
    %73 = arith.mulf %72, %71 : vector<104x32xf32>
    %cst_72 = arith.constant 0.707106769 : f32
    %74 = vector.broadcast %cst_72 : f32 to vector<104x32xf32>
    %75 = arith.mulf %71, %74 : vector<104x32xf32>
    %76 = math.erf %75 : vector<104x32xf32>
    %cst_73 = arith.constant 1.000000e+00 : f32
    %77 = vector.broadcast %cst_73 : f32 to vector<104x32xf32>
    %78 = arith.addf %77, %76 : vector<104x32xf32>
    %79 = arith.mulf %73, %78 : vector<104x32xf32>
    %c0_74 = arith.constant 0 : index
    %c0_75 = arith.constant 0 : index
    %c0_76 = arith.constant 0 : index
    %80 = vector.load %arg9[%c0_74, %c0_75, %c0_76] : memref<4x56x104xf32, #tpu.memory_space<vmem>>, vector<1x56x104xf32>
    %81 = vector.shape_cast %80 : vector<1x56x104xf32> to vector<56x104xf32>
    %cst_77 = arith.constant dense<0.000000e+00> : vector<56x32xf32>
    %82 = tpu.matmul %81, %79, %cst_77 {dimension_numbers = #tpu.dot_dimension_numbers<[1], [0], [0], [1], [0, 0, 1, 1], [], []>} : vector<56x104xf32>, vector<104x32xf32>, vector<56x32xf32> -> vector<56x32xf32>
    %c0_78 = arith.constant 0 : index
    %c0_79 = arith.constant 0 : index
    %c0_80 = arith.constant 0 : index
    %83 = vector.load %arg10[%c0_78, %c0_79, %c0_80] : memref<4x32x16xf32, #tpu.memory_space<vmem>>, vector<1x32x16xf32>
    %84 = vector.shape_cast %83 : vector<1x32x16xf32> to vector<32x16xf32>
    %cst_81 = arith.constant dense<0.000000e+00> : vector<56x16xf32>
    %85 = tpu.matmul %82, %84, %cst_81 {dimension_numbers = #tpu.dot_dimension_numbers<[1], [0], [0], [1], [0, 0, 1, 1], [], []>} : vector<56x32xf32>, vector<32x16xf32>, vector<56x16xf32> -> vector<56x16xf32>
    %c1_82 = arith.constant 1 : index
    %c0_83 = arith.constant 0 : index
    %c0_84 = arith.constant 0 : index
    %86 = vector.load %arg9[%c1_82, %c0_83, %c0_84] : memref<4x56x104xf32, #tpu.memory_space<vmem>>, vector<1x56x104xf32>
    %87 = vector.shape_cast %86 : vector<1x56x104xf32> to vector<56x104xf32>
    %cst_85 = arith.constant dense<0.000000e+00> : vector<56x32xf32>
    %88 = tpu.matmul %87, %79, %cst_85 {dimension_numbers = #tpu.dot_dimension_numbers<[1], [0], [0], [1], [0, 0, 1, 1], [], []>} : vector<56x104xf32>, vector<104x32xf32>, vector<56x32xf32> -> vector<56x32xf32>
    %c1_86 = arith.constant 1 : index
    %c0_87 = arith.constant 0 : index
    %c0_88 = arith.constant 0 : index
    %89 = vector.load %arg10[%c1_86, %c0_87, %c0_88] : memref<4x32x16xf32, #tpu.memory_space<vmem>>, vector<1x32x16xf32>
    %90 = vector.shape_cast %89 : vector<1x32x16xf32> to vector<32x16xf32>
    %cst_89 = arith.constant dense<0.000000e+00> : vector<56x16xf32>
    %91 = tpu.matmul %88, %90, %cst_89 {dimension_numbers = #tpu.dot_dimension_numbers<[1], [0], [0], [1], [0, 0, 1, 1], [], []>} : vector<56x32xf32>, vector<32x16xf32>, vector<56x16xf32> -> vector<56x16xf32>
    %92 = arith.addf %85, %91 : vector<56x16xf32>
    %c2_90 = arith.constant 2 : index
    %c0_91 = arith.constant 0 : index
    %c0_92 = arith.constant 0 : index
    %93 = vector.load %arg9[%c2_90, %c0_91, %c0_92] : memref<4x56x104xf32, #tpu.memory_space<vmem>>, vector<1x56x104xf32>
    %94 = vector.shape_cast %93 : vector<1x56x104xf32> to vector<56x104xf32>
    %cst_93 = arith.constant dense<0.000000e+00> : vector<56x32xf32>
    %95 = tpu.matmul %94, %79, %cst_93 {dimension_numbers = #tpu.dot_dimension_numbers<[1], [0], [0], [1], [0, 0, 1, 1], [], []>} : vector<56x104xf32>, vector<104x32xf32>, vector<56x32xf32> -> vector<56x32xf32>
    %c2_94 = arith.constant 2 : index
    %c0_95 = arith.constant 0 : index
    %c0_96 = arith.constant 0 : index
    %96 = vector.load %arg10[%c2_94, %c0_95, %c0_96] : memref<4x32x16xf32, #tpu.memory_space<vmem>>, vector<1x32x16xf32>
    %97 = vector.shape_cast %96 : vector<1x32x16xf32> to vector<32x16xf32>
    %cst_97 = arith.constant dense<0.000000e+00> : vector<56x16xf32>
    %98 = tpu.matmul %95, %97, %cst_97 {dimension_numbers = #tpu.dot_dimension_numbers<[1], [0], [0], [1], [0, 0, 1, 1], [], []>} : vector<56x32xf32>, vector<32x16xf32>, vector<56x16xf32> -> vector<56x16xf32>
    %99 = arith.addf %92, %98 : vector<56x16xf32>
    %c3_98 = arith.constant 3 : index
    %c0_99 = arith.constant 0 : index
    %c0_100 = arith.constant 0 : index
    %100 = vector.load %arg9[%c3_98, %c0_99, %c0_100] : memref<4x56x104xf32, #tpu.memory_space<vmem>>, vector<1x56x104xf32>
    %101 = vector.shape_cast %100 : vector<1x56x104xf32> to vector<56x104xf32>
    %cst_101 = arith.constant dense<0.000000e+00> : vector<56x32xf32>
    %102 = tpu.matmul %101, %79, %cst_101 {dimension_numbers = #tpu.dot_dimension_numbers<[1], [0], [0], [1], [0, 0, 1, 1], [], []>} : vector<56x104xf32>, vector<104x32xf32>, vector<56x32xf32> -> vector<56x32xf32>
    %c3_102 = arith.constant 3 : index
    %c0_103 = arith.constant 0 : index
    %c0_104 = arith.constant 0 : index
    %103 = vector.load %arg10[%c3_102, %c0_103, %c0_104] : memref<4x32x16xf32, #tpu.memory_space<vmem>>, vector<1x32x16xf32>
    %104 = vector.shape_cast %103 : vector<1x32x16xf32> to vector<32x16xf32>
    %cst_105 = arith.constant dense<0.000000e+00> : vector<56x16xf32>
    %105 = tpu.matmul %102, %104, %cst_105 {dimension_numbers = #tpu.dot_dimension_numbers<[1], [0], [0], [1], [0, 0, 1, 1], [], []>} : vector<56x32xf32>, vector<32x16xf32>, vector<56x16xf32> -> vector<56x16xf32>
    %106 = arith.addf %99, %105 : vector<56x16xf32>
    %c0_106 = arith.constant 0 : index
    %c0_107 = arith.constant 0 : index
    %107 = vector.load %arg11[%c0_106, %c0_107] : memref<1x16xf32, #tpu.memory_space<vmem>>, vector<1x16xf32>
    %108 = vector.broadcast %107 : vector<1x16xf32> to vector<56x16xf32>
    %109 = arith.mulf %106, %108 : vector<56x16xf32>
    %c0_108 = arith.constant 0 : index
    %c0_109 = arith.constant 0 : index
    %110 = vector.load %arg12[%c0_108, %c0_109] : memref<1x16xf32, #tpu.memory_space<vmem>>, vector<1x16xf32>
    %111 = vector.broadcast %110 : vector<1x16xf32> to vector<56x16xf32>
    %112 = arith.addf %109, %111 : vector<56x16xf32>
    %113 = math.tanh %112 : vector<56x16xf32>
    %114 = arith.subf %112, %113 : vector<56x16xf32>
    %c0_110 = arith.constant 0 : index
    %c0_111 = arith.constant 0 : index
    %c0_112 = arith.constant 0 : index
    %115 = vector.load %arg13[%c0_110, %c0_111, %c0_112] : memref<4x32x56xf32, #tpu.memory_space<vmem>>, vector<1x32x56xf32>
    %116 = vector.shape_cast %115 : vector<1x32x56xf32> to vector<32x56xf32>
    %cst_113 = arith.constant dense<0.000000e+00> : vector<32x16xf32>
    %117 = tpu.matmul %116, %114, %cst_113 {dimension_numbers = #tpu.dot_dimension_numbers<[1], [0], [0], [1], [0, 0, 1, 1], [], []>} : vector<32x56xf32>, vector<56x16xf32>, vector<32x16xf32> -> vector<32x16xf32>
    %c0_114 = arith.constant 0 : index
    %c0_115 = arith.constant 0 : index
    %c0_116 = arith.constant 0 : index
    %118 = vector.load %arg14[%c0_114, %c0_115, %c0_116] : memref<4x16x8xf32, #tpu.memory_space<vmem>>, vector<1x16x8xf32>
    %119 = vector.shape_cast %118 : vector<1x16x8xf32> to vector<16x8xf32>
    %cst_117 = arith.constant dense<0.000000e+00> : vector<32x8xf32>
    %120 = tpu.matmul %117, %119, %cst_117 {dimension_numbers = #tpu.dot_dimension_numbers<[1], [0], [0], [1], [0, 0, 1, 1], [], []>} : vector<32x16xf32>, vector<16x8xf32>, vector<32x8xf32> -> vector<32x8xf32>
    %c1_118 = arith.constant 1 : index
    %c0_119 = arith.constant 0 : index
    %c0_120 = arith.constant 0 : index
    %121 = vector.load %arg13[%c1_118, %c0_119, %c0_120] : memref<4x32x56xf32, #tpu.memory_space<vmem>>, vector<1x32x56xf32>
    %122 = vector.shape_cast %121 : vector<1x32x56xf32> to vector<32x56xf32>
    %cst_121 = arith.constant dense<0.000000e+00> : vector<32x16xf32>
    %123 = tpu.matmul %122, %114, %cst_121 {dimension_numbers = #tpu.dot_dimension_numbers<[1], [0], [0], [1], [0, 0, 1, 1], [], []>} : vector<32x56xf32>, vector<56x16xf32>, vector<32x16xf32> -> vector<32x16xf32>
    %c1_122 = arith.constant 1 : index
    %c0_123 = arith.constant 0 : index
    %c0_124 = arith.constant 0 : index
    %124 = vector.load %arg14[%c1_122, %c0_123, %c0_124] : memref<4x16x8xf32, #tpu.memory_space<vmem>>, vector<1x16x8xf32>
    %125 = vector.shape_cast %124 : vector<1x16x8xf32> to vector<16x8xf32>
    %cst_125 = arith.constant dense<0.000000e+00> : vector<32x8xf32>
    %126 = tpu.matmul %123, %125, %cst_125 {dimension_numbers = #tpu.dot_dimension_numbers<[1], [0], [0], [1], [0, 0, 1, 1], [], []>} : vector<32x16xf32>, vector<16x8xf32>, vector<32x8xf32> -> vector<32x8xf32>
    %127 = arith.addf %120, %126 : vector<32x8xf32>
    %c2_126 = arith.constant 2 : index
    %c0_127 = arith.constant 0 : index
    %c0_128 = arith.constant 0 : index
    %128 = vector.load %arg13[%c2_126, %c0_127, %c0_128] : memref<4x32x56xf32, #tpu.memory_space<vmem>>, vector<1x32x56xf32>
    %129 = vector.shape_cast %128 : vector<1x32x56xf32> to vector<32x56xf32>
    %cst_129 = arith.constant dense<0.000000e+00> : vector<32x16xf32>
    %130 = tpu.matmul %129, %114, %cst_129 {dimension_numbers = #tpu.dot_dimension_numbers<[1], [0], [0], [1], [0, 0, 1, 1], [], []>} : vector<32x56xf32>, vector<56x16xf32>, vector<32x16xf32> -> vector<32x16xf32>
    %c2_130 = arith.constant 2 : index
    %c0_131 = arith.constant 0 : index
    %c0_132 = arith.constant 0 : index
    %131 = vector.load %arg14[%c2_130, %c0_131, %c0_132] : memref<4x16x8xf32, #tpu.memory_space<vmem>>, vector<1x16x8xf32>
    %132 = vector.shape_cast %131 : vector<1x16x8xf32> to vector<16x8xf32>
    %cst_133 = arith.constant dense<0.000000e+00> : vector<32x8xf32>
    %133 = tpu.matmul %130, %132, %cst_133 {dimension_numbers = #tpu.dot_dimension_numbers<[1], [0], [0], [1], [0, 0, 1, 1], [], []>} : vector<32x16xf32>, vector<16x8xf32>, vector<32x8xf32> -> vector<32x8xf32>
    %134 = arith.addf %127, %133 : vector<32x8xf32>
    %c3_134 = arith.constant 3 : index
    %c0_135 = arith.constant 0 : index
    %c0_136 = arith.constant 0 : index
    %135 = vector.load %arg13[%c3_134, %c0_135, %c0_136] : memref<4x32x56xf32, #tpu.memory_space<vmem>>, vector<1x32x56xf32>
    %136 = vector.shape_cast %135 : vector<1x32x56xf32> to vector<32x56xf32>
    %cst_137 = arith.constant dense<0.000000e+00> : vector<32x16xf32>
    %137 = tpu.matmul %136, %114, %cst_137 {dimension_numbers = #tpu.dot_dimension_numbers<[1], [0], [0], [1], [0, 0, 1, 1], [], []>} : vector<32x56xf32>, vector<56x16xf32>, vector<32x16xf32> -> vector<32x16xf32>
    %c3_138 = arith.constant 3 : index
    %c0_139 = arith.constant 0 : index
    %c0_140 = arith.constant 0 : index
    %138 = vector.load %arg14[%c3_138, %c0_139, %c0_140] : memref<4x16x8xf32, #tpu.memory_space<vmem>>, vector<1x16x8xf32>
    %139 = vector.shape_cast %138 : vector<1x16x8xf32> to vector<16x8xf32>
    %cst_141 = arith.constant dense<0.000000e+00> : vector<32x8xf32>
    %140 = tpu.matmul %137, %139, %cst_141 {dimension_numbers = #tpu.dot_dimension_numbers<[1], [0], [0], [1], [0, 0, 1, 1], [], []>} : vector<32x16xf32>, vector<16x8xf32>, vector<32x8xf32> -> vector<32x8xf32>
    %141 = arith.addf %134, %140 : vector<32x8xf32>
    %c0_142 = arith.constant 0 : index
    %c0_143 = arith.constant 0 : index
    %142 = vector.load %arg15[%c0_142, %c0_143] : memref<1x8xf32, #tpu.memory_space<vmem>>, vector<1x8xf32>
    %143 = vector.broadcast %142 : vector<1x8xf32> to vector<32x8xf32>
    %144 = arith.mulf %141, %143 : vector<32x8xf32>
    %c0_144 = arith.constant 0 : index
    %c0_145 = arith.constant 0 : index
    %145 = vector.load %arg16[%c0_144, %c0_145] : memref<1x8xf32, #tpu.memory_space<vmem>>, vector<1x8xf32>
    %146 = vector.broadcast %145 : vector<1x8xf32> to vector<32x8xf32>
    %147 = arith.addf %144, %146 : vector<32x8xf32>
    %cst_146 = arith.constant 0.000000e+00 : f32
    %148 = vector.broadcast %cst_146 : f32 to vector<32x8xf32>
    %149 = arith.maximumf %147, %148 : vector<32x8xf32>
    %150 = math.absf %147 : vector<32x8xf32>
    %cst_147 = arith.constant 0.000000e+00 : f32
    %151 = vector.broadcast %cst_147 : f32 to vector<32x8xf32>
    %152 = arith.subf %151, %150 : vector<32x8xf32>
    %153 = math.exp %152 : vector<32x8xf32>
    %154 = math.log1p %153 : vector<32x8xf32>
    %155 = arith.addf %149, %154 : vector<32x8xf32>
    %156 = math.tanh %155 : vector<32x8xf32>
    %157 = arith.mulf %147, %156 : vector<32x8xf32>
    %c0_148 = arith.constant 0 : index
    %c0_149 = arith.constant 0 : index
    %c0_150 = arith.constant 0 : index
    %158 = vector.load %arg17[%c0_148, %c0_149, %c0_150] : memref<4x32x32xf32, #tpu.memory_space<vmem>>, vector<1x32x32xf32>
    %159 = vector.shape_cast %158 : vector<1x32x32xf32> to vector<32x32xf32>
    %cst_151 = arith.constant dense<0.000000e+00> : vector<32x8xf32>
    %160 = tpu.matmul %159, %157, %cst_151 {dimension_numbers = #tpu.dot_dimension_numbers<[1], [0], [0], [1], [0, 0, 1, 1], [], []>} : vector<32x32xf32>, vector<32x8xf32>, vector<32x8xf32> -> vector<32x8xf32>
    %c0_152 = arith.constant 0 : index
    %c0_153 = arith.constant 0 : index
    %c0_154 = arith.constant 0 : index
    %161 = vector.load %arg18[%c0_152, %c0_153, %c0_154] : memref<4x8x4xf32, #tpu.memory_space<vmem>>, vector<1x8x4xf32>
    %162 = vector.shape_cast %161 : vector<1x8x4xf32> to vector<8x4xf32>
    %cst_155 = arith.constant dense<0.000000e+00> : vector<32x4xf32>
    %163 = tpu.matmul %160, %162, %cst_155 {dimension_numbers = #tpu.dot_dimension_numbers<[1], [0], [0], [1], [0, 0, 1, 1], [], []>} : vector<32x8xf32>, vector<8x4xf32>, vector<32x4xf32> -> vector<32x4xf32>
    %c1_156 = arith.constant 1 : index
    %c0_157 = arith.constant 0 : index
    %c0_158 = arith.constant 0 : index
    %164 = vector.load %arg17[%c1_156, %c0_157, %c0_158] : memref<4x32x32xf32, #tpu.memory_space<vmem>>, vector<1x32x32xf32>
    %165 = vector.shape_cast %164 : vector<1x32x32xf32> to vector<32x32xf32>
    %cst_159 = arith.constant dense<0.000000e+00> : vector<32x8xf32>
    %166 = tpu.matmul %165, %157, %cst_159 {dimension_numbers = #tpu.dot_dimension_numbers<[1], [0], [0], [1], [0, 0, 1, 1], [], []>} : vector<32x32xf32>, vector<32x8xf32>, vector<32x8xf32> -> vector<32x8xf32>
    %c1_160 = arith.constant 1 : index
    %c0_161 = arith.constant 0 : index
    %c0_162 = arith.constant 0 : index
    %167 = vector.load %arg18[%c1_160, %c0_161, %c0_162] : memref<4x8x4xf32, #tpu.memory_space<vmem>>, vector<1x8x4xf32>
    %168 = vector.shape_cast %167 : vector<1x8x4xf32> to vector<8x4xf32>
    %cst_163 = arith.constant dense<0.000000e+00> : vector<32x4xf32>
    %169 = tpu.matmul %166, %168, %cst_163 {dimension_numbers = #tpu.dot_dimension_numbers<[1], [0], [0], [1], [0, 0, 1, 1], [], []>} : vector<32x8xf32>, vector<8x4xf32>, vector<32x4xf32> -> vector<32x4xf32>
    %170 = arith.addf %163, %169 : vector<32x4xf32>
    %c2_164 = arith.constant 2 : index
    %c0_165 = arith.constant 0 : index
    %c0_166 = arith.constant 0 : index
    %171 = vector.load %arg17[%c2_164, %c0_165, %c0_166] : memref<4x32x32xf32, #tpu.memory_space<vmem>>, vector<1x32x32xf32>
    %172 = vector.shape_cast %171 : vector<1x32x32xf32> to vector<32x32xf32>
    %cst_167 = arith.constant dense<0.000000e+00> : vector<32x8xf32>
    %173 = tpu.matmul %172, %157, %cst_167 {dimension_numbers = #tpu.dot_dimension_numbers<[1], [0], [0], [1], [0, 0, 1, 1], [], []>} : vector<32x32xf32>, vector<32x8xf32>, vector<32x8xf32> -> vector<32x8xf32>
    %c2_168 = arith.constant 2 : index
    %c0_169 = arith.constant 0 : index
    %c0_170 = arith.constant 0 : index
    %174 = vector.load %arg18[%c2_168, %c0_169, %c0_170] : memref<4x8x4xf32, #tpu.memory_space<vmem>>, vector<1x8x4xf32>
    %175 = vector.shape_cast %174 : vector<1x8x4xf32> to vector<8x4xf32>
    %cst_171 = arith.constant dense<0.000000e+00> : vector<32x4xf32>
    %176 = tpu.matmul %173, %175, %cst_171 {dimension_numbers = #tpu.dot_dimension_numbers<[1], [0], [0], [1], [0, 0, 1, 1], [], []>} : vector<32x8xf32>, vector<8x4xf32>, vector<32x4xf32> -> vector<32x4xf32>
    %177 = arith.addf %170, %176 : vector<32x4xf32>
    %c3_172 = arith.constant 3 : index
    %c0_173 = arith.constant 0 : index
    %c0_174 = arith.constant 0 : index
    %178 = vector.load %arg17[%c3_172, %c0_173, %c0_174] : memref<4x32x32xf32, #tpu.memory_space<vmem>>, vector<1x32x32xf32>
    %179 = vector.shape_cast %178 : vector<1x32x32xf32> to vector<32x32xf32>
    %cst_175 = arith.constant dense<0.000000e+00> : vector<32x8xf32>
    %180 = tpu.matmul %179, %157, %cst_175 {dimension_numbers = #tpu.dot_dimension_numbers<[1], [0], [0], [1], [0, 0, 1, 1], [], []>} : vector<32x32xf32>, vector<32x8xf32>, vector<32x8xf32> -> vector<32x8xf32>
    %c3_176 = arith.constant 3 : index
    %c0_177 = arith.constant 0 : index
    %c0_178 = arith.constant 0 : index
    %181 = vector.load %arg18[%c3_176, %c0_177, %c0_178] : memref<4x8x4xf32, #tpu.memory_space<vmem>>, vector<1x8x4xf32>
    %182 = vector.shape_cast %181 : vector<1x8x4xf32> to vector<8x4xf32>
    %cst_179 = arith.constant dense<0.000000e+00> : vector<32x4xf32>
    %183 = tpu.matmul %180, %182, %cst_179 {dimension_numbers = #tpu.dot_dimension_numbers<[1], [0], [0], [1], [0, 0, 1, 1], [], []>} : vector<32x8xf32>, vector<8x4xf32>, vector<32x4xf32> -> vector<32x4xf32>
    %184 = arith.addf %177, %183 : vector<32x4xf32>
    %c0_180 = arith.constant 0 : index
    %c0_181 = arith.constant 0 : index
    %185 = vector.load %arg19[%c0_180, %c0_181] : memref<1x4xf32, #tpu.memory_space<vmem>>, vector<1x4xf32>
    %186 = vector.broadcast %185 : vector<1x4xf32> to vector<32x4xf32>
    %187 = arith.mulf %184, %186 : vector<32x4xf32>
    %c0_182 = arith.constant 0 : index
    %c0_183 = arith.constant 0 : index
    %188 = vector.load %arg20[%c0_182, %c0_183] : memref<1x4xf32, #tpu.memory_space<vmem>>, vector<1x4xf32>
    %189 = vector.broadcast %188 : vector<1x4xf32> to vector<32x4xf32>
    %190 = arith.addf %187, %189 : vector<32x4xf32>
    %cst_184 = arith.constant dense<0xFF800000> : vector<32xf32>
    %191 = vector.multi_reduction <maximumf>, %190, %cst_184 [1] : vector<32x4xf32> to vector<32xf32>
    %192 = vector.shape_cast %191 : vector<32xf32> to vector<32x1xf32>
    %193 = vector.broadcast %192 : vector<32x1xf32> to vector<32x4xf32>
    %194 = arith.subf %190, %193 : vector<32x4xf32>
    %195 = math.exp %194 : vector<32x4xf32>
    %cst_185 = arith.constant dense<0.000000e+00> : vector<32xf32>
    %196 = vector.multi_reduction <add>, %195, %cst_185 [1] : vector<32x4xf32> to vector<32xf32>
    %197 = vector.shape_cast %196 : vector<32xf32> to vector<32x1xf32>
    %198 = tpu.reciprocal %197 : vector<32x1xf32> -> vector<32x1xf32>
    %199 = vector.broadcast %198 : vector<32x1xf32> to vector<32x4xf32>
    %200 = arith.mulf %195, %199 : vector<32x4xf32>
    %c0_186 = arith.constant 0 : index
    %c0_187 = arith.constant 0 : index
    %201 = vector.load %arg21[%c0_186, %c0_187] : memref<32x4xf32, #tpu.memory_space<vmem>>, vector<32x4xf32>
    tpu.vector_store %arg21[%c0_186, %c0_187], %200 {strides = array<i32>} : memref<32x4xf32, #tpu.memory_space<vmem>>, vector<32x4xf32>,
    return
  }
}

</mosaic_0001>

<llo_original>
// kernel: forward.1
$region0: #{forward.1}
  #allocation0 [shape = 'u32[]', space=smem, size = 0x4, offset = 0x4, fixed_abs, tag = 'smem constant byte address 0x4 - core index']
  #allocation1 [shape = 'u32[72,128]{1,0:T(1,128)}', space=vmem, size = 0x9000, scoped, tag = 'internal scratch']
  %s0 = inlined_call_operand.vmem [shape: f32[512,3], index: 0, kind: input, shape index: {}]
  %s1 = inlined_call_operand.hbm [shape: f32[4,200,512], index: 1, kind: input, shape index: {}]
  %s2 = inlined_call_operand.vmem [shape: f32[4,3,64], index: 2, kind: input, shape index: {}]
  %s3 = inlined_call_operand.hbm [shape: f32[1,64], index: 3, kind: input, shape index: {}]
  %s4 = inlined_call_operand.hbm [shape: f32[1,64], index: 4, kind: input, shape index: {}]
  %s5 = inlined_call_operand.vmem [shape: f32[4,104,200], index: 5, kind: input, shape index: {}]
  %s6 = inlined_call_operand.vmem [shape: f32[4,64,32], index: 6, kind: input, shape index: {}]
  %s7 = inlined_call_operand.hbm [shape: f32[1,32], index: 7, kind: input, shape index: {}]
  %s8 = inlined_call_operand.hbm [shape: f32[1,32], index: 8, kind: input, shape index: {}]
  %s9 = inlined_call_operand.vmem [shape: f32[4,56,104], index: 9, kind: input, shape index: {}]
  %s10 = inlined_call_operand.vmem [shape: f32[4,32,16], index: 10, kind: input, shape index: {}]
  %s11 = inlined_call_operand.hbm [shape: f32[1,16], index: 11, kind: input, shape index: {}]
  %s12 = inlined_call_operand.hbm [shape: f32[1,16], index: 12, kind: input, shape index: {}]
  %s13 = inlined_call_operand.hbm [shape: f32[4,32,56], index: 13, kind: input, shape index: {}]
  %s14 = inlined_call_operand.vmem [shape: f32[4,16,8], index: 14, kind: input, shape index: {}]
  %s15 = inlined_call_operand.hbm [shape: f32[1,8], index: 15, kind: input, shape index: {}]
  %s16 = inlined_call_operand.hbm [shape: f32[1,8], index: 16, kind: input, shape index: {}]
  %s17 = inlined_call_operand.hbm [shape: f32[4,32,32], index: 17, kind: input, shape index: {}]
  %s18 = inlined_call_operand.vmem [shape: f32[4,8,4], index: 18, kind: input, shape index: {}]
  %s19 = inlined_call_operand.hbm [shape: f32[1,4], index: 19, kind: input, shape index: {}]
  %s20 = inlined_call_operand.hbm [shape: f32[1,4], index: 20, kind: input, shape index: {}]
  %s21 = inlined_call_operand.vmem [shape: f32[32,4], index: 21, kind: output, shape index: {}]
  %s22 = sld [smem:[#allocation0]]
  $region146: #{forward.1} parent=0
    _
  %s24 = ssub.s32 1, %s22
  %s25 = scalar_select 0, %s24, %s22
  $region1: #{forward.1} parent=0
    #allocation2 [shape = 'u8[1638400]{0}', space=vmem, size = 0x190000, scoped, tag = 'input window, operand 1, single buffered']
    #allocation3 [shape = 's32[1]{0}', space=sflag, size = 0x4, scoped, tag = 'scoped memory for forward.1']
    #allocation4 [shape = 'u8[512]{0}', space=vmem, size = 0x400, scoped, tag = 'input window, operand 3, single buffered']
    #allocation5 [shape = 's32[1]{0}', space=sflag, size = 0x4, scoped, tag = 'scoped memory for forward.1']
    #allocation6 [shape = 'u8[512]{0}', space=vmem, size = 0x400, scoped, tag = 'input window, operand 4, single buffered']
    #allocation7 [shape = 'u8[512]{0}', space=vmem, size = 0x400, scoped, tag = 'input window, operand 7, single buffered']
    #allocation8 [shape = 's32[1]{0}', space=sflag, size = 0x4, scoped, tag = 'scoped memory for forward.1']
    #allocation9 [shape = 'u8[512]{0}', space=vmem, size = 0x400, scoped, tag = 'input window, operand 8, single buffered']
    #allocation10 [shape = 'u8[512]{0}', space=vmem, size = 0x400, scoped, tag = 'input window, operand 11, single buffered']
    #allocation11 [shape = 's32[1]{0}', space=sflag, size = 0x4, scoped, tag = 'scoped memory for forward.1']
    #allocation12 [shape = 'u8[512]{0}', space=vmem, size = 0x400, scoped, tag = 'input window, operand 12, single buffered']
    #allocation13 [shape = 'u8[65536]{0}', space=vmem, size = 0x10000, scoped, tag = 'input window, operand 13, single buffered']
    #allocation14 [shape = 's32[1]{0}', space=sflag, size = 0x4, scoped, tag = 'scoped memory for forward.1']
    #allocation15 [shape = 'u8[512]{0}', space=vmem, size = 0x400, scoped, tag = 'input window, operand 15, single buffered']
    #allocation16 [shape = 'u8[512]{0}', space=vmem, size = 0x400, scoped, tag = 'input window, operand 16, single buffered']
    #allocation17 [shape = 's32[1]{0}', space=sflag, size = 0x4, scoped, tag = 'scoped memory for forward.1']
    #allocation18 [shape = 'u8[65536]{0}', space=vmem, size = 0x10000, scoped, tag = 'input window, operand 17, single buffered']
    #allocation19 [shape = 'u8[512]{0}', space=vmem, size = 0x400, scoped, tag = 'input window, operand 19, single buffered']
    #allocation20 [shape = 's32[1]{0}', space=sflag, size = 0x4, scoped, tag = 'scoped memory for forward.1']
    #allocation21 [shape = 'u8[512]{0}', space=vmem, size = 0x400, scoped, tag = 'input window, operand 20, single buffered']
    %26 = vsyncpa [#allocation3], 0
    %27 = vsyncpa [#allocation5], 0
    %28 = vsyncpa [#allocation8], 0
    %29 = vsyncpa [#allocation11], 0
    %30 = vsyncpa [#allocation14], 0
    %31 = vsyncpa [#allocation17], 0
    %32 = vsyncpa [#allocation20], 0
    // Predicated region
    $region2: #{forward.1} parent=1 // pred_check
      _
    $region3: #{forward.1} parent=1 // pred_check_branch
      %34 = sbr.rel (0) target = $region5
    $region4: #{forward.1} parent=1 // pred_region
      _
    $region5: #{forward.1} parent=1 // pred_fallthru
      _
    // Predicated region
    $region6: #{forward.1} parent=1 // pred_check
      _
    $region7: #{forward.1} parent=1 // pred_check_branch
      %36 = sbr.rel (0) target = $region9
    $region8: #{forward.1} parent=1 // pred_region
      %38 = vsyncadd [#allocation3], 0
      %s39 = sshll.u32 %s1, 4
      %s40 = int_to_ptr.hbm [resolvable:$true] %s39
      %s41 = sshll.u32 [#allocation2], 4
      %s42 = int_to_ptr.vmem [resolvable:$true] %s41
      %47 = dma.hbm_to_vmem [thread:$0]  %s40, 51200, %s42, [#allocation3], 512, 512, 32
    $region9: #{forward.1} parent=1 // pred_fallthru
      _
    // Predicated region
    $region10: #{forward.1} parent=1 // pred_check
      _
    $region11: #{forward.1} parent=1 // pred_check_branch
      %49 = sbr.rel (0) target = $region13
    $region12: #{forward.1} parent=1 // pred_region
      _
    $region13: #{forward.1} parent=1 // pred_fallthru
      _
    // Predicated region
    $region14: #{forward.1} parent=1 // pred_check
      _
    $region15: #{forward.1} parent=1 // pred_check_branch
      %51 = sbr.rel (0) target = $region17
    $region16: #{forward.1} parent=1 // pred_region
      %53 = vsyncadd [#allocation5], 0
      %s55 = sshll.u32 %s3, 4
      %s56 = int_to_ptr.hbm [resolvable:$true] %s55
      %s57 = sshll.u32 [#allocation4], 4
      %s58 = int_to_ptr.vmem [resolvable:$true] %s57
      %60 = dma.hbm_to_vmem [thread:$0]  %s56, 16, %s58, [#allocation5]
    $region17: #{forward.1} parent=1 // pred_fallthru
      _
    // Predicated region
    $region18: #{forward.1} parent=1 // pred_check
      _
    $region19: #{forward.1} parent=1 // pred_check_branch
      %62 = sbr.rel (0) target = $region21
    $region20: #{forward.1} parent=1 // pred_region
      %64 = vsyncadd [#allocation5], 0
      %s66 = sshll.u32 %s4, 4
      %s67 = int_to_ptr.hbm [resolvable:$true] %s66
      %s68 = sshll.u32 [#allocation6], 4
      %s69 = int_to_ptr.vmem [resolvable:$true] %s68
      %71 = dma.hbm_to_vmem [thread:$0]  %s67, 16, %s69, [#allocation5]
    $region21: #{forward.1} parent=1 // pred_fallthru
      _
    // Predicated region
    $region22: #{forward.1} parent=1 // pred_check
      _
    $region23: #{forward.1} parent=1 // pred_check_branch
      %73 = sbr.rel (0) target = $region25
    $region24: #{forward.1} parent=1 // pred_region
      _
    $region25: #{forward.1} parent=1 // pred_fallthru
      _
    // Predicated region
    $region26: #{forward.1} parent=1 // pred_check
      _
    $region27: #{forward.1} parent=1 // pred_check_branch
      %75 = sbr.rel (0) target = $region29
    $region28: #{forward.1} parent=1 // pred_region
      _
    $region29: #{forward.1} parent=1 // pred_fallthru
      _
    // Predicated region
    $region30: #{forward.1} parent=1 // pred_check
      _
    $region31: #{forward.1} parent=1 // pred_check_branch
      %77 = sbr.rel (0) target = $region33
    $region32: #{forward.1} parent=1 // pred_region
      %79 = vsyncadd [#allocation8], 0
      %s81 = sshll.u32 %s7, 4
      %s82 = int_to_ptr.hbm [resolvable:$true] %s81
      %s83 = sshll.u32 [#allocation7], 4
      %s84 = int_to_ptr.vmem [resolvable:$true] %s83
      %86 = dma.hbm_to_vmem [thread:$0]  %s82, 16, %s84, [#allocation8]
    $region33: #{forward.1} parent=1 // pred_fallthru
      _
    // Predicated region
    $region34: #{forward.1} parent=1 // pred_check
      _
    $region35: #{forward.1} parent=1 // pred_check_branch
      %88 = sbr.rel (0) target = $region37
    $region36: #{forward.1} parent=1 // pred_region
      %90 = vsyncadd [#allocation8], 0
      %s92 = sshll.u32 %s8, 4
      %s93 = int_to_ptr.hbm [resolvable:$true] %s92
      %s94 = sshll.u32 [#allocation9], 4
      %s95 = int_to_ptr.vmem [resolvable:$true] %s94
      %97 = dma.hbm_to_vmem [thread:$0]  %s93, 16, %s95, [#allocation8]
    $region37: #{forward.1} parent=1 // pred_fallthru
      _
    // Predicated region
    $region38: #{forward.1} parent=1 // pred_check
      _
    $region39: #{forward.1} parent=1 // pred_check_branch
      %99 = sbr.rel (0) target = $region41
    $region40: #{forward.1} parent=1 // pred_region
      _
    $region41: #{forward.1} parent=1 // pred_fallthru
      _
    // Predicated region
    $region42: #{forward.1} parent=1 // pred_check
      _
    $region43: #{forward.1} parent=1 // pred_check_branch
      %101 = sbr.rel (0) target = $region45
    $region44: #{forward.1} parent=1 // pred_region
      _
    $region45: #{forward.1} parent=1 // pred_fallthru
      _
    // Predicated region
    $region46: #{forward.1} parent=1 // pred_check
      _
    $region47: #{forward.1} parent=1 // pred_check_branch
      %103 = sbr.rel (0) target = $region49
    $region48: #{forward.1} parent=1 // pred_region
      %105 = vsyncadd [#allocation11], 0
      %s107 = sshll.u32 %s11, 4
      %s108 = int_to_ptr.hbm [resolvable:$true] %s107
      %s109 = sshll.u32 [#allocation10], 4
      %s110 = int_to_ptr.vmem [resolvable:$true] %s109
      %112 = dma.hbm_to_vmem [thread:$0]  %s108, 16, %s110, [#allocation11]
    $region49: #{forward.1} parent=1 // pred_fallthru
      _
    // Predicated region
    $region50: #{forward.1} parent=1 // pred_check
      _
    $region51: #{forward.1} parent=1 // pred_check_branch
      %114 = sbr.rel (0) target = $region53
    $region52: #{forward.1} parent=1 // pred_region
      %116 = vsyncadd [#allocation11], 0
      %s118 = sshll.u32 %s12, 4
      %s119 = int_to_ptr.hbm [resolvable:$true] %s118
      %s120 = sshll.u32 [#allocation12], 4
      %s121 = int_to_ptr.vmem [resolvable:$true] %s120
      %123 = dma.hbm_to_vmem [thread:$0]  %s119, 16, %s121, [#allocation11]
    $region53: #{forward.1} parent=1 // pred_fallthru
      _
    // Predicated region
    $region54: #{forward.1} parent=1 // pred_check
      _
    $region55: #{forward.1} parent=1 // pred_check_branch
      %125 = sbr.rel (0) target = $region57
    $region56: #{forward.1} parent=1 // pred_region
      %127 = vsyncadd [#allocation14], 0
      %s128 = sshll.u32 %s13, 4
      %s129 = int_to_ptr.hbm [resolvable:$true] %s128
      %s130 = sshll.u32 [#allocation13], 4
      %s131 = int_to_ptr.vmem [resolvable:$true] %s130
      %136 = dma.hbm_to_vmem [thread:$0]  %s129, 2048, %s131, [#allocation14], 128, 128, 8
    $region57: #{forward.1} parent=1 // pred_fallthru
      _
    // Predicated region
    $region58: #{forward.1} parent=1 // pred_check
      _
    $region59: #{forward.1} parent=1 // pred_check_branch
      %138 = sbr.rel (0) target = $region61
    $region60: #{forward.1} parent=1 // pred_region
      _
    $region61: #{forward.1} parent=1 // pred_fallthru
      _
    // Predicated region
    $region62: #{forward.1} parent=1 // pred_check
      _
    $region63: #{forward.1} parent=1 // pred_check_branch
      %140 = sbr.rel (0) target = $region65
    $region64: #{forward.1} parent=1 // pred_region
      %142 = vsyncadd [#allocation14], 0
      %s144 = sshll.u32 %s15, 4
      %s145 = int_to_ptr.hbm [resolvable:$true] %s144
      %s146 = sshll.u32 [#allocation15], 4
      %s147 = int_to_ptr.vmem [resolvable:$true] %s146
      %149 = dma.hbm_to_vmem [thread:$0]  %s145, 16, %s147, [#allocation14]
    $region65: #{forward.1} parent=1 // pred_fallthru
      _
    // Predicated region
    $region66: #{forward.1} parent=1 // pred_check
      _
    $region67: #{forward.1} parent=1 // pred_check_branch
      %151 = sbr.rel (0) target = $region69
    $region68: #{forward.1} parent=1 // pred_region
      %153 = vsyncadd [#allocation17], 0
      %s155 = sshll.u32 %s16, 4
      %s156 = int_to_ptr.hbm [resolvable:$true] %s155
      %s157 = sshll.u32 [#allocation16], 4
      %s158 = int_to_ptr.vmem [resolvable:$true] %s157
      %160 = dma.hbm_to_vmem [thread:$0]  %s156, 16, %s158, [#allocation17]
    $region69: #{forward.1} parent=1 // pred_fallthru
      _
    // Predicated region
    $region70: #{forward.1} parent=1 // pred_check
      _
    $region71: #{forward.1} parent=1 // pred_check_branch
      %162 = sbr.rel (0) target = $region73
    $region72: #{forward.1} parent=1 // pred_region
      %164 = vsyncadd [#allocation17], 0
      %s165 = sshll.u32 %s17, 4
      %s166 = int_to_ptr.hbm [resolvable:$true] %s165
      %s167 = sshll.u32 [#allocation18], 4
      %s168 = int_to_ptr.vmem [resolvable:$true] %s167
      %173 = dma.hbm_to_vmem [thread:$0]  %s166, 2048, %s168, [#allocation17], 128, 128, 8
    $region73: #{forward.1} parent=1 // pred_fallthru
      _
    // Predicated region
    $region74: #{forward.1} parent=1 // pred_check
      _
    $region75: #{forward.1} parent=1 // pred_check_branch
      %175 = sbr.rel (0) target = $region77
    $region76: #{forward.1} parent=1 // pred_region
      _
    $region77: #{forward.1} parent=1 // pred_fallthru
      _
    // Predicated region
    $region78: #{forward.1} parent=1 // pred_check
      _
    $region79: #{forward.1} parent=1 // pred_check_branch
      %177 = sbr.rel (0) target = $region81
    $region80: #{forward.1} parent=1 // pred_region
      %179 = vsyncadd [#allocation20], 0
      %s181 = sshll.u32 %s19, 4
      %s182 = int_to_ptr.hbm [resolvable:$true] %s181
      %s183 = sshll.u32 [#allocation19], 4
      %s184 = int_to_ptr.vmem [resolvable:$true] %s183
      %186 = dma.hbm_to_vmem [thread:$0]  %s182, 16, %s184, [#allocation20]
    $region81: #{forward.1} parent=1 // pred_fallthru
      _
    // Predicated region
    $region82: #{forward.1} parent=1 // pred_check
      _
    $region83: #{forward.1} parent=1 // pred_check_branch
      %188 = sbr.rel (0) target = $region85
    $region84: #{forward.1} parent=1 // pred_region
      %190 = vsyncadd [#allocation20], 0
      %s192 = sshll.u32 %s20, 4
      %s193 = int_to_ptr.hbm [resolvable:$true] %s192
      %s194 = sshll.u32 [#allocation21], 4
      %s195 = int_to_ptr.vmem [resolvable:$true] %s194
      %197 = dma.hbm_to_vmem [thread:$0]  %s193, 16, %s195, [#allocation20]
    $region85: #{forward.1} parent=1 // pred_fallthru
      _
    // Predicated region
    $region86: #{forward.1} parent=1 // pred_check
      _
    $region87: #{forward.1} parent=1 // pred_check_branch
      %199 = sbr.rel (0) target = $region89
    $region88: #{forward.1} parent=1 // pred_region
      %201 = dma.done [#allocation3], 51200
    $region89: #{forward.1} parent=1 // pred_fallthru
      _
    // Predicated region
    $region90: #{forward.1} parent=1 // pred_check
      _
    $region91: #{forward.1} parent=1 // pred_check_branch
      %203 = sbr.rel (0) target = $region93
    $region92: #{forward.1} parent=1 // pred_region
      %205 = dma.done [#allocation5], 16
    $region93: #{forward.1} parent=1 // pred_fallthru
      _
    // Predicated region
    $region94: #{forward.1} parent=1 // pred_check
      _
    $region95: #{forward.1} parent=1 // pred_check_branch
      %207 = sbr.rel (0) target = $region97
    $region96: #{forward.1} parent=1 // pred_region
      %209 = dma.done [#allocation5], 16
    $region97: #{forward.1} parent=1 // pred_fallthru
      _
    // Predicated region
    $region98: #{forward.1} parent=1 // pred_check
      _
    $region99: #{forward.1} parent=1 // pred_check_branch
      %211 = sbr.rel (0) target = $region101
    $region100: #{forward.1} parent=1 // pred_region
      %213 = dma.done [#allocation8], 16
    $region101: #{forward.1} parent=1 // pred_fallthru
      _
    // Predicated region
    $region102: #{forward.1} parent=1 // pred_check
      _
    $region103: #{forward.1} parent=1 // pred_check_branch
      %215 = sbr.rel (0) target = $region105
    $region104: #{forward.1} parent=1 // pred_region
      %217 = dma.done [#allocation8], 16
    $region105: #{forward.1} parent=1 // pred_fallthru
      _
    // Predicated region
    $region106: #{forward.1} parent=1 // pred_check
      _
    $region107: #{forward.1} parent=1 // pred_check_branch
      %219 = sbr.rel (0) target = $region109
    $region108: #{forward.1} parent=1 // pred_region
      %221 = dma.done [#allocation11], 16
    $region109: #{forward.1} parent=1 // pred_fallthru
      _
    // Predicated region
    $region110: #{forward.1} parent=1 // pred_check
      _
    $region111: #{forward.1} parent=1 // pred_check_branch
      %223 = sbr.rel (0) target = $region113
    $region112: #{forward.1} parent=1 // pred_region
      %225 = dma.done [#allocation11], 16
    $region113: #{forward.1} parent=1 // pred_fallthru
      _
    // Predicated region
    $region114: #{forward.1} parent=1 // pred_check
      _
    $region115: #{forward.1} parent=1 // pred_check_branch
      %227 = sbr.rel (0) target = $region117
    $region116: #{forward.1} parent=1 // pred_region
      %229 = dma.done [#allocation14], 2048
    $region117: #{forward.1} parent=1 // pred_fallthru
      _
    // Predicated region
    $region118: #{forward.1} parent=1 // pred_check
      _
    $region119: #{forward.1} parent=1 // pred_check_branch
      %231 = sbr.rel (0) target = $region121
    $region120: #{forward.1} parent=1 // pred_region
      %233 = dma.done [#allocation14], 16
    $region121: #{forward.1} parent=1 // pred_fallthru
      _
    // Predicated region
    $region122: #{forward.1} parent=1 // pred_check
      _
    $region123: #{forward.1} parent=1 // pred_check_branch
      %235 = sbr.rel (0) target = $region125
    $region124: #{forward.1} parent=1 // pred_region
      %237 = dma.done [#allocation17], 16
    $region125: #{forward.1} parent=1 // pred_fallthru
      _
    // Predicated region
    $region126: #{forward.1} parent=1 // pred_check
      _
    $region127: #{forward.1} parent=1 // pred_check_branch
      %239 = sbr.rel (0) target = $region129
    $region128: #{forward.1} parent=1 // pred_region
      %241 = dma.done [#allocation17], 2048
    $region129: #{forward.1} parent=1 // pred_fallthru
      _
    // Predicated region
    $region130: #{forward.1} parent=1 // pred_check
      _
    $region131: #{forward.1} parent=1 // pred_check_branch
      %243 = sbr.rel (0) target = $region133
    $region132: #{forward.1} parent=1 // pred_region
      %245 = dma.done [#allocation20], 16
    $region133: #{forward.1} parent=1 // pred_fallthru
      _
    // Predicated region
    $region134: #{forward.1} parent=1 // pred_check
      _
    $region135: #{forward.1} parent=1 // pred_check_branch
      %247 = sbr.rel (0) target = $region137
    $region136: #{forward.1} parent=1 // pred_region
      %249 = dma.done [#allocation20], 16
    $region137: #{forward.1} parent=1 // pred_fallthru
      _
    %v250 = vld [vmem:[%s0] sm:$0xff]
    %v251 = vld [vmem:[%s0 + $0x8] sm:$0xff]
    %v252 = vld [vmem:[%s0 + $0x10] sm:$0xff]
    %v253 = vld [vmem:[%s0 + $0x18] sm:$0xff]
    %v254 = vld [vmem:[%s0 + $0x20] sm:$0xff]
    %v255 = vld [vmem:[%s0 + $0x28] sm:$0xff]
    %v256 = vld [vmem:[%s0 + $0x30] sm:$0xff]
    %v257 = vld [vmem:[%s0 + $0x38] sm:$0xff]
    %v258 = vld [vmem:[%s0 + $0x40] sm:$0xff]
    %v259 = vld [vmem:[%s0 + $0x48] sm:$0xff]
    %v260 = vld [vmem:[%s0 + $0x50] sm:$0xff]
    %v261 = vld [vmem:[%s0 + $0x58] sm:$0xff]
    %v262 = vld [vmem:[%s0 + $0x60] sm:$0xff]
    %v263 = vld [vmem:[%s0 + $0x68] sm:$0xff]
    %v264 = vld [vmem:[%s0 + $0x70] sm:$0xff]
    %v265 = vld [vmem:[%s0 + $0x78] sm:$0xff]
    %v266 = vld [vmem:[%s0 + $0x80] sm:$0xff]
    %v267 = vld [vmem:[%s0 + $0x88] sm:$0xff]
    %v268 = vld [vmem:[%s0 + $0x90] sm:$0xff]
    %v269 = vld [vmem:[%s0 + $0x98] sm:$0xff]
    %v270 = vld [vmem:[%s0 + $0xa0] sm:$0xff]
    %v271 = vld [vmem:[%s0 + $0xa8] sm:$0xff]
    %v272 = vld [vmem:[%s0 + $0xb0] sm:$0xff]
    %v273 = vld [vmem:[%s0 + $0xb8] sm:$0xff]
    %v274 = vld [vmem:[%s0 + $0xc0] sm:$0xff]
    %v275 = vld [vmem:[%s0 + $0xc8] sm:$0xff]
    %v276 = vld [vmem:[%s0 + $0xd0] sm:$0xff]
    %v277 = vld [vmem:[%s0 + $0xd8] sm:$0xff]
    %v278 = vld [vmem:[%s0 + $0xe0] sm:$0xff]
    %v279 = vld [vmem:[%s0 + $0xe8] sm:$0xff]
    %v280 = vld [vmem:[%s0 + $0xf0] sm:$0xff]
    %v281 = vld [vmem:[%s0 + $0xf8] sm:$0xff]
    %v282 = vld [vmem:[%s0 + $0x100] sm:$0xff]
    %v283 = vld [vmem:[%s0 + $0x108] sm:$0xff]
    %v284 = vld [vmem:[%s0 + $0x110] sm:$0xff]
    %v285 = vld [vmem:[%s0 + $0x118] sm:$0xff]
    %v286 = vld [vmem:[%s0 + $0x120] sm:$0xff]
    %v287 = vld [vmem:[%s0 + $0x128] sm:$0xff]
    %v288 = vld [vmem:[%s0 + $0x130] sm:$0xff]
    %v289 = vld [vmem:[%s0 + $0x138] sm:$0xff]
    %v290 = vld [vmem:[%s0 + $0x140] sm:$0xff]
    %v291 = vld [vmem:[%s0 + $0x148] sm:$0xff]
    %v292 = vld [vmem:[%s0 + $0x150] sm:$0xff]
    %v293 = vld [vmem:[%s0 + $0x158] sm:$0xff]
    %v294 = vld [vmem:[%s0 + $0x160] sm:$0xff]
    %v295 = vld [vmem:[%s0 + $0x168] sm:$0xff]
    %v296 = vld [vmem:[%s0 + $0x170] sm:$0xff]
    %v297 = vld [vmem:[%s0 + $0x178] sm:$0xff]
    %v298 = vld [vmem:[%s0 + $0x180] sm:$0xff]
    %v299 = vld [vmem:[%s0 + $0x188] sm:$0xff]
    %v300 = vld [vmem:[%s0 + $0x190] sm:$0xff]
    %v301 = vld [vmem:[%s0 + $0x198] sm:$0xff]
    %v302 = vld [vmem:[%s0 + $0x1a0] sm:$0xff]
    %v303 = vld [vmem:[%s0 + $0x1a8] sm:$0xff]
    %v304 = vld [vmem:[%s0 + $0x1b0] sm:$0xff]
    %v305 = vld [vmem:[%s0 + $0x1b8] sm:$0xff]
    %v306 = vld [vmem:[%s0 + $0x1c0] sm:$0xff]
    %v307 = vld [vmem:[%s0 + $0x1c8] sm:$0xff]
    %v308 = vld [vmem:[%s0 + $0x1d0] sm:$0xff]
    %v309 = vld [vmem:[%s0 + $0x1d8] sm:$0xff]
    %v310 = vld [vmem:[%s0 + $0x1e0] sm:$0xff]
    %v311 = vld [vmem:[%s0 + $0x1e8] sm:$0xff]
    %v312 = vld [vmem:[%s0 + $0x1f0] sm:$0xff]
    %v313 = vld [vmem:[%s0 + $0x1f8] sm:$0xff]
    %v314 = vld [vmem:[#allocation2] sm:$0xff]
    %v315 = vld [vmem:[#allocation2 + $0x8] sm:$0xff]
    %v316 = vld [vmem:[#allocation2 + $0x10] sm:$0xff]
    %v317 = vld [vmem:[#allocation2 + $0x18] sm:$0xff]
    %v318 = vld [vmem:[#allocation2 + $0x20] sm:$0xff]
    %v319 = vld [vmem:[#allocation2 + $0x28] sm:$0xff]
    %v320 = vld [vmem:[#allocation2 + $0x30] sm:$0xff]
    %v321 = vld [vmem:[#allocation2 + $0x38] sm:$0xff]
    %v322 = vld [vmem:[#allocation2 + $0x40] sm:$0xff]
    %v323 = vld [vmem:[#allocation2 + $0x48] sm:$0xff]
    %v324 = vld [vmem:[#allocation2 + $0x50] sm:$0xff]
    %v325 = vld [vmem:[#allocation2 + $0x58] sm:$0xff]
    %v326 = vld [vmem:[#allocation2 + $0x60] sm:$0xff]
    %v327 = vld [vmem:[#allocation2 + $0x68] sm:$0xff]
    %v328 = vld [vmem:[#allocation2 + $0x70] sm:$0xff]
    %v329 = vld [vmem:[#allocation2 + $0x78] sm:$0xff]
    %v330 = vld [vmem:[#allocation2 + $0x80] sm:$0xff]
    %v331 = vld [vmem:[#allocation2 + $0x88] sm:$0xff]
    %v332 = vld [vmem:[#allocation2 + $0x90] sm:$0xff]
    %v333 = vld [vmem:[#allocation2 + $0x98] sm:$0xff]
    %v334 = vld [vmem:[#allocation2 + $0xa0] sm:$0xff]
    %v335 = vld [vmem:[#allocation2 + $0xa8] sm:$0xff]
    %v336 = vld [vmem:[#allocation2 + $0xb0] sm:$0xff]
    %v337 = vld [vmem:[#allocation2 + $0xb8] sm:$0xff]
    %v338 = vld [vmem:[#allocation2 + $0xc0] sm:$0xff]
    %v339 = vld [vmem:[#allocation2 + $0xc8] sm:$0xff]
    %v340 = vld [vmem:[#allocation2 + $0xd0] sm:$0xff]
    %v341 = vld [vmem:[#allocation2 + $0xd8] sm:$0xff]
    %v342 = vld [vmem:[#allocation2 + $0xe0] sm:$0xff]
    %v343 = vld [vmem:[#allocation2 + $0xe8] sm:$0xff]
    %v344 = vld [vmem:[#allocation2 + $0xf0] sm:$0xff]
    %v345 = vld [vmem:[#allocation2 + $0xf8] sm:$0xff]
    %v346 = vld [vmem:[#allocation2 + $0x100] sm:$0xff]
    %v347 = vld [vmem:[#allocation2 + $0x108] sm:$0xff]
    %v348 = vld [vmem:[#allocation2 + $0x110] sm:$0xff]
    %v349 = vld [vmem:[#allocation2 + $0x118] sm:$0xff]
    %v350 = vld [vmem:[#allocation2 + $0x120] sm:$0xff]
    %v351 = vld [vmem:[#allocation2 + $0x128] sm:$0xff]
    %v352 = vld [vmem:[#allocation2 + $0x130] sm:$0xff]
    %v353 = vld [vmem:[#allocation2 + $0x138] sm:$0xff]
    %v354 = vld [vmem:[#allocation2 + $0x140] sm:$0xff]
    %v355 = vld [vmem:[#allocation2 + $0x148] sm:$0xff]
    %v356 = vld [vmem:[#allocation2 + $0x150] sm:$0xff]
    %v357 = vld [vmem:[#allocation2 + $0x158] sm:$0xff]
    %v358 = vld [vmem:[#allocation2 + $0x160] sm:$0xff]
    %v359 = vld [vmem:[#allocation2 + $0x168] sm:$0xff]
    %v360 = vld [vmem:[#allocation2 + $0x170] sm:$0xff]
    %v361 = vld [vmem:[#allocation2 + $0x178] sm:$0xff]
    %v362 = vld [vmem:[#allocation2 + $0x180] sm:$0xff]
    %v363 = vld [vmem:[#allocation2 + $0x188] sm:$0xff]
    %v364 = vld [vmem:[#allocation2 + $0x190] sm:$0xff]
    %v365 = vld [vmem:[#allocation2 + $0x198] sm:$0xff]
    %v366 = vld [vmem:[#allocation2 + $0x1a0] sm:$0xff]
    %v367 = vld [vmem:[#allocation2 + $0x1a8] sm:$0xff]
    %v368 = vld [vmem:[#allocation2 + $0x1b0] sm:$0xff]
    %v369 = vld [vmem:[#allocation2 + $0x1b8] sm:$0xff]
    %v370 = vld [vmem:[#allocation2 + $0x1c0] sm:$0xff]
    %v371 = vld [vmem:[#allocation2 + $0x1c8] sm:$0xff]
    %v372 = vld [vmem:[#allocation2 + $0x1d0] sm:$0xff]
    %v373 = vld [vmem:[#allocation2 + $0x1d8] sm:$0xff]
    %v374 = vld [vmem:[#allocation2 + $0x1e0] sm:$0xff]
    %v375 = vld [vmem:[#allocation2 + $0x1e8] sm:$0xff]
    %v376 = vld [vmem:[#allocation2 + $0x1f0] sm:$0xff]
    %v377 = vld [vmem:[#allocation2 + $0x1f8] sm:$0xff]
    %v378 = vld [vmem:[#allocation2 + $0x200] sm:$0xff]
    %v379 = vld [vmem:[#allocation2 + $0x208] sm:$0xff]
    %v380 = vld [vmem:[#allocation2 + $0x210] sm:$0xff]
    %v381 = vld [vmem:[#allocation2 + $0x218] sm:$0xff]
    %v382 = vld [vmem:[#allocation2 + $0x220] sm:$0xff]
    %v383 = vld [vmem:[#allocation2 + $0x228] sm:$0xff]
    %v384 = vld [vmem:[#allocation2 + $0x230] sm:$0xff]
    %v385 = vld [vmem:[#allocation2 + $0x238] sm:$0xff]
    %v386 = vld [vmem:[#allocation2 + $0x240] sm:$0xff]
    %v387 = vld [vmem:[#allocation2 + $0x248] sm:$0xff]
    %v388 = vld [vmem:[#allocation2 + $0x250] sm:$0xff]
    %v389 = vld [vmem:[#allocation2 + $0x258] sm:$0xff]
    %v390 = vld [vmem:[#allocation2 + $0x260] sm:$0xff]
    %v391 = vld [vmem:[#allocation2 + $0x268] sm:$0xff]
    %v392 = vld [vmem:[#allocation2 + $0x270] sm:$0xff]
    %v393 = vld [vmem:[#allocation2 + $0x278] sm:$0xff]
    %v394 = vld [vmem:[#allocation2 + $0x280] sm:$0xff]
    %v395 = vld [vmem:[#allocation2 + $0x288] sm:$0xff]
    %v396 = vld [vmem:[#allocation2 + $0x290] sm:$0xff]
    %v397 = vld [vmem:[#allocation2 + $0x298] sm:$0xff]
    %v398 = vld [vmem:[#allocation2 + $0x2a0] sm:$0xff]
    %v399 = vld [vmem:[#allocation2 + $0x2a8] sm:$0xff]
    %v400 = vld [vmem:[#allocation2 + $0x2b0] sm:$0xff]
    %v401 = vld [vmem:[#allocation2 + $0x2b8] sm:$0xff]
    %v402 = vld [vmem:[#allocation2 + $0x2c0] sm:$0xff]
    %v403 = vld [vmem:[#allocation2 + $0x2c8] sm:$0xff]
    %v404 = vld [vmem:[#allocation2 + $0x2d0] sm:$0xff]
    %v405 = vld [vmem:[#allocation2 + $0x2d8] sm:$0xff]
    %v406 = vld [vmem:[#allocation2 + $0x2e0] sm:$0xff]
    %v407 = vld [vmem:[#allocation2 + $0x2e8] sm:$0xff]
    %v408 = vld [vmem:[#allocation2 + $0x2f0] sm:$0xff]
    %v409 = vld [vmem:[#allocation2 + $0x2f8] sm:$0xff]
    %v410 = vld [vmem:[#allocation2 + $0x300] sm:$0xff]
    %v411 = vld [vmem:[#allocation2 + $0x308] sm:$0xff]
    %v412 = vld [vmem:[#allocation2 + $0x310] sm:$0xff]
    %v413 = vld [vmem:[#allocation2 + $0x318] sm:$0xff]
    %414 = vmatpush.msra.mxu0 %v265
    %415 = vmatpush.msra.mxu0 %v264
    %416 = vmatpush.msra.mxu0 %v263
    %417 = vmatpush.msra.mxu0 %v262
    %418 = vmatpush.msra.mxu0 %v261
    %419 = vmatpush.msra.mxu0 %v260
    %420 = vmatpush.msra.mxu0 %v259
    %421 = vmatpush.msra.mxu0 %v258
    %422 = vmatpush.msra.mxu0 %v257
    %423 = vmatpush.msra.mxu0 %v256
    %424 = vmatpush.msra.mxu0 %v255
    %425 = vmatpush.msra.mxu0 %v254
    %426 = vmatpush.msra.mxu0 %v253
    %427 = vmatpush.msra.mxu0 %v252
    %428 = vmatpush.msra.mxu0 %v251
    %429 = vmatpush.msra.mxu0 %v250
    %430 = vmatmul.f32.gmra.mxu0 %v314
    %v431 = vpop.f32.mrf.mxu0
    %v432 = vadd.f32 0.0, %v431
    %433 = vmatmul.f32.gmra.mxu0 %v318
    %v434 = vpop.f32.mrf.mxu0
    %v435 = vadd.f32 0.0, %v434
    %436 = vmatmul.f32.gmra.mxu0 %v322
    %v437 = vpop.f32.mrf.mxu0
    %v438 = vadd.f32 0.0, %v437
    %439 = vmatmul.f32.gmra.mxu0 %v326
    %v440 = vpop.f32.mrf.mxu0
    %v441 = vadd.f32 0.0, %v440
    %442 = vmatmul.f32.gmra.mxu0 %v330
    %v443 = vpop.f32.mrf.mxu0
    %v444 = vadd.f32 0.0, %v443
    %445 = vmatmul.f32.gmra.mxu0 %v334
    %v446 = vpop.f32.mrf.mxu0
    %v447 = vadd.f32 0.0, %v446
    %448 = vmatmul.f32.gmra.mxu0 %v338
    %v449 = vpop.f32.mrf.mxu0
    %v450 = vadd.f32 0.0, %v449
    %451 = vmatmul.f32.gmra.mxu0 %v342
    %v452 = vpop.f32.mrf.mxu0
    %v453 = vadd.f32 0.0, %v452
    %454 = vmatmul.f32.gmra.mxu0 %v346
    %v455 = vpop.f32.mrf.mxu0
    %v456 = vadd.f32 0.0, %v455
    %457 = vmatmul.f32.gmra.mxu0 %v350
    %v458 = vpop.f32.mrf.mxu0
    %v459 = vadd.f32 0.0, %v458
    %460 = vmatmul.f32.gmra.mxu0 %v354
    %v461 = vpop.f32.mrf.mxu0
    %v462 = vadd.f32 0.0, %v461
    %463 = vmatmul.f32.gmra.mxu0 %v358
    %v464 = vpop.f32.mrf.mxu0
    %v465 = vadd.f32 0.0, %v464
    %466 = vmatmul.f32.gmra.mxu0 %v362
    %v467 = vpop.f32.mrf.mxu0
    %v468 = vadd.f32 0.0, %v467
    %469 = vmatmul.f32.gmra.mxu0 %v366
    %v470 = vpop.f32.mrf.mxu0
    %v471 = vadd.f32 0.0, %v470
    %472 = vmatmul.f32.gmra.mxu0 %v370
    %v473 = vpop.f32.mrf.mxu0
    %v474 = vadd.f32 0.0, %v473
    %475 = vmatmul.f32.gmra.mxu0 %v374
    %v476 = vpop.f32.mrf.mxu0
    %v477 = vadd.f32 0.0, %v476
    %478 = vmatmul.f32.gmra.mxu0 %v378
    %v479 = vpop.f32.mrf.mxu0
    %v480 = vadd.f32 0.0, %v479
    %481 = vmatmul.f32.gmra.mxu0 %v382
    %v482 = vpop.f32.mrf.mxu0
    %v483 = vadd.f32 0.0, %v482
    %484 = vmatmul.f32.gmra.mxu0 %v386
    %v485 = vpop.f32.mrf.mxu0
    %v486 = vadd.f32 0.0, %v485
    %487 = vmatmul.f32.gmra.mxu0 %v390
    %v488 = vpop.f32.mrf.mxu0
    %v489 = vadd.f32 0.0, %v488
    %490 = vmatmul.f32.gmra.mxu0 %v394
    %v491 = vpop.f32.mrf.mxu0
    %v492 = vadd.f32 0.0, %v491
    %493 = vmatmul.f32.gmra.mxu0 %v398
    %v494 = vpop.f32.mrf.mxu0
    %v495 = vadd.f32 0.0, %v494
    %496 = vmatmul.f32.gmra.mxu0 %v402
    %v497 = vpop.f32.mrf.mxu0
    %v498 = vadd.f32 0.0, %v497
    %499 = vmatmul.f32.gmra.mxu0 %v406
    %v500 = vpop.f32.mrf.mxu0
    %v501 = vadd.f32 0.0, %v500
    %502 = vmatmul.f32.gmra.mxu0 %v410
    %v503 = vpop.f32.mrf.mxu0
    %v504 = vadd.f32 0.0, %v503
    %505 = vdwg.mxu0
    %506 = vmatpush.msra.mxu0 %v281
    %507 = vmatpush.msra.mxu0 %v280
    %508 = vmatpush.msra.mxu0 %v279
    %509 = vmatpush.msra.mxu0 %v278
    %510 = vmatpush.msra.mxu0 %v277
    %511 = vmatpush.msra.mxu0 %v276
    %512 = vmatpush.msra.mxu0 %v275
    %513 = vmatpush.msra.mxu0 %v274
    %514 = vmatpush.msra.mxu0 %v273
    %515 = vmatpush.msra.mxu0 %v272
    %516 = vmatpush.msra.mxu0 %v271
    %517 = vmatpush.msra.mxu0 %v270
    %518 = vmatpush.msra.mxu0 %v269
    %519 = vmatpush.msra.mxu0 %v268
    %520 = vmatpush.msra.mxu0 %v267
    %521 = vmatpush.msra.mxu0 %v266
    %522 = vmatmul.f32.gmra.mxu0 %v315
    %v523 = vpop.f32.mrf.mxu0
    %v524 = vadd.f32 %v432, %v523
    %525 = vmatmul.f32.gmra.mxu0 %v319
    %v526 = vpop.f32.mrf.mxu0
    %v527 = vadd.f32 %v435, %v526
    %528 = vmatmul.f32.gmra.mxu0 %v323
    %v529 = vpop.f32.mrf.mxu0
    %v530 = vadd.f32 %v438, %v529
    %531 = vmatmul.f32.gmra.mxu0 %v327
    %v532 = vpop.f32.mrf.mxu0
    %v533 = vadd.f32 %v441, %v532
    %534 = vmatmul.f32.gmra.mxu0 %v331
    %v535 = vpop.f32.mrf.mxu0
    %v536 = vadd.f32 %v444, %v535
    %537 = vmatmul.f32.gmra.mxu0 %v335
    %v538 = vpop.f32.mrf.mxu0
    %v539 = vadd.f32 %v447, %v538
    %540 = vmatmul.f32.gmra.mxu0 %v339
    %v541 = vpop.f32.mrf.mxu0
    %v542 = vadd.f32 %v450, %v541
    %543 = vmatmul.f32.gmra.mxu0 %v343
    %v544 = vpop.f32.mrf.mxu0
    %v545 = vadd.f32 %v453, %v544
    %546 = vmatmul.f32.gmra.mxu0 %v347
    %v547 = vpop.f32.mrf.mxu0
    %v548 = vadd.f32 %v456, %v547
    %549 = vmatmul.f32.gmra.mxu0 %v351
    %v550 = vpop.f32.mrf.mxu0
    %v551 = vadd.f32 %v459, %v550
    %552 = vmatmul.f32.gmra.mxu0 %v355
    %v553 = vpop.f32.mrf.mxu0
    %v554 = vadd.f32 %v462, %v553
    %555 = vmatmul.f32.gmra.mxu0 %v359
    %v556 = vpop.f32.mrf.mxu0
    %v557 = vadd.f32 %v465, %v556
    %558 = vmatmul.f32.gmra.mxu0 %v363
    %v559 = vpop.f32.mrf.mxu0
    %v560 = vadd.f32 %v468, %v559
    %561 = vmatmul.f32.gmra.mxu0 %v367
    %v562 = vpop.f32.mrf.mxu0
    %v563 = vadd.f32 %v471, %v562
    %564 = vmatmul.f32.gmra.mxu0 %v371
    %v565 = vpop.f32.mrf.mxu0
    %v566 = vadd.f32 %v474, %v565
    %567 = vmatmul.f32.gmra.mxu0 %v375
    %v568 = vpop.f32.mrf.mxu0
    %v569 = vadd.f32 %v477, %v568
    %570 = vmatmul.f32.gmra.mxu0 %v379
    %v571 = vpop.f32.mrf.mxu0
    %v572 = vadd.f32 %v480, %v571
    %573 = vmatmul.f32.gmra.mxu0 %v383
    %v574 = vpop.f32.mrf.mxu0
    %v575 = vadd.f32 %v483, %v574
    %576 = vmatmul.f32.gmra.mxu0 %v387
    %v577 = vpop.f32.mrf.mxu0
    %v578 = vadd.f32 %v486, %v577
    %579 = vmatmul.f32.gmra.mxu0 %v391
    %v580 = vpop.f32.mrf.mxu0
    %v581 = vadd.f32 %v489, %v580
    %582 = vmatmul.f32.gmra.mxu0 %v395
    %v583 = vpop.f32.mrf.mxu0
    %v584 = vadd.f32 %v492, %v583
    %585 = vmatmul.f32.gmra.mxu0 %v399
    %v586 = vpop.f32.mrf.mxu0
    %v587 = vadd.f32 %v495, %v586
    %588 = vmatmul.f32.gmra.mxu0 %v403
    %v589 = vpop.f32.mrf.mxu0
    %v590 = vadd.f32 %v498, %v589
    %591 = vmatmul.f32.gmra.mxu0 %v407
    %v592 = vpop.f32.mrf.mxu0
    %v593 = vadd.f32 %v501, %v592
    %594 = vmatmul.f32.gmra.mxu0 %v411
    %v595 = vpop.f32.mrf.mxu0
    %v596 = vadd.f32 %v504, %v595
    %597 = vdwg.mxu0
    %598 = vmatpush.msra.mxu0 %v297
    %599 = vmatpush.msra.mxu0 %v296
    %600 = vmatpush.msra.mxu0 %v295
    %601 = vmatpush.msra.mxu0 %v294
    %602 = vmatpush.msra.mxu0 %v293
    %603 = vmatpush.msra.mxu0 %v292
    %604 = vmatpush.msra.mxu0 %v291
    %605 = vmatpush.msra.mxu0 %v290
    %606 = vmatpush.msra.mxu0 %v289
    %607 = vmatpush.msra.mxu0 %v288
    %608 = vmatpush.msra.mxu0 %v287
    %609 = vmatpush.msra.mxu0 %v286
    %610 = vmatpush.msra.mxu0 %v285
    %611 = vmatpush.msra.mxu0 %v284
    %612 = vmatpush.msra.mxu0 %v283
    %613 = vmatpush.msra.mxu0 %v282
    %614 = vmatmul.f32.gmra.mxu0 %v316
    %v615 = vpop.f32.mrf.mxu0
    %v616 = vadd.f32 %v524, %v615
    %617 = vmatmul.f32.gmra.mxu0 %v320
    %v618 = vpop.f32.mrf.mxu0
    %v619 = vadd.f32 %v527, %v618
    %620 = vmatmul.f32.gmra.mxu0 %v324
    %v621 = vpop.f32.mrf.mxu0
    %v622 = vadd.f32 %v530, %v621
    %623 = vmatmul.f32.gmra.mxu0 %v328
    %v624 = vpop.f32.mrf.mxu0
    %v625 = vadd.f32 %v533, %v624
    %626 = vmatmul.f32.gmra.mxu0 %v332
    %v627 = vpop.f32.mrf.mxu0
    %v628 = vadd.f32 %v536, %v627
    %629 = vmatmul.f32.gmra.mxu0 %v336
    %v630 = vpop.f32.mrf.mxu0
    %v631 = vadd.f32 %v539, %v630
    %632 = vmatmul.f32.gmra.mxu0 %v340
    %v633 = vpop.f32.mrf.mxu0
    %v634 = vadd.f32 %v542, %v633
    %635 = vmatmul.f32.gmra.mxu0 %v344
    %v636 = vpop.f32.mrf.mxu0
    %v637 = vadd.f32 %v545, %v636
    %638 = vmatmul.f32.gmra.mxu0 %v348
    %v639 = vpop.f32.mrf.mxu0
    %v640 = vadd.f32 %v548, %v639
    %641 = vmatmul.f32.gmra.mxu0 %v352
    %v642 = vpop.f32.mrf.mxu0
    %v643 = vadd.f32 %v551, %v642
    %644 = vmatmul.f32.gmra.mxu0 %v356
    %v645 = vpop.f32.mrf.mxu0
    %v646 = vadd.f32 %v554, %v645
    %647 = vmatmul.f32.gmra.mxu0 %v360
    %v648 = vpop.f32.mrf.mxu0
    %v649 = vadd.f32 %v557, %v648
    %650 = vmatmul.f32.gmra.mxu0 %v364
    %v651 = vpop.f32.mrf.mxu0
    %v652 = vadd.f32 %v560, %v651
    %653 = vmatmul.f32.gmra.mxu0 %v368
    %v654 = vpop.f32.mrf.mxu0
    %v655 = vadd.f32 %v563, %v654
    %656 = vmatmul.f32.gmra.mxu0 %v372
    %v657 = vpop.f32.mrf.mxu0
    %v658 = vadd.f32 %v566, %v657
    %659 = vmatmul.f32.gmra.mxu0 %v376
    %v660 = vpop.f32.mrf.mxu0
    %v661 = vadd.f32 %v569, %v660
    %662 = vmatmul.f32.gmra.mxu0 %v380
    %v663 = vpop.f32.mrf.mxu0
    %v664 = vadd.f32 %v572, %v663
    %665 = vmatmul.f32.gmra.mxu0 %v384
    %v666 = vpop.f32.mrf.mxu0
    %v667 = vadd.f32 %v575, %v666
    %668 = vmatmul.f32.gmra.mxu0 %v388
    %v669 = vpop.f32.mrf.mxu0
    %v670 = vadd.f32 %v578, %v669
    %671 = vmatmul.f32.gmra.mxu0 %v392
    %v672 = vpop.f32.mrf.mxu0
    %v673 = vadd.f32 %v581, %v672
    %674 = vmatmul.f32.gmra.mxu0 %v396
    %v675 = vpop.f32.mrf.mxu0
    %v676 = vadd.f32 %v584, %v675
    %677 = vmatmul.f32.gmra.mxu0 %v400
    %v678 = vpop.f32.mrf.mxu0
    %v679 = vadd.f32 %v587, %v678
    %680 = vmatmul.f32.gmra.mxu0 %v404
    %v681 = vpop.f32.mrf.mxu0
    %v682 = vadd.f32 %v590, %v681
    %683 = vmatmul.f32.gmra.mxu0 %v408
    %v684 = vpop.f32.mrf.mxu0
    %v685 = vadd.f32 %v593, %v684
    %686 = vmatmul.f32.gmra.mxu0 %v412
    %v687 = vpop.f32.mrf.mxu0
    %v688 = vadd.f32 %v596, %v687
    %689 = vdwg.mxu0
    %690 = vmatpush.msra.mxu0 %v313
    %691 = vmatpush.msra.mxu0 %v312
    %692 = vmatpush.msra.mxu0 %v311
    %693 = vmatpush.msra.mxu0 %v310
    %694 = vmatpush.msra.mxu0 %v309
    %695 = vmatpush.msra.mxu0 %v308
    %696 = vmatpush.msra.mxu0 %v307
    %697 = vmatpush.msra.mxu0 %v306
    %698 = vmatpush.msra.mxu0 %v305
    %699 = vmatpush.msra.mxu0 %v304
    %700 = vmatpush.msra.mxu0 %v303
    %701 = vmatpush.msra.mxu0 %v302
    %702 = vmatpush.msra.mxu0 %v301
    %703 = vmatpush.msra.mxu0 %v300
    %704 = vmatpush.msra.mxu0 %v299
    %705 = vmatpush.msra.mxu0 %v298
    %706 = vmatmul.f32.gmra.mxu0 %v317
    %v707 = vpop.f32.mrf.mxu0
    %v708 = vadd.f32 %v616, %v707
    %709 = vmatmul.f32.gmra.mxu0 %v321
    %v710 = vpop.f32.mrf.mxu0
    %v711 = vadd.f32 %v619, %v710
    %712 = vmatmul.f32.gmra.mxu0 %v325
    %v713 = vpop.f32.mrf.mxu0
    %v714 = vadd.f32 %v622, %v713
    %715 = vmatmul.f32.gmra.mxu0 %v329
    %v716 = vpop.f32.mrf.mxu0
    %v717 = vadd.f32 %v625, %v716
    %718 = vmatmul.f32.gmra.mxu0 %v333
    %v719 = vpop.f32.mrf.mxu0
    %v720 = vadd.f32 %v628, %v719
    %721 = vmatmul.f32.gmra.mxu0 %v337
    %v722 = vpop.f32.mrf.mxu0
    %v723 = vadd.f32 %v631, %v722
    %724 = vmatmul.f32.gmra.mxu0 %v341
    %v725 = vpop.f32.mrf.mxu0
    %v726 = vadd.f32 %v634, %v725
    %727 = vmatmul.f32.gmra.mxu0 %v345
    %v728 = vpop.f32.mrf.mxu0
    %v729 = vadd.f32 %v637, %v728
    %730 = vmatmul.f32.gmra.mxu0 %v349
    %v731 = vpop.f32.mrf.mxu0
    %v732 = vadd.f32 %v640, %v731
    %733 = vmatmul.f32.gmra.mxu0 %v353
    %v734 = vpop.f32.mrf.mxu0
    %v735 = vadd.f32 %v643, %v734
    %736 = vmatmul.f32.gmra.mxu0 %v357
    %v737 = vpop.f32.mrf.mxu0
    %v738 = vadd.f32 %v646, %v737
    %739 = vmatmul.f32.gmra.mxu0 %v361
    %v740 = vpop.f32.mrf.mxu0
    %v741 = vadd.f32 %v649, %v740
    %742 = vmatmul.f32.gmra.mxu0 %v365
    %v743 = vpop.f32.mrf.mxu0
    %v744 = vadd.f32 %v652, %v743
    %745 = vmatmul.f32.gmra.mxu0 %v369
    %v746 = vpop.f32.mrf.mxu0
    %v747 = vadd.f32 %v655, %v746
    %748 = vmatmul.f32.gmra.mxu0 %v373
    %v749 = vpop.f32.mrf.mxu0
    %v750 = vadd.f32 %v658, %v749
    %751 = vmatmul.f32.gmra.mxu0 %v377
    %v752 = vpop.f32.mrf.mxu0
    %v753 = vadd.f32 %v661, %v752
    %754 = vmatmul.f32.gmra.mxu0 %v381
    %v755 = vpop.f32.mrf.mxu0
    %v756 = vadd.f32 %v664, %v755
    %757 = vmatmul.f32.gmra.mxu0 %v385
    %v758 = vpop.f32.mrf.mxu0
    %v759 = vadd.f32 %v667, %v758
    %760 = vmatmul.f32.gmra.mxu0 %v389
    %v761 = vpop.f32.mrf.mxu0
    %v762 = vadd.f32 %v670, %v761
    %763 = vmatmul.f32.gmra.mxu0 %v393
    %v764 = vpop.f32.mrf.mxu0
    %v765 = vadd.f32 %v673, %v764
    %766 = vmatmul.f32.gmra.mxu0 %v397
    %v767 = vpop.f32.mrf.mxu0
    %v768 = vadd.f32 %v676, %v767
    %769 = vmatmul.f32.gmra.mxu0 %v401
    %v770 = vpop.f32.mrf.mxu0
    %v771 = vadd.f32 %v679, %v770
    %772 = vmatmul.f32.gmra.mxu0 %v405
    %v773 = vpop.f32.mrf.mxu0
    %v774 = vadd.f32 %v682, %v773
    %775 = vmatmul.f32.gmra.mxu0 %v409
    %v776 = vpop.f32.mrf.mxu0
    %v777 = vadd.f32 %v685, %v776
    %778 = vmatmul.f32.gmra.mxu0 %v413
    %v779 = vpop.f32.mrf.mxu0
    %v780 = vadd.f32 %v688, %v779
    %781 = vdwg.mxu0
    %v782 = vld [vmem:[%s2] sm:$0x7]
    %s783 = scalar_lea.vmem [#allocation2], 800
    %v784 = vld [vmem:[%s783] sm:$0xff]
    %v785 = vld [vmem:[%s783 + $0x8] sm:$0xff]
    %v786 = vld [vmem:[%s783 + $0x10] sm:$0xff]
    %v787 = vld [vmem:[%s783 + $0x18] sm:$0xff]
    %v788 = vld [vmem:[%s783 + $0x20] sm:$0xff]
    %v789 = vld [vmem:[%s783 + $0x28] sm:$0xff]
    %v790 = vld [vmem:[%s783 + $0x30] sm:$0xff]
    %v791 = vld [vmem:[%s783 + $0x38] sm:$0xff]
    %v792 = vld [vmem:[%s783 + $0x40] sm:$0xff]
    %v793 = vld [vmem:[%s783 + $0x48] sm:$0xff]
    %v794 = vld [vmem:[%s783 + $0x50] sm:$0xff]
    %v795 = vld [vmem:[%s783 + $0x58] sm:$0xff]
    %v796 = vld [vmem:[%s783 + $0x60] sm:$0xff]
    %v797 = vld [vmem:[%s783 + $0x68] sm:$0xff]
    %v798 = vld [vmem:[%s783 + $0x70] sm:$0xff]
    %v799 = vld [vmem:[%s783 + $0x78] sm:$0xff]
    %v800 = vld [vmem:[%s783 + $0x80] sm:$0xff]
    %v801 = vld [vmem:[%s783 + $0x88] sm:$0xff]
    %v802 = vld [vmem:[%s783 + $0x90] sm:$0xff]
    %v803 = vld [vmem:[%s783 + $0x98] sm:$0xff]
    %v804 = vld [vmem:[%s783 + $0xa0] sm:$0xff]
    %v805 = vld [vmem:[%s783 + $0xa8] sm:$0xff]
    %v806 = vld [vmem:[%s783 + $0xb0] sm:$0xff]
    %v807 = vld [vmem:[%s783 + $0xb8] sm:$0xff]
    %v808 = vld [vmem:[%s783 + $0xc0] sm:$0xff]
    %v809 = vld [vmem:[%s783 + $0xc8] sm:$0xff]
    %v810 = vld [vmem:[%s783 + $0xd0] sm:$0xff]
    %v811 = vld [vmem:[%s783 + $0xd8] sm:$0xff]
    %v812 = vld [vmem:[%s783 + $0xe0] sm:$0xff]
    %v813 = vld [vmem:[%s783 + $0xe8] sm:$0xff]
    %v814 = vld [vmem:[%s783 + $0xf0] sm:$0xff]
    %v815 = vld [vmem:[%s783 + $0xf8] sm:$0xff]
    %v816 = vld [vmem:[%s783 + $0x100] sm:$0xff]
    %v817 = vld [vmem:[%s783 + $0x108] sm:$0xff]
    %v818 = vld [vmem:[%s783 + $0x110] sm:$0xff]
    %v819 = vld [vmem:[%s783 + $0x118] sm:$0xff]
    %v820 = vld [vmem:[%s783 + $0x120] sm:$0xff]
    %v821 = vld [vmem:[%s783 + $0x128] sm:$0xff]
    %v822 = vld [vmem:[%s783 + $0x130] sm:$0xff]
    %v823 = vld [vmem:[%s783 + $0x138] sm:$0xff]
    %v824 = vld [vmem:[%s783 + $0x140] sm:$0xff]
    %v825 = vld [vmem:[%s783 + $0x148] sm:$0xff]
    %v826 = vld [vmem:[%s783 + $0x150] sm:$0xff]
    %v827 = vld [vmem:[%s783 + $0x158] sm:$0xff]
    %v828 = vld [vmem:[%s783 + $0x160] sm:$0xff]
    %v829 = vld [vmem:[%s783 + $0x168] sm:$0xff]
    %v830 = vld [vmem:[%s783 + $0x170] sm:$0xff]
    %v831 = vld [vmem:[%s783 + $0x178] sm:$0xff]
    %v832 = vld [vmem:[%s783 + $0x180] sm:$0xff]
    %v833 = vld [vmem:[%s783 + $0x188] sm:$0xff]
    %v834 = vld [vmem:[%s783 + $0x190] sm:$0xff]
    %v835 = vld [vmem:[%s783 + $0x198] sm:$0xff]
    %v836 = vld [vmem:[%s783 + $0x1a0] sm:$0xff]
    %v837 = vld [vmem:[%s783 + $0x1a8] sm:$0xff]
    %v838 = vld [vmem:[%s783 + $0x1b0] sm:$0xff]
    %v839 = vld [vmem:[%s783 + $0x1b8] sm:$0xff]
    %v840 = vld [vmem:[%s783 + $0x1c0] sm:$0xff]
    %v841 = vld [vmem:[%s783 + $0x1c8] sm:$0xff]
    %v842 = vld [vmem:[%s783 + $0x1d0] sm:$0xff]
    %v843 = vld [vmem:[%s783 + $0x1d8] sm:$0xff]
    %v844 = vld [vmem:[%s783 + $0x1e0] sm:$0xff]
    %v845 = vld [vmem:[%s783 + $0x1e8] sm:$0xff]
    %v846 = vld [vmem:[%s783 + $0x1f0] sm:$0xff]
    %v847 = vld [vmem:[%s783 + $0x1f8] sm:$0xff]
    %v848 = vld [vmem:[%s783 + $0x200] sm:$0xff]
    %v849 = vld [vmem:[%s783 + $0x208] sm:$0xff]
    %v850 = vld [vmem:[%s783 + $0x210] sm:$0xff]
    %v851 = vld [vmem:[%s783 + $0x218] sm:$0xff]
    %v852 = vld [vmem:[%s783 + $0x220] sm:$0xff]
    %v853 = vld [vmem:[%s783 + $0x228] sm:$0xff]
    %v854 = vld [vmem:[%s783 + $0x230] sm:$0xff]
    %v855 = vld [vmem:[%s783 + $0x238] sm:$0xff]
    %v856 = vld [vmem:[%s783 + $0x240] sm:$0xff]
    %v857 = vld [vmem:[%s783 + $0x248] sm:$0xff]
    %v858 = vld [vmem:[%s783 + $0x250] sm:$0xff]
    %v859 = vld [vmem:[%s783 + $0x258] sm:$0xff]
    %v860 = vld [vmem:[%s783 + $0x260] sm:$0xff]
    %v861 = vld [vmem:[%s783 + $0x268] sm:$0xff]
    %v862 = vld [vmem:[%s783 + $0x270] sm:$0xff]
    %v863 = vld [vmem:[%s783 + $0x278] sm:$0xff]
    %v864 = vld [vmem:[%s783 + $0x280] sm:$0xff]
    %v865 = vld [vmem:[%s783 + $0x288] sm:$0xff]
    %v866 = vld [vmem:[%s783 + $0x290] sm:$0xff]
    %v867 = vld [vmem:[%s783 + $0x298] sm:$0xff]
    %v868 = vld [vmem:[%s783 + $0x2a0] sm:$0xff]
    %v869 = vld [vmem:[%s783 + $0x2a8] sm:$0xff]
    %v870 = vld [vmem:[%s783 + $0x2b0] sm:$0xff]
    %v871 = vld [vmem:[%s783 + $0x2b8] sm:$0xff]
    %v872 = vld [vmem:[%s783 + $0x2c0] sm:$0xff]
    %v873 = vld [vmem:[%s783 + $0x2c8] sm:$0xff]
    %v874 = vld [vmem:[%s783 + $0x2d0] sm:$0xff]
    %v875 = vld [vmem:[%s783 + $0x2d8] sm:$0xff]
    %v876 = vld [vmem:[%s783 + $0x2e0] sm:$0xff]
    %v877 = vld [vmem:[%s783 + $0x2e8] sm:$0xff]
    %v878 = vld [vmem:[%s783 + $0x2f0] sm:$0xff]
    %v879 = vld [vmem:[%s783 + $0x2f8] sm:$0xff]
    %v880 = vld [vmem:[%s783 + $0x300] sm:$0xff]
    %v881 = vld [vmem:[%s783 + $0x308] sm:$0xff]
    %v882 = vld [vmem:[%s783 + $0x310] sm:$0xff]
    %v883 = vld [vmem:[%s783 + $0x318] sm:$0xff]
    %884 = vmatpush.msra.mxu0 %v265
    %885 = vmatpush.msra.mxu0 %v264
    %886 = vmatpush.msra.mxu0 %v263
    %887 = vmatpush.msra.mxu0 %v262
    %888 = vmatpush.msra.mxu0 %v261
    %889 = vmatpush.msra.mxu0 %v260
    %890 = vmatpush.msra.mxu0 %v259
    %891 = vmatpush.msra.mxu0 %v258
    %892 = vmatpush.msra.mxu0 %v257
    %893 = vmatpush.msra.mxu0 %v256
    %894 = vmatpush.msra.mxu0 %v255
    %895 = vmatpush.msra.mxu0 %v254
    %896 = vmatpush.msra.mxu0 %v253
    %897 = vmatpush.msra.mxu0 %v252
    %898 = vmatpush.msra.mxu0 %v251
    %899 = vmatpush.msra.mxu0 %v250
    %900 = vmatmul.f32.gmra.mxu0 %v784
    %v901 = vpop.f32.mrf.mxu0
    %v902 = vadd.f32 0.0, %v901
    %903 = vmatmul.f32.gmra.mxu0 %v788
    %v904 = vpop.f32.mrf.mxu0
    %v905 = vadd.f32 0.0, %v904
    %906 = vmatmul.f32.gmra.mxu0 %v792
    %v907 = vpop.f32.mrf.mxu0
    %v908 = vadd.f32 0.0, %v907
    %909 = vmatmul.f32.gmra.mxu0 %v796
    %v910 = vpop.f32.mrf.mxu0
    %v911 = vadd.f32 0.0, %v910
    %912 = vmatmul.f32.gmra.mxu0 %v800
    %v913 = vpop.f32.mrf.mxu0
    %v914 = vadd.f32 0.0, %v913
    %915 = vmatmul.f32.gmra.mxu0 %v804
    %v916 = vpop.f32.mrf.mxu0
    %v917 = vadd.f32 0.0, %v916
    %918 = vmatmul.f32.gmra.mxu0 %v808
    %v919 = vpop.f32.mrf.mxu0
    %v920 = vadd.f32 0.0, %v919
    %921 = vmatmul.f32.gmra.mxu0 %v812
    %v922 = vpop.f32.mrf.mxu0
    %v923 = vadd.f32 0.0, %v922
    %924 = vmatmul.f32.gmra.mxu0 %v816
    %v925 = vpop.f32.mrf.mxu0
    %v926 = vadd.f32 0.0, %v925
    %927 = vmatmul.f32.gmra.mxu0 %v820
    %v928 = vpop.f32.mrf.mxu0
    %v929 = vadd.f32 0.0, %v928
    %930 = vmatmul.f32.gmra.mxu0 %v824
    %v931 = vpop.f32.mrf.mxu0
    %v932 = vadd.f32 0.0, %v931
    %933 = vmatmul.f32.gmra.mxu0 %v828
    %v934 = vpop.f32.mrf.mxu0
    %v935 = vadd.f32 0.0, %v934
    %936 = vmatmul.f32.gmra.mxu0 %v832
    %v937 = vpop.f32.mrf.mxu0
    %v938 = vadd.f32 0.0, %v937
    %939 = vmatmul.f32.gmra.mxu0 %v836
    %v940 = vpop.f32.mrf.mxu0
    %v941 = vadd.f32 0.0, %v940
    %942 = vmatmul.f32.gmra.mxu0 %v840
    %v943 = vpop.f32.mrf.mxu0
    %v944 = vadd.f32 0.0, %v943
    %945 = vmatmul.f32.gmra.mxu0 %v844
    %v946 = vpop.f32.mrf.mxu0
    %v947 = vadd.f32 0.0, %v946
    %948 = vmatmul.f32.gmra.mxu0 %v848
    %v949 = vpop.f32.mrf.mxu0
    %v950 = vadd.f32 0.0, %v949
    %951 = vmatmul.f32.gmra.mxu0 %v852
    %v952 = vpop.f32.mrf.mxu0
    %v953 = vadd.f32 0.0, %v952
    %954 = vmatmul.f32.gmra.mxu0 %v856
    %v955 = vpop.f32.mrf.mxu0
    %v956 = vadd.f32 0.0, %v955
    %957 = vmatmul.f32.gmra.mxu0 %v860
    %v958 = vpop.f32.mrf.mxu0
    %v959 = vadd.f32 0.0, %v958
    %960 = vmatmul.f32.gmra.mxu0 %v864
    %v961 = vpop.f32.mrf.mxu0
    %v962 = vadd.f32 0.0, %v961
    %963 = vmatmul.f32.gmra.mxu0 %v868
    %v964 = vpop.f32.mrf.mxu0
    %v965 = vadd.f32 0.0, %v964
    %966 = vmatmul.f32.gmra.mxu0 %v872
    %v967 = vpop.f32.mrf.mxu0
    %v968 = vadd.f32 0.0, %v967
    %969 = vmatmul.f32.gmra.mxu0 %v876
    %v970 = vpop.f32.mrf.mxu0
    %v971 = vadd.f32 0.0, %v970
    %972 = vmatmul.f32.gmra.mxu0 %v880
    %v973 = vpop.f32.mrf.mxu0
    %v974 = vadd.f32 0.0, %v973
    %975 = vdwg.mxu0
    %976 = vmatpush.msra.mxu0 %v281
    %977 = vmatpush.msra.mxu0 %v280
    %978 = vmatpush.msra.mxu0 %v279
    %979 = vmatpush.msra.mxu0 %v278
    %980 = vmatpush.msra.mxu0 %v277
    %981 = vmatpush.msra.mxu0 %v276
    %982 = vmatpush.msra.mxu0 %v275
    %983 = vmatpush.msra.mxu0 %v274
    %984 = vmatpush.msra.mxu0 %v273
    %985 = vmatpush.msra.mxu0 %v272
    %986 = vmatpush.msra.mxu0 %v271
    %987 = vmatpush.msra.mxu0 %v270
    %988 = vmatpush.msra.mxu0 %v269
    %989 = vmatpush.msra.mxu0 %v268
    %990 = vmatpush.msra.mxu0 %v267
    %991 = vmatpush.msra.mxu0 %v266
    %992 = vmatmul.f32.gmra.mxu0 %v785
    %v993 = vpop.f32.mrf.mxu0
    %v994 = vadd.f32 %v902, %v993
    %995 = vmatmul.f32.gmra.mxu0 %v789
    %v996 = vpop.f32.mrf.mxu0
    %v997 = vadd.f32 %v905, %v996
    %998 = vmatmul.f32.gmra.mxu0 %v793
    %v999 = vpop.f32.mrf.mxu0
    %v1000 = vadd.f32 %v908, %v999
    %1001 = vmatmul.f32.gmra.mxu0 %v797
    %v1002 = vpop.f32.mrf.mxu0
    %v1003 = vadd.f32 %v911, %v1002
    %1004 = vmatmul.f32.gmra.mxu0 %v801
    %v1005 = vpop.f32.mrf.mxu0
    %v1006 = vadd.f32 %v914, %v1005
    %1007 = vmatmul.f32.gmra.mxu0 %v805
    %v1008 = vpop.f32.mrf.mxu0
    %v1009 = vadd.f32 %v917, %v1008
    %1010 = vmatmul.f32.gmra.mxu0 %v809
    %v1011 = vpop.f32.mrf.mxu0
    %v1012 = vadd.f32 %v920, %v1011
    %1013 = vmatmul.f32.gmra.mxu0 %v813
    %v1014 = vpop.f32.mrf.mxu0
    %v1015 = vadd.f32 %v923, %v1014
    %1016 = vmatmul.f32.gmra.mxu0 %v817
    %v1017 = vpop.f32.mrf.mxu0
    %v1018 = vadd.f32 %v926, %v1017
    %1019 = vmatmul.f32.gmra.mxu0 %v821
    %v1020 = vpop.f32.mrf.mxu0
    %v1021 = vadd.f32 %v929, %v1020
    %1022 = vmatmul.f32.gmra.mxu0 %v825
    %v1023 = vpop.f32.mrf.mxu0
    %v1024 = vadd.f32 %v932, %v1023
    %1025 = vmatmul.f32.gmra.mxu0 %v829
    %v1026 = vpop.f32.mrf.mxu0
    %v1027 = vadd.f32 %v935, %v1026
    %1028 = vmatmul.f32.gmra.mxu0 %v833
    %v1029 = vpop.f32.mrf.mxu0
    %v1030 = vadd.f32 %v938, %v1029
    %1031 = vmatmul.f32.gmra.mxu0 %v837
    %v1032 = vpop.f32.mrf.mxu0
    %v1033 = vadd.f32 %v941, %v1032
    %1034 = vmatmul.f32.gmra.mxu0 %v841
    %v1035 = vpop.f32.mrf.mxu0
    %v1036 = vadd.f32 %v944, %v1035
    %1037 = vmatmul.f32.gmra.mxu0 %v845
    %v1038 = vpop.f32.mrf.mxu0
    %v1039 = vadd.f32 %v947, %v1038
    %1040 = vmatmul.f32.gmra.mxu0 %v849
    %v1041 = vpop.f32.mrf.mxu0
    %v1042 = vadd.f32 %v950, %v1041
    %1043 = vmatmul.f32.gmra.mxu0 %v853
    %v1044 = vpop.f32.mrf.mxu0
    %v1045 = vadd.f32 %v953, %v1044
    %1046 = vmatmul.f32.gmra.mxu0 %v857
    %v1047 = vpop.f32.mrf.mxu0
    %v1048 = vadd.f32 %v956, %v1047
    %1049 = vmatmul.f32.gmra.mxu0 %v861
    %v1050 = vpop.f32.mrf.mxu0
    %v1051 = vadd.f32 %v959, %v1050
    %1052 = vmatmul.f32.gmra.mxu0 %v865
    %v1053 = vpop.f32.mrf.mxu0
    %v1054 = vadd.f32 %v962, %v1053
    %1055 = vmatmul.f32.gmra.mxu0 %v869
    %v1056 = vpop.f32.mrf.mxu0
    %v1057 = vadd.f32 %v965, %v1056
    %1058 = vmatmul.f32.gmra.mxu0 %v873
    %v1059 = vpop.f32.mrf.mxu0
    %v1060 = vadd.f32 %v968, %v1059
    %1061 = vmatmul.f32.gmra.mxu0 %v877
    %v1062 = vpop.f32.mrf.mxu0
    %v1063 = vadd.f32 %v971, %v1062
    %1064 = vmatmul.f32.gmra.mxu0 %v881
    %v1065 = vpop.f32.mrf.mxu0
    %v1066 = vadd.f32 %v974, %v1065
    %1067 = vdwg.mxu0
    %1068 = vmatpush.msra.mxu0 %v297
    %1069 = vmatpush.msra.mxu0 %v296
    %1070 = vmatpush.msra.mxu0 %v295
    %1071 = vmatpush.msra.mxu0 %v294
    %1072 = vmatpush.msra.mxu0 %v293
    %1073 = vmatpush.msra.mxu0 %v292
    %1074 = vmatpush.msra.mxu0 %v291
    %1075 = vmatpush.msra.mxu0 %v290
    %1076 = vmatpush.msra.mxu0 %v289
    %1077 = vmatpush.msra.mxu0 %v288
    %1078 = vmatpush.msra.mxu0 %v287
    %1079 = vmatpush.msra.mxu0 %v286
    %1080 = vmatpush.msra.mxu0 %v285
    %1081 = vmatpush.msra.mxu0 %v284
    %1082 = vmatpush.msra.mxu0 %v283
    %1083 = vmatpush.msra.mxu0 %v282
    %1084 = vmatmul.f32.gmra.mxu0 %v786
    %v1085 = vpop.f32.mrf.mxu0
    %v1086 = vadd.f32 %v994, %v1085
    %1087 = vmatmul.f32.gmra.mxu0 %v790
    %v1088 = vpop.f32.mrf.mxu0
    %v1089 = vadd.f32 %v997, %v1088
    %1090 = vmatmul.f32.gmra.mxu0 %v794
    %v1091 = vpop.f32.mrf.mxu0
    %v1092 = vadd.f32 %v1000, %v1091
    %1093 = vmatmul.f32.gmra.mxu0 %v798
    %v1094 = vpop.f32.mrf.mxu0
    %v1095 = vadd.f32 %v1003, %v1094
    %1096 = vmatmul.f32.gmra.mxu0 %v802
    %v1097 = vpop.f32.mrf.mxu0
    %v1098 = vadd.f32 %v1006, %v1097
    %1099 = vmatmul.f32.gmra.mxu0 %v806
    %v1100 = vpop.f32.mrf.mxu0
    %v1101 = vadd.f32 %v1009, %v1100
    %1102 = vmatmul.f32.gmra.mxu0 %v810
    %v1103 = vpop.f32.mrf.mxu0
    %v1104 = vadd.f32 %v1012, %v1103
    %1105 = vmatmul.f32.gmra.mxu0 %v814
    %v1106 = vpop.f32.mrf.mxu0
    %v1107 = vadd.f32 %v1015, %v1106
    %1108 = vmatmul.f32.gmra.mxu0 %v818
    %v1109 = vpop.f32.mrf.mxu0
    %v1110 = vadd.f32 %v1018, %v1109
    %1111 = vmatmul.f32.gmra.mxu0 %v822
    %v1112 = vpop.f32.mrf.mxu0
    %v1113 = vadd.f32 %v1021, %v1112
    %1114 = vmatmul.f32.gmra.mxu0 %v826
    %v1115 = vpop.f32.mrf.mxu0
    %v1116 = vadd.f32 %v1024, %v1115
    %1117 = vmatmul.f32.gmra.mxu0 %v830
    %v1118 = vpop.f32.mrf.mxu0
    %v1119 = vadd.f32 %v1027, %v1118
    %1120 = vmatmul.f32.gmra.mxu0 %v834
    %v1121 = vpop.f32.mrf.mxu0
    %v1122 = vadd.f32 %v1030, %v1121
    %1123 = vmatmul.f32.gmra.mxu0 %v838
    %v1124 = vpop.f32.mrf.mxu0
    %v1125 = vadd.f32 %v1033, %v1124
    %1126 = vmatmul.f32.gmra.mxu0 %v842
    %v1127 = vpop.f32.mrf.mxu0
    %v1128 = vadd.f32 %v1036, %v1127
    %1129 = vmatmul.f32.gmra.mxu0 %v846
    %v1130 = vpop.f32.mrf.mxu0
    %v1131 = vadd.f32 %v1039, %v1130
    %1132 = vmatmul.f32.gmra.mxu0 %v850
    %v1133 = vpop.f32.mrf.mxu0
    %v1134 = vadd.f32 %v1042, %v1133
    %1135 = vmatmul.f32.gmra.mxu0 %v854
    %v1136 = vpop.f32.mrf.mxu0
    %v1137 = vadd.f32 %v1045, %v1136
    %1138 = vmatmul.f32.gmra.mxu0 %v858
    %v1139 = vpop.f32.mrf.mxu0
    %v1140 = vadd.f32 %v1048, %v1139
    %1141 = vmatmul.f32.gmra.mxu0 %v862
    %v1142 = vpop.f32.mrf.mxu0
    %v1143 = vadd.f32 %v1051, %v1142
    %1144 = vmatmul.f32.gmra.mxu0 %v866
    %v1145 = vpop.f32.mrf.mxu0
    %v1146 = vadd.f32 %v1054, %v1145
    %1147 = vmatmul.f32.gmra.mxu0 %v870
    %v1148 = vpop.f32.mrf.mxu0
    %v1149 = vadd.f32 %v1057, %v1148
    %1150 = vmatmul.f32.gmra.mxu0 %v874
    %v1151 = vpop.f32.mrf.mxu0
    %v1152 = vadd.f32 %v1060, %v1151
    %1153 = vmatmul.f32.gmra.mxu0 %v878
    %v1154 = vpop.f32.mrf.mxu0
    %v1155 = vadd.f32 %v1063, %v1154
    %1156 = vmatmul.f32.gmra.mxu0 %v882
    %v1157 = vpop.f32.mrf.mxu0
    %v1158 = vadd.f32 %v1066, %v1157
    %1159 = vdwg.mxu0
    %1160 = vmatpush.msra.mxu0 %v313
    %1161 = vmatpush.msra.mxu0 %v312
    %1162 = vmatpush.msra.mxu0 %v311
    %1163 = vmatpush.msra.mxu0 %v310
    %1164 = vmatpush.msra.mxu0 %v309
    %1165 = vmatpush.msra.mxu0 %v308
    %1166 = vmatpush.msra.mxu0 %v307
    %1167 = vmatpush.msra.mxu0 %v306
    %1168 = vmatpush.msra.mxu0 %v305
    %1169 = vmatpush.msra.mxu0 %v304
    %1170 = vmatpush.msra.mxu0 %v303
    %1171 = vmatpush.msra.mxu0 %v302
    %1172 = vmatpush.msra.mxu0 %v301
    %1173 = vmatpush.msra.mxu0 %v300
    %1174 = vmatpush.msra.mxu0 %v299
    %1175 = vmatpush.msra.mxu0 %v298
    %1176 = vmatmul.f32.gmra.mxu0 %v787
    %v1177 = vpop.f32.mrf.mxu0
    %v1178 = vadd.f32 %v1086, %v1177
    %1179 = vmatmul.f32.gmra.mxu0 %v791
    %v1180 = vpop.f32.mrf.mxu0
    %v1181 = vadd.f32 %v1089, %v1180
    %1182 = vmatmul.f32.gmra.mxu0 %v795
    %v1183 = vpop.f32.mrf.mxu0
    %v1184 = vadd.f32 %v1092, %v1183
    %1185 = vmatmul.f32.gmra.mxu0 %v799
    %v1186 = vpop.f32.mrf.mxu0
    %v1187 = vadd.f32 %v1095, %v1186
    %1188 = vmatmul.f32.gmra.mxu0 %v803
    %v1189 = vpop.f32.mrf.mxu0
    %v1190 = vadd.f32 %v1098, %v1189
    %1191 = vmatmul.f32.gmra.mxu0 %v807
    %v1192 = vpop.f32.mrf.mxu0
    %v1193 = vadd.f32 %v1101, %v1192
    %1194 = vmatmul.f32.gmra.mxu0 %v811
    %v1195 = vpop.f32.mrf.mxu0
    %v1196 = vadd.f32 %v1104, %v1195
    %1197 = vmatmul.f32.gmra.mxu0 %v815
    %v1198 = vpop.f32.mrf.mxu0
    %v1199 = vadd.f32 %v1107, %v1198
    %1200 = vmatmul.f32.gmra.mxu0 %v819
    %v1201 = vpop.f32.mrf.mxu0
    %v1202 = vadd.f32 %v1110, %v1201
    %1203 = vmatmul.f32.gmra.mxu0 %v823
    %v1204 = vpop.f32.mrf.mxu0
    %v1205 = vadd.f32 %v1113, %v1204
    %1206 = vmatmul.f32.gmra.mxu0 %v827
    %v1207 = vpop.f32.mrf.mxu0
    %v1208 = vadd.f32 %v1116, %v1207
    %1209 = vmatmul.f32.gmra.mxu0 %v831
    %v1210 = vpop.f32.mrf.mxu0
    %v1211 = vadd.f32 %v1119, %v1210
    %1212 = vmatmul.f32.gmra.mxu0 %v835
    %v1213 = vpop.f32.mrf.mxu0
    %v1214 = vadd.f32 %v1122, %v1213
    %1215 = vmatmul.f32.gmra.mxu0 %v839
    %v1216 = vpop.f32.mrf.mxu0
    %v1217 = vadd.f32 %v1125, %v1216
    %1218 = vmatmul.f32.gmra.mxu0 %v843
    %v1219 = vpop.f32.mrf.mxu0
    %v1220 = vadd.f32 %v1128, %v1219
    %1221 = vmatmul.f32.gmra.mxu0 %v847
    %v1222 = vpop.f32.mrf.mxu0
    %v1223 = vadd.f32 %v1131, %v1222
    %1224 = vmatmul.f32.gmra.mxu0 %v851
    %v1225 = vpop.f32.mrf.mxu0
    %v1226 = vadd.f32 %v1134, %v1225
    %1227 = vmatmul.f32.gmra.mxu0 %v855
    %v1228 = vpop.f32.mrf.mxu0
    %v1229 = vadd.f32 %v1137, %v1228
    %1230 = vmatmul.f32.gmra.mxu0 %v859
    %v1231 = vpop.f32.mrf.mxu0
    %v1232 = vadd.f32 %v1140, %v1231
    %1233 = vmatmul.f32.gmra.mxu0 %v863
    %v1234 = vpop.f32.mrf.mxu0
    %v1235 = vadd.f32 %v1143, %v1234
    %1236 = vmatmul.f32.gmra.mxu0 %v867
    %v1237 = vpop.f32.mrf.mxu0
    %v1238 = vadd.f32 %v1146, %v1237
    %1239 = vmatmul.f32.gmra.mxu0 %v871
    %v1240 = vpop.f32.mrf.mxu0
    %v1241 = vadd.f32 %v1149, %v1240
    %1242 = vmatmul.f32.gmra.mxu0 %v875
    %v1243 = vpop.f32.mrf.mxu0
    %v1244 = vadd.f32 %v1152, %v1243
    %1245 = vmatmul.f32.gmra.mxu0 %v879
    %v1246 = vpop.f32.mrf.mxu0
    %v1247 = vadd.f32 %v1155, %v1246
    %1248 = vmatmul.f32.gmra.mxu0 %v883
    %v1249 = vpop.f32.mrf.mxu0
    %v1250 = vadd.f32 %v1158, %v1249
    %1251 = vdwg.mxu0
    %s1252 = scalar_lea.vmem %s2, 4
    %v1253 = vld [vmem:[%s1252] sm:$0x7]
    %vm1254 = vcmask 23552
    %v1256 = vsel %vm1254, %v1178, 0
    %v1259 = vsel %vm1254, %v1181, 0
    %v1262 = vsel %vm1254, %v1184, 0
    %v1265 = vsel %vm1254, %v1187, 0
    %v1268 = vsel %vm1254, %v1190, 0
    %v1271 = vsel %vm1254, %v1193, 0
    %v1274 = vsel %vm1254, %v1196, 0
    %v1277 = vsel %vm1254, %v1199, 0
    %v1280 = vsel %vm1254, %v1202, 0
    %v1283 = vsel %vm1254, %v1205, 0
    %v1286 = vsel %vm1254, %v1208, 0
    %v1289 = vsel %vm1254, %v1211, 0
    %v1292 = vsel %vm1254, %v1214, 0
    %v1295 = vsel %vm1254, %v1217, 0
    %v1298 = vsel %vm1254, %v1220, 0
    %v1301 = vsel %vm1254, %v1223, 0
    %v1304 = vsel %vm1254, %v1226, 0
    %v1307 = vsel %vm1254, %v1229, 0
    %v1310 = vsel %vm1254, %v1232, 0
    %v1313 = vsel %vm1254, %v1235, 0
    %v1316 = vsel %vm1254, %v1238, 0
    %v1319 = vsel %vm1254, %v1241, 0
    %v1322 = vsel %vm1254, %v1244, 0
    %v1325 = vsel %vm1254, %v1247, 0
    %v1328 = vsel %vm1254, %v1250, 0
    %vm1330 = vcmask 1042432
    %v1332 = vsel %vm1330, %v1253, 0
    %1334 = vmatpush.msra.mxu0 0.0
    %1335 = vmatpush.msra.mxu0 0.0
    %1336 = vmatpush.msra.mxu0 0.0
    %1337 = vmatpush.msra.mxu0 0.0
    %1338 = vmatpush.msra.mxu0 0.0
    %1339 = vmatpush.msra.mxu0 0.0
    %1340 = vmatpush.msra.mxu0 0.0
    %1341 = vmatpush.msra.mxu0 0.0
    %1342 = vmatpush.msra.mxu0 0.0
    %1343 = vmatpush.msra.mxu0 0.0
    %1344 = vmatpush.msra.mxu0 0.0
    %1345 = vmatpush.msra.mxu0 0.0
    %1346 = vmatpush.msra.mxu0 0.0
    %1347 = vmatpush.msra.mxu0 0.0
    %1348 = vmatpush.msra.mxu0 0.0
    %1349 = vmatpush.msra.mxu0 %v1332
    %1350 = vmatmul.f32.gmra.mxu0 %v1256
    %v1351 = vpop.f32.mrf.mxu0
    %v1352 = vadd.f32 0.0, %v1351
    %1353 = vmatmul.f32.gmra.mxu0 %v1259
    %v1354 = vpop.f32.mrf.mxu0
    %v1355 = vadd.f32 0.0, %v1354
    %1356 = vmatmul.f32.gmra.mxu0 %v1262
    %v1357 = vpop.f32.mrf.mxu0
    %v1358 = vadd.f32 0.0, %v1357
    %1359 = vmatmul.f32.gmra.mxu0 %v1265
    %v1360 = vpop.f32.mrf.mxu0
    %v1361 = vadd.f32 0.0, %v1360
    %1362 = vmatmul.f32.gmra.mxu0 %v1268
    %v1363 = vpop.f32.mrf.mxu0
    %v1364 = vadd.f32 0.0, %v1363
    %1365 = vmatmul.f32.gmra.mxu0 %v1271
    %v1366 = vpop.f32.mrf.mxu0
    %v1367 = vadd.f32 0.0, %v1366
    %1368 = vmatmul.f32.gmra.mxu0 %v1274
    %v1369 = vpop.f32.mrf.mxu0
    %v1370 = vadd.f32 0.0, %v1369
    %1371 = vmatmul.f32.gmra.mxu0 %v1277
    %v1372 = vpop.f32.mrf.mxu0
    %v1373 = vadd.f32 0.0, %v1372
    %1374 = vmatmul.f32.gmra.mxu0 %v1280
    %v1375 = vpop.f32.mrf.mxu0
    %v1376 = vadd.f32 0.0, %v1375
    %1377 = vmatmul.f32.gmra.mxu0 %v1283
    %v1378 = vpop.f32.mrf.mxu0
    %v1379 = vadd.f32 0.0, %v1378
    %1380 = vmatmul.f32.gmra.mxu0 %v1286
    %v1381 = vpop.f32.mrf.mxu0
    %v1382 = vadd.f32 0.0, %v1381
    %1383 = vmatmul.f32.gmra.mxu0 %v1289
    %v1384 = vpop.f32.mrf.mxu0
    %v1385 = vadd.f32 0.0, %v1384
    %1386 = vmatmul.f32.gmra.mxu0 %v1292
    %v1387 = vpop.f32.mrf.mxu0
    %v1388 = vadd.f32 0.0, %v1387
    %1389 = vmatmul.f32.gmra.mxu0 %v1295
    %v1390 = vpop.f32.mrf.mxu0
    %v1391 = vadd.f32 0.0, %v1390
    %1392 = vmatmul.f32.gmra.mxu0 %v1298
    %v1393 = vpop.f32.mrf.mxu0
    %v1394 = vadd.f32 0.0, %v1393
    %1395 = vmatmul.f32.gmra.mxu0 %v1301
    %v1396 = vpop.f32.mrf.mxu0
    %v1397 = vadd.f32 0.0, %v1396
    %1398 = vmatmul.f32.gmra.mxu0 %v1304
    %v1399 = vpop.f32.mrf.mxu0
    %v1400 = vadd.f32 0.0, %v1399
    %1401 = vmatmul.f32.gmra.mxu0 %v1307
    %v1402 = vpop.f32.mrf.mxu0
    %v1403 = vadd.f32 0.0, %v1402
    %1404 = vmatmul.f32.gmra.mxu0 %v1310
    %v1405 = vpop.f32.mrf.mxu0
    %v1406 = vadd.f32 0.0, %v1405
    %1407 = vmatmul.f32.gmra.mxu0 %v1313
    %v1408 = vpop.f32.mrf.mxu0
    %v1409 = vadd.f32 0.0, %v1408
    %1410 = vmatmul.f32.gmra.mxu0 %v1316
    %v1411 = vpop.f32.mrf.mxu0
    %v1412 = vadd.f32 0.0, %v1411
    %1413 = vmatmul.f32.gmra.mxu0 %v1319
    %v1414 = vpop.f32.mrf.mxu0
    %v1415 = vadd.f32 0.0, %v1414
    %1416 = vmatmul.f32.gmra.mxu0 %v1322
    %v1417 = vpop.f32.mrf.mxu0
    %v1418 = vadd.f32 0.0, %v1417
    %1419 = vmatmul.f32.gmra.mxu0 %v1325
    %v1420 = vpop.f32.mrf.mxu0
    %v1421 = vadd.f32 0.0, %v1420
    %1422 = vmatmul.f32.gmra.mxu0 %v1328
    %v1423 = vpop.f32.mrf.mxu0
    %v1424 = vadd.f32 0.0, %v1423
    %1425 = vdwg.mxu0
    %v1427 = vsel %vm1254, %v708, 0
    %v1430 = vsel %vm1254, %v711, 0
    %v1433 = vsel %vm1254, %v714, 0
    %v1436 = vsel %vm1254, %v717, 0
    %v1439 = vsel %vm1254, %v720, 0
    %v1442 = vsel %vm1254, %v723, 0
    %v1445 = vsel %vm1254, %v726, 0
    %v1448 = vsel %vm1254, %v729, 0
    %v1451 = vsel %vm1254, %v732, 0
    %v1454 = vsel %vm1254, %v735, 0
    %v1457 = vsel %vm1254, %v738, 0
    %v1460 = vsel %vm1254, %v741, 0
    %v1463 = vsel %vm1254, %v744, 0
    %v1466 = vsel %vm1254, %v747, 0
    %v1469 = vsel %vm1254, %v750, 0
    %v1472 = vsel %vm1254, %v753, 0
    %v1475 = vsel %vm1254, %v756, 0
    %v1478 = vsel %vm1254, %v759, 0
    %v1481 = vsel %vm1254, %v762, 0
    %v1484 = vsel %vm1254, %v765, 0
    %v1487 = vsel %vm1254, %v768, 0
    %v1490 = vsel %vm1254, %v771, 0
    %v1493 = vsel %vm1254, %v774, 0
    %v1496 = vsel %vm1254, %v777, 0
    %v1499 = vsel %vm1254, %v780, 0
    %v1502 = vsel %vm1330, %v782, 0
    %1504 = vmatpush.msra.mxu0 0.0
    %1505 = vmatpush.msra.mxu0 0.0
    %1506 = vmatpush.msra.mxu0 0.0
    %1507 = vmatpush.msra.mxu0 0.0
    %1508 = vmatpush.msra.mxu0 0.0
    %1509 = vmatpush.msra.mxu0 0.0
    %1510 = vmatpush.msra.mxu0 0.0
    %1511 = vmatpush.msra.mxu0 0.0
    %1512 = vmatpush.msra.mxu0 0.0
    %1513 = vmatpush.msra.mxu0 0.0
    %1514 = vmatpush.msra.mxu0 0.0
    %1515 = vmatpush.msra.mxu0 0.0
    %1516 = vmatpush.msra.mxu0 0.0
    %1517 = vmatpush.msra.mxu0 0.0
    %1518 = vmatpush.msra.mxu0 0.0
    %1519 = vmatpush.msra.mxu0 %v1502
    %1520 = vmatmul.f32.gmra.mxu0 %v1427
    %v1521 = vpop.f32.mrf.mxu0
    %v1522 = vadd.f32 %v1352, %v1521
    %1523 = vmatmul.f32.gmra.mxu0 %v1430
    %v1524 = vpop.f32.mrf.mxu0
    %v1525 = vadd.f32 %v1355, %v1524
    %1526 = vmatmul.f32.gmra.mxu0 %v1433
    %v1527 = vpop.f32.mrf.mxu0
    %v1528 = vadd.f32 %v1358, %v1527
    %1529 = vmatmul.f32.gmra.mxu0 %v1436
    %v1530 = vpop.f32.mrf.mxu0
    %v1531 = vadd.f32 %v1361, %v1530
    %1532 = vmatmul.f32.gmra.mxu0 %v1439
    %v1533 = vpop.f32.mrf.mxu0
    %v1534 = vadd.f32 %v1364, %v1533
    %1535 = vmatmul.f32.gmra.mxu0 %v1442
    %v1536 = vpop.f32.mrf.mxu0
    %v1537 = vadd.f32 %v1367, %v1536
    %1538 = vmatmul.f32.gmra.mxu0 %v1445
    %v1539 = vpop.f32.mrf.mxu0
    %v1540 = vadd.f32 %v1370, %v1539
    %1541 = vmatmul.f32.gmra.mxu0 %v1448
    %v1542 = vpop.f32.mrf.mxu0
    %v1543 = vadd.f32 %v1373, %v1542
    %1544 = vmatmul.f32.gmra.mxu0 %v1451
    %v1545 = vpop.f32.mrf.mxu0
    %v1546 = vadd.f32 %v1376, %v1545
    %1547 = vmatmul.f32.gmra.mxu0 %v1454
    %v1548 = vpop.f32.mrf.mxu0
    %v1549 = vadd.f32 %v1379, %v1548
    %1550 = vmatmul.f32.gmra.mxu0 %v1457
    %v1551 = vpop.f32.mrf.mxu0
    %v1552 = vadd.f32 %v1382, %v1551
    %1553 = vmatmul.f32.gmra.mxu0 %v1460
    %v1554 = vpop.f32.mrf.mxu0
    %v1555 = vadd.f32 %v1385, %v1554
    %1556 = vmatmul.f32.gmra.mxu0 %v1463
    %v1557 = vpop.f32.mrf.mxu0
    %v1558 = vadd.f32 %v1388, %v1557
    %1559 = vmatmul.f32.gmra.mxu0 %v1466
    %v1560 = vpop.f32.mrf.mxu0
    %v1561 = vadd.f32 %v1391, %v1560
    %1562 = vmatmul.f32.gmra.mxu0 %v1469
    %v1563 = vpop.f32.mrf.mxu0
    %v1564 = vadd.f32 %v1394, %v1563
    %1565 = vmatmul.f32.gmra.mxu0 %v1472
    %v1566 = vpop.f32.mrf.mxu0
    %v1567 = vadd.f32 %v1397, %v1566
    %1568 = vmatmul.f32.gmra.mxu0 %v1475
    %v1569 = vpop.f32.mrf.mxu0
    %v1570 = vadd.f32 %v1400, %v1569
    %1571 = vmatmul.f32.gmra.mxu0 %v1478
    %v1572 = vpop.f32.mrf.mxu0
    %v1573 = vadd.f32 %v1403, %v1572
    %1574 = vmatmul.f32.gmra.mxu0 %v1481
    %v1575 = vpop.f32.mrf.mxu0
    %v1576 = vadd.f32 %v1406, %v1575
    %1577 = vmatmul.f32.gmra.mxu0 %v1484
    %v1578 = vpop.f32.mrf.mxu0
    %v1579 = vadd.f32 %v1409, %v1578
    %1580 = vmatmul.f32.gmra.mxu0 %v1487
    %v1581 = vpop.f32.mrf.mxu0
    %v1582 = vadd.f32 %v1412, %v1581
    %1583 = vmatmul.f32.gmra.mxu0 %v1490
    %v1584 = vpop.f32.mrf.mxu0
    %v1585 = vadd.f32 %v1415, %v1584
    %1586 = vmatmul.f32.gmra.mxu0 %v1493
    %v1587 = vpop.f32.mrf.mxu0
    %v1588 = vadd.f32 %v1418, %v1587
    %1589 = vmatmul.f32.gmra.mxu0 %v1496
    %v1590 = vpop.f32.mrf.mxu0
    %v1591 = vadd.f32 %v1421, %v1590
    %1592 = vmatmul.f32.gmra.mxu0 %v1499
    %v1593 = vpop.f32.mrf.mxu0
    %v1594 = vadd.f32 %v1424, %v1593
    %1595 = vdwg.mxu0
    %s1596 = scalar_lea.vmem [#allocation2], 1600
    %v1597 = vld [vmem:[%s1596] sm:$0xff]
    %v1598 = vld [vmem:[%s1596 + $0x8] sm:$0xff]
    %v1599 = vld [vmem:[%s1596 + $0x10] sm:$0xff]
    %v1600 = vld [vmem:[%s1596 + $0x18] sm:$0xff]
    %v1601 = vld [vmem:[%s1596 + $0x20] sm:$0xff]
    %v1602 = vld [vmem:[%s1596 + $0x28] sm:$0xff]
    %v1603 = vld [vmem:[%s1596 + $0x30] sm:$0xff]
    %v1604 = vld [vmem:[%s1596 + $0x38] sm:$0xff]
    %v1605 = vld [vmem:[%s1596 + $0x40] sm:$0xff]
    %v1606 = vld [vmem:[%s1596 + $0x48] sm:$0xff]
    %v1607 = vld [vmem:[%s1596 + $0x50] sm:$0xff]
    %v1608 = vld [vmem:[%s1596 + $0x58] sm:$0xff]
    %v1609 = vld [vmem:[%s1596 + $0x60] sm:$0xff]
    %v1610 = vld [vmem:[%s1596 + $0x68] sm:$0xff]
    %v1611 = vld [vmem:[%s1596 + $0x70] sm:$0xff]
    %v1612 = vld [vmem:[%s1596 + $0x78] sm:$0xff]
    %v1613 = vld [vmem:[%s1596 + $0x80] sm:$0xff]
    %v1614 = vld [vmem:[%s1596 + $0x88] sm:$0xff]
    %v1615 = vld [vmem:[%s1596 + $0x90] sm:$0xff]
    %v1616 = vld [vmem:[%s1596 + $0x98] sm:$0xff]
    %v1617 = vld [vmem:[%s1596 + $0xa0] sm:$0xff]
    %v1618 = vld [vmem:[%s1596 + $0xa8] sm:$0xff]
    %v1619 = vld [vmem:[%s1596 + $0xb0] sm:$0xff]
    %v1620 = vld [vmem:[%s1596 + $0xb8] sm:$0xff]
    %v1621 = vld [vmem:[%s1596 + $0xc0] sm:$0xff]
    %v1622 = vld [vmem:[%s1596 + $0xc8] sm:$0xff]
    %v1623 = vld [vmem:[%s1596 + $0xd0] sm:$0xff]
    %v1624 = vld [vmem:[%s1596 + $0xd8] sm:$0xff]
    %v1625 = vld [vmem:[%s1596 + $0xe0] sm:$0xff]
    %v1626 = vld [vmem:[%s1596 + $0xe8] sm:$0xff]
    %v1627 = vld [vmem:[%s1596 + $0xf0] sm:$0xff]
    %v1628 = vld [vmem:[%s1596 + $0xf8] sm:$0xff]
    %v1629 = vld [vmem:[%s1596 + $0x100] sm:$0xff]
    %v1630 = vld [vmem:[%s1596 + $0x108] sm:$0xff]
    %v1631 = vld [vmem:[%s1596 + $0x110] sm:$0xff]
    %v1632 = vld [vmem:[%s1596 + $0x118] sm:$0xff]
    %v1633 = vld [vmem:[%s1596 + $0x120] sm:$0xff]
    %v1634 = vld [vmem:[%s1596 + $0x128] sm:$0xff]
    %v1635 = vld [vmem:[%s1596 + $0x130] sm:$0xff]
    %v1636 = vld [vmem:[%s1596 + $0x138] sm:$0xff]
    %v1637 = vld [vmem:[%s1596 + $0x140] sm:$0xff]
    %v1638 = vld [vmem:[%s1596 + $0x148] sm:$0xff]
    %v1639 = vld [vmem:[%s1596 + $0x150] sm:$0xff]
    %v1640 = vld [vmem:[%s1596 + $0x158] sm:$0xff]
    %v1641 = vld [vmem:[%s1596 + $0x160] sm:$0xff]
    %v1642 = vld [vmem:[%s1596 + $0x168] sm:$0xff]
    %v1643 = vld [vmem:[%s1596 + $0x170] sm:$0xff]
    %v1644 = vld [vmem:[%s1596 + $0x178] sm:$0xff]
    %v1645 = vld [vmem:[%s1596 + $0x180] sm:$0xff]
    %v1646 = vld [vmem:[%s1596 + $0x188] sm:$0xff]
    %v1647 = vld [vmem:[%s1596 + $0x190] sm:$0xff]
    %v1648 = vld [vmem:[%s1596 + $0x198] sm:$0xff]
    %v1649 = vld [vmem:[%s1596 + $0x1a0] sm:$0xff]
    %v1650 = vld [vmem:[%s1596 + $0x1a8] sm:$0xff]
    %v1651 = vld [vmem:[%s1596 + $0x1b0] sm:$0xff]
    %v1652 = vld [vmem:[%s1596 + $0x1b8] sm:$0xff]
    %v1653 = vld [vmem:[%s1596 + $0x1c0] sm:$0xff]
    %v1654 = vld [vmem:[%s1596 + $0x1c8] sm:$0xff]
    %v1655 = vld [vmem:[%s1596 + $0x1d0] sm:$0xff]
    %v1656 = vld [vmem:[%s1596 + $0x1d8] sm:$0xff]
    %v1657 = vld [vmem:[%s1596 + $0x1e0] sm:$0xff]
    %v1658 = vld [vmem:[%s1596 + $0x1e8] sm:$0xff]
    %v1659 = vld [vmem:[%s1596 + $0x1f0] sm:$0xff]
    %v1660 = vld [vmem:[%s1596 + $0x1f8] sm:$0xff]
    %v1661 = vld [vmem:[%s1596 + $0x200] sm:$0xff]
    %v1662 = vld [vmem:[%s1596 + $0x208] sm:$0xff]
    %v1663 = vld [vmem:[%s1596 + $0x210] sm:$0xff]
    %v1664 = vld [vmem:[%s1596 + $0x218] sm:$0xff]
    %v1665 = vld [vmem:[%s1596 + $0x220] sm:$0xff]
    %v1666 = vld [vmem:[%s1596 + $0x228] sm:$0xff]
    %v1667 = vld [vmem:[%s1596 + $0x230] sm:$0xff]
    %v1668 = vld [vmem:[%s1596 + $0x238] sm:$0xff]
    %v1669 = vld [vmem:[%s1596 + $0x240] sm:$0xff]
    %v1670 = vld [vmem:[%s1596 + $0x248] sm:$0xff]
    %v1671 = vld [vmem:[%s1596 + $0x250] sm:$0xff]
    %v1672 = vld [vmem:[%s1596 + $0x258] sm:$0xff]
    %v1673 = vld [vmem:[%s1596 + $0x260] sm:$0xff]
    %v1674 = vld [vmem:[%s1596 + $0x268] sm:$0xff]
    %v1675 = vld [vmem:[%s1596 + $0x270] sm:$0xff]
    %v1676 = vld [vmem:[%s1596 + $0x278] sm:$0xff]
    %v1677 = vld [vmem:[%s1596 + $0x280] sm:$0xff]
    %v1678 = vld [vmem:[%s1596 + $0x288] sm:$0xff]
    %v1679 = vld [vmem:[%s1596 + $0x290] sm:$0xff]
    %v1680 = vld [vmem:[%s1596 + $0x298] sm:$0xff]
    %v1681 = vld [vmem:[%s1596 + $0x2a0] sm:$0xff]
    %v1682 = vld [vmem:[%s1596 + $0x2a8] sm:$0xff]
    %v1683 = vld [vmem:[%s1596 + $0x2b0] sm:$0xff]
    %v1684 = vld [vmem:[%s1596 + $0x2b8] sm:$0xff]
    %v1685 = vld [vmem:[%s1596 + $0x2c0] sm:$0xff]
    %v1686 = vld [vmem:[%s1596 + $0x2c8] sm:$0xff]
    %v1687 = vld [vmem:[%s1596 + $0x2d0] sm:$0xff]
    %v1688 = vld [vmem:[%s1596 + $0x2d8] sm:$0xff]
    %v1689 = vld [vmem:[%s1596 + $0x2e0] sm:$0xff]
    %v1690 = vld [vmem:[%s1596 + $0x2e8] sm:$0xff]
    %v1691 = vld [vmem:[%s1596 + $0x2f0] sm:$0xff]
    %v1692 = vld [vmem:[%s1596 + $0x2f8] sm:$0xff]
    %v1693 = vld [vmem:[%s1596 + $0x300] sm:$0xff]
    %v1694 = vld [vmem:[%s1596 + $0x308] sm:$0xff]
    %v1695 = vld [vmem:[%s1596 + $0x310] sm:$0xff]
    %v1696 = vld [vmem:[%s1596 + $0x318] sm:$0xff]
    %1697 = vmatpush.msra.mxu0 %v265
    %1698 = vmatpush.msra.mxu0 %v264
    %1699 = vmatpush.msra.mxu0 %v263
    %1700 = vmatpush.msra.mxu0 %v262
    %1701 = vmatpush.msra.mxu0 %v261
    %1702 = vmatpush.msra.mxu0 %v260
    %1703 = vmatpush.msra.mxu0 %v259
    %1704 = vmatpush.msra.mxu0 %v258
    %1705 = vmatpush.msra.mxu0 %v257
    %1706 = vmatpush.msra.mxu0 %v256
    %1707 = vmatpush.msra.mxu0 %v255
    %1708 = vmatpush.msra.mxu0 %v254
    %1709 = vmatpush.msra.mxu0 %v253
    %1710 = vmatpush.msra.mxu0 %v252
    %1711 = vmatpush.msra.mxu0 %v251
    %1712 = vmatpush.msra.mxu0 %v250
    %1713 = vmatmul.f32.gmra.mxu0 %v1597
    %v1714 = vpop.f32.mrf.mxu0
    %v1715 = vadd.f32 0.0, %v1714
    %1716 = vmatmul.f32.gmra.mxu0 %v1601
    %v1717 = vpop.f32.mrf.mxu0
    %v1718 = vadd.f32 0.0, %v1717
    %1719 = vmatmul.f32.gmra.mxu0 %v1605
    %v1720 = vpop.f32.mrf.mxu0
    %v1721 = vadd.f32 0.0, %v1720
    %1722 = vmatmul.f32.gmra.mxu0 %v1609
    %v1723 = vpop.f32.mrf.mxu0
    %v1724 = vadd.f32 0.0, %v1723
    %1725 = vmatmul.f32.gmra.mxu0 %v1613
    %v1726 = vpop.f32.mrf.mxu0
    %v1727 = vadd.f32 0.0, %v1726
    %1728 = vmatmul.f32.gmra.mxu0 %v1617
    %v1729 = vpop.f32.mrf.mxu0
    %v1730 = vadd.f32 0.0, %v1729
    %1731 = vmatmul.f32.gmra.mxu0 %v1621
    %v1732 = vpop.f32.mrf.mxu0
    %v1733 = vadd.f32 0.0, %v1732
    %1734 = vmatmul.f32.gmra.mxu0 %v1625
    %v1735 = vpop.f32.mrf.mxu0
    %v1736 = vadd.f32 0.0, %v1735
    %1737 = vmatmul.f32.gmra.mxu0 %v1629
    %v1738 = vpop.f32.mrf.mxu0
    %v1739 = vadd.f32 0.0, %v1738
    %1740 = vmatmul.f32.gmra.mxu0 %v1633
    %v1741 = vpop.f32.mrf.mxu0
    %v1742 = vadd.f32 0.0, %v1741
    %1743 = vmatmul.f32.gmra.mxu0 %v1637
    %v1744 = vpop.f32.mrf.mxu0
    %v1745 = vadd.f32 0.0, %v1744
    %1746 = vmatmul.f32.gmra.mxu0 %v1641
    %v1747 = vpop.f32.mrf.mxu0
    %v1748 = vadd.f32 0.0, %v1747
    %1749 = vmatmul.f32.gmra.mxu0 %v1645
    %v1750 = vpop.f32.mrf.mxu0
    %v1751 = vadd.f32 0.0, %v1750
    %1752 = vmatmul.f32.gmra.mxu0 %v1649
    %v1753 = vpop.f32.mrf.mxu0
    %v1754 = vadd.f32 0.0, %v1753
    %1755 = vmatmul.f32.gmra.mxu0 %v1653
    %v1756 = vpop.f32.mrf.mxu0
    %v1757 = vadd.f32 0.0, %v1756
    %1758 = vmatmul.f32.gmra.mxu0 %v1657
    %v1759 = vpop.f32.mrf.mxu0
    %v1760 = vadd.f32 0.0, %v1759
    %1761 = vmatmul.f32.gmra.mxu0 %v1661
    %v1762 = vpop.f32.mrf.mxu0
    %v1763 = vadd.f32 0.0, %v1762
    %1764 = vmatmul.f32.gmra.mxu0 %v1665
    %v1765 = vpop.f32.mrf.mxu0
    %v1766 = vadd.f32 0.0, %v1765
    %1767 = vmatmul.f32.gmra.mxu0 %v1669
    %v1768 = vpop.f32.mrf.mxu0
    %v1769 = vadd.f32 0.0, %v1768
    %1770 = vmatmul.f32.gmra.mxu0 %v1673
    %v1771 = vpop.f32.mrf.mxu0
    %v1772 = vadd.f32 0.0, %v1771
    %1773 = vmatmul.f32.gmra.mxu0 %v1677
    %v1774 = vpop.f32.mrf.mxu0
    %v1775 = vadd.f32 0.0, %v1774
    %1776 = vmatmul.f32.gmra.mxu0 %v1681
    %v1777 = vpop.f32.mrf.mxu0
    %v1778 = vadd.f32 0.0, %v1777
    %1779 = vmatmul.f32.gmra.mxu0 %v1685
    %v1780 = vpop.f32.mrf.mxu0
    %v1781 = vadd.f32 0.0, %v1780
    %1782 = vmatmul.f32.gmra.mxu0 %v1689
    %v1783 = vpop.f32.mrf.mxu0
    %v1784 = vadd.f32 0.0, %v1783
    %1785 = vmatmul.f32.gmra.mxu0 %v1693
    %v1786 = vpop.f32.mrf.mxu0
    %v1787 = vadd.f32 0.0, %v1786
    %1788 = vdwg.mxu0
    %1789 = vmatpush.msra.mxu0 %v281
    %1790 = vmatpush.msra.mxu0 %v280
    %1791 = vmatpush.msra.mxu0 %v279
    %1792 = vmatpush.msra.mxu0 %v278
    %1793 = vmatpush.msra.mxu0 %v277
    %1794 = vmatpush.msra.mxu0 %v276
    %1795 = vmatpush.msra.mxu0 %v275
    %1796 = vmatpush.msra.mxu0 %v274
    %1797 = vmatpush.msra.mxu0 %v273
    %1798 = vmatpush.msra.mxu0 %v272
    %1799 = vmatpush.msra.mxu0 %v271
    %1800 = vmatpush.msra.mxu0 %v270
    %1801 = vmatpush.msra.mxu0 %v269
    %1802 = vmatpush.msra.mxu0 %v268
    %1803 = vmatpush.msra.mxu0 %v267
    %1804 = vmatpush.msra.mxu0 %v266
    %1805 = vmatmul.f32.gmra.mxu0 %v1598
    %v1806 = vpop.f32.mrf.mxu0
    %v1807 = vadd.f32 %v1715, %v1806
    %1808 = vmatmul.f32.gmra.mxu0 %v1602
    %v1809 = vpop.f32.mrf.mxu0
    %v1810 = vadd.f32 %v1718, %v1809
    %1811 = vmatmul.f32.gmra.mxu0 %v1606
    %v1812 = vpop.f32.mrf.mxu0
    %v1813 = vadd.f32 %v1721, %v1812
    %1814 = vmatmul.f32.gmra.mxu0 %v1610
    %v1815 = vpop.f32.mrf.mxu0
    %v1816 = vadd.f32 %v1724, %v1815
    %1817 = vmatmul.f32.gmra.mxu0 %v1614
    %v1818 = vpop.f32.mrf.mxu0
    %v1819 = vadd.f32 %v1727, %v1818
    %1820 = vmatmul.f32.gmra.mxu0 %v1618
    %v1821 = vpop.f32.mrf.mxu0
    %v1822 = vadd.f32 %v1730, %v1821
    %1823 = vmatmul.f32.gmra.mxu0 %v1622
    %v1824 = vpop.f32.mrf.mxu0
    %v1825 = vadd.f32 %v1733, %v1824
    %1826 = vmatmul.f32.gmra.mxu0 %v1626
    %v1827 = vpop.f32.mrf.mxu0
    %v1828 = vadd.f32 %v1736, %v1827
    %1829 = vmatmul.f32.gmra.mxu0 %v1630
    %v1830 = vpop.f32.mrf.mxu0
    %v1831 = vadd.f32 %v1739, %v1830
    %1832 = vmatmul.f32.gmra.mxu0 %v1634
    %v1833 = vpop.f32.mrf.mxu0
    %v1834 = vadd.f32 %v1742, %v1833
    %1835 = vmatmul.f32.gmra.mxu0 %v1638
    %v1836 = vpop.f32.mrf.mxu0
    %v1837 = vadd.f32 %v1745, %v1836
    %1838 = vmatmul.f32.gmra.mxu0 %v1642
    %v1839 = vpop.f32.mrf.mxu0
    %v1840 = vadd.f32 %v1748, %v1839
    %1841 = vmatmul.f32.gmra.mxu0 %v1646
    %v1842 = vpop.f32.mrf.mxu0
    %v1843 = vadd.f32 %v1751, %v1842
    %1844 = vmatmul.f32.gmra.mxu0 %v1650
    %v1845 = vpop.f32.mrf.mxu0
    %v1846 = vadd.f32 %v1754, %v1845
    %1847 = vmatmul.f32.gmra.mxu0 %v1654
    %v1848 = vpop.f32.mrf.mxu0
    %v1849 = vadd.f32 %v1757, %v1848
    %1850 = vmatmul.f32.gmra.mxu0 %v1658
    %v1851 = vpop.f32.mrf.mxu0
    %v1852 = vadd.f32 %v1760, %v1851
    %1853 = vmatmul.f32.gmra.mxu0 %v1662
    %v1854 = vpop.f32.mrf.mxu0
    %v1855 = vadd.f32 %v1763, %v1854
    %1856 = vmatmul.f32.gmra.mxu0 %v1666
    %v1857 = vpop.f32.mrf.mxu0
    %v1858 = vadd.f32 %v1766, %v1857
    %1859 = vmatmul.f32.gmra.mxu0 %v1670
    %v1860 = vpop.f32.mrf.mxu0
    %v1861 = vadd.f32 %v1769, %v1860
    %1862 = vmatmul.f32.gmra.mxu0 %v1674
    %v1863 = vpop.f32.mrf.mxu0
    %v1864 = vadd.f32 %v1772, %v1863
    %1865 = vmatmul.f32.gmra.mxu0 %v1678
    %v1866 = vpop.f32.mrf.mxu0
    %v1867 = vadd.f32 %v1775, %v1866
    %1868 = vmatmul.f32.gmra.mxu0 %v1682
    %v1869 = vpop.f32.mrf.mxu0
    %v1870 = vadd.f32 %v1778, %v1869
    %1871 = vmatmul.f32.gmra.mxu0 %v1686
    %v1872 = vpop.f32.mrf.mxu0
    %v1873 = vadd.f32 %v1781, %v1872
    %1874 = vmatmul.f32.gmra.mxu0 %v1690
    %v1875 = vpop.f32.mrf.mxu0
    %v1876 = vadd.f32 %v1784, %v1875
    %1877 = vmatmul.f32.gmra.mxu0 %v1694
    %v1878 = vpop.f32.mrf.mxu0
    %v1879 = vadd.f32 %v1787, %v1878
    %1880 = vdwg.mxu0
    %1881 = vmatpush.msra.mxu0 %v297
    %1882 = vmatpush.msra.mxu0 %v296
    %1883 = vmatpush.msra.mxu0 %v295
    %1884 = vmatpush.msra.mxu0 %v294
    %1885 = vmatpush.msra.mxu0 %v293
    %1886 = vmatpush.msra.mxu0 %v292
    %1887 = vmatpush.msra.mxu0 %v291
    %1888 = vmatpush.msra.mxu0 %v290
    %1889 = vmatpush.msra.mxu0 %v289
    %1890 = vmatpush.msra.mxu0 %v288
    %1891 = vmatpush.msra.mxu0 %v287
    %1892 = vmatpush.msra.mxu0 %v286
    %1893 = vmatpush.msra.mxu0 %v285
    %1894 = vmatpush.msra.mxu0 %v284
    %1895 = vmatpush.msra.mxu0 %v283
    %1896 = vmatpush.msra.mxu0 %v282
    %1897 = vmatmul.f32.gmra.mxu0 %v1599
    %v1898 = vpop.f32.mrf.mxu0
    %v1899 = vadd.f32 %v1807, %v1898
    %1900 = vmatmul.f32.gmra.mxu0 %v1603
    %v1901 = vpop.f32.mrf.mxu0
    %v1902 = vadd.f32 %v1810, %v1901
    %1903 = vmatmul.f32.gmra.mxu0 %v1607
    %v1904 = vpop.f32.mrf.mxu0
    %v1905 = vadd.f32 %v1813, %v1904
    %1906 = vmatmul.f32.gmra.mxu0 %v1611
    %v1907 = vpop.f32.mrf.mxu0
    %v1908 = vadd.f32 %v1816, %v1907
    %1909 = vmatmul.f32.gmra.mxu0 %v1615
    %v1910 = vpop.f32.mrf.mxu0
    %v1911 = vadd.f32 %v1819, %v1910
    %1912 = vmatmul.f32.gmra.mxu0 %v1619
    %v1913 = vpop.f32.mrf.mxu0
    %v1914 = vadd.f32 %v1822, %v1913
    %1915 = vmatmul.f32.gmra.mxu0 %v1623
    %v1916 = vpop.f32.mrf.mxu0
    %v1917 = vadd.f32 %v1825, %v1916
    %1918 = vmatmul.f32.gmra.mxu0 %v1627
    %v1919 = vpop.f32.mrf.mxu0
    %v1920 = vadd.f32 %v1828, %v1919
    %1921 = vmatmul.f32.gmra.mxu0 %v1631
    %v1922 = vpop.f32.mrf.mxu0
    %v1923 = vadd.f32 %v1831, %v1922
    %1924 = vmatmul.f32.gmra.mxu0 %v1635
    %v1925 = vpop.f32.mrf.mxu0
    %v1926 = vadd.f32 %v1834, %v1925
    %1927 = vmatmul.f32.gmra.mxu0 %v1639
    %v1928 = vpop.f32.mrf.mxu0
    %v1929 = vadd.f32 %v1837, %v1928
    %1930 = vmatmul.f32.gmra.mxu0 %v1643
    %v1931 = vpop.f32.mrf.mxu0
    %v1932 = vadd.f32 %v1840, %v1931
    %1933 = vmatmul.f32.gmra.mxu0 %v1647
    %v1934 = vpop.f32.mrf.mxu0
    %v1935 = vadd.f32 %v1843, %v1934
    %1936 = vmatmul.f32.gmra.mxu0 %v1651
    %v1937 = vpop.f32.mrf.mxu0
    %v1938 = vadd.f32 %v1846, %v1937
    %1939 = vmatmul.f32.gmra.mxu0 %v1655
    %v1940 = vpop.f32.mrf.mxu0
    %v1941 = vadd.f32 %v1849, %v1940
    %1942 = vmatmul.f32.gmra.mxu0 %v1659
    %v1943 = vpop.f32.mrf.mxu0
    %v1944 = vadd.f32 %v1852, %v1943
    %1945 = vmatmul.f32.gmra.mxu0 %v1663
    %v1946 = vpop.f32.mrf.mxu0
    %v1947 = vadd.f32 %v1855, %v1946
    %1948 = vmatmul.f32.gmra.mxu0 %v1667
    %v1949 = vpop.f32.mrf.mxu0
    %v1950 = vadd.f32 %v1858, %v1949
    %1951 = vmatmul.f32.gmra.mxu0 %v1671
    %v1952 = vpop.f32.mrf.mxu0
    %v1953 = vadd.f32 %v1861, %v1952
    %1954 = vmatmul.f32.gmra.mxu0 %v1675
    %v1955 = vpop.f32.mrf.mxu0
    %v1956 = vadd.f32 %v1864, %v1955
    %1957 = vmatmul.f32.gmra.mxu0 %v1679
    %v1958 = vpop.f32.mrf.mxu0
    %v1959 = vadd.f32 %v1867, %v1958
    %1960 = vmatmul.f32.gmra.mxu0 %v1683
    %v1961 = vpop.f32.mrf.mxu0
    %v1962 = vadd.f32 %v1870, %v1961
    %1963 = vmatmul.f32.gmra.mxu0 %v1687
    %v1964 = vpop.f32.mrf.mxu0
    %v1965 = vadd.f32 %v1873, %v1964
    %1966 = vmatmul.f32.gmra.mxu0 %v1691
    %v1967 = vpop.f32.mrf.mxu0
    %v1968 = vadd.f32 %v1876, %v1967
    %1969 = vmatmul.f32.gmra.mxu0 %v1695
    %v1970 = vpop.f32.mrf.mxu0
    %v1971 = vadd.f32 %v1879, %v1970
    %1972 = vdwg.mxu0
    %1973 = vmatpush.msra.mxu0 %v313
    %1974 = vmatpush.msra.mxu0 %v312
    %1975 = vmatpush.msra.mxu0 %v311
    %1976 = vmatpush.msra.mxu0 %v310
    %1977 = vmatpush.msra.mxu0 %v309
    %1978 = vmatpush.msra.mxu0 %v308
    %1979 = vmatpush.msra.mxu0 %v307
    %1980 = vmatpush.msra.mxu0 %v306
    %1981 = vmatpush.msra.mxu0 %v305
    %1982 = vmatpush.msra.mxu0 %v304
    %1983 = vmatpush.msra.mxu0 %v303
    %1984 = vmatpush.msra.mxu0 %v302
    %1985 = vmatpush.msra.mxu0 %v301
    %1986 = vmatpush.msra.mxu0 %v300
    %1987 = vmatpush.msra.mxu0 %v299
    %1988 = vmatpush.msra.mxu0 %v298
    %1989 = vmatmul.f32.gmra.mxu0 %v1600
    %v1990 = vpop.f32.mrf.mxu0
    %v1991 = vadd.f32 %v1899, %v1990
    %1992 = vmatmul.f32.gmra.mxu0 %v1604
    %v1993 = vpop.f32.mrf.mxu0
    %v1994 = vadd.f32 %v1902, %v1993
    %1995 = vmatmul.f32.gmra.mxu0 %v1608
    %v1996 = vpop.f32.mrf.mxu0
    %v1997 = vadd.f32 %v1905, %v1996
    %1998 = vmatmul.f32.gmra.mxu0 %v1612
    %v1999 = vpop.f32.mrf.mxu0
    %v2000 = vadd.f32 %v1908, %v1999
    %2001 = vmatmul.f32.gmra.mxu0 %v1616
    %v2002 = vpop.f32.mrf.mxu0
    %v2003 = vadd.f32 %v1911, %v2002
    %2004 = vmatmul.f32.gmra.mxu0 %v1620
    %v2005 = vpop.f32.mrf.mxu0
    %v2006 = vadd.f32 %v1914, %v2005
    %2007 = vmatmul.f32.gmra.mxu0 %v1624
    %v2008 = vpop.f32.mrf.mxu0
    %v2009 = vadd.f32 %v1917, %v2008
    %2010 = vmatmul.f32.gmra.mxu0 %v1628
    %v2011 = vpop.f32.mrf.mxu0
    %v2012 = vadd.f32 %v1920, %v2011
    %2013 = vmatmul.f32.gmra.mxu0 %v1632
    %v2014 = vpop.f32.mrf.mxu0
    %v2015 = vadd.f32 %v1923, %v2014
    %2016 = vmatmul.f32.gmra.mxu0 %v1636
    %v2017 = vpop.f32.mrf.mxu0
    %v2018 = vadd.f32 %v1926, %v2017
    %2019 = vmatmul.f32.gmra.mxu0 %v1640
    %v2020 = vpop.f32.mrf.mxu0
    %v2021 = vadd.f32 %v1929, %v2020
    %2022 = vmatmul.f32.gmra.mxu0 %v1644
    %v2023 = vpop.f32.mrf.mxu0
    %v2024 = vadd.f32 %v1932, %v2023
    %2025 = vmatmul.f32.gmra.mxu0 %v1648
    %v2026 = vpop.f32.mrf.mxu0
    %v2027 = vadd.f32 %v1935, %v2026
    %2028 = vmatmul.f32.gmra.mxu0 %v1652
    %v2029 = vpop.f32.mrf.mxu0
    %v2030 = vadd.f32 %v1938, %v2029
    %2031 = vmatmul.f32.gmra.mxu0 %v1656
    %v2032 = vpop.f32.mrf.mxu0
    %v2033 = vadd.f32 %v1941, %v2032
    %2034 = vmatmul.f32.gmra.mxu0 %v1660
    %v2035 = vpop.f32.mrf.mxu0
    %v2036 = vadd.f32 %v1944, %v2035
    %2037 = vmatmul.f32.gmra.mxu0 %v1664
    %v2038 = vpop.f32.mrf.mxu0
    %v2039 = vadd.f32 %v1947, %v2038
    %2040 = vmatmul.f32.gmra.mxu0 %v1668
    %v2041 = vpop.f32.mrf.mxu0
    %v2042 = vadd.f32 %v1950, %v2041
    %2043 = vmatmul.f32.gmra.mxu0 %v1672
    %v2044 = vpop.f32.mrf.mxu0
    %v2045 = vadd.f32 %v1953, %v2044
    %2046 = vmatmul.f32.gmra.mxu0 %v1676
    %v2047 = vpop.f32.mrf.mxu0
    %v2048 = vadd.f32 %v1956, %v2047
    %2049 = vmatmul.f32.gmra.mxu0 %v1680
    %v2050 = vpop.f32.mrf.mxu0
    %v2051 = vadd.f32 %v1959, %v2050
    %2052 = vmatmul.f32.gmra.mxu0 %v1684
    %v2053 = vpop.f32.mrf.mxu0
    %v2054 = vadd.f32 %v1962, %v2053
    %2055 = vmatmul.f32.gmra.mxu0 %v1688
    %v2056 = vpop.f32.mrf.mxu0
    %v2057 = vadd.f32 %v1965, %v2056
    %2058 = vmatmul.f32.gmra.mxu0 %v1692
    %v2059 = vpop.f32.mrf.mxu0
    %v2060 = vadd.f32 %v1968, %v2059
    %2061 = vmatmul.f32.gmra.mxu0 %v1696
    %v2062 = vpop.f32.mrf.mxu0
    %v2063 = vadd.f32 %v1971, %v2062
    %2064 = vdwg.mxu0
    %s2065 = scalar_lea.vmem %s2, 8
    %v2066 = vld [vmem:[%s2065] sm:$0x7]
    %v2068 = vsel %vm1254, %v1991, 0
    %v2071 = vsel %vm1254, %v1994, 0
    %v2074 = vsel %vm1254, %v1997, 0
    %v2077 = vsel %vm1254, %v2000, 0
    %v2080 = vsel %vm1254, %v2003, 0
    %v2083 = vsel %vm1254, %v2006, 0
    %v2086 = vsel %vm1254, %v2009, 0
    %v2089 = vsel %vm1254, %v2012, 0
    %v2092 = vsel %vm1254, %v2015, 0
    %v2095 = vsel %vm1254, %v2018, 0
    %v2098 = vsel %vm1254, %v2021, 0
    %v2101 = vsel %vm1254, %v2024, 0
    %v2104 = vsel %vm1254, %v2027, 0
    %v2107 = vsel %vm1254, %v2030, 0
    %v2110 = vsel %vm1254, %v2033, 0
    %v2113 = vsel %vm1254, %v2036, 0
    %v2116 = vsel %vm1254, %v2039, 0
    %v2119 = vsel %vm1254, %v2042, 0
    %v2122 = vsel %vm1254, %v2045, 0
    %v2125 = vsel %vm1254, %v2048, 0
    %v2128 = vsel %vm1254, %v2051, 0
    %v2131 = vsel %vm1254, %v2054, 0
    %v2134 = vsel %vm1254, %v2057, 0
    %v2137 = vsel %vm1254, %v2060, 0
    %v2140 = vsel %vm1254, %v2063, 0
    %v2143 = vsel %vm1330, %v2066, 0
    %2145 = vmatpush.msra.mxu0 0.0
    %2146 = vmatpush.msra.mxu0 0.0
    %2147 = vmatpush.msra.mxu0 0.0
    %2148 = vmatpush.msra.mxu0 0.0
    %2149 = vmatpush.msra.mxu0 0.0
    %2150 = vmatpush.msra.mxu0 0.0
    %2151 = vmatpush.msra.mxu0 0.0
    %2152 = vmatpush.msra.mxu0 0.0
    %2153 = vmatpush.msra.mxu0 0.0
    %2154 = vmatpush.msra.mxu0 0.0
    %2155 = vmatpush.msra.mxu0 0.0
    %2156 = vmatpush.msra.mxu0 0.0
    %2157 = vmatpush.msra.mxu0 0.0
    %2158 = vmatpush.msra.mxu0 0.0
    %2159 = vmatpush.msra.mxu0 0.0
    %2160 = vmatpush.msra.mxu0 %v2143
    %2161 = vmatmul.f32.gmra.mxu0 %v2068
    %v2162 = vpop.f32.mrf.mxu0
    %v2163 = vadd.f32 0.0, %v2162
    %2164 = vmatmul.f32.gmra.mxu0 %v2071
    %v2165 = vpop.f32.mrf.mxu0
    %v2166 = vadd.f32 0.0, %v2165
    %2167 = vmatmul.f32.gmra.mxu0 %v2074
    %v2168 = vpop.f32.mrf.mxu0
    %v2169 = vadd.f32 0.0, %v2168
    %2170 = vmatmul.f32.gmra.mxu0 %v2077
    %v2171 = vpop.f32.mrf.mxu0
    %v2172 = vadd.f32 0.0, %v2171
    %2173 = vmatmul.f32.gmra.mxu0 %v2080
    %v2174 = vpop.f32.mrf.mxu0
    %v2175 = vadd.f32 0.0, %v2174
    %2176 = vmatmul.f32.gmra.mxu0 %v2083
    %v2177 = vpop.f32.mrf.mxu0
    %v2178 = vadd.f32 0.0, %v2177
    %2179 = vmatmul.f32.gmra.mxu0 %v2086
    %v2180 = vpop.f32.mrf.mxu0
    %v2181 = vadd.f32 0.0, %v2180
    %2182 = vmatmul.f32.gmra.mxu0 %v2089
    %v2183 = vpop.f32.mrf.mxu0
    %v2184 = vadd.f32 0.0, %v2183
    %2185 = vmatmul.f32.gmra.mxu0 %v2092
    %v2186 = vpop.f32.mrf.mxu0
    %v2187 = vadd.f32 0.0, %v2186
    %2188 = vmatmul.f32.gmra.mxu0 %v2095
    %v2189 = vpop.f32.mrf.mxu0
    %v2190 = vadd.f32 0.0, %v2189
    %2191 = vmatmul.f32.gmra.mxu0 %v2098
    %v2192 = vpop.f32.mrf.mxu0
    %v2193 = vadd.f32 0.0, %v2192
    %2194 = vmatmul.f32.gmra.mxu0 %v2101
    %v2195 = vpop.f32.mrf.mxu0
    %v2196 = vadd.f32 0.0, %v2195
    %2197 = vmatmul.f32.gmra.mxu0 %v2104
    %v2198 = vpop.f32.mrf.mxu0
    %v2199 = vadd.f32 0.0, %v2198
    %2200 = vmatmul.f32.gmra.mxu0 %v2107
    %v2201 = vpop.f32.mrf.mxu0
    %v2202 = vadd.f32 0.0, %v2201
    %2203 = vmatmul.f32.gmra.mxu0 %v2110
    %v2204 = vpop.f32.mrf.mxu0
    %v2205 = vadd.f32 0.0, %v2204
    %2206 = vmatmul.f32.gmra.mxu0 %v2113
    %v2207 = vpop.f32.mrf.mxu0
    %v2208 = vadd.f32 0.0, %v2207
    %2209 = vmatmul.f32.gmra.mxu0 %v2116
    %v2210 = vpop.f32.mrf.mxu0
    %v2211 = vadd.f32 0.0, %v2210
    %2212 = vmatmul.f32.gmra.mxu0 %v2119
    %v2213 = vpop.f32.mrf.mxu0
    %v2214 = vadd.f32 0.0, %v2213
    %2215 = vmatmul.f32.gmra.mxu0 %v2122
    %v2216 = vpop.f32.mrf.mxu0
    %v2217 = vadd.f32 0.0, %v2216
    %2218 = vmatmul.f32.gmra.mxu0 %v2125
    %v2219 = vpop.f32.mrf.mxu0
    %v2220 = vadd.f32 0.0, %v2219
    %2221 = vmatmul.f32.gmra.mxu0 %v2128
    %v2222 = vpop.f32.mrf.mxu0
    %v2223 = vadd.f32 0.0, %v2222
    %2224 = vmatmul.f32.gmra.mxu0 %v2131
    %v2225 = vpop.f32.mrf.mxu0
    %v2226 = vadd.f32 0.0, %v2225
    %2227 = vmatmul.f32.gmra.mxu0 %v2134
    %v2228 = vpop.f32.mrf.mxu0
    %v2229 = vadd.f32 0.0, %v2228
    %2230 = vmatmul.f32.gmra.mxu0 %v2137
    %v2231 = vpop.f32.mrf.mxu0
    %v2232 = vadd.f32 0.0, %v2231
    %2233 = vmatmul.f32.gmra.mxu0 %v2140
    %v2234 = vpop.f32.mrf.mxu0
    %v2235 = vadd.f32 0.0, %v2234
    %2236 = vdwg.mxu0
    %v2237 = vadd.f32 %v1522, %v2163
    %v2238 = vadd.f32 %v1525, %v2166
    %v2239 = vadd.f32 %v1528, %v2169
    %v2240 = vadd.f32 %v1531, %v2172
    %v2241 = vadd.f32 %v1534, %v2175
    %v2242 = vadd.f32 %v1537, %v2178
    %v2243 = vadd.f32 %v1540, %v2181
    %v2244 = vadd.f32 %v1543, %v2184
    %v2245 = vadd.f32 %v1546, %v2187
    %v2246 = vadd.f32 %v1549, %v2190
    %v2247 = vadd.f32 %v1552, %v2193
    %v2248 = vadd.f32 %v1555, %v2196
    %v2249 = vadd.f32 %v1558, %v2199
    %v2250 = vadd.f32 %v1561, %v2202
    %v2251 = vadd.f32 %v1564, %v2205
    %v2252 = vadd.f32 %v1567, %v2208
    %v2253 = vadd.f32 %v1570, %v2211
    %v2254 = vadd.f32 %v1573, %v2214
    %v2255 = vadd.f32 %v1576, %v2217
    %v2256 = vadd.f32 %v1579, %v2220
    %v2257 = vadd.f32 %v1582, %v2223
    %v2258 = vadd.f32 %v1585, %v2226
    %v2259 = vadd.f32 %v1588, %v2229
    %v2260 = vadd.f32 %v1591, %v2232
    %v2261 = vadd.f32 %v1594, %v2235
    %s2262 = scalar_lea.vmem [#allocation2], 2400
    %v2263 = vld [vmem:[%s2262] sm:$0xff]
    %v2264 = vld [vmem:[%s2262 + $0x8] sm:$0xff]
    %v2265 = vld [vmem:[%s2262 + $0x10] sm:$0xff]
    %v2266 = vld [vmem:[%s2262 + $0x18] sm:$0xff]
    %v2267 = vld [vmem:[%s2262 + $0x20] sm:$0xff]
    %v2268 = vld [vmem:[%s2262 + $0x28] sm:$0xff]
    %v2269 = vld [vmem:[%s2262 + $0x30] sm:$0xff]
    %v2270 = vld [vmem:[%s2262 + $0x38] sm:$0xff]
    %v2271 = vld [vmem:[%s2262 + $0x40] sm:$0xff]
    %v2272 = vld [vmem:[%s2262 + $0x48] sm:$0xff]
    %v2273 = vld [vmem:[%s2262 + $0x50] sm:$0xff]
    %v2274 = vld [vmem:[%s2262 + $0x58] sm:$0xff]
    %v2275 = vld [vmem:[%s2262 + $0x60] sm:$0xff]
    %v2276 = vld [vmem:[%s2262 + $0x68] sm:$0xff]
    %v2277 = vld [vmem:[%s2262 + $0x70] sm:$0xff]
    %v2278 = vld [vmem:[%s2262 + $0x78] sm:$0xff]
    %v2279 = vld [vmem:[%s2262 + $0x80] sm:$0xff]
    %v2280 = vld [vmem:[%s2262 + $0x88] sm:$0xff]
    %v2281 = vld [vmem:[%s2262 + $0x90] sm:$0xff]
    %v2282 = vld [vmem:[%s2262 + $0x98] sm:$0xff]
    %v2283 = vld [vmem:[%s2262 + $0xa0] sm:$0xff]
    %v2284 = vld [vmem:[%s2262 + $0xa8] sm:$0xff]
    %v2285 = vld [vmem:[%s2262 + $0xb0] sm:$0xff]
    %v2286 = vld [vmem:[%s2262 + $0xb8] sm:$0xff]
    %v2287 = vld [vmem:[%s2262 + $0xc0] sm:$0xff]
    %v2288 = vld [vmem:[%s2262 + $0xc8] sm:$0xff]
    %v2289 = vld [vmem:[%s2262 + $0xd0] sm:$0xff]
    %v2290 = vld [vmem:[%s2262 + $0xd8] sm:$0xff]
    %v2291 = vld [vmem:[%s2262 + $0xe0] sm:$0xff]
    %v2292 = vld [vmem:[%s2262 + $0xe8] sm:$0xff]
    %v2293 = vld [vmem:[%s2262 + $0xf0] sm:$0xff]
    %v2294 = vld [vmem:[%s2262 + $0xf8] sm:$0xff]
    %v2295 = vld [vmem:[%s2262 + $0x100] sm:$0xff]
    %v2296 = vld [vmem:[%s2262 + $0x108] sm:$0xff]
    %v2297 = vld [vmem:[%s2262 + $0x110] sm:$0xff]
    %v2298 = vld [vmem:[%s2262 + $0x118] sm:$0xff]
    %v2299 = vld [vmem:[%s2262 + $0x120] sm:$0xff]
    %v2300 = vld [vmem:[%s2262 + $0x128] sm:$0xff]
    %v2301 = vld [vmem:[%s2262 + $0x130] sm:$0xff]
    %v2302 = vld [vmem:[%s2262 + $0x138] sm:$0xff]
    %v2303 = vld [vmem:[%s2262 + $0x140] sm:$0xff]
    %v2304 = vld [vmem:[%s2262 + $0x148] sm:$0xff]
    %v2305 = vld [vmem:[%s2262 + $0x150] sm:$0xff]
    %v2306 = vld [vmem:[%s2262 + $0x158] sm:$0xff]
    %v2307 = vld [vmem:[%s2262 + $0x160] sm:$0xff]
    %v2308 = vld [vmem:[%s2262 + $0x168] sm:$0xff]
    %v2309 = vld [vmem:[%s2262 + $0x170] sm:$0xff]
    %v2310 = vld [vmem:[%s2262 + $0x178] sm:$0xff]
    %v2311 = vld [vmem:[%s2262 + $0x180] sm:$0xff]
    %v2312 = vld [vmem:[%s2262 + $0x188] sm:$0xff]
    %v2313 = vld [vmem:[%s2262 + $0x190] sm:$0xff]
    %v2314 = vld [vmem:[%s2262 + $0x198] sm:$0xff]
    %v2315 = vld [vmem:[%s2262 + $0x1a0] sm:$0xff]
    %v2316 = vld [vmem:[%s2262 + $0x1a8] sm:$0xff]
    %v2317 = vld [vmem:[%s2262 + $0x1b0] sm:$0xff]
    %v2318 = vld [vmem:[%s2262 + $0x1b8] sm:$0xff]
    %v2319 = vld [vmem:[%s2262 + $0x1c0] sm:$0xff]
    %v2320 = vld [vmem:[%s2262 + $0x1c8] sm:$0xff]
    %v2321 = vld [vmem:[%s2262 + $0x1d0] sm:$0xff]
    %v2322 = vld [vmem:[%s2262 + $0x1d8] sm:$0xff]
    %v2323 = vld [vmem:[%s2262 + $0x1e0] sm:$0xff]
    %v2324 = vld [vmem:[%s2262 + $0x1e8] sm:$0xff]
    %v2325 = vld [vmem:[%s2262 + $0x1f0] sm:$0xff]
    %v2326 = vld [vmem:[%s2262 + $0x1f8] sm:$0xff]
    %v2327 = vld [vmem:[%s2262 + $0x200] sm:$0xff]
    %v2328 = vld [vmem:[%s2262 + $0x208] sm:$0xff]
    %v2329 = vld [vmem:[%s2262 + $0x210] sm:$0xff]
    %v2330 = vld [vmem:[%s2262 + $0x218] sm:$0xff]
    %v2331 = vld [vmem:[%s2262 + $0x220] sm:$0xff]
    %v2332 = vld [vmem:[%s2262 + $0x228] sm:$0xff]
    %v2333 = vld [vmem:[%s2262 + $0x230] sm:$0xff]
    %v2334 = vld [vmem:[%s2262 + $0x238] sm:$0xff]
    %v2335 = vld [vmem:[%s2262 + $0x240] sm:$0xff]
    %v2336 = vld [vmem:[%s2262 + $0x248] sm:$0xff]
    %v2337 = vld [vmem:[%s2262 + $0x250] sm:$0xff]
    %v2338 = vld [vmem:[%s2262 + $0x258] sm:$0xff]
    %v2339 = vld [vmem:[%s2262 + $0x260] sm:$0xff]
    %v2340 = vld [vmem:[%s2262 + $0x268] sm:$0xff]
    %v2341 = vld [vmem:[%s2262 + $0x270] sm:$0xff]
    %v2342 = vld [vmem:[%s2262 + $0x278] sm:$0xff]
    %v2343 = vld [vmem:[%s2262 + $0x280] sm:$0xff]
    %v2344 = vld [vmem:[%s2262 + $0x288] sm:$0xff]
    %v2345 = vld [vmem:[%s2262 + $0x290] sm:$0xff]
    %v2346 = vld [vmem:[%s2262 + $0x298] sm:$0xff]
    %v2347 = vld [vmem:[%s2262 + $0x2a0] sm:$0xff]
    %v2348 = vld [vmem:[%s2262 + $0x2a8] sm:$0xff]
    %v2349 = vld [vmem:[%s2262 + $0x2b0] sm:$0xff]
    %v2350 = vld [vmem:[%s2262 + $0x2b8] sm:$0xff]
    %v2351 = vld [vmem:[%s2262 + $0x2c0] sm:$0xff]
    %v2352 = vld [vmem:[%s2262 + $0x2c8] sm:$0xff]
    %v2353 = vld [vmem:[%s2262 + $0x2d0] sm:$0xff]
    %v2354 = vld [vmem:[%s2262 + $0x2d8] sm:$0xff]
    %v2355 = vld [vmem:[%s2262 + $0x2e0] sm:$0xff]
    %v2356 = vld [vmem:[%s2262 + $0x2e8] sm:$0xff]
    %v2357 = vld [vmem:[%s2262 + $0x2f0] sm:$0xff]
    %v2358 = vld [vmem:[%s2262 + $0x2f8] sm:$0xff]
    %v2359 = vld [vmem:[%s2262 + $0x300] sm:$0xff]
    %v2360 = vld [vmem:[%s2262 + $0x308] sm:$0xff]
    %v2361 = vld [vmem:[%s2262 + $0x310] sm:$0xff]
    %v2362 = vld [vmem:[%s2262 + $0x318] sm:$0xff]
    %2363 = vmatpush.msra.mxu0 %v265
    %2364 = vmatpush.msra.mxu0 %v264
    %2365 = vmatpush.msra.mxu0 %v263
    %2366 = vmatpush.msra.mxu0 %v262
    %2367 = vmatpush.msra.mxu0 %v261
    %2368 = vmatpush.msra.mxu0 %v260
    %2369 = vmatpush.msra.mxu0 %v259
    %2370 = vmatpush.msra.mxu0 %v258
    %2371 = vmatpush.msra.mxu0 %v257
    %2372 = vmatpush.msra.mxu0 %v256
    %2373 = vmatpush.msra.mxu0 %v255
    %2374 = vmatpush.msra.mxu0 %v254
    %2375 = vmatpush.msra.mxu0 %v253
    %2376 = vmatpush.msra.mxu0 %v252
    %2377 = vmatpush.msra.mxu0 %v251
    %2378 = vmatpush.msra.mxu0 %v250
    %2379 = vmatmul.f32.gmra.mxu0 %v2263
    %v2380 = vpop.f32.mrf.mxu0
    %v2381 = vadd.f32 0.0, %v2380
    %2382 = vmatmul.f32.gmra.mxu0 %v2267
    %v2383 = vpop.f32.mrf.mxu0
    %v2384 = vadd.f32 0.0, %v2383
    %2385 = vmatmul.f32.gmra.mxu0 %v2271
    %v2386 = vpop.f32.mrf.mxu0
    %v2387 = vadd.f32 0.0, %v2386
    %2388 = vmatmul.f32.gmra.mxu0 %v2275
    %v2389 = vpop.f32.mrf.mxu0
    %v2390 = vadd.f32 0.0, %v2389
    %2391 = vmatmul.f32.gmra.mxu0 %v2279
    %v2392 = vpop.f32.mrf.mxu0
    %v2393 = vadd.f32 0.0, %v2392
    %2394 = vmatmul.f32.gmra.mxu0 %v2283
    %v2395 = vpop.f32.mrf.mxu0
    %v2396 = vadd.f32 0.0, %v2395
    %2397 = vmatmul.f32.gmra.mxu0 %v2287
    %v2398 = vpop.f32.mrf.mxu0
    %v2399 = vadd.f32 0.0, %v2398
    %2400 = vmatmul.f32.gmra.mxu0 %v2291
    %v2401 = vpop.f32.mrf.mxu0
    %v2402 = vadd.f32 0.0, %v2401
    %2403 = vmatmul.f32.gmra.mxu0 %v2295
    %v2404 = vpop.f32.mrf.mxu0
    %v2405 = vadd.f32 0.0, %v2404
    %2406 = vmatmul.f32.gmra.mxu0 %v2299
    %v2407 = vpop.f32.mrf.mxu0
    %v2408 = vadd.f32 0.0, %v2407
    %2409 = vmatmul.f32.gmra.mxu0 %v2303
    %v2410 = vpop.f32.mrf.mxu0
    %v2411 = vadd.f32 0.0, %v2410
    %2412 = vmatmul.f32.gmra.mxu0 %v2307
    %v2413 = vpop.f32.mrf.mxu0
    %v2414 = vadd.f32 0.0, %v2413
    %2415 = vmatmul.f32.gmra.mxu0 %v2311
    %v2416 = vpop.f32.mrf.mxu0
    %v2417 = vadd.f32 0.0, %v2416
    %2418 = vmatmul.f32.gmra.mxu0 %v2315
    %v2419 = vpop.f32.mrf.mxu0
    %v2420 = vadd.f32 0.0, %v2419
    %2421 = vmatmul.f32.gmra.mxu0 %v2319
    %v2422 = vpop.f32.mrf.mxu0
    %v2423 = vadd.f32 0.0, %v2422
    %2424 = vmatmul.f32.gmra.mxu0 %v2323
    %v2425 = vpop.f32.mrf.mxu0
    %v2426 = vadd.f32 0.0, %v2425
    %2427 = vmatmul.f32.gmra.mxu0 %v2327
    %v2428 = vpop.f32.mrf.mxu0
    %v2429 = vadd.f32 0.0, %v2428
    %2430 = vmatmul.f32.gmra.mxu0 %v2331
    %v2431 = vpop.f32.mrf.mxu0
    %v2432 = vadd.f32 0.0, %v2431
    %2433 = vmatmul.f32.gmra.mxu0 %v2335
    %v2434 = vpop.f32.mrf.mxu0
    %v2435 = vadd.f32 0.0, %v2434
    %2436 = vmatmul.f32.gmra.mxu0 %v2339
    %v2437 = vpop.f32.mrf.mxu0
    %v2438 = vadd.f32 0.0, %v2437
    %2439 = vmatmul.f32.gmra.mxu0 %v2343
    %v2440 = vpop.f32.mrf.mxu0
    %v2441 = vadd.f32 0.0, %v2440
    %2442 = vmatmul.f32.gmra.mxu0 %v2347
    %v2443 = vpop.f32.mrf.mxu0
    %v2444 = vadd.f32 0.0, %v2443
    %2445 = vmatmul.f32.gmra.mxu0 %v2351
    %v2446 = vpop.f32.mrf.mxu0
    %v2447 = vadd.f32 0.0, %v2446
    %2448 = vmatmul.f32.gmra.mxu0 %v2355
    %v2449 = vpop.f32.mrf.mxu0
    %v2450 = vadd.f32 0.0, %v2449
    %2451 = vmatmul.f32.gmra.mxu0 %v2359
    %v2452 = vpop.f32.mrf.mxu0
    %v2453 = vadd.f32 0.0, %v2452
    %2454 = vdwg.mxu0
    %2455 = vmatpush.msra.mxu0 %v281
    %2456 = vmatpush.msra.mxu0 %v280
    %2457 = vmatpush.msra.mxu0 %v279
    %2458 = vmatpush.msra.mxu0 %v278
    %2459 = vmatpush.msra.mxu0 %v277
    %2460 = vmatpush.msra.mxu0 %v276
    %2461 = vmatpush.msra.mxu0 %v275
    %2462 = vmatpush.msra.mxu0 %v274
    %2463 = vmatpush.msra.mxu0 %v273
    %2464 = vmatpush.msra.mxu0 %v272
    %2465 = vmatpush.msra.mxu0 %v271
    %2466 = vmatpush.msra.mxu0 %v270
    %2467 = vmatpush.msra.mxu0 %v269
    %2468 = vmatpush.msra.mxu0 %v268
    %2469 = vmatpush.msra.mxu0 %v267
    %2470 = vmatpush.msra.mxu0 %v266
    %2471 = vmatmul.f32.gmra.mxu0 %v2264
    %v2472 = vpop.f32.mrf.mxu0
    %v2473 = vadd.f32 %v2381, %v2472
    %2474 = vmatmul.f32.gmra.mxu0 %v2268
    %v2475 = vpop.f32.mrf.mxu0
    %v2476 = vadd.f32 %v2384, %v2475
    %2477 = vmatmul.f32.gmra.mxu0 %v2272
    %v2478 = vpop.f32.mrf.mxu0
    %v2479 = vadd.f32 %v2387, %v2478
    %2480 = vmatmul.f32.gmra.mxu0 %v2276
    %v2481 = vpop.f32.mrf.mxu0
    %v2482 = vadd.f32 %v2390, %v2481
    %2483 = vmatmul.f32.gmra.mxu0 %v2280
    %v2484 = vpop.f32.mrf.mxu0
    %v2485 = vadd.f32 %v2393, %v2484
    %2486 = vmatmul.f32.gmra.mxu0 %v2284
    %v2487 = vpop.f32.mrf.mxu0
    %v2488 = vadd.f32 %v2396, %v2487
    %2489 = vmatmul.f32.gmra.mxu0 %v2288
    %v2490 = vpop.f32.mrf.mxu0
    %v2491 = vadd.f32 %v2399, %v2490
    %2492 = vmatmul.f32.gmra.mxu0 %v2292
    %v2493 = vpop.f32.mrf.mxu0
    %v2494 = vadd.f32 %v2402, %v2493
    %2495 = vmatmul.f32.gmra.mxu0 %v2296
    %v2496 = vpop.f32.mrf.mxu0
    %v2497 = vadd.f32 %v2405, %v2496
    %2498 = vmatmul.f32.gmra.mxu0 %v2300
    %v2499 = vpop.f32.mrf.mxu0
    %v2500 = vadd.f32 %v2408, %v2499
    %2501 = vmatmul.f32.gmra.mxu0 %v2304
    %v2502 = vpop.f32.mrf.mxu0
    %v2503 = vadd.f32 %v2411, %v2502
    %2504 = vmatmul.f32.gmra.mxu0 %v2308
    %v2505 = vpop.f32.mrf.mxu0
    %v2506 = vadd.f32 %v2414, %v2505
    %2507 = vmatmul.f32.gmra.mxu0 %v2312
    %v2508 = vpop.f32.mrf.mxu0
    %v2509 = vadd.f32 %v2417, %v2508
    %2510 = vmatmul.f32.gmra.mxu0 %v2316
    %v2511 = vpop.f32.mrf.mxu0
    %v2512 = vadd.f32 %v2420, %v2511
    %2513 = vmatmul.f32.gmra.mxu0 %v2320
    %v2514 = vpop.f32.mrf.mxu0
    %v2515 = vadd.f32 %v2423, %v2514
    %2516 = vmatmul.f32.gmra.mxu0 %v2324
    %v2517 = vpop.f32.mrf.mxu0
    %v2518 = vadd.f32 %v2426, %v2517
    %2519 = vmatmul.f32.gmra.mxu0 %v2328
    %v2520 = vpop.f32.mrf.mxu0
    %v2521 = vadd.f32 %v2429, %v2520
    %2522 = vmatmul.f32.gmra.mxu0 %v2332
    %v2523 = vpop.f32.mrf.mxu0
    %v2524 = vadd.f32 %v2432, %v2523
    %2525 = vmatmul.f32.gmra.mxu0 %v2336
    %v2526 = vpop.f32.mrf.mxu0
    %v2527 = vadd.f32 %v2435, %v2526
    %2528 = vmatmul.f32.gmra.mxu0 %v2340
    %v2529 = vpop.f32.mrf.mxu0
    %v2530 = vadd.f32 %v2438, %v2529
    %2531 = vmatmul.f32.gmra.mxu0 %v2344
    %v2532 = vpop.f32.mrf.mxu0
    %v2533 = vadd.f32 %v2441, %v2532
    %2534 = vmatmul.f32.gmra.mxu0 %v2348
    %v2535 = vpop.f32.mrf.mxu0
    %v2536 = vadd.f32 %v2444, %v2535
    %2537 = vmatmul.f32.gmra.mxu0 %v2352
    %v2538 = vpop.f32.mrf.mxu0
    %v2539 = vadd.f32 %v2447, %v2538
    %2540 = vmatmul.f32.gmra.mxu0 %v2356
    %v2541 = vpop.f32.mrf.mxu0
    %v2542 = vadd.f32 %v2450, %v2541
    %2543 = vmatmul.f32.gmra.mxu0 %v2360
    %v2544 = vpop.f32.mrf.mxu0
    %v2545 = vadd.f32 %v2453, %v2544
    %2546 = vdwg.mxu0
    %2547 = vmatpush.msra.mxu0 %v297
    %2548 = vmatpush.msra.mxu0 %v296
    %2549 = vmatpush.msra.mxu0 %v295
    %2550 = vmatpush.msra.mxu0 %v294
    %2551 = vmatpush.msra.mxu0 %v293
    %2552 = vmatpush.msra.mxu0 %v292
    %2553 = vmatpush.msra.mxu0 %v291
    %2554 = vmatpush.msra.mxu0 %v290
    %2555 = vmatpush.msra.mxu0 %v289
    %2556 = vmatpush.msra.mxu0 %v288
    %2557 = vmatpush.msra.mxu0 %v287
    %2558 = vmatpush.msra.mxu0 %v286
    %2559 = vmatpush.msra.mxu0 %v285
    %2560 = vmatpush.msra.mxu0 %v284
    %2561 = vmatpush.msra.mxu0 %v283
    %2562 = vmatpush.msra.mxu0 %v282
    %2563 = vmatmul.f32.gmra.mxu0 %v2265
    %v2564 = vpop.f32.mrf.mxu0
    %v2565 = vadd.f32 %v2473, %v2564
    %2566 = vmatmul.f32.gmra.mxu0 %v2269
    %v2567 = vpop.f32.mrf.mxu0
    %v2568 = vadd.f32 %v2476, %v2567
    %2569 = vmatmul.f32.gmra.mxu0 %v2273
    %v2570 = vpop.f32.mrf.mxu0
    %v2571 = vadd.f32 %v2479, %v2570
    %2572 = vmatmul.f32.gmra.mxu0 %v2277
    %v2573 = vpop.f32.mrf.mxu0
    %v2574 = vadd.f32 %v2482, %v2573
    %2575 = vmatmul.f32.gmra.mxu0 %v2281
    %v2576 = vpop.f32.mrf.mxu0
    %v2577 = vadd.f32 %v2485, %v2576
    %2578 = vmatmul.f32.gmra.mxu0 %v2285
    %v2579 = vpop.f32.mrf.mxu0
    %v2580 = vadd.f32 %v2488, %v2579
    %2581 = vmatmul.f32.gmra.mxu0 %v2289
    %v2582 = vpop.f32.mrf.mxu0
    %v2583 = vadd.f32 %v2491, %v2582
    %2584 = vmatmul.f32.gmra.mxu0 %v2293
    %v2585 = vpop.f32.mrf.mxu0
    %v2586 = vadd.f32 %v2494, %v2585
    %2587 = vmatmul.f32.gmra.mxu0 %v2297
    %v2588 = vpop.f32.mrf.mxu0
    %v2589 = vadd.f32 %v2497, %v2588
    %2590 = vmatmul.f32.gmra.mxu0 %v2301
    %v2591 = vpop.f32.mrf.mxu0
    %v2592 = vadd.f32 %v2500, %v2591
    %2593 = vmatmul.f32.gmra.mxu0 %v2305
    %v2594 = vpop.f32.mrf.mxu0
    %v2595 = vadd.f32 %v2503, %v2594
    %2596 = vmatmul.f32.gmra.mxu0 %v2309
    %v2597 = vpop.f32.mrf.mxu0
    %v2598 = vadd.f32 %v2506, %v2597
    %2599 = vmatmul.f32.gmra.mxu0 %v2313
    %v2600 = vpop.f32.mrf.mxu0
    %v2601 = vadd.f32 %v2509, %v2600
    %2602 = vmatmul.f32.gmra.mxu0 %v2317
    %v2603 = vpop.f32.mrf.mxu0
    %v2604 = vadd.f32 %v2512, %v2603
    %2605 = vmatmul.f32.gmra.mxu0 %v2321
    %v2606 = vpop.f32.mrf.mxu0
    %v2607 = vadd.f32 %v2515, %v2606
    %2608 = vmatmul.f32.gmra.mxu0 %v2325
    %v2609 = vpop.f32.mrf.mxu0
    %v2610 = vadd.f32 %v2518, %v2609
    %2611 = vmatmul.f32.gmra.mxu0 %v2329
    %v2612 = vpop.f32.mrf.mxu0
    %v2613 = vadd.f32 %v2521, %v2612
    %2614 = vmatmul.f32.gmra.mxu0 %v2333
    %v2615 = vpop.f32.mrf.mxu0
    %v2616 = vadd.f32 %v2524, %v2615
    %2617 = vmatmul.f32.gmra.mxu0 %v2337
    %v2618 = vpop.f32.mrf.mxu0
    %v2619 = vadd.f32 %v2527, %v2618
    %2620 = vmatmul.f32.gmra.mxu0 %v2341
    %v2621 = vpop.f32.mrf.mxu0
    %v2622 = vadd.f32 %v2530, %v2621
    %2623 = vmatmul.f32.gmra.mxu0 %v2345
    %v2624 = vpop.f32.mrf.mxu0
    %v2625 = vadd.f32 %v2533, %v2624
    %2626 = vmatmul.f32.gmra.mxu0 %v2349
    %v2627 = vpop.f32.mrf.mxu0
    %v2628 = vadd.f32 %v2536, %v2627
    %2629 = vmatmul.f32.gmra.mxu0 %v2353
    %v2630 = vpop.f32.mrf.mxu0
    %v2631 = vadd.f32 %v2539, %v2630
    %2632 = vmatmul.f32.gmra.mxu0 %v2357
    %v2633 = vpop.f32.mrf.mxu0
    %v2634 = vadd.f32 %v2542, %v2633
    %2635 = vmatmul.f32.gmra.mxu0 %v2361
    %v2636 = vpop.f32.mrf.mxu0
    %v2637 = vadd.f32 %v2545, %v2636
    %2638 = vdwg.mxu0
    %2639 = vmatpush.msra.mxu0 %v313
    %2640 = vmatpush.msra.mxu0 %v312
    %2641 = vmatpush.msra.mxu0 %v311
    %2642 = vmatpush.msra.mxu0 %v310
    %2643 = vmatpush.msra.mxu0 %v309
    %2644 = vmatpush.msra.mxu0 %v308
    %2645 = vmatpush.msra.mxu0 %v307
    %2646 = vmatpush.msra.mxu0 %v306
    %2647 = vmatpush.msra.mxu0 %v305
    %2648 = vmatpush.msra.mxu0 %v304
    %2649 = vmatpush.msra.mxu0 %v303
    %2650 = vmatpush.msra.mxu0 %v302
    %2651 = vmatpush.msra.mxu0 %v301
    %2652 = vmatpush.msra.mxu0 %v300
    %2653 = vmatpush.msra.mxu0 %v299
    %2654 = vmatpush.msra.mxu0 %v298
    %2655 = vmatmul.f32.gmra.mxu0 %v2266
    %v2656 = vpop.f32.mrf.mxu0
    %v2657 = vadd.f32 %v2565, %v2656
    %2658 = vmatmul.f32.gmra.mxu0 %v2270
    %v2659 = vpop.f32.mrf.mxu0
    %v2660 = vadd.f32 %v2568, %v2659
    %2661 = vmatmul.f32.gmra.mxu0 %v2274
    %v2662 = vpop.f32.mrf.mxu0
    %v2663 = vadd.f32 %v2571, %v2662
    %2664 = vmatmul.f32.gmra.mxu0 %v2278
    %v2665 = vpop.f32.mrf.mxu0
    %v2666 = vadd.f32 %v2574, %v2665
    %2667 = vmatmul.f32.gmra.mxu0 %v2282
    %v2668 = vpop.f32.mrf.mxu0
    %v2669 = vadd.f32 %v2577, %v2668
    %2670 = vmatmul.f32.gmra.mxu0 %v2286
    %v2671 = vpop.f32.mrf.mxu0
    %v2672 = vadd.f32 %v2580, %v2671
    %2673 = vmatmul.f32.gmra.mxu0 %v2290
    %v2674 = vpop.f32.mrf.mxu0
    %v2675 = vadd.f32 %v2583, %v2674
    %2676 = vmatmul.f32.gmra.mxu0 %v2294
    %v2677 = vpop.f32.mrf.mxu0
    %v2678 = vadd.f32 %v2586, %v2677
    %2679 = vmatmul.f32.gmra.mxu0 %v2298
    %v2680 = vpop.f32.mrf.mxu0
    %v2681 = vadd.f32 %v2589, %v2680
    %2682 = vmatmul.f32.gmra.mxu0 %v2302
    %v2683 = vpop.f32.mrf.mxu0
    %v2684 = vadd.f32 %v2592, %v2683
    %2685 = vmatmul.f32.gmra.mxu0 %v2306
    %v2686 = vpop.f32.mrf.mxu0
    %v2687 = vadd.f32 %v2595, %v2686
    %2688 = vmatmul.f32.gmra.mxu0 %v2310
    %v2689 = vpop.f32.mrf.mxu0
    %v2690 = vadd.f32 %v2598, %v2689
    %2691 = vmatmul.f32.gmra.mxu0 %v2314
    %v2692 = vpop.f32.mrf.mxu0
    %v2693 = vadd.f32 %v2601, %v2692
    %2694 = vmatmul.f32.gmra.mxu0 %v2318
    %v2695 = vpop.f32.mrf.mxu0
    %v2696 = vadd.f32 %v2604, %v2695
    %2697 = vmatmul.f32.gmra.mxu0 %v2322
    %v2698 = vpop.f32.mrf.mxu0
    %v2699 = vadd.f32 %v2607, %v2698
    %2700 = vmatmul.f32.gmra.mxu0 %v2326
    %v2701 = vpop.f32.mrf.mxu0
    %v2702 = vadd.f32 %v2610, %v2701
    %2703 = vmatmul.f32.gmra.mxu0 %v2330
    %v2704 = vpop.f32.mrf.mxu0
    %v2705 = vadd.f32 %v2613, %v2704
    %2706 = vmatmul.f32.gmra.mxu0 %v2334
    %v2707 = vpop.f32.mrf.mxu0
    %v2708 = vadd.f32 %v2616, %v2707
    %2709 = vmatmul.f32.gmra.mxu0 %v2338
    %v2710 = vpop.f32.mrf.mxu0
    %v2711 = vadd.f32 %v2619, %v2710
    %2712 = vmatmul.f32.gmra.mxu0 %v2342
    %v2713 = vpop.f32.mrf.mxu0
    %v2714 = vadd.f32 %v2622, %v2713
    %2715 = vmatmul.f32.gmra.mxu0 %v2346
    %v2716 = vpop.f32.mrf.mxu0
    %v2717 = vadd.f32 %v2625, %v2716
    %2718 = vmatmul.f32.gmra.mxu0 %v2350
    %v2719 = vpop.f32.mrf.mxu0
    %v2720 = vadd.f32 %v2628, %v2719
    %2721 = vmatmul.f32.gmra.mxu0 %v2354
    %v2722 = vpop.f32.mrf.mxu0
    %v2723 = vadd.f32 %v2631, %v2722
    %2724 = vmatmul.f32.gmra.mxu0 %v2358
    %v2725 = vpop.f32.mrf.mxu0
    %v2726 = vadd.f32 %v2634, %v2725
    %2727 = vmatmul.f32.gmra.mxu0 %v2362
    %v2728 = vpop.f32.mrf.mxu0
    %v2729 = vadd.f32 %v2637, %v2728
    %2730 = vdwg.mxu0
    %s2731 = scalar_lea.vmem %s2, 12
    %v2732 = vld [vmem:[%s2731] sm:$0x7]
    %v2734 = vsel %vm1254, %v2657, 0
    %v2737 = vsel %vm1254, %v2660, 0
    %v2740 = vsel %vm1254, %v2663, 0
    %v2743 = vsel %vm1254, %v2666, 0
    %v2746 = vsel %vm1254, %v2669, 0
    %v2749 = vsel %vm1254, %v2672, 0
    %v2752 = vsel %vm1254, %v2675, 0
    %v2755 = vsel %vm1254, %v2678, 0
    %v2758 = vsel %vm1254, %v2681, 0
    %v2761 = vsel %vm1254, %v2684, 0
    %v2764 = vsel %vm1254, %v2687, 0
    %v2767 = vsel %vm1254, %v2690, 0
    %v2770 = vsel %vm1254, %v2693, 0
    %v2773 = vsel %vm1254, %v2696, 0
    %v2776 = vsel %vm1254, %v2699, 0
    %v2779 = vsel %vm1254, %v2702, 0
    %v2782 = vsel %vm1254, %v2705, 0
    %v2785 = vsel %vm1254, %v2708, 0
    %v2788 = vsel %vm1254, %v2711, 0
    %v2791 = vsel %vm1254, %v2714, 0
    %v2794 = vsel %vm1254, %v2717, 0
    %v2797 = vsel %vm1254, %v2720, 0
    %v2800 = vsel %vm1254, %v2723, 0
    %v2803 = vsel %vm1254, %v2726, 0
    %v2806 = vsel %vm1254, %v2729, 0
    %v2809 = vsel %vm1330, %v2732, 0
    %2811 = vmatpush.msra.mxu0 0.0
    %2812 = vmatpush.msra.mxu0 0.0
    %2813 = vmatpush.msra.mxu0 0.0
    %2814 = vmatpush.msra.mxu0 0.0
    %2815 = vmatpush.msra.mxu0 0.0
    %2816 = vmatpush.msra.mxu0 0.0
    %2817 = vmatpush.msra.mxu0 0.0
    %2818 = vmatpush.msra.mxu0 0.0
    %2819 = vmatpush.msra.mxu0 0.0
    %2820 = vmatpush.msra.mxu0 0.0
    %2821 = vmatpush.msra.mxu0 0.0
    %2822 = vmatpush.msra.mxu0 0.0
    %2823 = vmatpush.msra.mxu0 0.0
    %2824 = vmatpush.msra.mxu0 0.0
    %2825 = vmatpush.msra.mxu0 0.0
    %2826 = vmatpush.msra.mxu0 %v2809
    %2827 = vmatmul.f32.gmra.mxu0 %v2734
    %v2828 = vpop.f32.mrf.mxu0
    %v2829 = vadd.f32 0.0, %v2828
    %2830 = vmatmul.f32.gmra.mxu0 %v2737
    %v2831 = vpop.f32.mrf.mxu0
    %v2832 = vadd.f32 0.0, %v2831
    %2833 = vmatmul.f32.gmra.mxu0 %v2740
    %v2834 = vpop.f32.mrf.mxu0
    %v2835 = vadd.f32 0.0, %v2834
    %2836 = vmatmul.f32.gmra.mxu0 %v2743
    %v2837 = vpop.f32.mrf.mxu0
    %v2838 = vadd.f32 0.0, %v2837
    %2839 = vmatmul.f32.gmra.mxu0 %v2746
    %v2840 = vpop.f32.mrf.mxu0
    %v2841 = vadd.f32 0.0, %v2840
    %2842 = vmatmul.f32.gmra.mxu0 %v2749
    %v2843 = vpop.f32.mrf.mxu0
    %v2844 = vadd.f32 0.0, %v2843
    %2845 = vmatmul.f32.gmra.mxu0 %v2752
    %v2846 = vpop.f32.mrf.mxu0
    %v2847 = vadd.f32 0.0, %v2846
    %2848 = vmatmul.f32.gmra.mxu0 %v2755
    %v2849 = vpop.f32.mrf.mxu0
    %v2850 = vadd.f32 0.0, %v2849
    %2851 = vmatmul.f32.gmra.mxu0 %v2758
    %v2852 = vpop.f32.mrf.mxu0
    %v2853 = vadd.f32 0.0, %v2852
    %2854 = vmatmul.f32.gmra.mxu0 %v2761
    %v2855 = vpop.f32.mrf.mxu0
    %v2856 = vadd.f32 0.0, %v2855
    %2857 = vmatmul.f32.gmra.mxu0 %v2764
    %v2858 = vpop.f32.mrf.mxu0
    %v2859 = vadd.f32 0.0, %v2858
    %2860 = vmatmul.f32.gmra.mxu0 %v2767
    %v2861 = vpop.f32.mrf.mxu0
    %v2862 = vadd.f32 0.0, %v2861
    %2863 = vmatmul.f32.gmra.mxu0 %v2770
    %v2864 = vpop.f32.mrf.mxu0
    %v2865 = vadd.f32 0.0, %v2864
    %2866 = vmatmul.f32.gmra.mxu0 %v2773
    %v2867 = vpop.f32.mrf.mxu0
    %v2868 = vadd.f32 0.0, %v2867
    %2869 = vmatmul.f32.gmra.mxu0 %v2776
    %v2870 = vpop.f32.mrf.mxu0
    %v2871 = vadd.f32 0.0, %v2870
    %2872 = vmatmul.f32.gmra.mxu0 %v2779
    %v2873 = vpop.f32.mrf.mxu0
    %v2874 = vadd.f32 0.0, %v2873
    %2875 = vmatmul.f32.gmra.mxu0 %v2782
    %v2876 = vpop.f32.mrf.mxu0
    %v2877 = vadd.f32 0.0, %v2876
    %2878 = vmatmul.f32.gmra.mxu0 %v2785
    %v2879 = vpop.f32.mrf.mxu0
    %v2880 = vadd.f32 0.0, %v2879
    %2881 = vmatmul.f32.gmra.mxu0 %v2788
    %v2882 = vpop.f32.mrf.mxu0
    %v2883 = vadd.f32 0.0, %v2882
    %2884 = vmatmul.f32.gmra.mxu0 %v2791
    %v2885 = vpop.f32.mrf.mxu0
    %v2886 = vadd.f32 0.0, %v2885
    %2887 = vmatmul.f32.gmra.mxu0 %v2794
    %v2888 = vpop.f32.mrf.mxu0
    %v2889 = vadd.f32 0.0, %v2888
    %2890 = vmatmul.f32.gmra.mxu0 %v2797
    %v2891 = vpop.f32.mrf.mxu0
    %v2892 = vadd.f32 0.0, %v2891
    %2893 = vmatmul.f32.gmra.mxu0 %v2800
    %v2894 = vpop.f32.mrf.mxu0
    %v2895 = vadd.f32 0.0, %v2894
    %2896 = vmatmul.f32.gmra.mxu0 %v2803
    %v2897 = vpop.f32.mrf.mxu0
    %v2898 = vadd.f32 0.0, %v2897
    %2899 = vmatmul.f32.gmra.mxu0 %v2806
    %v2900 = vpop.f32.mrf.mxu0
    %v2901 = vadd.f32 0.0, %v2900
    %2902 = vdwg.mxu0
    %v2903 = vadd.f32 %v2237, %v2829
    %v2904 = vadd.f32 %v2238, %v2832
    %v2905 = vadd.f32 %v2239, %v2835
    %v2906 = vadd.f32 %v2240, %v2838
    %v2907 = vadd.f32 %v2241, %v2841
    %v2908 = vadd.f32 %v2242, %v2844
    %v2909 = vadd.f32 %v2243, %v2847
    %v2910 = vadd.f32 %v2244, %v2850
    %v2911 = vadd.f32 %v2245, %v2853
    %v2912 = vadd.f32 %v2246, %v2856
    %v2913 = vadd.f32 %v2247, %v2859
    %v2914 = vadd.f32 %v2248, %v2862
    %v2915 = vadd.f32 %v2249, %v2865
    %v2916 = vadd.f32 %v2250, %v2868
    %v2917 = vadd.f32 %v2251, %v2871
    %v2918 = vadd.f32 %v2252, %v2874
    %v2919 = vadd.f32 %v2253, %v2877
    %v2920 = vadd.f32 %v2254, %v2880
    %v2921 = vadd.f32 %v2255, %v2883
    %v2922 = vadd.f32 %v2256, %v2886
    %v2923 = vadd.f32 %v2257, %v2889
    %v2924 = vadd.f32 %v2258, %v2892
    %v2925 = vadd.f32 %v2259, %v2895
    %v2926 = vadd.f32 %v2260, %v2898
    %v2927 = vadd.f32 %v2261, %v2901
    %v2928 = vld [vmem:[#allocation4] sm:$0x1]
    %v2930 = vperm.slane %v2928, 0
    %v2932 = vmul.f32 %v2903, %v2930
    %v2933 = vmul.f32 %v2904, %v2930
    %v2934 = vmul.f32 %v2905, %v2930
    %v2935 = vmul.f32 %v2906, %v2930
    %v2936 = vmul.f32 %v2907, %v2930
    %v2937 = vmul.f32 %v2908, %v2930
    %v2938 = vmul.f32 %v2909, %v2930
    %v2939 = vmul.f32 %v2910, %v2930
    %v2940 = vmul.f32 %v2911, %v2930
    %v2941 = vmul.f32 %v2912, %v2930
    %v2942 = vmul.f32 %v2913, %v2930
    %v2943 = vmul.f32 %v2914, %v2930
    %v2944 = vmul.f32 %v2915, %v2930
    %v2945 = vmul.f32 %v2916, %v2930
    %v2946 = vmul.f32 %v2917, %v2930
    %v2947 = vmul.f32 %v2918, %v2930
    %v2948 = vmul.f32 %v2919, %v2930
    %v2949 = vmul.f32 %v2920, %v2930
    %v2950 = vmul.f32 %v2921, %v2930
    %v2951 = vmul.f32 %v2922, %v2930
    %v2952 = vmul.f32 %v2923, %v2930
    %v2953 = vmul.f32 %v2924, %v2930
    %v2954 = vmul.f32 %v2925, %v2930
    %v2955 = vmul.f32 %v2926, %v2930
    %v2956 = vmul.f32 %v2927, %v2930
    %v2957 = vld [vmem:[#allocation6] sm:$0x1]
    %v2959 = vperm.slane %v2957, 0
    %v2961 = vadd.f32 %v2932, %v2959
    %v2962 = vadd.f32 %v2933, %v2959
    %v2963 = vadd.f32 %v2934, %v2959
    %v2964 = vadd.f32 %v2935, %v2959
    %v2965 = vadd.f32 %v2936, %v2959
    %v2966 = vadd.f32 %v2937, %v2959
    %v2967 = vadd.f32 %v2938, %v2959
    %v2968 = vadd.f32 %v2939, %v2959
    %v2969 = vadd.f32 %v2940, %v2959
    %v2970 = vadd.f32 %v2941, %v2959
    %v2971 = vadd.f32 %v2942, %v2959
    %v2972 = vadd.f32 %v2943, %v2959
    %v2973 = vadd.f32 %v2944, %v2959
    %v2974 = vadd.f32 %v2945, %v2959
    %v2975 = vadd.f32 %v2946, %v2959
    %v2976 = vadd.f32 %v2947, %v2959
    %v2977 = vadd.f32 %v2948, %v2959
    %v2978 = vadd.f32 %v2949, %v2959
    %v2979 = vadd.f32 %v2950, %v2959
    %v2980 = vadd.f32 %v2951, %v2959
    %v2981 = vadd.f32 %v2952, %v2959
    %v2982 = vadd.f32 %v2953, %v2959
    %v2983 = vadd.f32 %v2954, %v2959
    %v2984 = vadd.f32 %v2955, %v2959
    %v2985 = vadd.f32 %v2956, %v2959
    %v2986 = vand.u32 2147483647, %v2961
    %v2987 = vand.u32 2147483647, %v2962
    %v2988 = vand.u32 2147483647, %v2963
    %v2989 = vand.u32 2147483647, %v2964
    %v2990 = vand.u32 2147483647, %v2965
    %v2991 = vand.u32 2147483647, %v2966
    %v2992 = vand.u32 2147483647, %v2967
    %v2993 = vand.u32 2147483647, %v2968
    %v2994 = vand.u32 2147483647, %v2969
    %v2995 = vand.u32 2147483647, %v2970
    %v2996 = vand.u32 2147483647, %v2971
    %v2997 = vand.u32 2147483647, %v2972
    %v2998 = vand.u32 2147483647, %v2973
    %v2999 = vand.u32 2147483647, %v2974
    %v3000 = vand.u32 2147483647, %v2975
    %v3001 = vand.u32 2147483647, %v2976
    %v3002 = vand.u32 2147483647, %v2977
    %v3003 = vand.u32 2147483647, %v2978
    %v3004 = vand.u32 2147483647, %v2979
    %v3005 = vand.u32 2147483647, %v2980
    %v3006 = vand.u32 2147483647, %v2981
    %v3007 = vand.u32 2147483647, %v2982
    %v3008 = vand.u32 2147483647, %v2983
    %v3009 = vand.u32 2147483647, %v2984
    %v3010 = vand.u32 2147483647, %v2985
    %vm3011 = vcmp.gt.f32.partialorder %v2986, 0.5
    %vm3012 = vcmp.gt.f32.partialorder %v2987, 0.5
    %vm3013 = vcmp.gt.f32.partialorder %v2988, 0.5
    %vm3014 = vcmp.gt.f32.partialorder %v2989, 0.5
    %vm3015 = vcmp.gt.f32.partialorder %v2990, 0.5
    %vm3016 = vcmp.gt.f32.partialorder %v2991, 0.5
    %vm3017 = vcmp.gt.f32.partialorder %v2992, 0.5
    %vm3018 = vcmp.gt.f32.partialorder %v2993, 0.5
    %vm3019 = vcmp.gt.f32.partialorder %v2994, 0.5
    %vm3020 = vcmp.gt.f32.partialorder %v2995, 0.5
    %vm3021 = vcmp.gt.f32.partialorder %v2996, 0.5
    %vm3022 = vcmp.gt.f32.partialorder %v2997, 0.5
    %vm3023 = vcmp.gt.f32.partialorder %v2998, 0.5
    %vm3024 = vcmp.gt.f32.partialorder %v2999, 0.5
    %vm3025 = vcmp.gt.f32.partialorder %v3000, 0.5
    %vm3026 = vcmp.gt.f32.partialorder %v3001, 0.5
    %vm3027 = vcmp.gt.f32.partialorder %v3002, 0.5
    %vm3028 = vcmp.gt.f32.partialorder %v3003, 0.5
    %vm3029 = vcmp.gt.f32.partialorder %v3004, 0.5
    %vm3030 = vcmp.gt.f32.partialorder %v3005, 0.5
    %vm3031 = vcmp.gt.f32.partialorder %v3006, 0.5
    %vm3032 = vcmp.gt.f32.partialorder %v3007, 0.5
    %vm3033 = vcmp.gt.f32.partialorder %v3008, 0.5
    %vm3034 = vcmp.gt.f32.partialorder %v3009, 0.5
    %vm3035 = vcmp.gt.f32.partialorder %v3010, 0.5
    %v3036 = vsel %vm3011, %v2961, 0.0
    %v3037 = vsel %vm3012, %v2962, 0.0
    %v3038 = vsel %vm3013, %v2963, 0.0
    %v3039 = vsel %vm3014, %v2964, 0.0
    %v3040 = vsel %vm3015, %v2965, 0.0
    %v3041 = vsel %vm3016, %v2966, 0.0
    %v3042 = vsel %vm3017, %v2967, 0.0
    %v3043 = vsel %vm3018, %v2968, 0.0
    %v3044 = vsel %vm3019, %v2969, 0.0
    %v3045 = vsel %vm3020, %v2970, 0.0
    %v3046 = vsel %vm3021, %v2971, 0.0
    %v3047 = vsel %vm3022, %v2972, 0.0
    %v3048 = vsel %vm3023, %v2973, 0.0
    %v3049 = vsel %vm3024, %v2974, 0.0
    %v3050 = vsel %vm3025, %v2975, 0.0
    %v3051 = vsel %vm3026, %v2976, 0.0
    %v3052 = vsel %vm3027, %v2977, 0.0
    %v3053 = vsel %vm3028, %v2978, 0.0
    %v3054 = vsel %vm3029, %v2979, 0.0
    %v3055 = vsel %vm3030, %v2980, 0.0
    %v3056 = vsel %vm3031, %v2981, 0.0
    %v3057 = vsel %vm3032, %v2982, 0.0
    %v3058 = vsel %vm3033, %v2983, 0.0
    %v3059 = vsel %vm3034, %v2984, 0.0
    %v3060 = vsel %vm3035, %v2985, 0.0
    %v3061 = vld [vmem:[%s5] sm:$0xff]
    %v3062 = vld [vmem:[%s5 + $0x8] sm:$0xff]
    %v3063 = vld [vmem:[%s5 + $0x10] sm:$0xff]
    %v3064 = vld [vmem:[%s5 + $0x18] sm:$0xff]
    %v3065 = vld [vmem:[%s5 + $0x20] sm:$0xff]
    %v3066 = vld [vmem:[%s5 + $0x28] sm:$0xff]
    %v3067 = vld [vmem:[%s5 + $0x30] sm:$0xff]
    %v3068 = vld [vmem:[%s5 + $0x38] sm:$0xff]
    %v3069 = vld [vmem:[%s5 + $0x40] sm:$0xff]
    %v3070 = vld [vmem:[%s5 + $0x48] sm:$0xff]
    %v3071 = vld [vmem:[%s5 + $0x50] sm:$0xff]
    %v3072 = vld [vmem:[%s5 + $0x58] sm:$0xff]
    %v3073 = vld [vmem:[%s5 + $0x60] sm:$0xff]
    %v3074 = vld [vmem:[%s5 + $0x68] sm:$0xff]
    %v3075 = vld [vmem:[%s5 + $0x70] sm:$0xff]
    %v3076 = vld [vmem:[%s5 + $0x78] sm:$0xff]
    %v3077 = vld [vmem:[%s5 + $0x80] sm:$0xff]
    %v3078 = vld [vmem:[%s5 + $0x88] sm:$0xff]
    %v3079 = vld [vmem:[%s5 + $0x90] sm:$0xff]
    %v3080 = vld [vmem:[%s5 + $0x98] sm:$0xff]
    %v3081 = vld [vmem:[%s5 + $0xa0] sm:$0xff]
    %v3082 = vld [vmem:[%s5 + $0xa8] sm:$0xff]
    %v3083 = vld [vmem:[%s5 + $0xb0] sm:$0xff]
    %v3084 = vld [vmem:[%s5 + $0xb8] sm:$0xff]
    %v3085 = vld [vmem:[%s5 + $0xc0] sm:$0xff]
    %v3086 = vld [vmem:[%s5 + $0xc8] sm:$0xff]
    %vm3087 = vcmask 588800
    %v3089 = vsel %vm3087, %v3062, 0
    %v3092 = vsel %vm3087, %v3064, 0
    %v3095 = vsel %vm3087, %v3066, 0
    %v3098 = vsel %vm3087, %v3068, 0
    %v3101 = vsel %vm3087, %v3070, 0
    %v3104 = vsel %vm3087, %v3072, 0
    %v3107 = vsel %vm3087, %v3074, 0
    %v3110 = vsel %vm3087, %v3076, 0
    %v3113 = vsel %vm3087, %v3078, 0
    %v3116 = vsel %vm3087, %v3080, 0
    %v3119 = vsel %vm3087, %v3082, 0
    %v3122 = vsel %vm3087, %v3084, 0
    %v3125 = vsel %vm3087, %v3086, 0
    %3127 = vmatpush.msra.mxu0 %v3051
    %3128 = vmatpush.msra.mxu0 %v3050
    %3129 = vmatpush.msra.mxu0 %v3049
    %3130 = vmatpush.msra.mxu0 %v3048
    %3131 = vmatpush.msra.mxu0 %v3047
    %3132 = vmatpush.msra.mxu0 %v3046
    %3133 = vmatpush.msra.mxu0 %v3045
    %3134 = vmatpush.msra.mxu0 %v3044
    %3135 = vmatpush.msra.mxu0 %v3043
    %3136 = vmatpush.msra.mxu0 %v3042
    %3137 = vmatpush.msra.mxu0 %v3041
    %3138 = vmatpush.msra.mxu0 %v3040
    %3139 = vmatpush.msra.mxu0 %v3039
    %3140 = vmatpush.msra.mxu0 %v3038
    %3141 = vmatpush.msra.mxu0 %v3037
    %3142 = vmatpush.msra.mxu0 %v3036
    %3143 = vmatmul.f32.gmra.mxu0 %v3061
    %v3144 = vpop.f32.mrf.mxu0
    %v3145 = vadd.f32 0.0, %v3144
    %3146 = vmatmul.f32.gmra.mxu0 %v3063
    %v3147 = vpop.f32.mrf.mxu0
    %v3148 = vadd.f32 0.0, %v3147
    %3149 = vmatmul.f32.gmra.mxu0 %v3065
    %v3150 = vpop.f32.mrf.mxu0
    %v3151 = vadd.f32 0.0, %v3150
    %3152 = vmatmul.f32.gmra.mxu0 %v3067
    %v3153 = vpop.f32.mrf.mxu0
    %v3154 = vadd.f32 0.0, %v3153
    %3155 = vmatmul.f32.gmra.mxu0 %v3069
    %v3156 = vpop.f32.mrf.mxu0
    %v3157 = vadd.f32 0.0, %v3156
    %3158 = vmatmul.f32.gmra.mxu0 %v3071
    %v3159 = vpop.f32.mrf.mxu0
    %v3160 = vadd.f32 0.0, %v3159
    %3161 = vmatmul.f32.gmra.mxu0 %v3073
    %v3162 = vpop.f32.mrf.mxu0
    %v3163 = vadd.f32 0.0, %v3162
    %3164 = vmatmul.f32.gmra.mxu0 %v3075
    %v3165 = vpop.f32.mrf.mxu0
    %v3166 = vadd.f32 0.0, %v3165
    %3167 = vmatmul.f32.gmra.mxu0 %v3077
    %v3168 = vpop.f32.mrf.mxu0
    %v3169 = vadd.f32 0.0, %v3168
    %3170 = vmatmul.f32.gmra.mxu0 %v3079
    %v3171 = vpop.f32.mrf.mxu0
    %v3172 = vadd.f32 0.0, %v3171
    %3173 = vmatmul.f32.gmra.mxu0 %v3081
    %v3174 = vpop.f32.mrf.mxu0
    %v3175 = vadd.f32 0.0, %v3174
    %3176 = vmatmul.f32.gmra.mxu0 %v3083
    %v3177 = vpop.f32.mrf.mxu0
    %v3178 = vadd.f32 0.0, %v3177
    %3179 = vmatmul.f32.gmra.mxu0 %v3085
    %v3180 = vpop.f32.mrf.mxu0
    %v3181 = vadd.f32 0.0, %v3180
    %3182 = vdwg.mxu0
    %3183 = vmatpush.msra.mxu0 0.0
    %3184 = vmatpush.msra.mxu0 0.0
    %3185 = vmatpush.msra.mxu0 0.0
    %3186 = vmatpush.msra.mxu0 0.0
    %3187 = vmatpush.msra.mxu0 0.0
    %3188 = vmatpush.msra.mxu0 0.0
    %3189 = vmatpush.msra.mxu0 0.0
    %3190 = vmatpush.msra.mxu0 %v3060
    %3191 = vmatpush.msra.mxu0 %v3059
    %3192 = vmatpush.msra.mxu0 %v3058
    %3193 = vmatpush.msra.mxu0 %v3057
    %3194 = vmatpush.msra.mxu0 %v3056
    %3195 = vmatpush.msra.mxu0 %v3055
    %3196 = vmatpush.msra.mxu0 %v3054
    %3197 = vmatpush.msra.mxu0 %v3053
    %3198 = vmatpush.msra.mxu0 %v3052
    %3199 = vmatmul.f32.gmra.mxu0 %v3089
    %v3200 = vpop.f32.mrf.mxu0
    %v3201 = vadd.f32 %v3145, %v3200
    %3202 = vmatmul.f32.gmra.mxu0 %v3092
    %v3203 = vpop.f32.mrf.mxu0
    %v3204 = vadd.f32 %v3148, %v3203
    %3205 = vmatmul.f32.gmra.mxu0 %v3095
    %v3206 = vpop.f32.mrf.mxu0
    %v3207 = vadd.f32 %v3151, %v3206
    %3208 = vmatmul.f32.gmra.mxu0 %v3098
    %v3209 = vpop.f32.mrf.mxu0
    %v3210 = vadd.f32 %v3154, %v3209
    %3211 = vmatmul.f32.gmra.mxu0 %v3101
    %v3212 = vpop.f32.mrf.mxu0
    %v3213 = vadd.f32 %v3157, %v3212
    %3214 = vmatmul.f32.gmra.mxu0 %v3104
    %v3215 = vpop.f32.mrf.mxu0
    %v3216 = vadd.f32 %v3160, %v3215
    %3217 = vmatmul.f32.gmra.mxu0 %v3107
    %v3218 = vpop.f32.mrf.mxu0
    %v3219 = vadd.f32 %v3163, %v3218
    %3220 = vmatmul.f32.gmra.mxu0 %v3110
    %v3221 = vpop.f32.mrf.mxu0
    %v3222 = vadd.f32 %v3166, %v3221
    %3223 = vmatmul.f32.gmra.mxu0 %v3113
    %v3224 = vpop.f32.mrf.mxu0
    %v3225 = vadd.f32 %v3169, %v3224
    %3226 = vmatmul.f32.gmra.mxu0 %v3116
    %v3227 = vpop.f32.mrf.mxu0
    %v3228 = vadd.f32 %v3172, %v3227
    %3229 = vmatmul.f32.gmra.mxu0 %v3119
    %v3230 = vpop.f32.mrf.mxu0
    %v3231 = vadd.f32 %v3175, %v3230
    %3232 = vmatmul.f32.gmra.mxu0 %v3122
    %v3233 = vpop.f32.mrf.mxu0
    %v3234 = vadd.f32 %v3178, %v3233
    %3235 = vmatmul.f32.gmra.mxu0 %v3125
    %v3236 = vpop.f32.mrf.mxu0
    %v3237 = vadd.f32 %v3181, %v3236
    %3238 = vdwg.mxu0
    %v3239 = vld [vmem:[%s6] sm:$0xff]
    %v3240 = vld [vmem:[%s6 + $0x8] sm:$0xff]
    %v3241 = vld [vmem:[%s6 + $0x10] sm:$0xff]
    %v3242 = vld [vmem:[%s6 + $0x18] sm:$0xff]
    %v3243 = vld [vmem:[%s6 + $0x20] sm:$0xff]
    %v3244 = vld [vmem:[%s6 + $0x28] sm:$0xff]
    %v3245 = vld [vmem:[%s6 + $0x30] sm:$0xff]
    %v3246 = vld [vmem:[%s6 + $0x38] sm:$0xff]
    %s3247 = scalar_lea.vmem %s5, 208
    %v3248 = vld [vmem:[%s3247] sm:$0xff]
    %v3249 = vld [vmem:[%s3247 + $0x8] sm:$0xff]
    %v3250 = vld [vmem:[%s3247 + $0x10] sm:$0xff]
    %v3251 = vld [vmem:[%s3247 + $0x18] sm:$0xff]
    %v3252 = vld [vmem:[%s3247 + $0x20] sm:$0xff]
    %v3253 = vld [vmem:[%s3247 + $0x28] sm:$0xff]
    %v3254 = vld [vmem:[%s3247 + $0x30] sm:$0xff]
    %v3255 = vld [vmem:[%s3247 + $0x38] sm:$0xff]
    %v3256 = vld [vmem:[%s3247 + $0x40] sm:$0xff]
    %v3257 = vld [vmem:[%s3247 + $0x48] sm:$0xff]
    %v3258 = vld [vmem:[%s3247 + $0x50] sm:$0xff]
    %v3259 = vld [vmem:[%s3247 + $0x58] sm:$0xff]
    %v3260 = vld [vmem:[%s3247 + $0x60] sm:$0xff]
    %v3261 = vld [vmem:[%s3247 + $0x68] sm:$0xff]
    %v3262 = vld [vmem:[%s3247 + $0x70] sm:$0xff]
    %v3263 = vld [vmem:[%s3247 + $0x78] sm:$0xff]
    %v3264 = vld [vmem:[%s3247 + $0x80] sm:$0xff]
    %v3265 = vld [vmem:[%s3247 + $0x88] sm:$0xff]
    %v3266 = vld [vmem:[%s3247 + $0x90] sm:$0xff]
    %v3267 = vld [vmem:[%s3247 + $0x98] sm:$0xff]
    %v3268 = vld [vmem:[%s3247 + $0xa0] sm:$0xff]
    %v3269 = vld [vmem:[%s3247 + $0xa8] sm:$0xff]
    %v3270 = vld [vmem:[%s3247 + $0xb0] sm:$0xff]
    %v3271 = vld [vmem:[%s3247 + $0xb8] sm:$0xff]
    %v3272 = vld [vmem:[%s3247 + $0xc0] sm:$0xff]
    %v3273 = vld [vmem:[%s3247 + $0xc8] sm:$0xff]
    %v3275 = vsel %vm3087, %v3249, 0
    %v3278 = vsel %vm3087, %v3251, 0
    %v3281 = vsel %vm3087, %v3253, 0
    %v3284 = vsel %vm3087, %v3255, 0
    %v3287 = vsel %vm3087, %v3257, 0
    %v3290 = vsel %vm3087, %v3259, 0
    %v3293 = vsel %vm3087, %v3261, 0
    %v3296 = vsel %vm3087, %v3263, 0
    %v3299 = vsel %vm3087, %v3265, 0
    %v3302 = vsel %vm3087, %v3267, 0
    %v3305 = vsel %vm3087, %v3269, 0
    %v3308 = vsel %vm3087, %v3271, 0
    %v3311 = vsel %vm3087, %v3273, 0
    %3313 = vmatpush.msra.mxu0 %v3051
    %3314 = vmatpush.msra.mxu0 %v3050
    %3315 = vmatpush.msra.mxu0 %v3049
    %3316 = vmatpush.msra.mxu0 %v3048
    %3317 = vmatpush.msra.mxu0 %v3047
    %3318 = vmatpush.msra.mxu0 %v3046
    %3319 = vmatpush.msra.mxu0 %v3045
    %3320 = vmatpush.msra.mxu0 %v3044
    %3321 = vmatpush.msra.mxu0 %v3043
    %3322 = vmatpush.msra.mxu0 %v3042
    %3323 = vmatpush.msra.mxu0 %v3041
    %3324 = vmatpush.msra.mxu0 %v3040
    %3325 = vmatpush.msra.mxu0 %v3039
    %3326 = vmatpush.msra.mxu0 %v3038
    %3327 = vmatpush.msra.mxu0 %v3037
    %3328 = vmatpush.msra.mxu0 %v3036
    %3329 = vmatmul.f32.gmra.mxu0 %v3248
    %v3330 = vpop.f32.mrf.mxu0
    %v3331 = vadd.f32 0.0, %v3330
    %3332 = vmatmul.f32.gmra.mxu0 %v3250
    %v3333 = vpop.f32.mrf.mxu0
    %v3334 = vadd.f32 0.0, %v3333
    %3335 = vmatmul.f32.gmra.mxu0 %v3252
    %v3336 = vpop.f32.mrf.mxu0
    %v3337 = vadd.f32 0.0, %v3336
    %3338 = vmatmul.f32.gmra.mxu0 %v3254
    %v3339 = vpop.f32.mrf.mxu0
    %v3340 = vadd.f32 0.0, %v3339
    %3341 = vmatmul.f32.gmra.mxu0 %v3256
    %v3342 = vpop.f32.mrf.mxu0
    %v3343 = vadd.f32 0.0, %v3342
    %3344 = vmatmul.f32.gmra.mxu0 %v3258
    %v3345 = vpop.f32.mrf.mxu0
    %v3346 = vadd.f32 0.0, %v3345
    %3347 = vmatmul.f32.gmra.mxu0 %v3260
    %v3348 = vpop.f32.mrf.mxu0
    %v3349 = vadd.f32 0.0, %v3348
    %3350 = vmatmul.f32.gmra.mxu0 %v3262
    %v3351 = vpop.f32.mrf.mxu0
    %v3352 = vadd.f32 0.0, %v3351
    %3353 = vmatmul.f32.gmra.mxu0 %v3264
    %v3354 = vpop.f32.mrf.mxu0
    %v3355 = vadd.f32 0.0, %v3354
    %3356 = vmatmul.f32.gmra.mxu0 %v3266
    %v3357 = vpop.f32.mrf.mxu0
    %v3358 = vadd.f32 0.0, %v3357
    %3359 = vmatmul.f32.gmra.mxu0 %v3268
    %v3360 = vpop.f32.mrf.mxu0
    %v3361 = vadd.f32 0.0, %v3360
    %3362 = vmatmul.f32.gmra.mxu0 %v3270
    %v3363 = vpop.f32.mrf.mxu0
    %v3364 = vadd.f32 0.0, %v3363
    %3365 = vmatmul.f32.gmra.mxu0 %v3272
    %v3366 = vpop.f32.mrf.mxu0
    %v3367 = vadd.f32 0.0, %v3366
    %3368 = vdwg.mxu0
    %3369 = vmatpush.msra.mxu0 0.0
    %3370 = vmatpush.msra.mxu0 0.0
    %3371 = vmatpush.msra.mxu0 0.0
    %3372 = vmatpush.msra.mxu0 0.0
    %3373 = vmatpush.msra.mxu0 0.0
    %3374 = vmatpush.msra.mxu0 0.0
    %3375 = vmatpush.msra.mxu0 0.0
    %3376 = vmatpush.msra.mxu0 %v3060
    %3377 = vmatpush.msra.mxu0 %v3059
    %3378 = vmatpush.msra.mxu0 %v3058
    %3379 = vmatpush.msra.mxu0 %v3057
    %3380 = vmatpush.msra.mxu0 %v3056
    %3381 = vmatpush.msra.mxu0 %v3055
    %3382 = vmatpush.msra.mxu0 %v3054
    %3383 = vmatpush.msra.mxu0 %v3053
    %3384 = vmatpush.msra.mxu0 %v3052
    %3385 = vmatmul.f32.gmra.mxu0 %v3275
    %v3386 = vpop.f32.mrf.mxu0
    %v3387 = vadd.f32 %v3331, %v3386
    %3388 = vmatmul.f32.gmra.mxu0 %v3278
    %v3389 = vpop.f32.mrf.mxu0
    %v3390 = vadd.f32 %v3334, %v3389
    %3391 = vmatmul.f32.gmra.mxu0 %v3281
    %v3392 = vpop.f32.mrf.mxu0
    %v3393 = vadd.f32 %v3337, %v3392
    %3394 = vmatmul.f32.gmra.mxu0 %v3284
    %v3395 = vpop.f32.mrf.mxu0
    %v3396 = vadd.f32 %v3340, %v3395
    %3397 = vmatmul.f32.gmra.mxu0 %v3287
    %v3398 = vpop.f32.mrf.mxu0
    %v3399 = vadd.f32 %v3343, %v3398
    %3400 = vmatmul.f32.gmra.mxu0 %v3290
    %v3401 = vpop.f32.mrf.mxu0
    %v3402 = vadd.f32 %v3346, %v3401
    %3403 = vmatmul.f32.gmra.mxu0 %v3293
    %v3404 = vpop.f32.mrf.mxu0
    %v3405 = vadd.f32 %v3349, %v3404
    %3406 = vmatmul.f32.gmra.mxu0 %v3296
    %v3407 = vpop.f32.mrf.mxu0
    %v3408 = vadd.f32 %v3352, %v3407
    %3409 = vmatmul.f32.gmra.mxu0 %v3299
    %v3410 = vpop.f32.mrf.mxu0
    %v3411 = vadd.f32 %v3355, %v3410
    %3412 = vmatmul.f32.gmra.mxu0 %v3302
    %v3413 = vpop.f32.mrf.mxu0
    %v3414 = vadd.f32 %v3358, %v3413
    %3415 = vmatmul.f32.gmra.mxu0 %v3305
    %v3416 = vpop.f32.mrf.mxu0
    %v3417 = vadd.f32 %v3361, %v3416
    %3418 = vmatmul.f32.gmra.mxu0 %v3308
    %v3419 = vpop.f32.mrf.mxu0
    %v3420 = vadd.f32 %v3364, %v3419
    %3421 = vmatmul.f32.gmra.mxu0 %v3311
    %v3422 = vpop.f32.mrf.mxu0
    %v3423 = vadd.f32 %v3367, %v3422
    %3424 = vdwg.mxu0
    %s3425 = scalar_lea.vmem %s6, 64
    %v3426 = vld [vmem:[%s3425] sm:$0xff]
    %v3427 = vld [vmem:[%s3425 + $0x8] sm:$0xff]
    %v3428 = vld [vmem:[%s3425 + $0x10] sm:$0xff]
    %v3429 = vld [vmem:[%s3425 + $0x18] sm:$0xff]
    %v3430 = vld [vmem:[%s3425 + $0x20] sm:$0xff]
    %v3431 = vld [vmem:[%s3425 + $0x28] sm:$0xff]
    %v3432 = vld [vmem:[%s3425 + $0x30] sm:$0xff]
    %v3433 = vld [vmem:[%s3425 + $0x38] sm:$0xff]
    %vm3434 = vcmask 523264
    %v3436 = vsel %vm3434, %v3387, 0
    %v3439 = vsel %vm3434, %v3390, 0
    %v3442 = vsel %vm3434, %v3393, 0
    %v3445 = vsel %vm3434, %v3396, 0
    %v3448 = vsel %vm3434, %v3399, 0
    %v3451 = vsel %vm3434, %v3402, 0
    %v3454 = vsel %vm3434, %v3405, 0
    %v3457 = vsel %vm3434, %v3408, 0
    %v3460 = vsel %vm3434, %v3411, 0
    %v3463 = vsel %vm3434, %v3414, 0
    %v3466 = vsel %vm3434, %v3417, 0
    %v3469 = vsel %vm3434, %v3420, 0
    %v3472 = vsel %vm3434, %v3423, 0
    %3474 = vmatpush.msra.mxu0 0.0
    %3475 = vmatpush.msra.mxu0 0.0
    %3476 = vmatpush.msra.mxu0 0.0
    %3477 = vmatpush.msra.mxu0 0.0
    %3478 = vmatpush.msra.mxu0 0.0
    %3479 = vmatpush.msra.mxu0 0.0
    %3480 = vmatpush.msra.mxu0 0.0
    %3481 = vmatpush.msra.mxu0 0.0
    %3482 = vmatpush.msra.mxu0 %v3433
    %3483 = vmatpush.msra.mxu0 %v3432
    %3484 = vmatpush.msra.mxu0 %v3431
    %3485 = vmatpush.msra.mxu0 %v3430
    %3486 = vmatpush.msra.mxu0 %v3429
    %3487 = vmatpush.msra.mxu0 %v3428
    %3488 = vmatpush.msra.mxu0 %v3427
    %3489 = vmatpush.msra.mxu0 %v3426
    %3490 = vmatmul.f32.gmra.mxu0 %v3436
    %v3491 = vpop.f32.mrf.mxu0
    %v3492 = vadd.f32 0.0, %v3491
    %3493 = vmatmul.f32.gmra.mxu0 %v3439
    %v3494 = vpop.f32.mrf.mxu0
    %v3495 = vadd.f32 0.0, %v3494
    %3496 = vmatmul.f32.gmra.mxu0 %v3442
    %v3497 = vpop.f32.mrf.mxu0
    %v3498 = vadd.f32 0.0, %v3497
    %3499 = vmatmul.f32.gmra.mxu0 %v3445
    %v3500 = vpop.f32.mrf.mxu0
    %v3501 = vadd.f32 0.0, %v3500
    %3502 = vmatmul.f32.gmra.mxu0 %v3448
    %v3503 = vpop.f32.mrf.mxu0
    %v3504 = vadd.f32 0.0, %v3503
    %3505 = vmatmul.f32.gmra.mxu0 %v3451
    %v3506 = vpop.f32.mrf.mxu0
    %v3507 = vadd.f32 0.0, %v3506
    %3508 = vmatmul.f32.gmra.mxu0 %v3454
    %v3509 = vpop.f32.mrf.mxu0
    %v3510 = vadd.f32 0.0, %v3509
    %3511 = vmatmul.f32.gmra.mxu0 %v3457
    %v3512 = vpop.f32.mrf.mxu0
    %v3513 = vadd.f32 0.0, %v3512
    %3514 = vmatmul.f32.gmra.mxu0 %v3460
    %v3515 = vpop.f32.mrf.mxu0
    %v3516 = vadd.f32 0.0, %v3515
    %3517 = vmatmul.f32.gmra.mxu0 %v3463
    %v3518 = vpop.f32.mrf.mxu0
    %v3519 = vadd.f32 0.0, %v3518
    %3520 = vmatmul.f32.gmra.mxu0 %v3466
    %v3521 = vpop.f32.mrf.mxu0
    %v3522 = vadd.f32 0.0, %v3521
    %3523 = vmatmul.f32.gmra.mxu0 %v3469
    %v3524 = vpop.f32.mrf.mxu0
    %v3525 = vadd.f32 0.0, %v3524
    %3526 = vmatmul.f32.gmra.mxu0 %v3472
    %v3527 = vpop.f32.mrf.mxu0
    %v3528 = vadd.f32 0.0, %v3527
    %3529 = vdwg.mxu0
    %v3531 = vsel %vm3434, %v3201, 0
    %v3534 = vsel %vm3434, %v3204, 0
    %v3537 = vsel %vm3434, %v3207, 0
    %v3540 = vsel %vm3434, %v3210, 0
    %v3543 = vsel %vm3434, %v3213, 0
    %v3546 = vsel %vm3434, %v3216, 0
    %v3549 = vsel %vm3434, %v3219, 0
    %v3552 = vsel %vm3434, %v3222, 0
    %v3555 = vsel %vm3434, %v3225, 0
    %v3558 = vsel %vm3434, %v3228, 0
    %v3561 = vsel %vm3434, %v3231, 0
    %v3564 = vsel %vm3434, %v3234, 0
    %v3567 = vsel %vm3434, %v3237, 0
    %3569 = vmatpush.msra.mxu0 0.0
    %3570 = vmatpush.msra.mxu0 0.0
    %3571 = vmatpush.msra.mxu0 0.0
    %3572 = vmatpush.msra.mxu0 0.0
    %3573 = vmatpush.msra.mxu0 0.0
    %3574 = vmatpush.msra.mxu0 0.0
    %3575 = vmatpush.msra.mxu0 0.0
    %3576 = vmatpush.msra.mxu0 0.0
    %3577 = vmatpush.msra.mxu0 %v3246
    %3578 = vmatpush.msra.mxu0 %v3245
    %3579 = vmatpush.msra.mxu0 %v3244
    %3580 = vmatpush.msra.mxu0 %v3243
    %3581 = vmatpush.msra.mxu0 %v3242
    %3582 = vmatpush.msra.mxu0 %v3241
    %3583 = vmatpush.msra.mxu0 %v3240
    %3584 = vmatpush.msra.mxu0 %v3239
    %3585 = vmatmul.f32.gmra.mxu0 %v3531
    %v3586 = vpop.f32.mrf.mxu0
    %v3587 = vadd.f32 %v3492, %v3586
    %3588 = vmatmul.f32.gmra.mxu0 %v3534
    %v3589 = vpop.f32.mrf.mxu0
    %v3590 = vadd.f32 %v3495, %v3589
    %3591 = vmatmul.f32.gmra.mxu0 %v3537
    %v3592 = vpop.f32.mrf.mxu0
    %v3593 = vadd.f32 %v3498, %v3592
    %3594 = vmatmul.f32.gmra.mxu0 %v3540
    %v3595 = vpop.f32.mrf.mxu0
    %v3596 = vadd.f32 %v3501, %v3595
    %3597 = vmatmul.f32.gmra.mxu0 %v3543
    %v3598 = vpop.f32.mrf.mxu0
    %v3599 = vadd.f32 %v3504, %v3598
    %3600 = vmatmul.f32.gmra.mxu0 %v3546
    %v3601 = vpop.f32.mrf.mxu0
    %v3602 = vadd.f32 %v3507, %v3601
    %3603 = vmatmul.f32.gmra.mxu0 %v3549
    %v3604 = vpop.f32.mrf.mxu0
    %v3605 = vadd.f32 %v3510, %v3604
    %3606 = vmatmul.f32.gmra.mxu0 %v3552
    %v3607 = vpop.f32.mrf.mxu0
    %v3608 = vadd.f32 %v3513, %v3607
    %3609 = vmatmul.f32.gmra.mxu0 %v3555
    %v3610 = vpop.f32.mrf.mxu0
    %v3611 = vadd.f32 %v3516, %v3610
    %3612 = vmatmul.f32.gmra.mxu0 %v3558
    %v3613 = vpop.f32.mrf.mxu0
    %v3614 = vadd.f32 %v3519, %v3613
    %3615 = vmatmul.f32.gmra.mxu0 %v3561
    %v3616 = vpop.f32.mrf.mxu0
    %v3617 = vadd.f32 %v3522, %v3616
    %3618 = vmatmul.f32.gmra.mxu0 %v3564
    %v3619 = vpop.f32.mrf.mxu0
    %v3620 = vadd.f32 %v3525, %v3619
    %3621 = vmatmul.f32.gmra.mxu0 %v3567
    %v3622 = vpop.f32.mrf.mxu0
    %v3623 = vadd.f32 %v3528, %v3622
    %3624 = vdwg.mxu0
    %s3625 = scalar_lea.vmem %s5, 416
    %v3626 = vld [vmem:[%s3625] sm:$0xff]
    %v3627 = vld [vmem:[%s3625 + $0x8] sm:$0xff]
    %v3628 = vld [vmem:[%s3625 + $0x10] sm:$0xff]
    %v3629 = vld [vmem:[%s3625 + $0x18] sm:$0xff]
    %v3630 = vld [vmem:[%s3625 + $0x20] sm:$0xff]
    %v3631 = vld [vmem:[%s3625 + $0x28] sm:$0xff]
    %v3632 = vld [vmem:[%s3625 + $0x30] sm:$0xff]
    %v3633 = vld [vmem:[%s3625 + $0x38] sm:$0xff]
    %v3634 = vld [vmem:[%s3625 + $0x40] sm:$0xff]
    %v3635 = vld [vmem:[%s3625 + $0x48] sm:$0xff]
    %v3636 = vld [vmem:[%s3625 + $0x50] sm:$0xff]
    %v3637 = vld [vmem:[%s3625 + $0x58] sm:$0xff]
    %v3638 = vld [vmem:[%s3625 + $0x60] sm:$0xff]
    %v3639 = vld [vmem:[%s3625 + $0x68] sm:$0xff]
    %v3640 = vld [vmem:[%s3625 + $0x70] sm:$0xff]
    %v3641 = vld [vmem:[%s3625 + $0x78] sm:$0xff]
    %v3642 = vld [vmem:[%s3625 + $0x80] sm:$0xff]
    %v3643 = vld [vmem:[%s3625 + $0x88] sm:$0xff]
    %v3644 = vld [vmem:[%s3625 + $0x90] sm:$0xff]
    %v3645 = vld [vmem:[%s3625 + $0x98] sm:$0xff]
    %v3646 = vld [vmem:[%s3625 + $0xa0] sm:$0xff]
    %v3647 = vld [vmem:[%s3625 + $0xa8] sm:$0xff]
    %v3648 = vld [vmem:[%s3625 + $0xb0] sm:$0xff]
    %v3649 = vld [vmem:[%s3625 + $0xb8] sm:$0xff]
    %v3650 = vld [vmem:[%s3625 + $0xc0] sm:$0xff]
    %v3651 = vld [vmem:[%s3625 + $0xc8] sm:$0xff]
    %v3653 = vsel %vm3087, %v3627, 0
    %v3656 = vsel %vm3087, %v3629, 0
    %v3659 = vsel %vm3087, %v3631, 0
    %v3662 = vsel %vm3087, %v3633, 0
    %v3665 = vsel %vm3087, %v3635, 0
    %v3668 = vsel %vm3087, %v3637, 0
    %v3671 = vsel %vm3087, %v3639, 0
    %v3674 = vsel %vm3087, %v3641, 0
    %v3677 = vsel %vm3087, %v3643, 0
    %v3680 = vsel %vm3087, %v3645, 0
    %v3683 = vsel %vm3087, %v3647, 0
    %v3686 = vsel %vm3087, %v3649, 0
    %v3689 = vsel %vm3087, %v3651, 0
    %3691 = vmatpush.msra.mxu0 %v3051
    %3692 = vmatpush.msra.mxu0 %v3050
    %3693 = vmatpush.msra.mxu0 %v3049
    %3694 = vmatpush.msra.mxu0 %v3048
    %3695 = vmatpush.msra.mxu0 %v3047
    %3696 = vmatpush.msra.mxu0 %v3046
    %3697 = vmatpush.msra.mxu0 %v3045
    %3698 = vmatpush.msra.mxu0 %v3044
    %3699 = vmatpush.msra.mxu0 %v3043
    %3700 = vmatpush.msra.mxu0 %v3042
    %3701 = vmatpush.msra.mxu0 %v3041
    %3702 = vmatpush.msra.mxu0 %v3040
    %3703 = vmatpush.msra.mxu0 %v3039
    %3704 = vmatpush.msra.mxu0 %v3038
    %3705 = vmatpush.msra.mxu0 %v3037
    %3706 = vmatpush.msra.mxu0 %v3036
    %3707 = vmatmul.f32.gmra.mxu0 %v3626
    %v3708 = vpop.f32.mrf.mxu0
    %v3709 = vadd.f32 0.0, %v3708
    %3710 = vmatmul.f32.gmra.mxu0 %v3628
    %v3711 = vpop.f32.mrf.mxu0
    %v3712 = vadd.f32 0.0, %v3711
    %3713 = vmatmul.f32.gmra.mxu0 %v3630
    %v3714 = vpop.f32.mrf.mxu0
    %v3715 = vadd.f32 0.0, %v3714
    %3716 = vmatmul.f32.gmra.mxu0 %v3632
    %v3717 = vpop.f32.mrf.mxu0
    %v3718 = vadd.f32 0.0, %v3717
    %3719 = vmatmul.f32.gmra.mxu0 %v3634
    %v3720 = vpop.f32.mrf.mxu0
    %v3721 = vadd.f32 0.0, %v3720
    %3722 = vmatmul.f32.gmra.mxu0 %v3636
    %v3723 = vpop.f32.mrf.mxu0
    %v3724 = vadd.f32 0.0, %v3723
    %3725 = vmatmul.f32.gmra.mxu0 %v3638
    %v3726 = vpop.f32.mrf.mxu0
    %v3727 = vadd.f32 0.0, %v3726
    %3728 = vmatmul.f32.gmra.mxu0 %v3640
    %v3729 = vpop.f32.mrf.mxu0
    %v3730 = vadd.f32 0.0, %v3729
    %3731 = vmatmul.f32.gmra.mxu0 %v3642
    %v3732 = vpop.f32.mrf.mxu0
    %v3733 = vadd.f32 0.0, %v3732
    %3734 = vmatmul.f32.gmra.mxu0 %v3644
    %v3735 = vpop.f32.mrf.mxu0
    %v3736 = vadd.f32 0.0, %v3735
    %3737 = vmatmul.f32.gmra.mxu0 %v3646
    %v3738 = vpop.f32.mrf.mxu0
    %v3739 = vadd.f32 0.0, %v3738
    %3740 = vmatmul.f32.gmra.mxu0 %v3648
    %v3741 = vpop.f32.mrf.mxu0
    %v3742 = vadd.f32 0.0, %v3741
    %3743 = vmatmul.f32.gmra.mxu0 %v3650
    %v3744 = vpop.f32.mrf.mxu0
    %v3745 = vadd.f32 0.0, %v3744
    %3746 = vdwg.mxu0
    %3747 = vmatpush.msra.mxu0 0.0
    %3748 = vmatpush.msra.mxu0 0.0
    %3749 = vmatpush.msra.mxu0 0.0
    %3750 = vmatpush.msra.mxu0 0.0
    %3751 = vmatpush.msra.mxu0 0.0
    %3752 = vmatpush.msra.mxu0 0.0
    %3753 = vmatpush.msra.mxu0 0.0
    %3754 = vmatpush.msra.mxu0 %v3060
    %3755 = vmatpush.msra.mxu0 %v3059
    %3756 = vmatpush.msra.mxu0 %v3058
    %3757 = vmatpush.msra.mxu0 %v3057
    %3758 = vmatpush.msra.mxu0 %v3056
    %3759 = vmatpush.msra.mxu0 %v3055
    %3760 = vmatpush.msra.mxu0 %v3054
    %3761 = vmatpush.msra.mxu0 %v3053
    %3762 = vmatpush.msra.mxu0 %v3052
    %3763 = vmatmul.f32.gmra.mxu0 %v3653
    %v3764 = vpop.f32.mrf.mxu0
    %v3765 = vadd.f32 %v3709, %v3764
    %3766 = vmatmul.f32.gmra.mxu0 %v3656
    %v3767 = vpop.f32.mrf.mxu0
    %v3768 = vadd.f32 %v3712, %v3767
    %3769 = vmatmul.f32.gmra.mxu0 %v3659
    %v3770 = vpop.f32.mrf.mxu0
    %v3771 = vadd.f32 %v3715, %v3770
    %3772 = vmatmul.f32.gmra.mxu0 %v3662
    %v3773 = vpop.f32.mrf.mxu0
    %v3774 = vadd.f32 %v3718, %v3773
    %3775 = vmatmul.f32.gmra.mxu0 %v3665
    %v3776 = vpop.f32.mrf.mxu0
    %v3777 = vadd.f32 %v3721, %v3776
    %3778 = vmatmul.f32.gmra.mxu0 %v3668
    %v3779 = vpop.f32.mrf.mxu0
    %v3780 = vadd.f32 %v3724, %v3779
    %3781 = vmatmul.f32.gmra.mxu0 %v3671
    %v3782 = vpop.f32.mrf.mxu0
    %v3783 = vadd.f32 %v3727, %v3782
    %3784 = vmatmul.f32.gmra.mxu0 %v3674
    %v3785 = vpop.f32.mrf.mxu0
    %v3786 = vadd.f32 %v3730, %v3785
    %3787 = vmatmul.f32.gmra.mxu0 %v3677
    %v3788 = vpop.f32.mrf.mxu0
    %v3789 = vadd.f32 %v3733, %v3788
    %3790 = vmatmul.f32.gmra.mxu0 %v3680
    %v3791 = vpop.f32.mrf.mxu0
    %v3792 = vadd.f32 %v3736, %v3791
    %3793 = vmatmul.f32.gmra.mxu0 %v3683
    %v3794 = vpop.f32.mrf.mxu0
    %v3795 = vadd.f32 %v3739, %v3794
    %3796 = vmatmul.f32.gmra.mxu0 %v3686
    %v3797 = vpop.f32.mrf.mxu0
    %v3798 = vadd.f32 %v3742, %v3797
    %3799 = vmatmul.f32.gmra.mxu0 %v3689
    %v3800 = vpop.f32.mrf.mxu0
    %v3801 = vadd.f32 %v3745, %v3800
    %3802 = vdwg.mxu0
    %s3803 = scalar_lea.vmem %s6, 128
    %v3804 = vld [vmem:[%s3803] sm:$0xff]
    %v3805 = vld [vmem:[%s3803 + $0x8] sm:$0xff]
    %v3806 = vld [vmem:[%s3803 + $0x10] sm:$0xff]
    %v3807 = vld [vmem:[%s3803 + $0x18] sm:$0xff]
    %v3808 = vld [vmem:[%s3803 + $0x20] sm:$0xff]
    %v3809 = vld [vmem:[%s3803 + $0x28] sm:$0xff]
    %v3810 = vld [vmem:[%s3803 + $0x30] sm:$0xff]
    %v3811 = vld [vmem:[%s3803 + $0x38] sm:$0xff]
    %v3813 = vsel %vm3434, %v3765, 0
    %v3816 = vsel %vm3434, %v3768, 0
    %v3819 = vsel %vm3434, %v3771, 0
    %v3822 = vsel %vm3434, %v3774, 0
    %v3825 = vsel %vm3434, %v3777, 0
    %v3828 = vsel %vm3434, %v3780, 0
    %v3831 = vsel %vm3434, %v3783, 0
    %v3834 = vsel %vm3434, %v3786, 0
    %v3837 = vsel %vm3434, %v3789, 0
    %v3840 = vsel %vm3434, %v3792, 0
    %v3843 = vsel %vm3434, %v3795, 0
    %v3846 = vsel %vm3434, %v3798, 0
    %v3849 = vsel %vm3434, %v3801, 0
    %3851 = vmatpush.msra.mxu0 0.0
    %3852 = vmatpush.msra.mxu0 0.0
    %3853 = vmatpush.msra.mxu0 0.0
    %3854 = vmatpush.msra.mxu0 0.0
    %3855 = vmatpush.msra.mxu0 0.0
    %3856 = vmatpush.msra.mxu0 0.0
    %3857 = vmatpush.msra.mxu0 0.0
    %3858 = vmatpush.msra.mxu0 0.0
    %3859 = vmatpush.msra.mxu0 %v3811
    %3860 = vmatpush.msra.mxu0 %v3810
    %3861 = vmatpush.msra.mxu0 %v3809
    %3862 = vmatpush.msra.mxu0 %v3808
    %3863 = vmatpush.msra.mxu0 %v3807
    %3864 = vmatpush.msra.mxu0 %v3806
    %3865 = vmatpush.msra.mxu0 %v3805
    %3866 = vmatpush.msra.mxu0 %v3804
    %3867 = vmatmul.f32.gmra.mxu0 %v3813
    %v3868 = vpop.f32.mrf.mxu0
    %v3869 = vadd.f32 0.0, %v3868
    %3870 = vmatmul.f32.gmra.mxu0 %v3816
    %v3871 = vpop.f32.mrf.mxu0
    %v3872 = vadd.f32 0.0, %v3871
    %3873 = vmatmul.f32.gmra.mxu0 %v3819
    %v3874 = vpop.f32.mrf.mxu0
    %v3875 = vadd.f32 0.0, %v3874
    %3876 = vmatmul.f32.gmra.mxu0 %v3822
    %v3877 = vpop.f32.mrf.mxu0
    %v3878 = vadd.f32 0.0, %v3877
    %3879 = vmatmul.f32.gmra.mxu0 %v3825
    %v3880 = vpop.f32.mrf.mxu0
    %v3881 = vadd.f32 0.0, %v3880
    %3882 = vmatmul.f32.gmra.mxu0 %v3828
    %v3883 = vpop.f32.mrf.mxu0
    %v3884 = vadd.f32 0.0, %v3883
    %3885 = vmatmul.f32.gmra.mxu0 %v3831
    %v3886 = vpop.f32.mrf.mxu0
    %v3887 = vadd.f32 0.0, %v3886
    %3888 = vmatmul.f32.gmra.mxu0 %v3834
    %v3889 = vpop.f32.mrf.mxu0
    %v3890 = vadd.f32 0.0, %v3889
    %3891 = vmatmul.f32.gmra.mxu0 %v3837
    %v3892 = vpop.f32.mrf.mxu0
    %v3893 = vadd.f32 0.0, %v3892
    %3894 = vmatmul.f32.gmra.mxu0 %v3840
    %v3895 = vpop.f32.mrf.mxu0
    %v3896 = vadd.f32 0.0, %v3895
    %3897 = vmatmul.f32.gmra.mxu0 %v3843
    %v3898 = vpop.f32.mrf.mxu0
    %v3899 = vadd.f32 0.0, %v3898
    %3900 = vmatmul.f32.gmra.mxu0 %v3846
    %v3901 = vpop.f32.mrf.mxu0
    %v3902 = vadd.f32 0.0, %v3901
    %3903 = vmatmul.f32.gmra.mxu0 %v3849
    %v3904 = vpop.f32.mrf.mxu0
    %v3905 = vadd.f32 0.0, %v3904
    %3906 = vdwg.mxu0
    %v3907 = vadd.f32 %v3587, %v3869
    %v3908 = vadd.f32 %v3590, %v3872
    %v3909 = vadd.f32 %v3593, %v3875
    %v3910 = vadd.f32 %v3596, %v3878
    %v3911 = vadd.f32 %v3599, %v3881
    %v3912 = vadd.f32 %v3602, %v3884
    %v3913 = vadd.f32 %v3605, %v3887
    %v3914 = vadd.f32 %v3608, %v3890
    %v3915 = vadd.f32 %v3611, %v3893
    %v3916 = vadd.f32 %v3614, %v3896
    %v3917 = vadd.f32 %v3617, %v3899
    %v3918 = vadd.f32 %v3620, %v3902
    %v3919 = vadd.f32 %v3623, %v3905
    %s3920 = scalar_lea.vmem %s5, 624
    %v3921 = vld [vmem:[%s3920] sm:$0xff]
    %v3922 = vld [vmem:[%s3920 + $0x8] sm:$0xff]
    %v3923 = vld [vmem:[%s3920 + $0x10] sm:$0xff]
    %v3924 = vld [vmem:[%s3920 + $0x18] sm:$0xff]
    %v3925 = vld [vmem:[%s3920 + $0x20] sm:$0xff]
    %v3926 = vld [vmem:[%s3920 + $0x28] sm:$0xff]
    %v3927 = vld [vmem:[%s3920 + $0x30] sm:$0xff]
    %v3928 = vld [vmem:[%s3920 + $0x38] sm:$0xff]
    %v3929 = vld [vmem:[%s3920 + $0x40] sm:$0xff]
    %v3930 = vld [vmem:[%s3920 + $0x48] sm:$0xff]
    %v3931 = vld [vmem:[%s3920 + $0x50] sm:$0xff]
    %v3932 = vld [vmem:[%s3920 + $0x58] sm:$0xff]
    %v3933 = vld [vmem:[%s3920 + $0x60] sm:$0xff]
    %v3934 = vld [vmem:[%s3920 + $0x68] sm:$0xff]
    %v3935 = vld [vmem:[%s3920 + $0x70] sm:$0xff]
    %v3936 = vld [vmem:[%s3920 + $0x78] sm:$0xff]
    %v3937 = vld [vmem:[%s3920 + $0x80] sm:$0xff]
    %v3938 = vld [vmem:[%s3920 + $0x88] sm:$0xff]
    %v3939 = vld [vmem:[%s3920 + $0x90] sm:$0xff]
    %v3940 = vld [vmem:[%s3920 + $0x98] sm:$0xff]
    %v3941 = vld [vmem:[%s3920 + $0xa0] sm:$0xff]
    %v3942 = vld [vmem:[%s3920 + $0xa8] sm:$0xff]
    %v3943 = vld [vmem:[%s3920 + $0xb0] sm:$0xff]
    %v3944 = vld [vmem:[%s3920 + $0xb8] sm:$0xff]
    %v3945 = vld [vmem:[%s3920 + $0xc0] sm:$0xff]
    %v3946 = vld [vmem:[%s3920 + $0xc8] sm:$0xff]
    %v3948 = vsel %vm3087, %v3922, 0
    %v3951 = vsel %vm3087, %v3924, 0
    %v3954 = vsel %vm3087, %v3926, 0
    %v3957 = vsel %vm3087, %v3928, 0
    %v3960 = vsel %vm3087, %v3930, 0
    %v3963 = vsel %vm3087, %v3932, 0
    %v3966 = vsel %vm3087, %v3934, 0
    %v3969 = vsel %vm3087, %v3936, 0
    %v3972 = vsel %vm3087, %v3938, 0
    %v3975 = vsel %vm3087, %v3940, 0
    %v3978 = vsel %vm3087, %v3942, 0
    %v3981 = vsel %vm3087, %v3944, 0
    %v3984 = vsel %vm3087, %v3946, 0
    %3986 = vmatpush.msra.mxu0 %v3051
    %3987 = vmatpush.msra.mxu0 %v3050
    %3988 = vmatpush.msra.mxu0 %v3049
    %3989 = vmatpush.msra.mxu0 %v3048
    %3990 = vmatpush.msra.mxu0 %v3047
    %3991 = vmatpush.msra.mxu0 %v3046
    %3992 = vmatpush.msra.mxu0 %v3045
    %3993 = vmatpush.msra.mxu0 %v3044
    %3994 = vmatpush.msra.mxu0 %v3043
    %3995 = vmatpush.msra.mxu0 %v3042
    %3996 = vmatpush.msra.mxu0 %v3041
    %3997 = vmatpush.msra.mxu0 %v3040
    %3998 = vmatpush.msra.mxu0 %v3039
    %3999 = vmatpush.msra.mxu0 %v3038
    %4000 = vmatpush.msra.mxu0 %v3037
    %4001 = vmatpush.msra.mxu0 %v3036
    %4002 = vmatmul.f32.gmra.mxu0 %v3921
    %v4003 = vpop.f32.mrf.mxu0
    %v4004 = vadd.f32 0.0, %v4003
    %4005 = vmatmul.f32.gmra.mxu0 %v3923
    %v4006 = vpop.f32.mrf.mxu0
    %v4007 = vadd.f32 0.0, %v4006
    %4008 = vmatmul.f32.gmra.mxu0 %v3925
    %v4009 = vpop.f32.mrf.mxu0
    %v4010 = vadd.f32 0.0, %v4009
    %4011 = vmatmul.f32.gmra.mxu0 %v3927
    %v4012 = vpop.f32.mrf.mxu0
    %v4013 = vadd.f32 0.0, %v4012
    %4014 = vmatmul.f32.gmra.mxu0 %v3929
    %v4015 = vpop.f32.mrf.mxu0
    %v4016 = vadd.f32 0.0, %v4015
    %4017 = vmatmul.f32.gmra.mxu0 %v3931
    %v4018 = vpop.f32.mrf.mxu0
    %v4019 = vadd.f32 0.0, %v4018
    %4020 = vmatmul.f32.gmra.mxu0 %v3933
    %v4021 = vpop.f32.mrf.mxu0
    %v4022 = vadd.f32 0.0, %v4021
    %4023 = vmatmul.f32.gmra.mxu0 %v3935
    %v4024 = vpop.f32.mrf.mxu0
    %v4025 = vadd.f32 0.0, %v4024
    %4026 = vmatmul.f32.gmra.mxu0 %v3937
    %v4027 = vpop.f32.mrf.mxu0
    %v4028 = vadd.f32 0.0, %v4027
    %4029 = vmatmul.f32.gmra.mxu0 %v3939
    %v4030 = vpop.f32.mrf.mxu0
    %v4031 = vadd.f32 0.0, %v4030
    %4032 = vmatmul.f32.gmra.mxu0 %v3941
    %v4033 = vpop.f32.mrf.mxu0
    %v4034 = vadd.f32 0.0, %v4033
    %4035 = vmatmul.f32.gmra.mxu0 %v3943
    %v4036 = vpop.f32.mrf.mxu0
    %v4037 = vadd.f32 0.0, %v4036
    %4038 = vmatmul.f32.gmra.mxu0 %v3945
    %v4039 = vpop.f32.mrf.mxu0
    %v4040 = vadd.f32 0.0, %v4039
    %4041 = vdwg.mxu0
    %4042 = vmatpush.msra.mxu0 0.0
    %4043 = vmatpush.msra.mxu0 0.0
    %4044 = vmatpush.msra.mxu0 0.0
    %4045 = vmatpush.msra.mxu0 0.0
    %4046 = vmatpush.msra.mxu0 0.0
    %4047 = vmatpush.msra.mxu0 0.0
    %4048 = vmatpush.msra.mxu0 0.0
    %4049 = vmatpush.msra.mxu0 %v3060
    %4050 = vmatpush.msra.mxu0 %v3059
    %4051 = vmatpush.msra.mxu0 %v3058
    %4052 = vmatpush.msra.mxu0 %v3057
    %4053 = vmatpush.msra.mxu0 %v3056
    %4054 = vmatpush.msra.mxu0 %v3055
    %4055 = vmatpush.msra.mxu0 %v3054
    %4056 = vmatpush.msra.mxu0 %v3053
    %4057 = vmatpush.msra.mxu0 %v3052
    %4058 = vmatmul.f32.gmra.mxu0 %v3948
    %v4059 = vpop.f32.mrf.mxu0
    %v4060 = vadd.f32 %v4004, %v4059
    %4061 = vmatmul.f32.gmra.mxu0 %v3951
    %v4062 = vpop.f32.mrf.mxu0
    %v4063 = vadd.f32 %v4007, %v4062
    %4064 = vmatmul.f32.gmra.mxu0 %v3954
    %v4065 = vpop.f32.mrf.mxu0
    %v4066 = vadd.f32 %v4010, %v4065
    %4067 = vmatmul.f32.gmra.mxu0 %v3957
    %v4068 = vpop.f32.mrf.mxu0
    %v4069 = vadd.f32 %v4013, %v4068
    %4070 = vmatmul.f32.gmra.mxu0 %v3960
    %v4071 = vpop.f32.mrf.mxu0
    %v4072 = vadd.f32 %v4016, %v4071
    %4073 = vmatmul.f32.gmra.mxu0 %v3963
    %v4074 = vpop.f32.mrf.mxu0
    %v4075 = vadd.f32 %v4019, %v4074
    %4076 = vmatmul.f32.gmra.mxu0 %v3966
    %v4077 = vpop.f32.mrf.mxu0
    %v4078 = vadd.f32 %v4022, %v4077
    %4079 = vmatmul.f32.gmra.mxu0 %v3969
    %v4080 = vpop.f32.mrf.mxu0
    %v4081 = vadd.f32 %v4025, %v4080
    %4082 = vmatmul.f32.gmra.mxu0 %v3972
    %v4083 = vpop.f32.mrf.mxu0
    %v4084 = vadd.f32 %v4028, %v4083
    %4085 = vmatmul.f32.gmra.mxu0 %v3975
    %v4086 = vpop.f32.mrf.mxu0
    %v4087 = vadd.f32 %v4031, %v4086
    %4088 = vmatmul.f32.gmra.mxu0 %v3978
    %v4089 = vpop.f32.mrf.mxu0
    %v4090 = vadd.f32 %v4034, %v4089
    %4091 = vmatmul.f32.gmra.mxu0 %v3981
    %v4092 = vpop.f32.mrf.mxu0
    %v4093 = vadd.f32 %v4037, %v4092
    %4094 = vmatmul.f32.gmra.mxu0 %v3984
    %v4095 = vpop.f32.mrf.mxu0
    %v4096 = vadd.f32 %v4040, %v4095
    %4097 = vdwg.mxu0
    %s4098 = scalar_lea.vmem %s6, 192
    %v4099 = vld [vmem:[%s4098] sm:$0xff]
    %v4100 = vld [vmem:[%s4098 + $0x8] sm:$0xff]
    %v4101 = vld [vmem:[%s4098 + $0x10] sm:$0xff]
    %v4102 = vld [vmem:[%s4098 + $0x18] sm:$0xff]
    %v4103 = vld [vmem:[%s4098 + $0x20] sm:$0xff]
    %v4104 = vld [vmem:[%s4098 + $0x28] sm:$0xff]
    %v4105 = vld [vmem:[%s4098 + $0x30] sm:$0xff]
    %v4106 = vld [vmem:[%s4098 + $0x38] sm:$0xff]
    %v4108 = vsel %vm3434, %v4060, 0
    %v4111 = vsel %vm3434, %v4063, 0
    %v4114 = vsel %vm3434, %v4066, 0
    %v4117 = vsel %vm3434, %v4069, 0
    %v4120 = vsel %vm3434, %v4072, 0
    %v4123 = vsel %vm3434, %v4075, 0
    %v4126 = vsel %vm3434, %v4078, 0
    %v4129 = vsel %vm3434, %v4081, 0
    %v4132 = vsel %vm3434, %v4084, 0
    %v4135 = vsel %vm3434, %v4087, 0
    %v4138 = vsel %vm3434, %v4090, 0
    %v4141 = vsel %vm3434, %v4093, 0
    %v4144 = vsel %vm3434, %v4096, 0
    %4146 = vmatpush.msra.mxu0 0.0
    %4147 = vmatpush.msra.mxu0 0.0
    %4148 = vmatpush.msra.mxu0 0.0
    %4149 = vmatpush.msra.mxu0 0.0
    %4150 = vmatpush.msra.mxu0 0.0
    %4151 = vmatpush.msra.mxu0 0.0
    %4152 = vmatpush.msra.mxu0 0.0
    %4153 = vmatpush.msra.mxu0 0.0
    %4154 = vmatpush.msra.mxu0 %v4106
    %4155 = vmatpush.msra.mxu0 %v4105
    %4156 = vmatpush.msra.mxu0 %v4104
    %4157 = vmatpush.msra.mxu0 %v4103
    %4158 = vmatpush.msra.mxu0 %v4102
    %4159 = vmatpush.msra.mxu0 %v4101
    %4160 = vmatpush.msra.mxu0 %v4100
    %4161 = vmatpush.msra.mxu0 %v4099
    %4162 = vmatmul.f32.gmra.mxu0 %v4108
    %v4163 = vpop.f32.mrf.mxu0
    %v4164 = vadd.f32 0.0, %v4163
    %4165 = vmatmul.f32.gmra.mxu0 %v4111
    %v4166 = vpop.f32.mrf.mxu0
    %v4167 = vadd.f32 0.0, %v4166
    %4168 = vmatmul.f32.gmra.mxu0 %v4114
    %v4169 = vpop.f32.mrf.mxu0
    %v4170 = vadd.f32 0.0, %v4169
    %4171 = vmatmul.f32.gmra.mxu0 %v4117
    %v4172 = vpop.f32.mrf.mxu0
    %v4173 = vadd.f32 0.0, %v4172
    %4174 = vmatmul.f32.gmra.mxu0 %v4120
    %v4175 = vpop.f32.mrf.mxu0
    %v4176 = vadd.f32 0.0, %v4175
    %4177 = vmatmul.f32.gmra.mxu0 %v4123
    %v4178 = vpop.f32.mrf.mxu0
    %v4179 = vadd.f32 0.0, %v4178
    %4180 = vmatmul.f32.gmra.mxu0 %v4126
    %v4181 = vpop.f32.mrf.mxu0
    %v4182 = vadd.f32 0.0, %v4181
    %4183 = vmatmul.f32.gmra.mxu0 %v4129
    %v4184 = vpop.f32.mrf.mxu0
    %v4185 = vadd.f32 0.0, %v4184
    %4186 = vmatmul.f32.gmra.mxu0 %v4132
    %v4187 = vpop.f32.mrf.mxu0
    %v4188 = vadd.f32 0.0, %v4187
    %4189 = vmatmul.f32.gmra.mxu0 %v4135
    %v4190 = vpop.f32.mrf.mxu0
    %v4191 = vadd.f32 0.0, %v4190
    %4192 = vmatmul.f32.gmra.mxu0 %v4138
    %v4193 = vpop.f32.mrf.mxu0
    %v4194 = vadd.f32 0.0, %v4193
    %4195 = vmatmul.f32.gmra.mxu0 %v4141
    %v4196 = vpop.f32.mrf.mxu0
    %v4197 = vadd.f32 0.0, %v4196
    %4198 = vmatmul.f32.gmra.mxu0 %v4144
    %v4199 = vpop.f32.mrf.mxu0
    %v4200 = vadd.f32 0.0, %v4199
    %4201 = vdwg.mxu0
    %v4202 = vadd.f32 %v3907, %v4164
    %v4203 = vadd.f32 %v3908, %v4167
    %v4204 = vadd.f32 %v3909, %v4170
    %v4205 = vadd.f32 %v3910, %v4173
    %v4206 = vadd.f32 %v3911, %v4176
    %v4207 = vadd.f32 %v3912, %v4179
    %v4208 = vadd.f32 %v3913, %v4182
    %v4209 = vadd.f32 %v3914, %v4185
    %v4210 = vadd.f32 %v3915, %v4188
    %v4211 = vadd.f32 %v3916, %v4191
    %v4212 = vadd.f32 %v3917, %v4194
    %v4213 = vadd.f32 %v3918, %v4197
    %v4214 = vadd.f32 %v3919, %v4200
    %v4215 = vld [vmem:[#allocation7] sm:$0x1]
    %v4217 = vperm.slane %v4215, 0
    %v4219 = vmul.f32 %v4202, %v4217
    %v4220 = vmul.f32 %v4203, %v4217
    %v4221 = vmul.f32 %v4204, %v4217
    %v4222 = vmul.f32 %v4205, %v4217
    %v4223 = vmul.f32 %v4206, %v4217
    %v4224 = vmul.f32 %v4207, %v4217
    %v4225 = vmul.f32 %v4208, %v4217
    %v4226 = vmul.f32 %v4209, %v4217
    %v4227 = vmul.f32 %v4210, %v4217
    %v4228 = vmul.f32 %v4211, %v4217
    %v4229 = vmul.f32 %v4212, %v4217
    %v4230 = vmul.f32 %v4213, %v4217
    %v4231 = vmul.f32 %v4214, %v4217
    %v4232 = vld [vmem:[#allocation9] sm:$0x1]
    %v4234 = vperm.slane %v4232, 0
    %v4236 = vadd.f32 %v4219, %v4234
    %v4237 = vadd.f32 %v4220, %v4234
    %v4238 = vadd.f32 %v4221, %v4234
    %v4239 = vadd.f32 %v4222, %v4234
    %v4240 = vadd.f32 %v4223, %v4234
    %v4241 = vadd.f32 %v4224, %v4234
    %v4242 = vadd.f32 %v4225, %v4234
    %v4243 = vadd.f32 %v4226, %v4234
    %v4244 = vadd.f32 %v4227, %v4234
    %v4245 = vadd.f32 %v4228, %v4234
    %v4246 = vadd.f32 %v4229, %v4234
    %v4247 = vadd.f32 %v4230, %v4234
    %v4248 = vadd.f32 %v4231, %v4234
    %v4249 = vmul.f32 %v4236, 0.5
    %v4250 = vmul.f32 %v4237, 0.5
    %v4251 = vmul.f32 %v4238, 0.5
    %v4252 = vmul.f32 %v4239, 0.5
    %v4253 = vmul.f32 %v4240, 0.5
    %v4254 = vmul.f32 %v4241, 0.5
    %v4255 = vmul.f32 %v4242, 0.5
    %v4256 = vmul.f32 %v4243, 0.5
    %v4257 = vmul.f32 %v4244, 0.5
    %v4258 = vmul.f32 %v4245, 0.5
    %v4259 = vmul.f32 %v4246, 0.5
    %v4260 = vmul.f32 %v4247, 0.5
    %v4261 = vmul.f32 %v4248, 0.5
    %v4262 = vmul.f32 %v4236, 0.70710677
    %v4263 = vmul.f32 %v4237, 0.70710677
    %v4264 = vmul.f32 %v4238, 0.70710677
    %v4265 = vmul.f32 %v4239, 0.70710677
    %v4266 = vmul.f32 %v4240, 0.70710677
    %v4267 = vmul.f32 %v4241, 0.70710677
    %v4268 = vmul.f32 %v4242, 0.70710677
    %v4269 = vmul.f32 %v4243, 0.70710677
    %v4270 = vmul.f32 %v4244, 0.70710677
    %v4271 = vmul.f32 %v4245, 0.70710677
    %v4272 = vmul.f32 %v4246, 0.70710677
    %v4273 = vmul.f32 %v4247, 0.70710677
    %v4274 = vmul.f32 %v4248, 0.70710677
    %v4275 = vmul.f32 %v4262, %v4262
    %v4276 = vmin.f32 16.0, %v4275
    %v4277 = vmul.f32 %v4276, 2.1237322e-06
    %v4278 = vadd.f32 %v4277, 0.00028619796
    %v4279 = vmul.f32 %v4276, %v4278
    %v4280 = vadd.f32 %v4279, 0.0036580483
    %v4281 = vmul.f32 %v4276, %v4280
    %v4282 = vadd.f32 %v4281, 0.05243302
    %v4283 = vmul.f32 %v4276, %v4282
    %v4284 = vadd.f32 %v4283, 0.18741608
    %v4285 = vmul.f32 %v4276, %v4284
    %v4286 = vadd.f32 %v4285, 1.1283791
    %v4287 = vmul.f32 %v4262, %v4286
    %v4288 = vmul.f32 %v4276, 3.8918573e-05
    %v4289 = vadd.f32 %v4288, 0.001143296
    %v4290 = vmul.f32 %v4276, %v4289
    %v4291 = vadd.f32 %v4290, 0.014752088
    %v4292 = vmul.f32 %v4276, %v4291
    %v4293 = vadd.f32 %v4292, 0.112945676
    %v4294 = vmul.f32 %v4276, %v4293
    %v4295 = vadd.f32 %v4294, 0.4994258
    %v4296 = vmul.f32 %v4276, %v4295
    %v4297 = vadd.f32 %v4296, 1.0
    %v4298 = vrcp.pop %v4297
    %v4299 = vmul.f32 %v4297, %v4298
    %v4300 = vsub.f32 1.0, %v4299
    %v4301 = vmul.f32 %v4298, %v4300
    %v4302 = vadd.f32 %v4298, %v4301
    %vm4303 = vweird.f32 %v4297
    %vm4304 = vweird.f32 %v4298
    %vm4305 = vmor %vm4303, %vm4304
    %v4306 = vsel %vm4305, %v4298, %v4302
    %v4307 = vand.u32 2147483647, %v4297
    %vm4308 = vcmp.eq.f32.partialorder %v4307, 8.507059e+37
    %v4309 = vand.u32 %v4297, 2147483648
    %v4310 = vor.u32 1.1754944e-38, %v4309
    %v4311 = vsel %vm4308, %v4310, %v4306
    %v4312 = vmul.f32 %v4287, %v4311
    %v4313 = vmin.f32 %v4312, 1.0
    %v4314 = vmax.f32 %v4313, -1.0
    %v4315 = vmul.f32 %v4263, %v4263
    %v4316 = vmin.f32 16.0, %v4315
    %v4317 = vmul.f32 %v4316, 2.1237322e-06
    %v4318 = vadd.f32 %v4317, 0.00028619796
    %v4319 = vmul.f32 %v4316, %v4318
    %v4320 = vadd.f32 %v4319, 0.0036580483
    %v4321 = vmul.f32 %v4316, %v4320
    %v4322 = vadd.f32 %v4321, 0.05243302
    %v4323 = vmul.f32 %v4316, %v4322
    %v4324 = vadd.f32 %v4323, 0.18741608
    %v4325 = vmul.f32 %v4316, %v4324
    %v4326 = vadd.f32 %v4325, 1.1283791
    %v4327 = vmul.f32 %v4263, %v4326
    %v4328 = vmul.f32 %v4316, 3.8918573e-05
    %v4329 = vadd.f32 %v4328, 0.001143296
    %v4330 = vmul.f32 %v4316, %v4329
    %v4331 = vadd.f32 %v4330, 0.014752088
    %v4332 = vmul.f32 %v4316, %v4331
    %v4333 = vadd.f32 %v4332, 0.112945676
    %v4334 = vmul.f32 %v4316, %v4333
    %v4335 = vadd.f32 %v4334, 0.4994258
    %v4336 = vmul.f32 %v4316, %v4335
    %v4337 = vadd.f32 %v4336, 1.0
    %v4338 = vrcp.pop %v4337
    %v4339 = vmul.f32 %v4337, %v4338
    %v4340 = vsub.f32 1.0, %v4339
    %v4341 = vmul.f32 %v4338, %v4340
    %v4342 = vadd.f32 %v4338, %v4341
    %vm4343 = vweird.f32 %v4337
    %vm4344 = vweird.f32 %v4338
    %vm4345 = vmor %vm4343, %vm4344
    %v4346 = vsel %vm4345, %v4338, %v4342
    %v4347 = vand.u32 2147483647, %v4337
    %vm4348 = vcmp.eq.f32.partialorder %v4347, 8.507059e+37
    %v4349 = vand.u32 %v4337, 2147483648
    %v4350 = vor.u32 1.1754944e-38, %v4349
    %v4351 = vsel %vm4348, %v4350, %v4346
    %v4352 = vmul.f32 %v4327, %v4351
    %v4353 = vmin.f32 %v4352, 1.0
    %v4354 = vmax.f32 %v4353, -1.0
    %v4355 = vmul.f32 %v4264, %v4264
    %v4356 = vmin.f32 16.0, %v4355
    %v4357 = vmul.f32 %v4356, 2.1237322e-06
    %v4358 = vadd.f32 %v4357, 0.00028619796
    %v4359 = vmul.f32 %v4356, %v4358
    %v4360 = vadd.f32 %v4359, 0.0036580483
    %v4361 = vmul.f32 %v4356, %v4360
    %v4362 = vadd.f32 %v4361, 0.05243302
    %v4363 = vmul.f32 %v4356, %v4362
    %v4364 = vadd.f32 %v4363, 0.18741608
    %v4365 = vmul.f32 %v4356, %v4364
    %v4366 = vadd.f32 %v4365, 1.1283791
    %v4367 = vmul.f32 %v4264, %v4366
    %v4368 = vmul.f32 %v4356, 3.8918573e-05
    %v4369 = vadd.f32 %v4368, 0.001143296
    %v4370 = vmul.f32 %v4356, %v4369
    %v4371 = vadd.f32 %v4370, 0.014752088
    %v4372 = vmul.f32 %v4356, %v4371
    %v4373 = vadd.f32 %v4372, 0.112945676
    %v4374 = vmul.f32 %v4356, %v4373
    %v4375 = vadd.f32 %v4374, 0.4994258
    %v4376 = vmul.f32 %v4356, %v4375
    %v4377 = vadd.f32 %v4376, 1.0
    %v4378 = vrcp.pop %v4377
    %v4379 = vmul.f32 %v4377, %v4378
    %v4380 = vsub.f32 1.0, %v4379
    %v4381 = vmul.f32 %v4378, %v4380
    %v4382 = vadd.f32 %v4378, %v4381
    %vm4383 = vweird.f32 %v4377
    %vm4384 = vweird.f32 %v4378
    %vm4385 = vmor %vm4383, %vm4384
    %v4386 = vsel %vm4385, %v4378, %v4382
    %v4387 = vand.u32 2147483647, %v4377
    %vm4388 = vcmp.eq.f32.partialorder %v4387, 8.507059e+37
    %v4389 = vand.u32 %v4377, 2147483648
    %v4390 = vor.u32 1.1754944e-38, %v4389
    %v4391 = vsel %vm4388, %v4390, %v4386
    %v4392 = vmul.f32 %v4367, %v4391
    %v4393 = vmin.f32 %v4392, 1.0
    %v4394 = vmax.f32 %v4393, -1.0
    %v4395 = vmul.f32 %v4265, %v4265
    %v4396 = vmin.f32 16.0, %v4395
    %v4397 = vmul.f32 %v4396, 2.1237322e-06
    %v4398 = vadd.f32 %v4397, 0.00028619796
    %v4399 = vmul.f32 %v4396, %v4398
    %v4400 = vadd.f32 %v4399, 0.0036580483
    %v4401 = vmul.f32 %v4396, %v4400
    %v4402 = vadd.f32 %v4401, 0.05243302
    %v4403 = vmul.f32 %v4396, %v4402
    %v4404 = vadd.f32 %v4403, 0.18741608
    %v4405 = vmul.f32 %v4396, %v4404
    %v4406 = vadd.f32 %v4405, 1.1283791
    %v4407 = vmul.f32 %v4265, %v4406
    %v4408 = vmul.f32 %v4396, 3.8918573e-05
    %v4409 = vadd.f32 %v4408, 0.001143296
    %v4410 = vmul.f32 %v4396, %v4409
    %v4411 = vadd.f32 %v4410, 0.014752088
    %v4412 = vmul.f32 %v4396, %v4411
    %v4413 = vadd.f32 %v4412, 0.112945676
    %v4414 = vmul.f32 %v4396, %v4413
    %v4415 = vadd.f32 %v4414, 0.4994258
    %v4416 = vmul.f32 %v4396, %v4415
    %v4417 = vadd.f32 %v4416, 1.0
    %v4418 = vrcp.pop %v4417
    %v4419 = vmul.f32 %v4417, %v4418
    %v4420 = vsub.f32 1.0, %v4419
    %v4421 = vmul.f32 %v4418, %v4420
    %v4422 = vadd.f32 %v4418, %v4421
    %vm4423 = vweird.f32 %v4417
    %vm4424 = vweird.f32 %v4418
    %vm4425 = vmor %vm4423, %vm4424
    %v4426 = vsel %vm4425, %v4418, %v4422
    %v4427 = vand.u32 2147483647, %v4417
    %vm4428 = vcmp.eq.f32.partialorder %v4427, 8.507059e+37
    %v4429 = vand.u32 %v4417, 2147483648
    %v4430 = vor.u32 1.1754944e-38, %v4429
    %v4431 = vsel %vm4428, %v4430, %v4426
    %v4432 = vmul.f32 %v4407, %v4431
    %v4433 = vmin.f32 %v4432, 1.0
    %v4434 = vmax.f32 %v4433, -1.0
    %v4435 = vmul.f32 %v4266, %v4266
    %v4436 = vmin.f32 16.0, %v4435
    %v4437 = vmul.f32 %v4436, 2.1237322e-06
    %v4438 = vadd.f32 %v4437, 0.00028619796
    %v4439 = vmul.f32 %v4436, %v4438
    %v4440 = vadd.f32 %v4439, 0.0036580483
    %v4441 = vmul.f32 %v4436, %v4440
    %v4442 = vadd.f32 %v4441, 0.05243302
    %v4443 = vmul.f32 %v4436, %v4442
    %v4444 = vadd.f32 %v4443, 0.18741608
    %v4445 = vmul.f32 %v4436, %v4444
    %v4446 = vadd.f32 %v4445, 1.1283791
    %v4447 = vmul.f32 %v4266, %v4446
    %v4448 = vmul.f32 %v4436, 3.8918573e-05
    %v4449 = vadd.f32 %v4448, 0.001143296
    %v4450 = vmul.f32 %v4436, %v4449
    %v4451 = vadd.f32 %v4450, 0.014752088
    %v4452 = vmul.f32 %v4436, %v4451
    %v4453 = vadd.f32 %v4452, 0.112945676
    %v4454 = vmul.f32 %v4436, %v4453
    %v4455 = vadd.f32 %v4454, 0.4994258
    %v4456 = vmul.f32 %v4436, %v4455
    %v4457 = vadd.f32 %v4456, 1.0
    %v4458 = vrcp.pop %v4457
    %v4459 = vmul.f32 %v4457, %v4458
    %v4460 = vsub.f32 1.0, %v4459
    %v4461 = vmul.f32 %v4458, %v4460
    %v4462 = vadd.f32 %v4458, %v4461
    %vm4463 = vweird.f32 %v4457
    %vm4464 = vweird.f32 %v4458
    %vm4465 = vmor %vm4463, %vm4464
    %v4466 = vsel %vm4465, %v4458, %v4462
    %v4467 = vand.u32 2147483647, %v4457
    %vm4468 = vcmp.eq.f32.partialorder %v4467, 8.507059e+37
    %v4469 = vand.u32 %v4457, 2147483648
    %v4470 = vor.u32 1.1754944e-38, %v4469
    %v4471 = vsel %vm4468, %v4470, %v4466
    %v4472 = vmul.f32 %v4447, %v4471
    %v4473 = vmin.f32 %v4472, 1.0
    %v4474 = vmax.f32 %v4473, -1.0
    %v4475 = vmul.f32 %v4267, %v4267
    %v4476 = vmin.f32 16.0, %v4475
    %v4477 = vmul.f32 %v4476, 2.1237322e-06
    %v4478 = vadd.f32 %v4477, 0.00028619796
    %v4479 = vmul.f32 %v4476, %v4478
    %v4480 = vadd.f32 %v4479, 0.0036580483
    %v4481 = vmul.f32 %v4476, %v4480
    %v4482 = vadd.f32 %v4481, 0.05243302
    %v4483 = vmul.f32 %v4476, %v4482
    %v4484 = vadd.f32 %v4483, 0.18741608
    %v4485 = vmul.f32 %v4476, %v4484
    %v4486 = vadd.f32 %v4485, 1.1283791
    %v4487 = vmul.f32 %v4267, %v4486
    %v4488 = vmul.f32 %v4476, 3.8918573e-05
    %v4489 = vadd.f32 %v4488, 0.001143296
    %v4490 = vmul.f32 %v4476, %v4489
    %v4491 = vadd.f32 %v4490, 0.014752088
    %v4492 = vmul.f32 %v4476, %v4491
    %v4493 = vadd.f32 %v4492, 0.112945676
    %v4494 = vmul.f32 %v4476, %v4493
    %v4495 = vadd.f32 %v4494, 0.4994258
    %v4496 = vmul.f32 %v4476, %v4495
    %v4497 = vadd.f32 %v4496, 1.0
    %v4498 = vrcp.pop %v4497
    %v4499 = vmul.f32 %v4497, %v4498
    %v4500 = vsub.f32 1.0, %v4499
    %v4501 = vmul.f32 %v4498, %v4500
    %v4502 = vadd.f32 %v4498, %v4501
    %vm4503 = vweird.f32 %v4497
    %vm4504 = vweird.f32 %v4498
    %vm4505 = vmor %vm4503, %vm4504
    %v4506 = vsel %vm4505, %v4498, %v4502
    %v4507 = vand.u32 2147483647, %v4497
    %vm4508 = vcmp.eq.f32.partialorder %v4507, 8.507059e+37
    %v4509 = vand.u32 %v4497, 2147483648
    %v4510 = vor.u32 1.1754944e-38, %v4509
    %v4511 = vsel %vm4508, %v4510, %v4506
    %v4512 = vmul.f32 %v4487, %v4511
    %v4513 = vmin.f32 %v4512, 1.0
    %v4514 = vmax.f32 %v4513, -1.0
    %v4515 = vmul.f32 %v4268, %v4268
    %v4516 = vmin.f32 16.0, %v4515
    %v4517 = vmul.f32 %v4516, 2.1237322e-06
    %v4518 = vadd.f32 %v4517, 0.00028619796
    %v4519 = vmul.f32 %v4516, %v4518
    %v4520 = vadd.f32 %v4519, 0.0036580483
    %v4521 = vmul.f32 %v4516, %v4520
    %v4522 = vadd.f32 %v4521, 0.05243302
    %v4523 = vmul.f32 %v4516, %v4522
    %v4524 = vadd.f32 %v4523, 0.18741608
    %v4525 = vmul.f32 %v4516, %v4524
    %v4526 = vadd.f32 %v4525, 1.1283791
    %v4527 = vmul.f32 %v4268, %v4526
    %v4528 = vmul.f32 %v4516, 3.8918573e-05
    %v4529 = vadd.f32 %v4528, 0.001143296
    %v4530 = vmul.f32 %v4516, %v4529
    %v4531 = vadd.f32 %v4530, 0.014752088
    %v4532 = vmul.f32 %v4516, %v4531
    %v4533 = vadd.f32 %v4532, 0.112945676
    %v4534 = vmul.f32 %v4516, %v4533
    %v4535 = vadd.f32 %v4534, 0.4994258
    %v4536 = vmul.f32 %v4516, %v4535
    %v4537 = vadd.f32 %v4536, 1.0
    %v4538 = vrcp.pop %v4537
    %v4539 = vmul.f32 %v4537, %v4538
    %v4540 = vsub.f32 1.0, %v4539
    %v4541 = vmul.f32 %v4538, %v4540
    %v4542 = vadd.f32 %v4538, %v4541
    %vm4543 = vweird.f32 %v4537
    %vm4544 = vweird.f32 %v4538
    %vm4545 = vmor %vm4543, %vm4544
    %v4546 = vsel %vm4545, %v4538, %v4542
    %v4547 = vand.u32 2147483647, %v4537
    %vm4548 = vcmp.eq.f32.partialorder %v4547, 8.507059e+37
    %v4549 = vand.u32 %v4537, 2147483648
    %v4550 = vor.u32 1.1754944e-38, %v4549
    %v4551 = vsel %vm4548, %v4550, %v4546
    %v4552 = vmul.f32 %v4527, %v4551
    %v4553 = vmin.f32 %v4552, 1.0
    %v4554 = vmax.f32 %v4553, -1.0
    %v4555 = vmul.f32 %v4269, %v4269
    %v4556 = vmin.f32 16.0, %v4555
    %v4557 = vmul.f32 %v4556, 2.1237322e-06
    %v4558 = vadd.f32 %v4557, 0.00028619796
    %v4559 = vmul.f32 %v4556, %v4558
    %v4560 = vadd.f32 %v4559, 0.0036580483
    %v4561 = vmul.f32 %v4556, %v4560
    %v4562 = vadd.f32 %v4561, 0.05243302
    %v4563 = vmul.f32 %v4556, %v4562
    %v4564 = vadd.f32 %v4563, 0.18741608
    %v4565 = vmul.f32 %v4556, %v4564
    %v4566 = vadd.f32 %v4565, 1.1283791
    %v4567 = vmul.f32 %v4269, %v4566
    %v4568 = vmul.f32 %v4556, 3.8918573e-05
    %v4569 = vadd.f32 %v4568, 0.001143296
    %v4570 = vmul.f32 %v4556, %v4569
    %v4571 = vadd.f32 %v4570, 0.014752088
    %v4572 = vmul.f32 %v4556, %v4571
    %v4573 = vadd.f32 %v4572, 0.112945676
    %v4574 = vmul.f32 %v4556, %v4573
    %v4575 = vadd.f32 %v4574, 0.4994258
    %v4576 = vmul.f32 %v4556, %v4575
    %v4577 = vadd.f32 %v4576, 1.0
    %v4578 = vrcp.pop %v4577
    %v4579 = vmul.f32 %v4577, %v4578
    %v4580 = vsub.f32 1.0, %v4579
    %v4581 = vmul.f32 %v4578, %v4580
    %v4582 = vadd.f32 %v4578, %v4581
    %vm4583 = vweird.f32 %v4577
    %vm4584 = vweird.f32 %v4578
    %vm4585 = vmor %vm4583, %vm4584
    %v4586 = vsel %vm4585, %v4578, %v4582
    %v4587 = vand.u32 2147483647, %v4577
    %vm4588 = vcmp.eq.f32.partialorder %v4587, 8.507059e+37
    %v4589 = vand.u32 %v4577, 2147483648
    %v4590 = vor.u32 1.1754944e-38, %v4589
    %v4591 = vsel %vm4588, %v4590, %v4586
    %v4592 = vmul.f32 %v4567, %v4591
    %v4593 = vmin.f32 %v4592, 1.0
    %v4594 = vmax.f32 %v4593, -1.0
    %v4595 = vmul.f32 %v4270, %v4270
    %v4596 = vmin.f32 16.0, %v4595
    %v4597 = vmul.f32 %v4596, 2.1237322e-06
    %v4598 = vadd.f32 %v4597, 0.00028619796
    %v4599 = vmul.f32 %v4596, %v4598
    %v4600 = vadd.f32 %v4599, 0.0036580483
    %v4601 = vmul.f32 %v4596, %v4600
    %v4602 = vadd.f32 %v4601, 0.05243302
    %v4603 = vmul.f32 %v4596, %v4602
    %v4604 = vadd.f32 %v4603, 0.18741608
    %v4605 = vmul.f32 %v4596, %v4604
    %v4606 = vadd.f32 %v4605, 1.1283791
    %v4607 = vmul.f32 %v4270, %v4606
    %v4608 = vmul.f32 %v4596, 3.8918573e-05
    %v4609 = vadd.f32 %v4608, 0.001143296
    %v4610 = vmul.f32 %v4596, %v4609
    %v4611 = vadd.f32 %v4610, 0.014752088
    %v4612 = vmul.f32 %v4596, %v4611
    %v4613 = vadd.f32 %v4612, 0.112945676
    %v4614 = vmul.f32 %v4596, %v4613
    %v4615 = vadd.f32 %v4614, 0.4994258
    %v4616 = vmul.f32 %v4596, %v4615
    %v4617 = vadd.f32 %v4616, 1.0
    %v4618 = vrcp.pop %v4617
    %v4619 = vmul.f32 %v4617, %v4618
    %v4620 = vsub.f32 1.0, %v4619
    %v4621 = vmul.f32 %v4618, %v4620
    %v4622 = vadd.f32 %v4618, %v4621
    %vm4623 = vweird.f32 %v4617
    %vm4624 = vweird.f32 %v4618
    %vm4625 = vmor %vm4623, %vm4624
    %v4626 = vsel %vm4625, %v4618, %v4622
    %v4627 = vand.u32 2147483647, %v4617
    %vm4628 = vcmp.eq.f32.partialorder %v4627, 8.507059e+37
    %v4629 = vand.u32 %v4617, 2147483648
    %v4630 = vor.u32 1.1754944e-38, %v4629
    %v4631 = vsel %vm4628, %v4630, %v4626
    %v4632 = vmul.f32 %v4607, %v4631
    %v4633 = vmin.f32 %v4632, 1.0
    %v4634 = vmax.f32 %v4633, -1.0
    %v4635 = vmul.f32 %v4271, %v4271
    %v4636 = vmin.f32 16.0, %v4635
    %v4637 = vmul.f32 %v4636, 2.1237322e-06
    %v4638 = vadd.f32 %v4637, 0.00028619796
    %v4639 = vmul.f32 %v4636, %v4638
    %v4640 = vadd.f32 %v4639, 0.0036580483
    %v4641 = vmul.f32 %v4636, %v4640
    %v4642 = vadd.f32 %v4641, 0.05243302
    %v4643 = vmul.f32 %v4636, %v4642
    %v4644 = vadd.f32 %v4643, 0.18741608
    %v4645 = vmul.f32 %v4636, %v4644
    %v4646 = vadd.f32 %v4645, 1.1283791
    %v4647 = vmul.f32 %v4271, %v4646
    %v4648 = vmul.f32 %v4636, 3.8918573e-05
    %v4649 = vadd.f32 %v4648, 0.001143296
    %v4650 = vmul.f32 %v4636, %v4649
    %v4651 = vadd.f32 %v4650, 0.014752088
    %v4652 = vmul.f32 %v4636, %v4651
    %v4653 = vadd.f32 %v4652, 0.112945676
    %v4654 = vmul.f32 %v4636, %v4653
    %v4655 = vadd.f32 %v4654, 0.4994258
    %v4656 = vmul.f32 %v4636, %v4655
    %v4657 = vadd.f32 %v4656, 1.0
    %v4658 = vrcp.pop %v4657
    %v4659 = vmul.f32 %v4657, %v4658
    %v4660 = vsub.f32 1.0, %v4659
    %v4661 = vmul.f32 %v4658, %v4660
    %v4662 = vadd.f32 %v4658, %v4661
    %vm4663 = vweird.f32 %v4657
    %vm4664 = vweird.f32 %v4658
    %vm4665 = vmor %vm4663, %vm4664
    %v4666 = vsel %vm4665, %v4658, %v4662
    %v4667 = vand.u32 2147483647, %v4657
    %vm4668 = vcmp.eq.f32.partialorder %v4667, 8.507059e+37
    %v4669 = vand.u32 %v4657, 2147483648
    %v4670 = vor.u32 1.1754944e-38, %v4669
    %v4671 = vsel %vm4668, %v4670, %v4666
    %v4672 = vmul.f32 %v4647, %v4671
    %v4673 = vmin.f32 %v4672, 1.0
    %v4674 = vmax.f32 %v4673, -1.0
    %v4675 = vmul.f32 %v4272, %v4272
    %v4676 = vmin.f32 16.0, %v4675
    %v4677 = vmul.f32 %v4676, 2.1237322e-06
    %v4678 = vadd.f32 %v4677, 0.00028619796
    %v4679 = vmul.f32 %v4676, %v4678
    %v4680 = vadd.f32 %v4679, 0.0036580483
    %v4681 = vmul.f32 %v4676, %v4680
    %v4682 = vadd.f32 %v4681, 0.05243302
    %v4683 = vmul.f32 %v4676, %v4682
    %v4684 = vadd.f32 %v4683, 0.18741608
    %v4685 = vmul.f32 %v4676, %v4684
    %v4686 = vadd.f32 %v4685, 1.1283791
    %v4687 = vmul.f32 %v4272, %v4686
    %v4688 = vmul.f32 %v4676, 3.8918573e-05
    %v4689 = vadd.f32 %v4688, 0.001143296
    %v4690 = vmul.f32 %v4676, %v4689
    %v4691 = vadd.f32 %v4690, 0.014752088
    %v4692 = vmul.f32 %v4676, %v4691
    %v4693 = vadd.f32 %v4692, 0.112945676
    %v4694 = vmul.f32 %v4676, %v4693
    %v4695 = vadd.f32 %v4694, 0.4994258
    %v4696 = vmul.f32 %v4676, %v4695
    %v4697 = vadd.f32 %v4696, 1.0
    %v4698 = vrcp.pop %v4697
    %v4699 = vmul.f32 %v4697, %v4698
    %v4700 = vsub.f32 1.0, %v4699
    %v4701 = vmul.f32 %v4698, %v4700
    %v4702 = vadd.f32 %v4698, %v4701
    %vm4703 = vweird.f32 %v4697
    %vm4704 = vweird.f32 %v4698
    %vm4705 = vmor %vm4703, %vm4704
    %v4706 = vsel %vm4705, %v4698, %v4702
    %v4707 = vand.u32 2147483647, %v4697
    %vm4708 = vcmp.eq.f32.partialorder %v4707, 8.507059e+37
    %v4709 = vand.u32 %v4697, 2147483648
    %v4710 = vor.u32 1.1754944e-38, %v4709
    %v4711 = vsel %vm4708, %v4710, %v4706
    %v4712 = vmul.f32 %v4687, %v4711
    %v4713 = vmin.f32 %v4712, 1.0
    %v4714 = vmax.f32 %v4713, -1.0
    %v4715 = vmul.f32 %v4273, %v4273
    %v4716 = vmin.f32 16.0, %v4715
    %v4717 = vmul.f32 %v4716, 2.1237322e-06
    %v4718 = vadd.f32 %v4717, 0.00028619796
    %v4719 = vmul.f32 %v4716, %v4718
    %v4720 = vadd.f32 %v4719, 0.0036580483
    %v4721 = vmul.f32 %v4716, %v4720
    %v4722 = vadd.f32 %v4721, 0.05243302
    %v4723 = vmul.f32 %v4716, %v4722
    %v4724 = vadd.f32 %v4723, 0.18741608
    %v4725 = vmul.f32 %v4716, %v4724
    %v4726 = vadd.f32 %v4725, 1.1283791
    %v4727 = vmul.f32 %v4273, %v4726
    %v4728 = vmul.f32 %v4716, 3.8918573e-05
    %v4729 = vadd.f32 %v4728, 0.001143296
    %v4730 = vmul.f32 %v4716, %v4729
    %v4731 = vadd.f32 %v4730, 0.014752088
    %v4732 = vmul.f32 %v4716, %v4731
    %v4733 = vadd.f32 %v4732, 0.112945676
    %v4734 = vmul.f32 %v4716, %v4733
    %v4735 = vadd.f32 %v4734, 0.4994258
    %v4736 = vmul.f32 %v4716, %v4735
    %v4737 = vadd.f32 %v4736, 1.0
    %v4738 = vrcp.pop %v4737
    %v4739 = vmul.f32 %v4737, %v4738
    %v4740 = vsub.f32 1.0, %v4739
    %v4741 = vmul.f32 %v4738, %v4740
    %v4742 = vadd.f32 %v4738, %v4741
    %vm4743 = vweird.f32 %v4737
    %vm4744 = vweird.f32 %v4738
    %vm4745 = vmor %vm4743, %vm4744
    %v4746 = vsel %vm4745, %v4738, %v4742
    %v4747 = vand.u32 2147483647, %v4737
    %vm4748 = vcmp.eq.f32.partialorder %v4747, 8.507059e+37
    %v4749 = vand.u32 %v4737, 2147483648
    %v4750 = vor.u32 1.1754944e-38, %v4749
    %v4751 = vsel %vm4748, %v4750, %v4746
    %v4752 = vmul.f32 %v4727, %v4751
    %v4753 = vmin.f32 %v4752, 1.0
    %v4754 = vmax.f32 %v4753, -1.0
    %v4755 = vmul.f32 %v4274, %v4274
    %v4756 = vmin.f32 16.0, %v4755
    %v4757 = vmul.f32 %v4756, 2.1237322e-06
    %v4758 = vadd.f32 %v4757, 0.00028619796
    %v4759 = vmul.f32 %v4756, %v4758
    %v4760 = vadd.f32 %v4759, 0.0036580483
    %v4761 = vmul.f32 %v4756, %v4760
    %v4762 = vadd.f32 %v4761, 0.05243302
    %v4763 = vmul.f32 %v4756, %v4762
    %v4764 = vadd.f32 %v4763, 0.18741608
    %v4765 = vmul.f32 %v4756, %v4764
    %v4766 = vadd.f32 %v4765, 1.1283791
    %v4767 = vmul.f32 %v4274, %v4766
    %v4768 = vmul.f32 %v4756, 3.8918573e-05
    %v4769 = vadd.f32 %v4768, 0.001143296
    %v4770 = vmul.f32 %v4756, %v4769
    %v4771 = vadd.f32 %v4770, 0.014752088
    %v4772 = vmul.f32 %v4756, %v4771
    %v4773 = vadd.f32 %v4772, 0.112945676
    %v4774 = vmul.f32 %v4756, %v4773
    %v4775 = vadd.f32 %v4774, 0.4994258
    %v4776 = vmul.f32 %v4756, %v4775
    %v4777 = vadd.f32 %v4776, 1.0
    %v4778 = vrcp.pop %v4777
    %v4779 = vmul.f32 %v4777, %v4778
    %v4780 = vsub.f32 1.0, %v4779
    %v4781 = vmul.f32 %v4778, %v4780
    %v4782 = vadd.f32 %v4778, %v4781
    %vm4783 = vweird.f32 %v4777
    %vm4784 = vweird.f32 %v4778
    %vm4785 = vmor %vm4783, %vm4784
    %v4786 = vsel %vm4785, %v4778, %v4782
    %v4787 = vand.u32 2147483647, %v4777
    %vm4788 = vcmp.eq.f32.partialorder %v4787, 8.507059e+37
    %v4789 = vand.u32 %v4777, 2147483648
    %v4790 = vor.u32 1.1754944e-38, %v4789
    %v4791 = vsel %vm4788, %v4790, %v4786
    %v4792 = vmul.f32 %v4767, %v4791
    %v4793 = vmin.f32 %v4792, 1.0
    %v4794 = vmax.f32 %v4793, -1.0
    %v4795 = vadd.f32 %v4314, 1.0
    %v4796 = vadd.f32 %v4354, 1.0
    %v4797 = vadd.f32 %v4394, 1.0
    %v4798 = vadd.f32 %v4434, 1.0
    %v4799 = vadd.f32 %v4474, 1.0
    %v4800 = vadd.f32 %v4514, 1.0
    %v4801 = vadd.f32 %v4554, 1.0
    %v4802 = vadd.f32 %v4594, 1.0
    %v4803 = vadd.f32 %v4634, 1.0
    %v4804 = vadd.f32 %v4674, 1.0
    %v4805 = vadd.f32 %v4714, 1.0
    %v4806 = vadd.f32 %v4754, 1.0
    %v4807 = vadd.f32 %v4794, 1.0
    %v4808 = vmul.f32 %v4249, %v4795
    %v4809 = vmul.f32 %v4250, %v4796
    %v4810 = vmul.f32 %v4251, %v4797
    %v4811 = vmul.f32 %v4252, %v4798
    %v4812 = vmul.f32 %v4253, %v4799
    %v4813 = vmul.f32 %v4254, %v4800
    %v4814 = vmul.f32 %v4255, %v4801
    %v4815 = vmul.f32 %v4256, %v4802
    %v4816 = vmul.f32 %v4257, %v4803
    %v4817 = vmul.f32 %v4258, %v4804
    %v4818 = vmul.f32 %v4259, %v4805
    %v4819 = vmul.f32 %v4260, %v4806
    %v4820 = vmul.f32 %v4261, %v4807
    %v4821 = vld [vmem:[%s9] sm:$0xff]
    %v4822 = vld [vmem:[%s9 + $0x8] sm:$0xff]
    %v4823 = vld [vmem:[%s9 + $0x10] sm:$0xff]
    %v4824 = vld [vmem:[%s9 + $0x18] sm:$0xff]
    %v4825 = vld [vmem:[%s9 + $0x20] sm:$0xff]
    %v4826 = vld [vmem:[%s9 + $0x28] sm:$0xff]
    %v4827 = vld [vmem:[%s9 + $0x30] sm:$0xff]
    %vm4828 = vcmask 850944
    %v4830 = vsel %vm4828, %v4821, 0
    %v4833 = vsel %vm4828, %v4822, 0
    %v4836 = vsel %vm4828, %v4823, 0
    %v4839 = vsel %vm4828, %v4824, 0
    %v4842 = vsel %vm4828, %v4825, 0
    %v4845 = vsel %vm4828, %v4826, 0
    %v4848 = vsel %vm4828, %v4827, 0
    %4850 = vmatpush.msra.mxu0 0.0
    %4851 = vmatpush.msra.mxu0 0.0
    %4852 = vmatpush.msra.mxu0 0.0
    %4853 = vmatpush.msra.mxu0 %v4820
    %4854 = vmatpush.msra.mxu0 %v4819
    %4855 = vmatpush.msra.mxu0 %v4818
    %4856 = vmatpush.msra.mxu0 %v4817
    %4857 = vmatpush.msra.mxu0 %v4816
    %4858 = vmatpush.msra.mxu0 %v4815
    %4859 = vmatpush.msra.mxu0 %v4814
    %4860 = vmatpush.msra.mxu0 %v4813
    %4861 = vmatpush.msra.mxu0 %v4812
    %4862 = vmatpush.msra.mxu0 %v4811
    %4863 = vmatpush.msra.mxu0 %v4810
    %4864 = vmatpush.msra.mxu0 %v4809
    %4865 = vmatpush.msra.mxu0 %v4808
    %4866 = vmatmul.f32.gmra.mxu0 %v4830
    %v4867 = vpop.f32.mrf.mxu0
    %v4868 = vadd.f32 0.0, %v4867
    %4869 = vmatmul.f32.gmra.mxu0 %v4833
    %v4870 = vpop.f32.mrf.mxu0
    %v4871 = vadd.f32 0.0, %v4870
    %4872 = vmatmul.f32.gmra.mxu0 %v4836
    %v4873 = vpop.f32.mrf.mxu0
    %v4874 = vadd.f32 0.0, %v4873
    %4875 = vmatmul.f32.gmra.mxu0 %v4839
    %v4876 = vpop.f32.mrf.mxu0
    %v4877 = vadd.f32 0.0, %v4876
    %4878 = vmatmul.f32.gmra.mxu0 %v4842
    %v4879 = vpop.f32.mrf.mxu0
    %v4880 = vadd.f32 0.0, %v4879
    %4881 = vmatmul.f32.gmra.mxu0 %v4845
    %v4882 = vpop.f32.mrf.mxu0
    %v4883 = vadd.f32 0.0, %v4882
    %4884 = vmatmul.f32.gmra.mxu0 %v4848
    %v4885 = vpop.f32.mrf.mxu0
    %v4886 = vadd.f32 0.0, %v4885
    %4887 = vdwg.mxu0
    %v4888 = vld [vmem:[%s10] sm:$0xff]
    %v4889 = vld [vmem:[%s10 + $0x8] sm:$0xff]
    %v4890 = vld [vmem:[%s10 + $0x10] sm:$0xff]
    %v4891 = vld [vmem:[%s10 + $0x18] sm:$0xff]
    %s4892 = scalar_lea.vmem %s9, 56
    %v4893 = vld [vmem:[%s4892] sm:$0xff]
    %v4894 = vld [vmem:[%s4892 + $0x8] sm:$0xff]
    %v4895 = vld [vmem:[%s4892 + $0x10] sm:$0xff]
    %v4896 = vld [vmem:[%s4892 + $0x18] sm:$0xff]
    %v4897 = vld [vmem:[%s4892 + $0x20] sm:$0xff]
    %v4898 = vld [vmem:[%s4892 + $0x28] sm:$0xff]
    %v4899 = vld [vmem:[%s4892 + $0x30] sm:$0xff]
    %v4901 = vsel %vm4828, %v4893, 0
    %v4904 = vsel %vm4828, %v4894, 0
    %v4907 = vsel %vm4828, %v4895, 0
    %v4910 = vsel %vm4828, %v4896, 0
    %v4913 = vsel %vm4828, %v4897, 0
    %v4916 = vsel %vm4828, %v4898, 0
    %v4919 = vsel %vm4828, %v4899, 0
    %4921 = vmatpush.msra.mxu0 0.0
    %4922 = vmatpush.msra.mxu0 0.0
    %4923 = vmatpush.msra.mxu0 0.0
    %4924 = vmatpush.msra.mxu0 %v4820
    %4925 = vmatpush.msra.mxu0 %v4819
    %4926 = vmatpush.msra.mxu0 %v4818
    %4927 = vmatpush.msra.mxu0 %v4817
    %4928 = vmatpush.msra.mxu0 %v4816
    %4929 = vmatpush.msra.mxu0 %v4815
    %4930 = vmatpush.msra.mxu0 %v4814
    %4931 = vmatpush.msra.mxu0 %v4813
    %4932 = vmatpush.msra.mxu0 %v4812
    %4933 = vmatpush.msra.mxu0 %v4811
    %4934 = vmatpush.msra.mxu0 %v4810
    %4935 = vmatpush.msra.mxu0 %v4809
    %4936 = vmatpush.msra.mxu0 %v4808
    %4937 = vmatmul.f32.gmra.mxu0 %v4901
    %v4938 = vpop.f32.mrf.mxu0
    %v4939 = vadd.f32 0.0, %v4938
    %4940 = vmatmul.f32.gmra.mxu0 %v4904
    %v4941 = vpop.f32.mrf.mxu0
    %v4942 = vadd.f32 0.0, %v4941
    %4943 = vmatmul.f32.gmra.mxu0 %v4907
    %v4944 = vpop.f32.mrf.mxu0
    %v4945 = vadd.f32 0.0, %v4944
    %4946 = vmatmul.f32.gmra.mxu0 %v4910
    %v4947 = vpop.f32.mrf.mxu0
    %v4948 = vadd.f32 0.0, %v4947
    %4949 = vmatmul.f32.gmra.mxu0 %v4913
    %v4950 = vpop.f32.mrf.mxu0
    %v4951 = vadd.f32 0.0, %v4950
    %4952 = vmatmul.f32.gmra.mxu0 %v4916
    %v4953 = vpop.f32.mrf.mxu0
    %v4954 = vadd.f32 0.0, %v4953
    %4955 = vmatmul.f32.gmra.mxu0 %v4919
    %v4956 = vpop.f32.mrf.mxu0
    %v4957 = vadd.f32 0.0, %v4956
    %4958 = vdwg.mxu0
    %s4959 = scalar_lea.vmem %s10, 32
    %v4960 = vld [vmem:[%s4959] sm:$0xff]
    %v4961 = vld [vmem:[%s4959 + $0x8] sm:$0xff]
    %v4962 = vld [vmem:[%s4959 + $0x10] sm:$0xff]
    %v4963 = vld [vmem:[%s4959 + $0x18] sm:$0xff]
    %vm4964 = vcmask 261120
    %v4966 = vsel %vm4964, %v4939, 0
    %v4969 = vsel %vm4964, %v4942, 0
    %v4972 = vsel %vm4964, %v4945, 0
    %v4975 = vsel %vm4964, %v4948, 0
    %v4978 = vsel %vm4964, %v4951, 0
    %v4981 = vsel %vm4964, %v4954, 0
    %v4984 = vsel %vm4964, %v4957, 0
    %4986 = vmatpush.msra.mxu0 0.0
    %4987 = vmatpush.msra.mxu0 0.0
    %4988 = vmatpush.msra.mxu0 0.0
    %4989 = vmatpush.msra.mxu0 0.0
    %4990 = vmatpush.msra.mxu0 0.0
    %4991 = vmatpush.msra.mxu0 0.0
    %4992 = vmatpush.msra.mxu0 0.0
    %4993 = vmatpush.msra.mxu0 0.0
    %4994 = vmatpush.msra.mxu0 0.0
    %4995 = vmatpush.msra.mxu0 0.0
    %4996 = vmatpush.msra.mxu0 0.0
    %4997 = vmatpush.msra.mxu0 0.0
    %4998 = vmatpush.msra.mxu0 %v4963
    %4999 = vmatpush.msra.mxu0 %v4962
    %5000 = vmatpush.msra.mxu0 %v4961
    %5001 = vmatpush.msra.mxu0 %v4960
    %5002 = vmatmul.f32.gmra.mxu0 %v4966
    %v5003 = vpop.f32.mrf.mxu0
    %v5004 = vadd.f32 0.0, %v5003
    %5005 = vmatmul.f32.gmra.mxu0 %v4969
    %v5006 = vpop.f32.mrf.mxu0
    %v5007 = vadd.f32 0.0, %v5006
    %5008 = vmatmul.f32.gmra.mxu0 %v4972
    %v5009 = vpop.f32.mrf.mxu0
    %v5010 = vadd.f32 0.0, %v5009
    %5011 = vmatmul.f32.gmra.mxu0 %v4975
    %v5012 = vpop.f32.mrf.mxu0
    %v5013 = vadd.f32 0.0, %v5012
    %5014 = vmatmul.f32.gmra.mxu0 %v4978
    %v5015 = vpop.f32.mrf.mxu0
    %v5016 = vadd.f32 0.0, %v5015
    %5017 = vmatmul.f32.gmra.mxu0 %v4981
    %v5018 = vpop.f32.mrf.mxu0
    %v5019 = vadd.f32 0.0, %v5018
    %5020 = vmatmul.f32.gmra.mxu0 %v4984
    %v5021 = vpop.f32.mrf.mxu0
    %v5022 = vadd.f32 0.0, %v5021
    %5023 = vdwg.mxu0
    %v5025 = vsel %vm4964, %v4868, 0
    %v5028 = vsel %vm4964, %v4871, 0
    %v5031 = vsel %vm4964, %v4874, 0
    %v5034 = vsel %vm4964, %v4877, 0
    %v5037 = vsel %vm4964, %v4880, 0
    %v5040 = vsel %vm4964, %v4883, 0
    %v5043 = vsel %vm4964, %v4886, 0
    %5045 = vmatpush.msra.mxu0 0.0
    %5046 = vmatpush.msra.mxu0 0.0
    %5047 = vmatpush.msra.mxu0 0.0
    %5048 = vmatpush.msra.mxu0 0.0
    %5049 = vmatpush.msra.mxu0 0.0
    %5050 = vmatpush.msra.mxu0 0.0
    %5051 = vmatpush.msra.mxu0 0.0
    %5052 = vmatpush.msra.mxu0 0.0
    %5053 = vmatpush.msra.mxu0 0.0
    %5054 = vmatpush.msra.mxu0 0.0
    %5055 = vmatpush.msra.mxu0 0.0
    %5056 = vmatpush.msra.mxu0 0.0
    %5057 = vmatpush.msra.mxu0 %v4891
    %5058 = vmatpush.msra.mxu0 %v4890
    %5059 = vmatpush.msra.mxu0 %v4889
    %5060 = vmatpush.msra.mxu0 %v4888
    %5061 = vmatmul.f32.gmra.mxu0 %v5025
    %v5062 = vpop.f32.mrf.mxu0
    %v5063 = vadd.f32 %v5004, %v5062
    %5064 = vmatmul.f32.gmra.mxu0 %v5028
    %v5065 = vpop.f32.mrf.mxu0
    %v5066 = vadd.f32 %v5007, %v5065
    %5067 = vmatmul.f32.gmra.mxu0 %v5031
    %v5068 = vpop.f32.mrf.mxu0
    %v5069 = vadd.f32 %v5010, %v5068
    %5070 = vmatmul.f32.gmra.mxu0 %v5034
    %v5071 = vpop.f32.mrf.mxu0
    %v5072 = vadd.f32 %v5013, %v5071
    %5073 = vmatmul.f32.gmra.mxu0 %v5037
    %v5074 = vpop.f32.mrf.mxu0
    %v5075 = vadd.f32 %v5016, %v5074
    %5076 = vmatmul.f32.gmra.mxu0 %v5040
    %v5077 = vpop.f32.mrf.mxu0
    %v5078 = vadd.f32 %v5019, %v5077
    %5079 = vmatmul.f32.gmra.mxu0 %v5043
    %v5080 = vpop.f32.mrf.mxu0
    %v5081 = vadd.f32 %v5022, %v5080
    %5082 = vdwg.mxu0
    %s5083 = scalar_lea.vmem %s9, 112
    %v5084 = vld [vmem:[%s5083] sm:$0xff]
    %v5085 = vld [vmem:[%s5083 + $0x8] sm:$0xff]
    %v5086 = vld [vmem:[%s5083 + $0x10] sm:$0xff]
    %v5087 = vld [vmem:[%s5083 + $0x18] sm:$0xff]
    %v5088 = vld [vmem:[%s5083 + $0x20] sm:$0xff]
    %v5089 = vld [vmem:[%s5083 + $0x28] sm:$0xff]
    %v5090 = vld [vmem:[%s5083 + $0x30] sm:$0xff]
    %v5092 = vsel %vm4828, %v5084, 0
    %v5095 = vsel %vm4828, %v5085, 0
    %v5098 = vsel %vm4828, %v5086, 0
    %v5101 = vsel %vm4828, %v5087, 0
    %v5104 = vsel %vm4828, %v5088, 0
    %v5107 = vsel %vm4828, %v5089, 0
    %v5110 = vsel %vm4828, %v5090, 0
    %5112 = vmatpush.msra.mxu0 0.0
    %5113 = vmatpush.msra.mxu0 0.0
    %5114 = vmatpush.msra.mxu0 0.0
    %5115 = vmatpush.msra.mxu0 %v4820
    %5116 = vmatpush.msra.mxu0 %v4819
    %5117 = vmatpush.msra.mxu0 %v4818
    %5118 = vmatpush.msra.mxu0 %v4817
    %5119 = vmatpush.msra.mxu0 %v4816
    %5120 = vmatpush.msra.mxu0 %v4815
    %5121 = vmatpush.msra.mxu0 %v4814
    %5122 = vmatpush.msra.mxu0 %v4813
    %5123 = vmatpush.msra.mxu0 %v4812
    %5124 = vmatpush.msra.mxu0 %v4811
    %5125 = vmatpush.msra.mxu0 %v4810
    %5126 = vmatpush.msra.mxu0 %v4809
    %5127 = vmatpush.msra.mxu0 %v4808
    %5128 = vmatmul.f32.gmra.mxu0 %v5092
    %v5129 = vpop.f32.mrf.mxu0
    %v5130 = vadd.f32 0.0, %v5129
    %5131 = vmatmul.f32.gmra.mxu0 %v5095
    %v5132 = vpop.f32.mrf.mxu0
    %v5133 = vadd.f32 0.0, %v5132
    %5134 = vmatmul.f32.gmra.mxu0 %v5098
    %v5135 = vpop.f32.mrf.mxu0
    %v5136 = vadd.f32 0.0, %v5135
    %5137 = vmatmul.f32.gmra.mxu0 %v5101
    %v5138 = vpop.f32.mrf.mxu0
    %v5139 = vadd.f32 0.0, %v5138
    %5140 = vmatmul.f32.gmra.mxu0 %v5104
    %v5141 = vpop.f32.mrf.mxu0
    %v5142 = vadd.f32 0.0, %v5141
    %5143 = vmatmul.f32.gmra.mxu0 %v5107
    %v5144 = vpop.f32.mrf.mxu0
    %v5145 = vadd.f32 0.0, %v5144
    %5146 = vmatmul.f32.gmra.mxu0 %v5110
    %v5147 = vpop.f32.mrf.mxu0
    %v5148 = vadd.f32 0.0, %v5147
    %5149 = vdwg.mxu0
    %s5150 = scalar_lea.vmem %s10, 64
    %v5151 = vld [vmem:[%s5150] sm:$0xff]
    %v5152 = vld [vmem:[%s5150 + $0x8] sm:$0xff]
    %v5153 = vld [vmem:[%s5150 + $0x10] sm:$0xff]
    %v5154 = vld [vmem:[%s5150 + $0x18] sm:$0xff]
    %v5156 = vsel %vm4964, %v5130, 0
    %v5159 = vsel %vm4964, %v5133, 0
    %v5162 = vsel %vm4964, %v5136, 0
    %v5165 = vsel %vm4964, %v5139, 0
    %v5168 = vsel %vm4964, %v5142, 0
    %v5171 = vsel %vm4964, %v5145, 0
    %v5174 = vsel %vm4964, %v5148, 0
    %5176 = vmatpush.msra.mxu0 0.0
    %5177 = vmatpush.msra.mxu0 0.0
    %5178 = vmatpush.msra.mxu0 0.0
    %5179 = vmatpush.msra.mxu0 0.0
    %5180 = vmatpush.msra.mxu0 0.0
    %5181 = vmatpush.msra.mxu0 0.0
    %5182 = vmatpush.msra.mxu0 0.0
    %5183 = vmatpush.msra.mxu0 0.0
    %5184 = vmatpush.msra.mxu0 0.0
    %5185 = vmatpush.msra.mxu0 0.0
    %5186 = vmatpush.msra.mxu0 0.0
    %5187 = vmatpush.msra.mxu0 0.0
    %5188 = vmatpush.msra.mxu0 %v5154
    %5189 = vmatpush.msra.mxu0 %v5153
    %5190 = vmatpush.msra.mxu0 %v5152
    %5191 = vmatpush.msra.mxu0 %v5151
    %5192 = vmatmul.f32.gmra.mxu0 %v5156
    %v5193 = vpop.f32.mrf.mxu0
    %v5194 = vadd.f32 0.0, %v5193
    %5195 = vmatmul.f32.gmra.mxu0 %v5159
    %v5196 = vpop.f32.mrf.mxu0
    %v5197 = vadd.f32 0.0, %v5196
    %5198 = vmatmul.f32.gmra.mxu0 %v5162
    %v5199 = vpop.f32.mrf.mxu0
    %v5200 = vadd.f32 0.0, %v5199
    %5201 = vmatmul.f32.gmra.mxu0 %v5165
    %v5202 = vpop.f32.mrf.mxu0
    %v5203 = vadd.f32 0.0, %v5202
    %5204 = vmatmul.f32.gmra.mxu0 %v5168
    %v5205 = vpop.f32.mrf.mxu0
    %v5206 = vadd.f32 0.0, %v5205
    %5207 = vmatmul.f32.gmra.mxu0 %v5171
    %v5208 = vpop.f32.mrf.mxu0
    %v5209 = vadd.f32 0.0, %v5208
    %5210 = vmatmul.f32.gmra.mxu0 %v5174
    %v5211 = vpop.f32.mrf.mxu0
    %v5212 = vadd.f32 0.0, %v5211
    %5213 = vdwg.mxu0
    %v5214 = vadd.f32 %v5063, %v5194
    %v5215 = vadd.f32 %v5066, %v5197
    %v5216 = vadd.f32 %v5069, %v5200
    %v5217 = vadd.f32 %v5072, %v5203
    %v5218 = vadd.f32 %v5075, %v5206
    %v5219 = vadd.f32 %v5078, %v5209
    %v5220 = vadd.f32 %v5081, %v5212
    %s5221 = scalar_lea.vmem %s9, 168
    %v5222 = vld [vmem:[%s5221] sm:$0xff]
    %v5223 = vld [vmem:[%s5221 + $0x8] sm:$0xff]
    %v5224 = vld [vmem:[%s5221 + $0x10] sm:$0xff]
    %v5225 = vld [vmem:[%s5221 + $0x18] sm:$0xff]
    %v5226 = vld [vmem:[%s5221 + $0x20] sm:$0xff]
    %v5227 = vld [vmem:[%s5221 + $0x28] sm:$0xff]
    %v5228 = vld [vmem:[%s5221 + $0x30] sm:$0xff]
    %v5230 = vsel %vm4828, %v5222, 0
    %v5233 = vsel %vm4828, %v5223, 0
    %v5236 = vsel %vm4828, %v5224, 0
    %v5239 = vsel %vm4828, %v5225, 0
    %v5242 = vsel %vm4828, %v5226, 0
    %v5245 = vsel %vm4828, %v5227, 0
    %v5248 = vsel %vm4828, %v5228, 0
    %5250 = vmatpush.msra.mxu0 0.0
    %5251 = vmatpush.msra.mxu0 0.0
    %5252 = vmatpush.msra.mxu0 0.0
    %5253 = vmatpush.msra.mxu0 %v4820
    %5254 = vmatpush.msra.mxu0 %v4819
    %5255 = vmatpush.msra.mxu0 %v4818
    %5256 = vmatpush.msra.mxu0 %v4817
    %5257 = vmatpush.msra.mxu0 %v4816
    %5258 = vmatpush.msra.mxu0 %v4815
    %5259 = vmatpush.msra.mxu0 %v4814
    %5260 = vmatpush.msra.mxu0 %v4813
    %5261 = vmatpush.msra.mxu0 %v4812
    %5262 = vmatpush.msra.mxu0 %v4811
    %5263 = vmatpush.msra.mxu0 %v4810
    %5264 = vmatpush.msra.mxu0 %v4809
    %5265 = vmatpush.msra.mxu0 %v4808
    %5266 = vmatmul.f32.gmra.mxu0 %v5230
    %v5267 = vpop.f32.mrf.mxu0
    %v5268 = vadd.f32 0.0, %v5267
    %5269 = vmatmul.f32.gmra.mxu0 %v5233
    %v5270 = vpop.f32.mrf.mxu0
    %v5271 = vadd.f32 0.0, %v5270
    %5272 = vmatmul.f32.gmra.mxu0 %v5236
    %v5273 = vpop.f32.mrf.mxu0
    %v5274 = vadd.f32 0.0, %v5273
    %5275 = vmatmul.f32.gmra.mxu0 %v5239
    %v5276 = vpop.f32.mrf.mxu0
    %v5277 = vadd.f32 0.0, %v5276
    %5278 = vmatmul.f32.gmra.mxu0 %v5242
    %v5279 = vpop.f32.mrf.mxu0
    %v5280 = vadd.f32 0.0, %v5279
    %5281 = vmatmul.f32.gmra.mxu0 %v5245
    %v5282 = vpop.f32.mrf.mxu0
    %v5283 = vadd.f32 0.0, %v5282
    %5284 = vmatmul.f32.gmra.mxu0 %v5248
    %v5285 = vpop.f32.mrf.mxu0
    %v5286 = vadd.f32 0.0, %v5285
    %5287 = vdwg.mxu0
    %s5288 = scalar_lea.vmem %s10, 96
    %v5289 = vld [vmem:[%s5288] sm:$0xff]
    %v5290 = vld [vmem:[%s5288 + $0x8] sm:$0xff]
    %v5291 = vld [vmem:[%s5288 + $0x10] sm:$0xff]
    %v5292 = vld [vmem:[%s5288 + $0x18] sm:$0xff]
    %v5294 = vsel %vm4964, %v5268, 0
    %v5297 = vsel %vm4964, %v5271, 0
    %v5300 = vsel %vm4964, %v5274, 0
    %v5303 = vsel %vm4964, %v5277, 0
    %v5306 = vsel %vm4964, %v5280, 0
    %v5309 = vsel %vm4964, %v5283, 0
    %v5312 = vsel %vm4964, %v5286, 0
    %5314 = vmatpush.msra.mxu0 0.0
    %5315 = vmatpush.msra.mxu0 0.0
    %5316 = vmatpush.msra.mxu0 0.0
    %5317 = vmatpush.msra.mxu0 0.0
    %5318 = vmatpush.msra.mxu0 0.0
    %5319 = vmatpush.msra.mxu0 0.0
    %5320 = vmatpush.msra.mxu0 0.0
    %5321 = vmatpush.msra.mxu0 0.0
    %5322 = vmatpush.msra.mxu0 0.0
    %5323 = vmatpush.msra.mxu0 0.0
    %5324 = vmatpush.msra.mxu0 0.0
    %5325 = vmatpush.msra.mxu0 0.0
    %5326 = vmatpush.msra.mxu0 %v5292
    %5327 = vmatpush.msra.mxu0 %v5291
    %5328 = vmatpush.msra.mxu0 %v5290
    %5329 = vmatpush.msra.mxu0 %v5289
    %5330 = vmatmul.f32.gmra.mxu0 %v5294
    %v5331 = vpop.f32.mrf.mxu0
    %v5332 = vadd.f32 0.0, %v5331
    %5333 = vmatmul.f32.gmra.mxu0 %v5297
    %v5334 = vpop.f32.mrf.mxu0
    %v5335 = vadd.f32 0.0, %v5334
    %5336 = vmatmul.f32.gmra.mxu0 %v5300
    %v5337 = vpop.f32.mrf.mxu0
    %v5338 = vadd.f32 0.0, %v5337
    %5339 = vmatmul.f32.gmra.mxu0 %v5303
    %v5340 = vpop.f32.mrf.mxu0
    %v5341 = vadd.f32 0.0, %v5340
    %5342 = vmatmul.f32.gmra.mxu0 %v5306
    %v5343 = vpop.f32.mrf.mxu0
    %v5344 = vadd.f32 0.0, %v5343
    %5345 = vmatmul.f32.gmra.mxu0 %v5309
    %v5346 = vpop.f32.mrf.mxu0
    %v5347 = vadd.f32 0.0, %v5346
    %5348 = vmatmul.f32.gmra.mxu0 %v5312
    %v5349 = vpop.f32.mrf.mxu0
    %v5350 = vadd.f32 0.0, %v5349
    %5351 = vdwg.mxu0
    %v5352 = vadd.f32 %v5214, %v5332
    %v5353 = vadd.f32 %v5215, %v5335
    %v5354 = vadd.f32 %v5216, %v5338
    %v5355 = vadd.f32 %v5217, %v5341
    %v5356 = vadd.f32 %v5218, %v5344
    %v5357 = vadd.f32 %v5219, %v5347
    %v5358 = vadd.f32 %v5220, %v5350
    %v5359 = vld [vmem:[#allocation10] sm:$0x1]
    %v5361 = vperm.slane %v5359, 0
    %v5363 = vmul.f32 %v5352, %v5361
    %v5364 = vmul.f32 %v5353, %v5361
    %v5365 = vmul.f32 %v5354, %v5361
    %v5366 = vmul.f32 %v5355, %v5361
    %v5367 = vmul.f32 %v5356, %v5361
    %v5368 = vmul.f32 %v5357, %v5361
    %v5369 = vmul.f32 %v5358, %v5361
    %v5370 = vld [vmem:[#allocation12] sm:$0x1]
    %v5372 = vperm.slane %v5370, 0
    %v5374 = vadd.f32 %v5363, %v5372
    %v5375 = vadd.f32 %v5364, %v5372
    %v5376 = vadd.f32 %v5365, %v5372
    %v5377 = vadd.f32 %v5366, %v5372
    %v5378 = vadd.f32 %v5367, %v5372
    %v5379 = vadd.f32 %v5368, %v5372
    %v5380 = vadd.f32 %v5369, %v5372
    %v5381 = vtanh.pop %v5374
    %v5382 = vtanh.pop %v5375
    %v5383 = vtanh.pop %v5376
    %v5384 = vtanh.pop %v5377
    %v5385 = vtanh.pop %v5378
    %v5386 = vtanh.pop %v5379
    %v5387 = vtanh.pop %v5380
    %v5388 = vsub.f32 %v5374, %v5381
    %v5389 = vsub.f32 %v5375, %v5382
    %v5390 = vsub.f32 %v5376, %v5383
    %v5391 = vsub.f32 %v5377, %v5384
    %v5392 = vsub.f32 %v5378, %v5385
    %v5393 = vsub.f32 %v5379, %v5386
    %v5394 = vsub.f32 %v5380, %v5387
    %v5395 = vld [vmem:[#allocation13] sm:$0xff]
    %v5396 = vld [vmem:[#allocation13 + $0x8] sm:$0xff]
    %v5397 = vld [vmem:[#allocation13 + $0x10] sm:$0xff]
    %v5398 = vld [vmem:[#allocation13 + $0x18] sm:$0xff]
    %vm5399 = vcmask 457728
    %v5401 = vsel %vm5399, %v5395, 0
    %v5404 = vsel %vm5399, %v5396, 0
    %v5407 = vsel %vm5399, %v5397, 0
    %v5410 = vsel %vm5399, %v5398, 0
    %5412 = vmatpush.msra.mxu0 0.0
    %5413 = vmatpush.msra.mxu0 0.0
    %5414 = vmatpush.msra.mxu0 0.0
    %5415 = vmatpush.msra.mxu0 0.0
    %5416 = vmatpush.msra.mxu0 0.0
    %5417 = vmatpush.msra.mxu0 0.0
    %5418 = vmatpush.msra.mxu0 0.0
    %5419 = vmatpush.msra.mxu0 0.0
    %5420 = vmatpush.msra.mxu0 0.0
    %5421 = vmatpush.msra.mxu0 %v5394
    %5422 = vmatpush.msra.mxu0 %v5393
    %5423 = vmatpush.msra.mxu0 %v5392
    %5424 = vmatpush.msra.mxu0 %v5391
    %5425 = vmatpush.msra.mxu0 %v5390
    %5426 = vmatpush.msra.mxu0 %v5389
    %5427 = vmatpush.msra.mxu0 %v5388
    %5428 = vmatmul.f32.gmra.mxu0 %v5401
    %v5429 = vpop.f32.mrf.mxu0
    %v5430 = vadd.f32 0.0, %v5429
    %5431 = vmatmul.f32.gmra.mxu0 %v5404
    %v5432 = vpop.f32.mrf.mxu0
    %v5433 = vadd.f32 0.0, %v5432
    %5434 = vmatmul.f32.gmra.mxu0 %v5407
    %v5435 = vpop.f32.mrf.mxu0
    %v5436 = vadd.f32 0.0, %v5435
    %5437 = vmatmul.f32.gmra.mxu0 %v5410
    %v5438 = vpop.f32.mrf.mxu0
    %v5439 = vadd.f32 0.0, %v5438
    %5440 = vdwg.mxu0
    %v5441 = vld [vmem:[%s14] sm:$0xff]
    %v5442 = vld [vmem:[%s14 + $0x8] sm:$0xff]
    %s5443 = scalar_lea.vmem [#allocation13], 32
    %v5444 = vld [vmem:[%s5443] sm:$0xff]
    %v5445 = vld [vmem:[%s5443 + $0x8] sm:$0xff]
    %v5446 = vld [vmem:[%s5443 + $0x10] sm:$0xff]
    %v5447 = vld [vmem:[%s5443 + $0x18] sm:$0xff]
    %v5449 = vsel %vm5399, %v5444, 0
    %v5452 = vsel %vm5399, %v5445, 0
    %v5455 = vsel %vm5399, %v5446, 0
    %v5458 = vsel %vm5399, %v5447, 0
    %5460 = vmatpush.msra.mxu0 0.0
    %5461 = vmatpush.msra.mxu0 0.0
    %5462 = vmatpush.msra.mxu0 0.0
    %5463 = vmatpush.msra.mxu0 0.0
    %5464 = vmatpush.msra.mxu0 0.0
    %5465 = vmatpush.msra.mxu0 0.0
    %5466 = vmatpush.msra.mxu0 0.0
    %5467 = vmatpush.msra.mxu0 0.0
    %5468 = vmatpush.msra.mxu0 0.0
    %5469 = vmatpush.msra.mxu0 %v5394
    %5470 = vmatpush.msra.mxu0 %v5393
    %5471 = vmatpush.msra.mxu0 %v5392
    %5472 = vmatpush.msra.mxu0 %v5391
    %5473 = vmatpush.msra.mxu0 %v5390
    %5474 = vmatpush.msra.mxu0 %v5389
    %5475 = vmatpush.msra.mxu0 %v5388
    %5476 = vmatmul.f32.gmra.mxu0 %v5449
    %v5477 = vpop.f32.mrf.mxu0
    %v5478 = vadd.f32 0.0, %v5477
    %5479 = vmatmul.f32.gmra.mxu0 %v5452
    %v5480 = vpop.f32.mrf.mxu0
    %v5481 = vadd.f32 0.0, %v5480
    %5482 = vmatmul.f32.gmra.mxu0 %v5455
    %v5483 = vpop.f32.mrf.mxu0
    %v5484 = vadd.f32 0.0, %v5483
    %5485 = vmatmul.f32.gmra.mxu0 %v5458
    %v5486 = vpop.f32.mrf.mxu0
    %v5487 = vadd.f32 0.0, %v5486
    %5488 = vdwg.mxu0
    %s5489 = scalar_lea.vmem %s14, 16
    %v5490 = vld [vmem:[%s5489] sm:$0xff]
    %v5491 = vld [vmem:[%s5489 + $0x8] sm:$0xff]
    %vm5492 = vcmask 130048
    %v5494 = vsel %vm5492, %v5478, 0
    %v5497 = vsel %vm5492, %v5481, 0
    %v5500 = vsel %vm5492, %v5484, 0
    %v5503 = vsel %vm5492, %v5487, 0
    %5505 = vmatpush.msra.mxu0 0.0
    %5506 = vmatpush.msra.mxu0 0.0
    %5507 = vmatpush.msra.mxu0 0.0
    %5508 = vmatpush.msra.mxu0 0.0
    %5509 = vmatpush.msra.mxu0 0.0
    %5510 = vmatpush.msra.mxu0 0.0
    %5511 = vmatpush.msra.mxu0 0.0
    %5512 = vmatpush.msra.mxu0 0.0
    %5513 = vmatpush.msra.mxu0 0.0
    %5514 = vmatpush.msra.mxu0 0.0
    %5515 = vmatpush.msra.mxu0 0.0
    %5516 = vmatpush.msra.mxu0 0.0
    %5517 = vmatpush.msra.mxu0 0.0
    %5518 = vmatpush.msra.mxu0 0.0
    %5519 = vmatpush.msra.mxu0 %v5491
    %5520 = vmatpush.msra.mxu0 %v5490
    %5521 = vmatmul.f32.gmra.mxu0 %v5494
    %v5522 = vpop.f32.mrf.mxu0
    %v5523 = vadd.f32 0.0, %v5522
    %5524 = vmatmul.f32.gmra.mxu0 %v5497
    %v5525 = vpop.f32.mrf.mxu0
    %v5526 = vadd.f32 0.0, %v5525
    %5527 = vmatmul.f32.gmra.mxu0 %v5500
    %v5528 = vpop.f32.mrf.mxu0
    %v5529 = vadd.f32 0.0, %v5528
    %5530 = vmatmul.f32.gmra.mxu0 %v5503
    %v5531 = vpop.f32.mrf.mxu0
    %v5532 = vadd.f32 0.0, %v5531
    %5533 = vdwg.mxu0
    %v5535 = vsel %vm5492, %v5430, 0
    %v5538 = vsel %vm5492, %v5433, 0
    %v5541 = vsel %vm5492, %v5436, 0
    %v5544 = vsel %vm5492, %v5439, 0
    %5546 = vmatpush.msra.mxu0 0.0
    %5547 = vmatpush.msra.mxu0 0.0
    %5548 = vmatpush.msra.mxu0 0.0
    %5549 = vmatpush.msra.mxu0 0.0
    %5550 = vmatpush.msra.mxu0 0.0
    %5551 = vmatpush.msra.mxu0 0.0
    %5552 = vmatpush.msra.mxu0 0.0
    %5553 = vmatpush.msra.mxu0 0.0
    %5554 = vmatpush.msra.mxu0 0.0
    %5555 = vmatpush.msra.mxu0 0.0
    %5556 = vmatpush.msra.mxu0 0.0
    %5557 = vmatpush.msra.mxu0 0.0
    %5558 = vmatpush.msra.mxu0 0.0
    %5559 = vmatpush.msra.mxu0 0.0
    %5560 = vmatpush.msra.mxu0 %v5442
    %5561 = vmatpush.msra.mxu0 %v5441
    %5562 = vmatmul.f32.gmra.mxu0 %v5535
    %v5563 = vpop.f32.mrf.mxu0
    %v5564 = vadd.f32 %v5523, %v5563
    %5565 = vmatmul.f32.gmra.mxu0 %v5538
    %v5566 = vpop.f32.mrf.mxu0
    %v5567 = vadd.f32 %v5526, %v5566
    %5568 = vmatmul.f32.gmra.mxu0 %v5541
    %v5569 = vpop.f32.mrf.mxu0
    %v5570 = vadd.f32 %v5529, %v5569
    %5571 = vmatmul.f32.gmra.mxu0 %v5544
    %v5572 = vpop.f32.mrf.mxu0
    %v5573 = vadd.f32 %v5532, %v5572
    %5574 = vdwg.mxu0
    %s5575 = scalar_lea.vmem [#allocation13], 64
    %v5576 = vld [vmem:[%s5575] sm:$0xff]
    %v5577 = vld [vmem:[%s5575 + $0x8] sm:$0xff]
    %v5578 = vld [vmem:[%s5575 + $0x10] sm:$0xff]
    %v5579 = vld [vmem:[%s5575 + $0x18] sm:$0xff]
    %v5581 = vsel %vm5399, %v5576, 0
    %v5584 = vsel %vm5399, %v5577, 0
    %v5587 = vsel %vm5399, %v5578, 0
    %v5590 = vsel %vm5399, %v5579, 0
    %5592 = vmatpush.msra.mxu0 0.0
    %5593 = vmatpush.msra.mxu0 0.0
    %5594 = vmatpush.msra.mxu0 0.0
    %5595 = vmatpush.msra.mxu0 0.0
    %5596 = vmatpush.msra.mxu0 0.0
    %5597 = vmatpush.msra.mxu0 0.0
    %5598 = vmatpush.msra.mxu0 0.0
    %5599 = vmatpush.msra.mxu0 0.0
    %5600 = vmatpush.msra.mxu0 0.0
    %5601 = vmatpush.msra.mxu0 %v5394
    %5602 = vmatpush.msra.mxu0 %v5393
    %5603 = vmatpush.msra.mxu0 %v5392
    %5604 = vmatpush.msra.mxu0 %v5391
    %5605 = vmatpush.msra.mxu0 %v5390
    %5606 = vmatpush.msra.mxu0 %v5389
    %5607 = vmatpush.msra.mxu0 %v5388
    %5608 = vmatmul.f32.gmra.mxu0 %v5581
    %v5609 = vpop.f32.mrf.mxu0
    %v5610 = vadd.f32 0.0, %v5609
    %5611 = vmatmul.f32.gmra.mxu0 %v5584
    %v5612 = vpop.f32.mrf.mxu0
    %v5613 = vadd.f32 0.0, %v5612
    %5614 = vmatmul.f32.gmra.mxu0 %v5587
    %v5615 = vpop.f32.mrf.mxu0
    %v5616 = vadd.f32 0.0, %v5615
    %5617 = vmatmul.f32.gmra.mxu0 %v5590
    %v5618 = vpop.f32.mrf.mxu0
    %v5619 = vadd.f32 0.0, %v5618
    %5620 = vdwg.mxu0
    %s5621 = scalar_lea.vmem %s14, 32
    %v5622 = vld [vmem:[%s5621] sm:$0xff]
    %v5623 = vld [vmem:[%s5621 + $0x8] sm:$0xff]
    %v5625 = vsel %vm5492, %v5610, 0
    %v5628 = vsel %vm5492, %v5613, 0
    %v5631 = vsel %vm5492, %v5616, 0
    %v5634 = vsel %vm5492, %v5619, 0
    %5636 = vmatpush.msra.mxu0 0.0
    %5637 = vmatpush.msra.mxu0 0.0
    %5638 = vmatpush.msra.mxu0 0.0
    %5639 = vmatpush.msra.mxu0 0.0
    %5640 = vmatpush.msra.mxu0 0.0
    %5641 = vmatpush.msra.mxu0 0.0
    %5642 = vmatpush.msra.mxu0 0.0
    %5643 = vmatpush.msra.mxu0 0.0
    %5644 = vmatpush.msra.mxu0 0.0
    %5645 = vmatpush.msra.mxu0 0.0
    %5646 = vmatpush.msra.mxu0 0.0
    %5647 = vmatpush.msra.mxu0 0.0
    %5648 = vmatpush.msra.mxu0 0.0
    %5649 = vmatpush.msra.mxu0 0.0
    %5650 = vmatpush.msra.mxu0 %v5623
    %5651 = vmatpush.msra.mxu0 %v5622
    %5652 = vmatmul.f32.gmra.mxu0 %v5625
    %v5653 = vpop.f32.mrf.mxu0
    %v5654 = vadd.f32 0.0, %v5653
    %5655 = vmatmul.f32.gmra.mxu0 %v5628
    %v5656 = vpop.f32.mrf.mxu0
    %v5657 = vadd.f32 0.0, %v5656
    %5658 = vmatmul.f32.gmra.mxu0 %v5631
    %v5659 = vpop.f32.mrf.mxu0
    %v5660 = vadd.f32 0.0, %v5659
    %5661 = vmatmul.f32.gmra.mxu0 %v5634
    %v5662 = vpop.f32.mrf.mxu0
    %v5663 = vadd.f32 0.0, %v5662
    %5664 = vdwg.mxu0
    %v5665 = vadd.f32 %v5564, %v5654
    %v5666 = vadd.f32 %v5567, %v5657
    %v5667 = vadd.f32 %v5570, %v5660
    %v5668 = vadd.f32 %v5573, %v5663
    %s5669 = scalar_lea.vmem [#allocation13], 96
    %v5670 = vld [vmem:[%s5669] sm:$0xff]
    %v5671 = vld [vmem:[%s5669 + $0x8] sm:$0xff]
    %v5672 = vld [vmem:[%s5669 + $0x10] sm:$0xff]
    %v5673 = vld [vmem:[%s5669 + $0x18] sm:$0xff]
    %v5675 = vsel %vm5399, %v5670, 0
    %v5678 = vsel %vm5399, %v5671, 0
    %v5681 = vsel %vm5399, %v5672, 0
    %v5684 = vsel %vm5399, %v5673, 0
    %5686 = vmatpush.msra.mxu0 0.0
    %5687 = vmatpush.msra.mxu0 0.0
    %5688 = vmatpush.msra.mxu0 0.0
    %5689 = vmatpush.msra.mxu0 0.0
    %5690 = vmatpush.msra.mxu0 0.0
    %5691 = vmatpush.msra.mxu0 0.0
    %5692 = vmatpush.msra.mxu0 0.0
    %5693 = vmatpush.msra.mxu0 0.0
    %5694 = vmatpush.msra.mxu0 0.0
    %5695 = vmatpush.msra.mxu0 %v5394
    %5696 = vmatpush.msra.mxu0 %v5393
    %5697 = vmatpush.msra.mxu0 %v5392
    %5698 = vmatpush.msra.mxu0 %v5391
    %5699 = vmatpush.msra.mxu0 %v5390
    %5700 = vmatpush.msra.mxu0 %v5389
    %5701 = vmatpush.msra.mxu0 %v5388
    %5702 = vmatmul.f32.gmra.mxu0 %v5675
    %v5703 = vpop.f32.mrf.mxu0
    %v5704 = vadd.f32 0.0, %v5703
    %5705 = vmatmul.f32.gmra.mxu0 %v5678
    %v5706 = vpop.f32.mrf.mxu0
    %v5707 = vadd.f32 0.0, %v5706
    %5708 = vmatmul.f32.gmra.mxu0 %v5681
    %v5709 = vpop.f32.mrf.mxu0
    %v5710 = vadd.f32 0.0, %v5709
    %5711 = vmatmul.f32.gmra.mxu0 %v5684
    %v5712 = vpop.f32.mrf.mxu0
    %v5713 = vadd.f32 0.0, %v5712
    %5714 = vdwg.mxu0
    %s5715 = scalar_lea.vmem %s14, 48
    %v5716 = vld [vmem:[%s5715] sm:$0xff]
    %v5717 = vld [vmem:[%s5715 + $0x8] sm:$0xff]
    %v5719 = vsel %vm5492, %v5704, 0
    %v5722 = vsel %vm5492, %v5707, 0
    %v5725 = vsel %vm5492, %v5710, 0
    %v5728 = vsel %vm5492, %v5713, 0
    %5730 = vmatpush.msra.mxu0 0.0
    %5731 = vmatpush.msra.mxu0 0.0
    %5732 = vmatpush.msra.mxu0 0.0
    %5733 = vmatpush.msra.mxu0 0.0
    %5734 = vmatpush.msra.mxu0 0.0
    %5735 = vmatpush.msra.mxu0 0.0
    %5736 = vmatpush.msra.mxu0 0.0
    %5737 = vmatpush.msra.mxu0 0.0
    %5738 = vmatpush.msra.mxu0 0.0
    %5739 = vmatpush.msra.mxu0 0.0
    %5740 = vmatpush.msra.mxu0 0.0
    %5741 = vmatpush.msra.mxu0 0.0
    %5742 = vmatpush.msra.mxu0 0.0
    %5743 = vmatpush.msra.mxu0 0.0
    %5744 = vmatpush.msra.mxu0 %v5717
    %5745 = vmatpush.msra.mxu0 %v5716
    %5746 = vmatmul.f32.gmra.mxu0 %v5719
    %v5747 = vpop.f32.mrf.mxu0
    %v5748 = vadd.f32 0.0, %v5747
    %5749 = vmatmul.f32.gmra.mxu0 %v5722
    %v5750 = vpop.f32.mrf.mxu0
    %v5751 = vadd.f32 0.0, %v5750
    %5752 = vmatmul.f32.gmra.mxu0 %v5725
    %v5753 = vpop.f32.mrf.mxu0
    %v5754 = vadd.f32 0.0, %v5753
    %5755 = vmatmul.f32.gmra.mxu0 %v5728
    %v5756 = vpop.f32.mrf.mxu0
    %v5757 = vadd.f32 0.0, %v5756
    %5758 = vdwg.mxu0
    %v5759 = vadd.f32 %v5665, %v5748
    %v5760 = vadd.f32 %v5666, %v5751
    %v5761 = vadd.f32 %v5667, %v5754
    %v5762 = vadd.f32 %v5668, %v5757
    %v5763 = vld [vmem:[#allocation15] sm:$0x1]
    %v5765 = vperm.slane %v5763, 0
    %v5767 = vmul.f32 %v5759, %v5765
    %v5768 = vmul.f32 %v5760, %v5765
    %v5769 = vmul.f32 %v5761, %v5765
    %v5770 = vmul.f32 %v5762, %v5765
    %v5771 = vld [vmem:[#allocation16] sm:$0x1]
    %v5773 = vperm.slane %v5771, 0
    %v5775 = vadd.f32 %v5767, %v5773
    %v5776 = vadd.f32 %v5768, %v5773
    %v5777 = vadd.f32 %v5769, %v5773
    %v5778 = vadd.f32 %v5770, %v5773
    %v5779 = vmax.f32 %v5775, 0.0
    %v5780 = vmax.f32 %v5776, 0.0
    %v5781 = vmax.f32 %v5777, 0.0
    %v5782 = vmax.f32 %v5778, 0.0
    %v5783 = vand.u32 2147483647, %v5775
    %v5784 = vand.u32 2147483647, %v5776
    %v5785 = vand.u32 2147483647, %v5777
    %v5786 = vand.u32 2147483647, %v5778
    %v5787 = vsub.f32 0.0, %v5783
    %v5788 = vsub.f32 0.0, %v5784
    %v5789 = vsub.f32 0.0, %v5785
    %v5790 = vsub.f32 0.0, %v5786
    %v5791 = vmul.f32 %v5787, 1.442695
    %v5792 = vpow.pop %v5791
    %v5793 = vmul.f32 %v5788, 1.442695
    %v5794 = vpow.pop %v5793
    %v5795 = vmul.f32 %v5789, 1.442695
    %v5796 = vpow.pop %v5795
    %v5797 = vmul.f32 %v5790, 1.442695
    %v5798 = vpow.pop %v5797
    %v5799 = vadd.f32 %v5792, 1.0
    %v5800 = vlog2.pop %v5799
    %v5801 = vmul.f32 %v5800, 0.6931472
    %v5802 = vmul.f32 -0.5, %v5792
    %v5803 = vadd.f32 %v5802, 1.0
    %v5804 = vmul.f32 %v5803, %v5792
    %v5805 = vand.u32 2147483647, %v5792
    %vm5806 = vcmp.lt.f32.partialorder %v5805, 0.0004427343
    %v5807 = vsel %vm5806, %v5804, %v5801
    %v5808 = vadd.f32 %v5794, 1.0
    %v5809 = vlog2.pop %v5808
    %v5810 = vmul.f32 %v5809, 0.6931472
    %v5811 = vmul.f32 -0.5, %v5794
    %v5812 = vadd.f32 %v5811, 1.0
    %v5813 = vmul.f32 %v5812, %v5794
    %v5814 = vand.u32 2147483647, %v5794
    %vm5815 = vcmp.lt.f32.partialorder %v5814, 0.0004427343
    %v5816 = vsel %vm5815, %v5813, %v5810
    %v5817 = vadd.f32 %v5796, 1.0
    %v5818 = vlog2.pop %v5817
    %v5819 = vmul.f32 %v5818, 0.6931472
    %v5820 = vmul.f32 -0.5, %v5796
    %v5821 = vadd.f32 %v5820, 1.0
    %v5822 = vmul.f32 %v5821, %v5796
    %v5823 = vand.u32 2147483647, %v5796
    %vm5824 = vcmp.lt.f32.partialorder %v5823, 0.0004427343
    %v5825 = vsel %vm5824, %v5822, %v5819
    %v5826 = vadd.f32 %v5798, 1.0
    %v5827 = vlog2.pop %v5826
    %v5828 = vmul.f32 %v5827, 0.6931472
    %v5829 = vmul.f32 -0.5, %v5798
    %v5830 = vadd.f32 %v5829, 1.0
    %v5831 = vmul.f32 %v5830, %v5798
    %v5832 = vand.u32 2147483647, %v5798
    %vm5833 = vcmp.lt.f32.partialorder %v5832, 0.0004427343
    %v5834 = vsel %vm5833, %v5831, %v5828
    %v5835 = vadd.f32 %v5779, %v5807
    %v5836 = vadd.f32 %v5780, %v5816
    %v5837 = vadd.f32 %v5781, %v5825
    %v5838 = vadd.f32 %v5782, %v5834
    %v5839 = vtanh.pop %v5835
    %v5840 = vtanh.pop %v5836
    %v5841 = vtanh.pop %v5837
    %v5842 = vtanh.pop %v5838
    %v5843 = vmul.f32 %v5775, %v5839
    %v5844 = vmul.f32 %v5776, %v5840
    %v5845 = vmul.f32 %v5777, %v5841
    %v5846 = vmul.f32 %v5778, %v5842
    %v5847 = vld [vmem:[#allocation18] sm:$0xff]
    %v5848 = vld [vmem:[#allocation18 + $0x8] sm:$0xff]
    %v5849 = vld [vmem:[#allocation18 + $0x10] sm:$0xff]
    %v5850 = vld [vmem:[#allocation18 + $0x18] sm:$0xff]
    %v5852 = vsel %vm4964, %v5847, 0
    %v5855 = vsel %vm4964, %v5848, 0
    %v5858 = vsel %vm4964, %v5849, 0
    %v5861 = vsel %vm4964, %v5850, 0
    %5863 = vmatpush.msra.mxu0 0.0
    %5864 = vmatpush.msra.mxu0 0.0
    %5865 = vmatpush.msra.mxu0 0.0
    %5866 = vmatpush.msra.mxu0 0.0
    %5867 = vmatpush.msra.mxu0 0.0
    %5868 = vmatpush.msra.mxu0 0.0
    %5869 = vmatpush.msra.mxu0 0.0
    %5870 = vmatpush.msra.mxu0 0.0
    %5871 = vmatpush.msra.mxu0 0.0
    %5872 = vmatpush.msra.mxu0 0.0
    %5873 = vmatpush.msra.mxu0 0.0
    %5874 = vmatpush.msra.mxu0 0.0
    %5875 = vmatpush.msra.mxu0 %v5846
    %5876 = vmatpush.msra.mxu0 %v5845
    %5877 = vmatpush.msra.mxu0 %v5844
    %5878 = vmatpush.msra.mxu0 %v5843
    %5879 = vmatmul.f32.gmra.mxu0 %v5852
    %v5880 = vpop.f32.mrf.mxu0
    %v5881 = vadd.f32 0.0, %v5880
    %5882 = vmatmul.f32.gmra.mxu0 %v5855
    %v5883 = vpop.f32.mrf.mxu0
    %v5884 = vadd.f32 0.0, %v5883
    %5885 = vmatmul.f32.gmra.mxu0 %v5858
    %v5886 = vpop.f32.mrf.mxu0
    %v5887 = vadd.f32 0.0, %v5886
    %5888 = vmatmul.f32.gmra.mxu0 %v5861
    %v5889 = vpop.f32.mrf.mxu0
    %v5890 = vadd.f32 0.0, %v5889
    %5891 = vdwg.mxu0
    %v5892 = vld [vmem:[%s18] sm:$0xff]
    %s5893 = scalar_lea.vmem [#allocation18], 32
    %v5894 = vld [vmem:[%s5893] sm:$0xff]
    %v5895 = vld [vmem:[%s5893 + $0x8] sm:$0xff]
    %v5896 = vld [vmem:[%s5893 + $0x10] sm:$0xff]
    %v5897 = vld [vmem:[%s5893 + $0x18] sm:$0xff]
    %v5899 = vsel %vm4964, %v5894, 0
    %v5902 = vsel %vm4964, %v5895, 0
    %v5905 = vsel %vm4964, %v5896, 0
    %v5908 = vsel %vm4964, %v5897, 0
    %5910 = vmatpush.msra.mxu0 0.0
    %5911 = vmatpush.msra.mxu0 0.0
    %5912 = vmatpush.msra.mxu0 0.0
    %5913 = vmatpush.msra.mxu0 0.0
    %5914 = vmatpush.msra.mxu0 0.0
    %5915 = vmatpush.msra.mxu0 0.0
    %5916 = vmatpush.msra.mxu0 0.0
    %5917 = vmatpush.msra.mxu0 0.0
    %5918 = vmatpush.msra.mxu0 0.0
    %5919 = vmatpush.msra.mxu0 0.0
    %5920 = vmatpush.msra.mxu0 0.0
    %5921 = vmatpush.msra.mxu0 0.0
    %5922 = vmatpush.msra.mxu0 %v5846
    %5923 = vmatpush.msra.mxu0 %v5845
    %5924 = vmatpush.msra.mxu0 %v5844
    %5925 = vmatpush.msra.mxu0 %v5843
    %5926 = vmatmul.f32.gmra.mxu0 %v5899
    %v5927 = vpop.f32.mrf.mxu0
    %v5928 = vadd.f32 0.0, %v5927
    %5929 = vmatmul.f32.gmra.mxu0 %v5902
    %v5930 = vpop.f32.mrf.mxu0
    %v5931 = vadd.f32 0.0, %v5930
    %5932 = vmatmul.f32.gmra.mxu0 %v5905
    %v5933 = vpop.f32.mrf.mxu0
    %v5934 = vadd.f32 0.0, %v5933
    %5935 = vmatmul.f32.gmra.mxu0 %v5908
    %v5936 = vpop.f32.mrf.mxu0
    %v5937 = vadd.f32 0.0, %v5936
    %5938 = vdwg.mxu0
    %s5939 = scalar_lea.vmem %s18, 8
    %v5940 = vld [vmem:[%s5939] sm:$0xff]
    %vm5941 = vcmask 64512
    %v5943 = vsel %vm5941, %v5928, 0
    %v5946 = vsel %vm5941, %v5931, 0
    %v5949 = vsel %vm5941, %v5934, 0
    %v5952 = vsel %vm5941, %v5937, 0
    %5954 = vmatpush.msra.mxu0 0.0
    %5955 = vmatpush.msra.mxu0 0.0
    %5956 = vmatpush.msra.mxu0 0.0
    %5957 = vmatpush.msra.mxu0 0.0
    %5958 = vmatpush.msra.mxu0 0.0
    %5959 = vmatpush.msra.mxu0 0.0
    %5960 = vmatpush.msra.mxu0 0.0
    %5961 = vmatpush.msra.mxu0 0.0
    %5962 = vmatpush.msra.mxu0 0.0
    %5963 = vmatpush.msra.mxu0 0.0
    %5964 = vmatpush.msra.mxu0 0.0
    %5965 = vmatpush.msra.mxu0 0.0
    %5966 = vmatpush.msra.mxu0 0.0
    %5967 = vmatpush.msra.mxu0 0.0
    %5968 = vmatpush.msra.mxu0 0.0
    %5969 = vmatpush.msra.mxu0 %v5940
    %5970 = vmatmul.f32.gmra.mxu0 %v5943
    %v5971 = vpop.f32.mrf.mxu0
    %v5972 = vadd.f32 0.0, %v5971
    %5973 = vmatmul.f32.gmra.mxu0 %v5946
    %v5974 = vpop.f32.mrf.mxu0
    %v5975 = vadd.f32 0.0, %v5974
    %5976 = vmatmul.f32.gmra.mxu0 %v5949
    %v5977 = vpop.f32.mrf.mxu0
    %v5978 = vadd.f32 0.0, %v5977
    %5979 = vmatmul.f32.gmra.mxu0 %v5952
    %v5980 = vpop.f32.mrf.mxu0
    %v5981 = vadd.f32 0.0, %v5980
    %5982 = vdwg.mxu0
    %v5984 = vsel %vm5941, %v5881, 0
    %v5987 = vsel %vm5941, %v5884, 0
    %v5990 = vsel %vm5941, %v5887, 0
    %v5993 = vsel %vm5941, %v5890, 0
    %5995 = vmatpush.msra.mxu0 0.0
    %5996 = vmatpush.msra.mxu0 0.0
    %5997 = vmatpush.msra.mxu0 0.0
    %5998 = vmatpush.msra.mxu0 0.0
    %5999 = vmatpush.msra.mxu0 0.0
    %6000 = vmatpush.msra.mxu0 0.0
    %6001 = vmatpush.msra.mxu0 0.0
    %6002 = vmatpush.msra.mxu0 0.0
    %6003 = vmatpush.msra.mxu0 0.0
    %6004 = vmatpush.msra.mxu0 0.0
    %6005 = vmatpush.msra.mxu0 0.0
    %6006 = vmatpush.msra.mxu0 0.0
    %6007 = vmatpush.msra.mxu0 0.0
    %6008 = vmatpush.msra.mxu0 0.0
    %6009 = vmatpush.msra.mxu0 0.0
    %6010 = vmatpush.msra.mxu0 %v5892
    %6011 = vmatmul.f32.gmra.mxu0 %v5984
    %v6012 = vpop.f32.mrf.mxu0
    %v6013 = vadd.f32 %v5972, %v6012
    %6014 = vmatmul.f32.gmra.mxu0 %v5987
    %v6015 = vpop.f32.mrf.mxu0
    %v6016 = vadd.f32 %v5975, %v6015
    %6017 = vmatmul.f32.gmra.mxu0 %v5990
    %v6018 = vpop.f32.mrf.mxu0
    %v6019 = vadd.f32 %v5978, %v6018
    %6020 = vmatmul.f32.gmra.mxu0 %v5993
    %v6021 = vpop.f32.mrf.mxu0
    %v6022 = vadd.f32 %v5981, %v6021
    %6023 = vdwg.mxu0
    %s6024 = scalar_lea.vmem [#allocation18], 64
    %v6025 = vld [vmem:[%s6024] sm:$0xff]
    %v6026 = vld [vmem:[%s6024 + $0x8] sm:$0xff]
    %v6027 = vld [vmem:[%s6024 + $0x10] sm:$0xff]
    %v6028 = vld [vmem:[%s6024 + $0x18] sm:$0xff]
    %v6030 = vsel %vm4964, %v6025, 0
    %v6033 = vsel %vm4964, %v6026, 0
    %v6036 = vsel %vm4964, %v6027, 0
    %v6039 = vsel %vm4964, %v6028, 0
    %6041 = vmatpush.msra.mxu0 0.0
    %6042 = vmatpush.msra.mxu0 0.0
    %6043 = vmatpush.msra.mxu0 0.0
    %6044 = vmatpush.msra.mxu0 0.0
    %6045 = vmatpush.msra.mxu0 0.0
    %6046 = vmatpush.msra.mxu0 0.0
    %6047 = vmatpush.msra.mxu0 0.0
    %6048 = vmatpush.msra.mxu0 0.0
    %6049 = vmatpush.msra.mxu0 0.0
    %6050 = vmatpush.msra.mxu0 0.0
    %6051 = vmatpush.msra.mxu0 0.0
    %6052 = vmatpush.msra.mxu0 0.0
    %6053 = vmatpush.msra.mxu0 %v5846
    %6054 = vmatpush.msra.mxu0 %v5845
    %6055 = vmatpush.msra.mxu0 %v5844
    %6056 = vmatpush.msra.mxu0 %v5843
    %6057 = vmatmul.f32.gmra.mxu0 %v6030
    %v6058 = vpop.f32.mrf.mxu0
    %v6059 = vadd.f32 0.0, %v6058
    %6060 = vmatmul.f32.gmra.mxu0 %v6033
    %v6061 = vpop.f32.mrf.mxu0
    %v6062 = vadd.f32 0.0, %v6061
    %6063 = vmatmul.f32.gmra.mxu0 %v6036
    %v6064 = vpop.f32.mrf.mxu0
    %v6065 = vadd.f32 0.0, %v6064
    %6066 = vmatmul.f32.gmra.mxu0 %v6039
    %v6067 = vpop.f32.mrf.mxu0
    %v6068 = vadd.f32 0.0, %v6067
    %6069 = vdwg.mxu0
    %s6070 = scalar_lea.vmem %s18, 16
    %v6071 = vld [vmem:[%s6070] sm:$0xff]
    %v6073 = vsel %vm5941, %v6059, 0
    %v6076 = vsel %vm5941, %v6062, 0
    %v6079 = vsel %vm5941, %v6065, 0
    %v6082 = vsel %vm5941, %v6068, 0
    %6084 = vmatpush.msra.mxu0 0.0
    %6085 = vmatpush.msra.mxu0 0.0
    %6086 = vmatpush.msra.mxu0 0.0
    %6087 = vmatpush.msra.mxu0 0.0
    %6088 = vmatpush.msra.mxu0 0.0
    %6089 = vmatpush.msra.mxu0 0.0
    %6090 = vmatpush.msra.mxu0 0.0
    %6091 = vmatpush.msra.mxu0 0.0
    %6092 = vmatpush.msra.mxu0 0.0
    %6093 = vmatpush.msra.mxu0 0.0
    %6094 = vmatpush.msra.mxu0 0.0
    %6095 = vmatpush.msra.mxu0 0.0
    %6096 = vmatpush.msra.mxu0 0.0
    %6097 = vmatpush.msra.mxu0 0.0
    %6098 = vmatpush.msra.mxu0 0.0
    %6099 = vmatpush.msra.mxu0 %v6071
    %6100 = vmatmul.f32.gmra.mxu0 %v6073
    %v6101 = vpop.f32.mrf.mxu0
    %v6102 = vadd.f32 0.0, %v6101
    %6103 = vmatmul.f32.gmra.mxu0 %v6076
    %v6104 = vpop.f32.mrf.mxu0
    %v6105 = vadd.f32 0.0, %v6104
    %6106 = vmatmul.f32.gmra.mxu0 %v6079
    %v6107 = vpop.f32.mrf.mxu0
    %v6108 = vadd.f32 0.0, %v6107
    %6109 = vmatmul.f32.gmra.mxu0 %v6082
    %v6110 = vpop.f32.mrf.mxu0
    %v6111 = vadd.f32 0.0, %v6110
    %6112 = vdwg.mxu0
    %v6113 = vadd.f32 %v6013, %v6102
    %v6114 = vadd.f32 %v6016, %v6105
    %v6115 = vadd.f32 %v6019, %v6108
    %v6116 = vadd.f32 %v6022, %v6111
    %s6117 = scalar_lea.vmem [#allocation18], 96
    %v6118 = vld [vmem:[%s6117] sm:$0xff]
    %v6119 = vld [vmem:[%s6117 + $0x8] sm:$0xff]
    %v6120 = vld [vmem:[%s6117 + $0x10] sm:$0xff]
    %v6121 = vld [vmem:[%s6117 + $0x18] sm:$0xff]
    %v6123 = vsel %vm4964, %v6118, 0
    %v6126 = vsel %vm4964, %v6119, 0
    %v6129 = vsel %vm4964, %v6120, 0
    %v6132 = vsel %vm4964, %v6121, 0
    %6134 = vmatpush.msra.mxu0 0.0
    %6135 = vmatpush.msra.mxu0 0.0
    %6136 = vmatpush.msra.mxu0 0.0
    %6137 = vmatpush.msra.mxu0 0.0
    %6138 = vmatpush.msra.mxu0 0.0
    %6139 = vmatpush.msra.mxu0 0.0
    %6140 = vmatpush.msra.mxu0 0.0
    %6141 = vmatpush.msra.mxu0 0.0
    %6142 = vmatpush.msra.mxu0 0.0
    %6143 = vmatpush.msra.mxu0 0.0
    %6144 = vmatpush.msra.mxu0 0.0
    %6145 = vmatpush.msra.mxu0 0.0
    %6146 = vmatpush.msra.mxu0 %v5846
    %6147 = vmatpush.msra.mxu0 %v5845
    %6148 = vmatpush.msra.mxu0 %v5844
    %6149 = vmatpush.msra.mxu0 %v5843
    %6150 = vmatmul.f32.gmra.mxu0 %v6123
    %v6151 = vpop.f32.mrf.mxu0
    %v6152 = vadd.f32 0.0, %v6151
    %6153 = vmatmul.f32.gmra.mxu0 %v6126
    %v6154 = vpop.f32.mrf.mxu0
    %v6155 = vadd.f32 0.0, %v6154
    %6156 = vmatmul.f32.gmra.mxu0 %v6129
    %v6157 = vpop.f32.mrf.mxu0
    %v6158 = vadd.f32 0.0, %v6157
    %6159 = vmatmul.f32.gmra.mxu0 %v6132
    %v6160 = vpop.f32.mrf.mxu0
    %v6161 = vadd.f32 0.0, %v6160
    %6162 = vdwg.mxu0
    %s6163 = scalar_lea.vmem %s18, 24
    %v6164 = vld [vmem:[%s6163] sm:$0xff]
    %v6166 = vsel %vm5941, %v6152, 0
    %v6169 = vsel %vm5941, %v6155, 0
    %v6172 = vsel %vm5941, %v6158, 0
    %v6175 = vsel %vm5941, %v6161, 0
    %6177 = vmatpush.msra.mxu0 0.0
    %6178 = vmatpush.msra.mxu0 0.0
    %6179 = vmatpush.msra.mxu0 0.0
    %6180 = vmatpush.msra.mxu0 0.0
    %6181 = vmatpush.msra.mxu0 0.0
    %6182 = vmatpush.msra.mxu0 0.0
    %6183 = vmatpush.msra.mxu0 0.0
    %6184 = vmatpush.msra.mxu0 0.0
    %6185 = vmatpush.msra.mxu0 0.0
    %6186 = vmatpush.msra.mxu0 0.0
    %6187 = vmatpush.msra.mxu0 0.0
    %6188 = vmatpush.msra.mxu0 0.0
    %6189 = vmatpush.msra.mxu0 0.0
    %6190 = vmatpush.msra.mxu0 0.0
    %6191 = vmatpush.msra.mxu0 0.0
    %6192 = vmatpush.msra.mxu0 %v6164
    %6193 = vmatmul.f32.gmra.mxu0 %v6166
    %v6194 = vpop.f32.mrf.mxu0
    %v6195 = vadd.f32 0.0, %v6194
    %6196 = vmatmul.f32.gmra.mxu0 %v6169
    %v6197 = vpop.f32.mrf.mxu0
    %v6198 = vadd.f32 0.0, %v6197
    %6199 = vmatmul.f32.gmra.mxu0 %v6172
    %v6200 = vpop.f32.mrf.mxu0
    %v6201 = vadd.f32 0.0, %v6200
    %6202 = vmatmul.f32.gmra.mxu0 %v6175
    %v6203 = vpop.f32.mrf.mxu0
    %v6204 = vadd.f32 0.0, %v6203
    %6205 = vdwg.mxu0
    %v6206 = vadd.f32 %v6113, %v6195
    %v6207 = vadd.f32 %v6114, %v6198
    %v6208 = vadd.f32 %v6115, %v6201
    %v6209 = vadd.f32 %v6116, %v6204
    %v6210 = vld [vmem:[#allocation19] sm:$0x1]
    %v6212 = vperm.slane %v6210, 0
    %v6214 = vmul.f32 %v6206, %v6212
    %v6215 = vmul.f32 %v6207, %v6212
    %v6216 = vmul.f32 %v6208, %v6212
    %v6217 = vmul.f32 %v6209, %v6212
    %v6218 = vld [vmem:[#allocation21] sm:$0x1]
    %v6220 = vperm.slane %v6218, 0
    %v6222 = vadd.f32 %v6214, %v6220
    %v6223 = vadd.f32 %v6215, %v6220
    %v6224 = vadd.f32 %v6216, %v6220
    %v6225 = vadd.f32 %v6217, %v6220
    %vm6226 = vcmask 31744
    %v6227 = vsel %vm6226, %v6222, -inf
    %6228 = vmax.xlane.f32.xlu0 %v6227
    %v6229 = vpop.xlane.xlu0 %6228
    %v6230 = vsel %vm6226, %v6223, -inf
    %6231 = vmax.xlane.f32.xlu0 %v6230
    %v6232 = vpop.xlane.xlu0 %6231
    %v6233 = vsel %vm6226, %v6224, -inf
    %6234 = vmax.xlane.f32.xlu0 %v6233
    %v6235 = vpop.xlane.xlu0 %6234
    %v6236 = vsel %vm6226, %v6225, -inf
    %6237 = vmax.xlane.f32.xlu0 %v6236
    %v6238 = vpop.xlane.xlu0 %6237
    %v6239 = vsub.f32 %v6222, %v6229
    %v6240 = vsub.f32 %v6223, %v6232
    %v6241 = vsub.f32 %v6224, %v6235
    %v6242 = vsub.f32 %v6225, %v6238
    %v6243 = vmul.f32 %v6239, 1.442695
    %v6244 = vpow.pop %v6243
    %v6245 = vmul.f32 %v6240, 1.442695
    %v6246 = vpow.pop %v6245
    %v6247 = vmul.f32 %v6241, 1.442695
    %v6248 = vpow.pop %v6247
    %v6249 = vmul.f32 %v6242, 1.442695
    %v6250 = vpow.pop %v6249
    %v6251 = vsel %vm6226, %v6244, 0.0
    %6252 = vadd.xlane.f32.xlu0 %v6251
    %v6253 = vpop.xlane.xlu0 %6252
    %v6254 = vsel %vm6226, %v6246, 0.0
    %6255 = vadd.xlane.f32.xlu0 %v6254
    %v6256 = vpop.xlane.xlu0 %6255
    %v6257 = vsel %vm6226, %v6248, 0.0
    %6258 = vadd.xlane.f32.xlu0 %v6257
    %v6259 = vpop.xlane.xlu0 %6258
    %v6260 = vsel %vm6226, %v6250, 0.0
    %6261 = vadd.xlane.f32.xlu0 %v6260
    %v6262 = vpop.xlane.xlu0 %6261
    %v6263 = vrcp.pop %v6253
    %v6264 = vmul.f32 %v6253, %v6263
    %v6265 = vsub.f32 1.0, %v6264
    %v6266 = vmul.f32 %v6263, %v6265
    %v6267 = vadd.f32 %v6263, %v6266
    %vm6268 = vweird.f32 %v6253
    %vm6269 = vweird.f32 %v6263
    %vm6270 = vmor %vm6268, %vm6269
    %v6271 = vsel %vm6270, %v6263, %v6267
    %v6272 = vand.u32 2147483647, %v6253
    %vm6273 = vcmp.eq.f32.partialorder %v6272, 8.507059e+37
    %v6274 = vand.u32 %v6253, 2147483648
    %v6275 = vor.u32 1.1754944e-38, %v6274
    %v6276 = vsel %vm6273, %v6275, %v6271
    %v6277 = vrcp.pop %v6256
    %v6278 = vmul.f32 %v6256, %v6277
    %v6279 = vsub.f32 1.0, %v6278
    %v6280 = vmul.f32 %v6277, %v6279
    %v6281 = vadd.f32 %v6277, %v6280
    %vm6282 = vweird.f32 %v6256
    %vm6283 = vweird.f32 %v6277
    %vm6284 = vmor %vm6282, %vm6283
    %v6285 = vsel %vm6284, %v6277, %v6281
    %v6286 = vand.u32 2147483647, %v6256
    %vm6287 = vcmp.eq.f32.partialorder %v6286, 8.507059e+37
    %v6288 = vand.u32 %v6256, 2147483648
    %v6289 = vor.u32 1.1754944e-38, %v6288
    %v6290 = vsel %vm6287, %v6289, %v6285
    %v6291 = vrcp.pop %v6259
    %v6292 = vmul.f32 %v6259, %v6291
    %v6293 = vsub.f32 1.0, %v6292
    %v6294 = vmul.f32 %v6291, %v6293
    %v6295 = vadd.f32 %v6291, %v6294
    %vm6296 = vweird.f32 %v6259
    %vm6297 = vweird.f32 %v6291
    %vm6298 = vmor %vm6296, %vm6297
    %v6299 = vsel %vm6298, %v6291, %v6295
    %v6300 = vand.u32 2147483647, %v6259
    %vm6301 = vcmp.eq.f32.partialorder %v6300, 8.507059e+37
    %v6302 = vand.u32 %v6259, 2147483648
    %v6303 = vor.u32 1.1754944e-38, %v6302
    %v6304 = vsel %vm6301, %v6303, %v6299
    %v6305 = vrcp.pop %v6262
    %v6306 = vmul.f32 %v6262, %v6305
    %v6307 = vsub.f32 1.0, %v6306
    %v6308 = vmul.f32 %v6305, %v6307
    %v6309 = vadd.f32 %v6305, %v6308
    %vm6310 = vweird.f32 %v6262
    %vm6311 = vweird.f32 %v6305
    %vm6312 = vmor %vm6310, %vm6311
    %v6313 = vsel %vm6312, %v6305, %v6309
    %v6314 = vand.u32 2147483647, %v6262
    %vm6315 = vcmp.eq.f32.partialorder %v6314, 8.507059e+37
    %v6316 = vand.u32 %v6262, 2147483648
    %v6317 = vor.u32 1.1754944e-38, %v6316
    %v6318 = vsel %vm6315, %v6317, %v6313
    %v6319 = vmul.f32 %v6244, %v6276
    %v6320 = vmul.f32 %v6246, %v6290
    %v6321 = vmul.f32 %v6248, %v6304
    %v6322 = vmul.f32 %v6250, %v6318
    %6323 = vst.msk [vmem:[%s21] sm:$0xff] %vm6226, %v6319
    %6324 = vst.msk [vmem:[%s21 + $0x8] sm:$0xff] %vm6226, %v6320
    %6325 = vst.msk [vmem:[%s21 + $0x10] sm:$0xff] %vm6226, %v6321
    %6326 = vst.msk [vmem:[%s21 + $0x18] sm:$0xff] %vm6226, %v6322
    // Predicated region
    $region138: #{forward.1} parent=1 // pred_check
      _
    $region139: #{forward.1} parent=1 // pred_check_branch
      %6328 = sbr.rel (0) target = $region141
    $region140: #{forward.1} parent=1 // pred_region
      _
    $region141: #{forward.1} parent=1 // pred_fallthru
      _
    // Predicated region
    $region142: #{forward.1} parent=1 // pred_check
      _
    $region143: #{forward.1} parent=1 // pred_check_branch
      %6330 = sbr.rel (0) target = $region145
    $region144: #{forward.1} parent=1 // pred_region
      _
    $region145: #{forward.1} parent=1 // pred_fallthru
      _
    %6331 = vsyncpa [#allocation3], 1
    %6332 = vsyncpa [#allocation5], 1
    %6333 = vsyncpa [#allocation8], 1
    %6334 = vsyncpa [#allocation11], 1
    %6335 = vsyncpa [#allocation14], 1
    %6336 = vsyncpa [#allocation17], 1
    %6337 = vsyncpa [#allocation20], 1

</llo_original>
